<compile_context>
chip_gen: v5e
topology: v5e:2x2
jax: 0.10.0
libtpu: 0.0.40
codegen_flags: <defaults>
</compile_context>

<pallas_src>
import numpy as np
import jax
import jax.numpy as jnp
from jax.experimental import pallas as pl
from jax.experimental.pallas import tpu as pltpu


def _sigmoid(x):
    # exp-based so it lowers to the EUP path; same formula in the reference.
    return 1.0 / (1.0 + jnp.exp(-x))


def _round_up(n, m):
    return -(-n // m) * m


# ---------------------------------------------------------------------------
# Pallas forward
# ---------------------------------------------------------------------------
def deepconvlstm_forward(x, params, batch_tile=None):
    """x: (B, L, C).  Returns (B, H) = LSTM top-layer output at last time step."""
    B, L, C = x.shape
    K, F = params["w1"].shape
    H = params["whh0"].shape[0]
    G = 4 * H
    T = L - 4 * (K - 1)                 # conv4 output length == LSTM sequence length
    assert T >= 1, "sequence too short for four valid convs"

    # Pad every intermediate time length up to a multiple of 16 (the bf16
    # sublane tile) so all in-kernel (BC, Lo, ...) <-> (BC*Lo, ...) reshapes are
    # pure views (no relayout of the im2col slabs).  Padded rows are finite
    # garbage that is never read.
    PAD = 16
    Tp = _round_up(T, PAD)
    L3p = _round_up(Tp + K - 1, PAD)
    L2p = _round_up(L3p + K - 1, PAD)
    L1p = _round_up(L2p + K - 1, PAD)
    Lpad = L1p + K - 1                  # conv1 taps read rows [k, k+L1p) <= Lpad

    bt = B if batch_tile is None else int(batch_tile)
    assert B % bt == 0 and (bt == B or bt % 8 == 0), "bad batch tile"
    nb = B // bt
    bc = bt * C
    BC = B * C
    f32, bf16 = jnp.float32, jnp.bfloat16

    # ---- host-side layout prep (glue only; no redundant im2col) -------------
    # per-(b, c) time series, zero-padded along time, shaped (BC, Lpad, 1) so
    # conv1 taps are sublane slices broadcast across the F lanes in-kernel.
    xt = jnp.transpose(x, (0, 2, 1)).reshape(BC, L).astype(f32)
    xt = jnp.pad(xt, ((0, 0), (0, Lpad - L)))
    xcol = xt[..., None]                                    # (BC, Lpad, 1) f32

    w1 = params["w1"].astype(f32)                           # (K, F) -- conv1 stays f32 (accuracy, trivial FLOPs)
    b1 = params["b1"].reshape(1, F).astype(f32)
    w2 = params["w2"].reshape(K * F, F).astype(bf16)        # row = k*F + cin
    b2 = params["b2"].reshape(1, F).astype(f32)
    w3 = params["w3"].reshape(K * F, F).astype(bf16)
    b3 = params["b3"].reshape(1, F).astype(f32)
    w4 = params["w4"].reshape(K * F, F).astype(bf16)
    b4 = params["b4"].reshape(1, F).astype(f32)
    wih0 = params["wih0"].astype(bf16)                      # (C*F, 4H), row = c*F + f
    bl0 = params["b_l0"].reshape(1, G).astype(f32)
    # Fused recurrent weight for the wavefront:
    #   [h0 | h1] @ Wrec = [ h0@whh0 | h0@wih1 + h1@whh1 ]
    #                    = [ layer-0 recurrent term | layer-1 gate input (minus bias) ]
    wrec = jnp.concatenate(
        [jnp.concatenate([params["whh0"], params["wih1"]], axis=1),
         jnp.concatenate([jnp.zeros((H, G), f32), params["whh1"]], axis=1)],
        axis=0).astype(f32)                                 # (2H, 2G) f32 (latency-bound -> keep full precision)
    bl1 = params["b_l1"].reshape(1, G).astype(f32)

    # ---- kernel --------------------------------------------------------------
    def kernel(xc_ref, w1_ref, b1_ref, w2_ref, b2_ref, w3_ref, b3_ref,
               w4_ref, b4_ref, wih0_ref, bl0_ref, wrec_ref, bl1_ref, out_ref):
        # conv1: K shifted broadcast-FMAs on the VPU (f32), ReLU, cast to bf16.
        xc = xc_ref[...]                                    # (bc, Lpad, 1) f32
        w1v = w1_ref[...]                                   # (K, F) f32
        acc = b1_ref[...].reshape(1, 1, F)
        for k in range(K):
            acc = acc + xc[:, k:k + L1p, :] * w1v[k:k + 1, :].reshape(1, 1, F)
        y = jnp.maximum(acc, 0.0).astype(bf16)              # (bc, L1p, F) bf16

        # conv2-4: in-kernel bf16 im2col (single lane-axis concat) + one MXU dot.
        def conv_block(yin, w_ref, b_ref, lout):
            cols = jnp.concatenate([yin[:, k:k + lout, :] for k in range(K)],
                                   axis=-1)                 # (bc, lout, K*F) bf16
            a = jnp.dot(cols.reshape(bc * lout, K * F), w_ref[...],
                        preferred_element_type=f32)
            a = jnp.maximum(a + b_ref[...], 0.0).astype(bf16)
            return a.reshape(bc, lout, F)                   # lout % 16 == 0 -> free reshape

        y = conv_block(y, w2_ref, b2_ref, L2p)
        y = conv_block(y, w3_ref, b3_ref, L3p)
        y = conv_block(y, w4_ref, b4_ref, Tp)               # (bc, Tp, F) bf16

        # Dropout(0.5) before the LSTM: identity at inference.
        # TODO(synk): training-mode dropout not implemented (eval forward only).

        # LSTM layer-0 input projection: one K = C*F contraction for all steps.
        # Feature order c*F + f matches the torch permute/reshape and wih0 rows.
        y4 = y.reshape(bt, C, Tp, F)
        feats = jnp.concatenate([y4[:, ci, :, :] for ci in range(C)], axis=-1)  # (bt, Tp, C*F)
        gin0 = (jnp.dot(feats.reshape(bt * Tp, C * F), wih0_ref[...],
                        preferred_element_type=f32)
                + bl0_ref[...]).reshape(bt, Tp, G)          # (bt, Tp, 4H) f32

        # Two-layer LSTM, wavefronted: one fused (bt,2H)@(2H,2*4H) dot per round.
        wrec_v = wrec_ref[...]                              # (2H, 2G) f32
        bl1_v = bl1_ref[...]                                # (1, G)  f32

        def cell(g, c_prev):                                # torch gate order i,f,g,o
            i_g = _sigmoid(g[:, 0:H])
            f_g = _sigmoid(g[:, H:2 * H])
            g_g = jnp.tanh(g[:, 2 * H:3 * H])
            o_g = _sigmoid(g[:, 3 * H:4 * H])
            c_new = f_g * c_prev + i_g * g_g
            return o_g * jnp.tanh(c_new), c_new

        zeros_h = jnp.zeros((bt, H), f32)
        h0, c0 = cell(gin0[:, 0, :], zeros_h)               # layer-0 step 0 (h_{-1} = 0)
        h1, c1 = zeros_h, zeros_h
        for r in range(1, T + 1):                           # static unroll (T small here)
            # rec uses last round's (h0, h1); the two cell updates below are
            # independent of each other within the round.
            rec = jnp.dot(jnp.concatenate([h0, h1], axis=-1), wrec_v,
                          preferred_element_type=f32)       # (bt, 2G)
            h1, c1 = cell(rec[:, G:] + bl1_v, c1)           # layer-1 step r-1
            if r < T:
                h0, c0 = cell(gin0[:, r, :] + rec[:, :G], c0)   # layer-0 step r
        # TODO(synk): for long T, switch the unroll to lax.fori_loop with gin0
        # staged in VMEM scratch (pl.ds reads) to bound live ranges/compile time.

        out_ref[...] = h1                                   # (bt, H) lane-dense f32

    weights = (w1, b1, w2, b2, w3, b3, w4, b4, wih0, bl0, wrec, bl1)

    def _wspec(a):
        nd = a.ndim
        return pl.BlockSpec(a.shape, lambda i, _nd=nd: (0,) * _nd)

    out = pl.pallas_call(
        kernel,
        out_shape=jax.ShapeDtypeStruct((B, H), f32),
        grid=(nb,),                                          # batch tiles (parallel -> 2nd TC on v7x)
        in_specs=[pl.BlockSpec((bc, Lpad, 1), lambda i: (i, 0, 0))]
                 + [_wspec(a) for a in weights],
        out_specs=pl.BlockSpec((bt, H), lambda i: (i, 0)),
        compiler_params=pltpu.CompilerParams(
            dimension_semantics=("parallel",)),
    )(xcol, *weights)
    return out


# ---------------------------------------------------------------------------
# Deterministic synthetic parameters (shapes match the module; weights stored
# pre-transposed for matmuls: conv (K, Cin, Cout) <-> torch (Cout, Cin, K, 1);
# LSTM wih/whh = weight_ih.T / weight_hh.T; b_l = b_ih + b_hh; gate order i,f,g,o).
# ---------------------------------------------------------------------------
def init_params(key, n_channels, conv_kernels=64, kernel_size=5, lstm_units=128):
    C, F, K, H = n_channels, conv_kernels, kernel_size, lstm_units
    G, In0 = 4 * H, n_channels * conv_kernels
    ks = jax.random.split(key, 14)

    def nrm(k, shape, scale):
        return scale * jax.random.normal(k, shape, jnp.float32)

    return {
        "w1": nrm(ks[0], (K, F), 1.0 / np.sqrt(K)),
        "b1": nrm(ks[1], (F,), 0.1),
        "w2": nrm(ks[2], (K, F, F), 1.0 / np.sqrt(K * F)),
        "b2": nrm(ks[3], (F,), 0.1),
        "w3": nrm(ks[4], (K, F, F), 1.0 / np.sqrt(K * F)),
        "b3": nrm(ks[5], (F,), 0.1),
        "w4": nrm(ks[6], (K, F, F), 1.0 / np.sqrt(K * F)),
        "b4": nrm(ks[7], (F,), 0.1),
        "wih0": nrm(ks[8], (In0, G), 1.0 / np.sqrt(In0)),
        "whh0": nrm(ks[9], (H, G), 1.0 / np.sqrt(H)),
        "b_l0": nrm(ks[10], (G,), 0.1),
        "wih1": nrm(ks[11], (H, G), 1.0 / np.sqrt(H)),
        "whh1": nrm(ks[12], (H, G), 1.0 / np.sqrt(H)),
        "b_l1": nrm(ks[13], (G,), 0.1),
    }


# ---------------------------------------------------------------------------
# Pure-JAX f32 reference mirroring the PyTorch forward, for validation.
# ---------------------------------------------------------------------------
def reference_forward(x, p):
    B, L, C = x.shape
    K, F = p["w1"].shape
    H = p["whh0"].shape[0]

    y = jnp.transpose(x, (0, 2, 1))[..., None]              # (B, C, L, 1)

    def conv_relu(y, w, b):                                  # w: (K, Cin, Cout)
        Kk = w.shape[0]
        Lo = y.shape[2] - Kk + 1
        acc = jnp.zeros(y.shape[:2] + (Lo, w.shape[2]), jnp.float32)
        for k in range(Kk):
            acc = acc + jnp.einsum("bcti,io->bcto", y[:, :, k:k + Lo, :], w[k])
        return jnp.maximum(acc + b, 0.0)

    y = conv_relu(y, p["w1"][:, None, :], p["b1"])
    y = conv_relu(y, p["w2"], p["b2"])
    y = conv_relu(y, p["w3"], p["b3"])
    y = conv_relu(y, p["w4"], p["b4"])                       # (B, C, T, F)

    T = y.shape[2]
    # torch: (B, F, T, C).permute(2,0,3,1).reshape(T, B, C*F) -> c-major features
    seq = jnp.transpose(y, (2, 0, 1, 3)).reshape(T, B, C * F)
    # Dropout(0.5): identity in eval.

    def lstm_layer(seq, wih, whh, bias):
        h = jnp.zeros((B, H), jnp.float32)
        c = jnp.zeros((B, H), jnp.float32)
        hs = []
        for t in range(seq.shape[0]):
            g = seq[t] @ wih + h @ whh + bias
            i_g = _sigmoid(g[:, 0:H])
            f_g = _sigmoid(g[:, H:2 * H])
            g_g = jnp.tanh(g[:, 2 * H:3 * H])
            o_g = _sigmoid(g[:, 3 * H:4 * H])
            c = f_g * c + i_g * g_g
            h = o_g * jnp.tanh(c)
            hs.append(h)
        return jnp.stack(hs, 0), h

    h0_seq, _ = lstm_layer(seq, p["wih0"], p["whh0"], p["b_l0"])
    _, h_last = lstm_layer(h0_seq, p["wih1"], p["whh1"], p["b_l1"])
    return h_last


if __name__ == "__main__":
    key = jax.random.PRNGKey(0)
    kx, kp = jax.random.split(key)

    # Small shapes consistent with the module: batch=2, 24 time steps, 4 sensor
    # channels; module defaults conv_kernels=64, kernel_size=5, LSTM_units=128
    # -> LSTM sequence length T = 24 - 4*4 = 8.
    B, L, C = 2, 24, 4
    F, K, H = 64, 5, 128

    x = jax.random.normal(kx, (B, L, C), jnp.float32)
    params = init_params(kp, n_channels=C, conv_kernels=F,
                         kernel_size=K, lstm_units=H)

    out = jax.jit(deepconvlstm_forward)(x, params)
    out = jax.block_until_ready(out)

    ref = reference_forward(x, params)
    assert out.shape == ref.shape == (B, H), (out.shape, ref.shape)
    # bf16 MXU operands on conv2-4 / the LSTM input projection (f32 accumulation,
    # f32 conv1 + f32 recurrent path) -> relaxed tolerance.
    np.testing.assert_allclose(np.asarray(out), np.asarray(ref),
                               rtol=3e-2, atol=3e-2)
    print("KERNEL_OK")
</pallas_src>

<mosaic_0001>
module attributes {stable_mosaic.version = 11 : i64} {
  func.func @kernel(%arg0: i32, %arg1: memref<8x68x1xf32, #tpu.memory_space<vmem>>, %arg2: memref<5x64xf32, #tpu.memory_space<vmem>>, %arg3: memref<1x64xf32, #tpu.memory_space<vmem>>, %arg4: memref<320x64xbf16, #tpu.memory_space<vmem>>, %arg5: memref<1x64xf32, #tpu.memory_space<vmem>>, %arg6: memref<320x64xbf16, #tpu.memory_space<vmem>>, %arg7: memref<1x64xf32, #tpu.memory_space<vmem>>, %arg8: memref<320x64xbf16, #tpu.memory_space<vmem>>, %arg9: memref<1x64xf32, #tpu.memory_space<vmem>>, %arg10: memref<256x512xbf16, #tpu.memory_space<vmem>>, %arg11: memref<1x512xf32, #tpu.memory_space<vmem>>, %arg12: memref<256x1024xf32, #tpu.memory_space<vmem>>, %arg13: memref<1x512xf32, #tpu.memory_space<vmem>>, %arg14: memref<2x128xf32, #tpu.memory_space<vmem>>) attributes {dimension_semantics = [#tpu.dimension_semantics<parallel>], iteration_bounds = array<i64: 1>, scalar_prefetch = 0 : i64, scratch_operands = 0 : i64, tpu.core_type = #tpu.core_type<tc>, window_params = [{transform_indices = @transform_0, window_bounds = array<i64: 8, 68, 1>}, {pipeline_mode = #tpu.pipeline_mode<synchronous>, transform_indices = @transform_1, window_bounds = array<i64: 5, 64>}, {pipeline_mode = #tpu.pipeline_mode<synchronous>, transform_indices = @transform_2, window_bounds = array<i64: 1, 64>}, {pipeline_mode = #tpu.pipeline_mode<synchronous>, transform_indices = @transform_3, window_bounds = array<i64: 320, 64>}, {pipeline_mode = #tpu.pipeline_mode<synchronous>, transform_indices = @transform_4, window_bounds = array<i64: 1, 64>}, {pipeline_mode = #tpu.pipeline_mode<synchronous>, transform_indices = @transform_5, window_bounds = array<i64: 320, 64>}, {pipeline_mode = #tpu.pipeline_mode<synchronous>, transform_indices = @transform_6, window_bounds = array<i64: 1, 64>}, {pipeline_mode = #tpu.pipeline_mode<synchronous>, transform_indices = @transform_7, window_bounds = array<i64: 320, 64>}, {pipeline_mode = #tpu.pipeline_mode<synchronous>, transform_indices = @transform_8, window_bounds = array<i64: 1, 64>}, {pipeline_mode = #tpu.pipeline_mode<synchronous>, transform_indices = @transform_9, window_bounds = array<i64: 256, 512>}, {pipeline_mode = #tpu.pipeline_mode<synchronous>, transform_indices = @transform_10, window_bounds = array<i64: 1, 512>}, {pipeline_mode = #tpu.pipeline_mode<synchronous>, transform_indices = @transform_11, window_bounds = array<i64: 256, 1024>}, {pipeline_mode = #tpu.pipeline_mode<synchronous>, transform_indices = @transform_12, window_bounds = array<i64: 1, 512>}, {transform_indices = @transform_13, window_bounds = array<i64: 2, 128>}]} {
    %c0 = arith.constant 0 : index
    %c0_0 = arith.constant 0 : index
    %c0_1 = arith.constant 0 : index
    %0 = vector.load %arg1[%c0, %c0_0, %c0_1] : memref<8x68x1xf32, #tpu.memory_space<vmem>>, vector<8x68x1xf32>
    %c0_2 = arith.constant 0 : index
    %c0_3 = arith.constant 0 : index
    %1 = vector.load %arg2[%c0_2, %c0_3] : memref<5x64xf32, #tpu.memory_space<vmem>>, vector<5x64xf32>
    %c0_4 = arith.constant 0 : index
    %c0_5 = arith.constant 0 : index
    %2 = vector.load %arg3[%c0_4, %c0_5] : memref<1x64xf32, #tpu.memory_space<vmem>>, vector<1x64xf32>
    %3 = vector.shape_cast %2 : vector<1x64xf32> to vector<1x1x64xf32>
    %4 = vector.extract_strided_slice %0 {offsets = [0, 0, 0], sizes = [8, 64, 1], strides = [1, 1, 1]} : vector<8x68x1xf32> to vector<8x64x1xf32>
    %5 = vector.extract_strided_slice %1 {offsets = [0, 0], sizes = [1, 64], strides = [1, 1]} : vector<5x64xf32> to vector<1x64xf32>
    %6 = vector.shape_cast %5 : vector<1x64xf32> to vector<1x1x64xf32>
    %7 = vector.broadcast %4 : vector<8x64x1xf32> to vector<8x64x64xf32>
    %8 = vector.broadcast %6 : vector<1x1x64xf32> to vector<8x64x64xf32>
    %9 = arith.mulf %7, %8 : vector<8x64x64xf32>
    %10 = vector.broadcast %3 : vector<1x1x64xf32> to vector<8x64x64xf32>
    %11 = arith.addf %10, %9 : vector<8x64x64xf32>
    %12 = vector.extract_strided_slice %0 {offsets = [0, 1, 0], sizes = [8, 64, 1], strides = [1, 1, 1]} : vector<8x68x1xf32> to vector<8x64x1xf32>
    %13 = vector.extract_strided_slice %1 {offsets = [1, 0], sizes = [1, 64], strides = [1, 1]} : vector<5x64xf32> to vector<1x64xf32>
    %14 = vector.shape_cast %13 : vector<1x64xf32> to vector<1x1x64xf32>
    %15 = vector.broadcast %12 : vector<8x64x1xf32> to vector<8x64x64xf32>
    %16 = vector.broadcast %14 : vector<1x1x64xf32> to vector<8x64x64xf32>
    %17 = arith.mulf %15, %16 : vector<8x64x64xf32>
    %18 = arith.addf %11, %17 : vector<8x64x64xf32>
    %19 = vector.extract_strided_slice %0 {offsets = [0, 2, 0], sizes = [8, 64, 1], strides = [1, 1, 1]} : vector<8x68x1xf32> to vector<8x64x1xf32>
    %20 = vector.extract_strided_slice %1 {offsets = [2, 0], sizes = [1, 64], strides = [1, 1]} : vector<5x64xf32> to vector<1x64xf32>
    %21 = vector.shape_cast %20 : vector<1x64xf32> to vector<1x1x64xf32>
    %22 = vector.broadcast %19 : vector<8x64x1xf32> to vector<8x64x64xf32>
    %23 = vector.broadcast %21 : vector<1x1x64xf32> to vector<8x64x64xf32>
    %24 = arith.mulf %22, %23 : vector<8x64x64xf32>
    %25 = arith.addf %18, %24 : vector<8x64x64xf32>
    %26 = vector.extract_strided_slice %0 {offsets = [0, 3, 0], sizes = [8, 64, 1], strides = [1, 1, 1]} : vector<8x68x1xf32> to vector<8x64x1xf32>
    %27 = vector.extract_strided_slice %1 {offsets = [3, 0], sizes = [1, 64], strides = [1, 1]} : vector<5x64xf32> to vector<1x64xf32>
    %28 = vector.shape_cast %27 : vector<1x64xf32> to vector<1x1x64xf32>
    %29 = vector.broadcast %26 : vector<8x64x1xf32> to vector<8x64x64xf32>
    %30 = vector.broadcast %28 : vector<1x1x64xf32> to vector<8x64x64xf32>
    %31 = arith.mulf %29, %30 : vector<8x64x64xf32>
    %32 = arith.addf %25, %31 : vector<8x64x64xf32>
    %33 = vector.extract_strided_slice %0 {offsets = [0, 4, 0], sizes = [8, 64, 1], strides = [1, 1, 1]} : vector<8x68x1xf32> to vector<8x64x1xf32>
    %34 = vector.extract_strided_slice %1 {offsets = [4, 0], sizes = [1, 64], strides = [1, 1]} : vector<5x64xf32> to vector<1x64xf32>
    %35 = vector.shape_cast %34 : vector<1x64xf32> to vector<1x1x64xf32>
    %36 = vector.broadcast %33 : vector<8x64x1xf32> to vector<8x64x64xf32>
    %37 = vector.broadcast %35 : vector<1x1x64xf32> to vector<8x64x64xf32>
    %38 = arith.mulf %36, %37 : vector<8x64x64xf32>
    %39 = arith.addf %32, %38 : vector<8x64x64xf32>
    %cst = arith.constant 0.000000e+00 : f32
    %40 = vector.broadcast %cst : f32 to vector<8x64x64xf32>
    %41 = arith.maximumf %39, %40 : vector<8x64x64xf32>
    %42 = arith.truncf %41 : vector<8x64x64xf32> to vector<8x64x64xbf16>
    %43 = vector.extract_strided_slice %42 {offsets = [0, 0, 0], sizes = [8, 48, 64], strides = [1, 1, 1]} : vector<8x64x64xbf16> to vector<8x48x64xbf16>
    %44 = vector.extract_strided_slice %42 {offsets = [0, 1, 0], sizes = [8, 48, 64], strides = [1, 1, 1]} : vector<8x64x64xbf16> to vector<8x48x64xbf16>
    %45 = vector.extract_strided_slice %42 {offsets = [0, 2, 0], sizes = [8, 48, 64], strides = [1, 1, 1]} : vector<8x64x64xbf16> to vector<8x48x64xbf16>
    %46 = vector.extract_strided_slice %42 {offsets = [0, 3, 0], sizes = [8, 48, 64], strides = [1, 1, 1]} : vector<8x64x64xbf16> to vector<8x48x64xbf16>
    %47 = vector.extract_strided_slice %42 {offsets = [0, 4, 0], sizes = [8, 48, 64], strides = [1, 1, 1]} : vector<8x64x64xbf16> to vector<8x48x64xbf16>
    %48 = tpu.concatenate %43, %44, %45, %46, %47 in 2 : vector<8x48x64xbf16>, vector<8x48x64xbf16>, vector<8x48x64xbf16>, vector<8x48x64xbf16>, vector<8x48x64xbf16> -> vector<8x48x320xbf16>
    %49 = vector.shape_cast %48 : vector<8x48x320xbf16> to vector<384x320xbf16>
    %c0_6 = arith.constant 0 : index
    %c0_7 = arith.constant 0 : index
    %50 = vector.load %arg4[%c0_6, %c0_7] : memref<320x64xbf16, #tpu.memory_space<vmem>>, vector<320x64xbf16>
    %cst_8 = arith.constant dense<0.000000e+00> : vector<384x64xf32>
    %51 = tpu.matmul %49, %50, %cst_8 {dimension_numbers = #tpu.dot_dimension_numbers<[1], [0], [0], [1], [0, 0, 1, 1], [], []>} : vector<384x320xbf16>, vector<320x64xbf16>, vector<384x64xf32> -> vector<384x64xf32>
    %c0_9 = arith.constant 0 : index
    %c0_10 = arith.constant 0 : index
    %52 = vector.load %arg5[%c0_9, %c0_10] : memref<1x64xf32, #tpu.memory_space<vmem>>, vector<1x64xf32>
    %53 = vector.broadcast %52 : vector<1x64xf32> to vector<384x64xf32>
    %54 = arith.addf %51, %53 : vector<384x64xf32>
    %cst_11 = arith.constant 0.000000e+00 : f32
    %55 = vector.broadcast %cst_11 : f32 to vector<384x64xf32>
    %56 = arith.maximumf %54, %55 : vector<384x64xf32>
    %57 = arith.truncf %56 : vector<384x64xf32> to vector<384x64xbf16>
    %58 = vector.shape_cast %57 : vector<384x64xbf16> to vector<8x48x64xbf16>
    %59 = vector.extract_strided_slice %58 {offsets = [0, 0, 0], sizes = [8, 32, 64], strides = [1, 1, 1]} : vector<8x48x64xbf16> to vector<8x32x64xbf16>
    %60 = vector.extract_strided_slice %58 {offsets = [0, 1, 0], sizes = [8, 32, 64], strides = [1, 1, 1]} : vector<8x48x64xbf16> to vector<8x32x64xbf16>
    %61 = vector.extract_strided_slice %58 {offsets = [0, 2, 0], sizes = [8, 32, 64], strides = [1, 1, 1]} : vector<8x48x64xbf16> to vector<8x32x64xbf16>
    %62 = vector.extract_strided_slice %58 {offsets = [0, 3, 0], sizes = [8, 32, 64], strides = [1, 1, 1]} : vector<8x48x64xbf16> to vector<8x32x64xbf16>
    %63 = vector.extract_strided_slice %58 {offsets = [0, 4, 0], sizes = [8, 32, 64], strides = [1, 1, 1]} : vector<8x48x64xbf16> to vector<8x32x64xbf16>
    %64 = tpu.concatenate %59, %60, %61, %62, %63 in 2 : vector<8x32x64xbf16>, vector<8x32x64xbf16>, vector<8x32x64xbf16>, vector<8x32x64xbf16>, vector<8x32x64xbf16> -> vector<8x32x320xbf16>
    %65 = vector.shape_cast %64 : vector<8x32x320xbf16> to vector<256x320xbf16>
    %c0_12 = arith.constant 0 : index
    %c0_13 = arith.constant 0 : index
    %66 = vector.load %arg6[%c0_12, %c0_13] : memref<320x64xbf16, #tpu.memory_space<vmem>>, vector<320x64xbf16>
    %cst_14 = arith.constant dense<0.000000e+00> : vector<256x64xf32>
    %67 = tpu.matmul %65, %66, %cst_14 {dimension_numbers = #tpu.dot_dimension_numbers<[1], [0], [0], [1], [0, 0, 1, 1], [], []>} : vector<256x320xbf16>, vector<320x64xbf16>, vector<256x64xf32> -> vector<256x64xf32>
    %c0_15 = arith.constant 0 : index
    %c0_16 = arith.constant 0 : index
    %68 = vector.load %arg7[%c0_15, %c0_16] : memref<1x64xf32, #tpu.memory_space<vmem>>, vector<1x64xf32>
    %69 = vector.broadcast %68 : vector<1x64xf32> to vector<256x64xf32>
    %70 = arith.addf %67, %69 : vector<256x64xf32>
    %cst_17 = arith.constant 0.000000e+00 : f32
    %71 = vector.broadcast %cst_17 : f32 to vector<256x64xf32>
    %72 = arith.maximumf %70, %71 : vector<256x64xf32>
    %73 = arith.truncf %72 : vector<256x64xf32> to vector<256x64xbf16>
    %74 = vector.shape_cast %73 : vector<256x64xbf16> to vector<8x32x64xbf16>
    %75 = vector.extract_strided_slice %74 {offsets = [0, 0, 0], sizes = [8, 16, 64], strides = [1, 1, 1]} : vector<8x32x64xbf16> to vector<8x16x64xbf16>
    %76 = vector.extract_strided_slice %74 {offsets = [0, 1, 0], sizes = [8, 16, 64], strides = [1, 1, 1]} : vector<8x32x64xbf16> to vector<8x16x64xbf16>
    %77 = vector.extract_strided_slice %74 {offsets = [0, 2, 0], sizes = [8, 16, 64], strides = [1, 1, 1]} : vector<8x32x64xbf16> to vector<8x16x64xbf16>
    %78 = vector.extract_strided_slice %74 {offsets = [0, 3, 0], sizes = [8, 16, 64], strides = [1, 1, 1]} : vector<8x32x64xbf16> to vector<8x16x64xbf16>
    %79 = vector.extract_strided_slice %74 {offsets = [0, 4, 0], sizes = [8, 16, 64], strides = [1, 1, 1]} : vector<8x32x64xbf16> to vector<8x16x64xbf16>
    %80 = tpu.concatenate %75, %76, %77, %78, %79 in 2 : vector<8x16x64xbf16>, vector<8x16x64xbf16>, vector<8x16x64xbf16>, vector<8x16x64xbf16>, vector<8x16x64xbf16> -> vector<8x16x320xbf16>
    %81 = vector.shape_cast %80 : vector<8x16x320xbf16> to vector<128x320xbf16>
    %c0_18 = arith.constant 0 : index
    %c0_19 = arith.constant 0 : index
    %82 = vector.load %arg8[%c0_18, %c0_19] : memref<320x64xbf16, #tpu.memory_space<vmem>>, vector<320x64xbf16>
    %cst_20 = arith.constant dense<0.000000e+00> : vector<128x64xf32>
    %83 = tpu.matmul %81, %82, %cst_20 {dimension_numbers = #tpu.dot_dimension_numbers<[1], [0], [0], [1], [0, 0, 1, 1], [], []>} : vector<128x320xbf16>, vector<320x64xbf16>, vector<128x64xf32> -> vector<128x64xf32>
    %c0_21 = arith.constant 0 : index
    %c0_22 = arith.constant 0 : index
    %84 = vector.load %arg9[%c0_21, %c0_22] : memref<1x64xf32, #tpu.memory_space<vmem>>, vector<1x64xf32>
    %85 = vector.broadcast %84 : vector<1x64xf32> to vector<128x64xf32>
    %86 = arith.addf %83, %85 : vector<128x64xf32>
    %cst_23 = arith.constant 0.000000e+00 : f32
    %87 = vector.broadcast %cst_23 : f32 to vector<128x64xf32>
    %88 = arith.maximumf %86, %87 : vector<128x64xf32>
    %89 = arith.truncf %88 : vector<128x64xf32> to vector<128x64xbf16>
    %90 = vector.shape_cast %89 : vector<128x64xbf16> to vector<8x16x64xbf16>
    %91 = vector.shape_cast %90 : vector<8x16x64xbf16> to vector<2x4x16x64xbf16>
    %92 = vector.extract_strided_slice %91 {offsets = [0, 0, 0, 0], sizes = [2, 1, 16, 64], strides = [1, 1, 1, 1]} : vector<2x4x16x64xbf16> to vector<2x1x16x64xbf16>
    %93 = vector.shape_cast %92 : vector<2x1x16x64xbf16> to vector<2x16x64xbf16>
    %94 = vector.extract_strided_slice %91 {offsets = [0, 1, 0, 0], sizes = [2, 1, 16, 64], strides = [1, 1, 1, 1]} : vector<2x4x16x64xbf16> to vector<2x1x16x64xbf16>
    %95 = vector.shape_cast %94 : vector<2x1x16x64xbf16> to vector<2x16x64xbf16>
    %96 = vector.extract_strided_slice %91 {offsets = [0, 2, 0, 0], sizes = [2, 1, 16, 64], strides = [1, 1, 1, 1]} : vector<2x4x16x64xbf16> to vector<2x1x16x64xbf16>
    %97 = vector.shape_cast %96 : vector<2x1x16x64xbf16> to vector<2x16x64xbf16>
    %98 = vector.extract_strided_slice %91 {offsets = [0, 3, 0, 0], sizes = [2, 1, 16, 64], strides = [1, 1, 1, 1]} : vector<2x4x16x64xbf16> to vector<2x1x16x64xbf16>
    %99 = vector.shape_cast %98 : vector<2x1x16x64xbf16> to vector<2x16x64xbf16>
    %100 = tpu.concatenate %93, %95, %97, %99 in 2 : vector<2x16x64xbf16>, vector<2x16x64xbf16>, vector<2x16x64xbf16>, vector<2x16x64xbf16> -> vector<2x16x256xbf16>
    %101 = vector.shape_cast %100 : vector<2x16x256xbf16> to vector<32x256xbf16>
    %c0_24 = arith.constant 0 : index
    %c0_25 = arith.constant 0 : index
    %102 = vector.load %arg10[%c0_24, %c0_25] : memref<256x512xbf16, #tpu.memory_space<vmem>>, vector<256x512xbf16>
    %cst_26 = arith.constant dense<0.000000e+00> : vector<32x512xf32>
    %103 = tpu.matmul %101, %102, %cst_26 {dimension_numbers = #tpu.dot_dimension_numbers<[1], [0], [0], [1], [0, 0, 1, 1], [], []>} : vector<32x256xbf16>, vector<256x512xbf16>, vector<32x512xf32> -> vector<32x512xf32>
    %c0_27 = arith.constant 0 : index
    %c0_28 = arith.constant 0 : index
    %104 = vector.load %arg11[%c0_27, %c0_28] : memref<1x512xf32, #tpu.memory_space<vmem>>, vector<1x512xf32>
    %105 = vector.broadcast %104 : vector<1x512xf32> to vector<32x512xf32>
    %106 = arith.addf %103, %105 : vector<32x512xf32>
    %107 = vector.shape_cast %106 : vector<32x512xf32> to vector<2x16x512xf32>
    %c0_29 = arith.constant 0 : index
    %c0_30 = arith.constant 0 : index
    %108 = vector.load %arg12[%c0_29, %c0_30] : memref<256x1024xf32, #tpu.memory_space<vmem>>, vector<256x1024xf32>
    %c0_31 = arith.constant 0 : index
    %c0_32 = arith.constant 0 : index
    %109 = vector.load %arg13[%c0_31, %c0_32] : memref<1x512xf32, #tpu.memory_space<vmem>>, vector<1x512xf32>
    %cst_33 = arith.constant 0.000000e+00 : f32
    %110 = vector.broadcast %cst_33 : f32 to vector<2x128xf32>
    %111 = vector.extract_strided_slice %107 {offsets = [0, 0, 0], sizes = [2, 1, 512], strides = [1, 1, 1]} : vector<2x16x512xf32> to vector<2x1x512xf32>
    %112 = vector.shape_cast %111 : vector<2x1x512xf32> to vector<2x512xf32>
    %113 = vector.extract_strided_slice %112 {offsets = [0, 0], sizes = [2, 128], strides = [1, 1]} : vector<2x512xf32> to vector<2x128xf32>
    %cst_34 = arith.constant 0.000000e+00 : f32
    %114 = vector.broadcast %cst_34 : f32 to vector<2x128xf32>
    %115 = arith.subf %114, %113 : vector<2x128xf32>
    %116 = math.exp %115 : vector<2x128xf32>
    %cst_35 = arith.constant 1.000000e+00 : f32
    %117 = vector.broadcast %cst_35 : f32 to vector<2x128xf32>
    %118 = arith.addf %117, %116 : vector<2x128xf32>
    %cst_36 = arith.constant 1.000000e+00 : f32
    %119 = vector.broadcast %cst_36 : f32 to vector<2x128xf32>
    %120 = arith.divf %119, %118 : vector<2x128xf32>
    %121 = vector.extract_strided_slice %112 {offsets = [0, 128], sizes = [2, 128], strides = [1, 1]} : vector<2x512xf32> to vector<2x128xf32>
    %cst_37 = arith.constant 0.000000e+00 : f32
    %122 = vector.broadcast %cst_37 : f32 to vector<2x128xf32>
    %123 = arith.subf %122, %121 : vector<2x128xf32>
    %124 = math.exp %123 : vector<2x128xf32>
    %cst_38 = arith.constant 1.000000e+00 : f32
    %125 = vector.broadcast %cst_38 : f32 to vector<2x128xf32>
    %126 = arith.addf %125, %124 : vector<2x128xf32>
    %cst_39 = arith.constant 1.000000e+00 : f32
    %127 = vector.broadcast %cst_39 : f32 to vector<2x128xf32>
    %128 = arith.divf %127, %126 : vector<2x128xf32>
    %129 = vector.extract_strided_slice %112 {offsets = [0, 256], sizes = [2, 128], strides = [1, 1]} : vector<2x512xf32> to vector<2x128xf32>
    %130 = math.tanh %129 : vector<2x128xf32>
    %131 = vector.extract_strided_slice %112 {offsets = [0, 384], sizes = [2, 128], strides = [1, 1]} : vector<2x512xf32> to vector<2x128xf32>
    %cst_40 = arith.constant 0.000000e+00 : f32
    %132 = vector.broadcast %cst_40 : f32 to vector<2x128xf32>
    %133 = arith.subf %132, %131 : vector<2x128xf32>
    %134 = math.exp %133 : vector<2x128xf32>
    %cst_41 = arith.constant 1.000000e+00 : f32
    %135 = vector.broadcast %cst_41 : f32 to vector<2x128xf32>
    %136 = arith.addf %135, %134 : vector<2x128xf32>
    %cst_42 = arith.constant 1.000000e+00 : f32
    %137 = vector.broadcast %cst_42 : f32 to vector<2x128xf32>
    %138 = arith.divf %137, %136 : vector<2x128xf32>
    %139 = arith.mulf %128, %110 : vector<2x128xf32>
    %140 = arith.mulf %120, %130 : vector<2x128xf32>
    %141 = arith.addf %139, %140 : vector<2x128xf32>
    %142 = math.tanh %141 : vector<2x128xf32>
    %143 = arith.mulf %138, %142 : vector<2x128xf32>
    %144 = tpu.concatenate %143, %110 in 1 : vector<2x128xf32>, vector<2x128xf32> -> vector<2x256xf32>
    %cst_43 = arith.constant dense<0.000000e+00> : vector<2x1024xf32>
    %145 = tpu.matmul %144, %108, %cst_43 {dimension_numbers = #tpu.dot_dimension_numbers<[1], [0], [0], [1], [0, 0, 1, 1], [], []>} : vector<2x256xf32>, vector<256x1024xf32>, vector<2x1024xf32> -> vector<2x1024xf32>
    %146 = vector.extract_strided_slice %145 {offsets = [0, 512], sizes = [2, 512], strides = [1, 1]} : vector<2x1024xf32> to vector<2x512xf32>
    %147 = vector.broadcast %109 : vector<1x512xf32> to vector<2x512xf32>
    %148 = arith.addf %146, %147 : vector<2x512xf32>
    %149 = vector.extract_strided_slice %148 {offsets = [0, 0], sizes = [2, 128], strides = [1, 1]} : vector<2x512xf32> to vector<2x128xf32>
    %cst_44 = arith.constant 0.000000e+00 : f32
    %150 = vector.broadcast %cst_44 : f32 to vector<2x128xf32>
    %151 = arith.subf %150, %149 : vector<2x128xf32>
    %152 = math.exp %151 : vector<2x128xf32>
    %cst_45 = arith.constant 1.000000e+00 : f32
    %153 = vector.broadcast %cst_45 : f32 to vector<2x128xf32>
    %154 = arith.addf %153, %152 : vector<2x128xf32>
    %cst_46 = arith.constant 1.000000e+00 : f32
    %155 = vector.broadcast %cst_46 : f32 to vector<2x128xf32>
    %156 = arith.divf %155, %154 : vector<2x128xf32>
    %157 = vector.extract_strided_slice %148 {offsets = [0, 128], sizes = [2, 128], strides = [1, 1]} : vector<2x512xf32> to vector<2x128xf32>
    %cst_47 = arith.constant 0.000000e+00 : f32
    %158 = vector.broadcast %cst_47 : f32 to vector<2x128xf32>
    %159 = arith.subf %158, %157 : vector<2x128xf32>
    %160 = math.exp %159 : vector<2x128xf32>
    %cst_48 = arith.constant 1.000000e+00 : f32
    %161 = vector.broadcast %cst_48 : f32 to vector<2x128xf32>
    %162 = arith.addf %161, %160 : vector<2x128xf32>
    %cst_49 = arith.constant 1.000000e+00 : f32
    %163 = vector.broadcast %cst_49 : f32 to vector<2x128xf32>
    %164 = arith.divf %163, %162 : vector<2x128xf32>
    %165 = vector.extract_strided_slice %148 {offsets = [0, 256], sizes = [2, 128], strides = [1, 1]} : vector<2x512xf32> to vector<2x128xf32>
    %166 = math.tanh %165 : vector<2x128xf32>
    %167 = vector.extract_strided_slice %148 {offsets = [0, 384], sizes = [2, 128], strides = [1, 1]} : vector<2x512xf32> to vector<2x128xf32>
    %cst_50 = arith.constant 0.000000e+00 : f32
    %168 = vector.broadcast %cst_50 : f32 to vector<2x128xf32>
    %169 = arith.subf %168, %167 : vector<2x128xf32>
    %170 = math.exp %169 : vector<2x128xf32>
    %cst_51 = arith.constant 1.000000e+00 : f32
    %171 = vector.broadcast %cst_51 : f32 to vector<2x128xf32>
    %172 = arith.addf %171, %170 : vector<2x128xf32>
    %cst_52 = arith.constant 1.000000e+00 : f32
    %173 = vector.broadcast %cst_52 : f32 to vector<2x128xf32>
    %174 = arith.divf %173, %172 : vector<2x128xf32>
    %175 = arith.mulf %164, %110 : vector<2x128xf32>
    %176 = arith.mulf %156, %166 : vector<2x128xf32>
    %177 = arith.addf %175, %176 : vector<2x128xf32>
    %178 = math.tanh %177 : vector<2x128xf32>
    %179 = arith.mulf %174, %178 : vector<2x128xf32>
    %180 = vector.extract_strided_slice %107 {offsets = [0, 1, 0], sizes = [2, 1, 512], strides = [1, 1, 1]} : vector<2x16x512xf32> to vector<2x1x512xf32>
    %181 = vector.shape_cast %180 : vector<2x1x512xf32> to vector<2x512xf32>
    %182 = vector.extract_strided_slice %145 {offsets = [0, 0], sizes = [2, 512], strides = [1, 1]} : vector<2x1024xf32> to vector<2x512xf32>
    %183 = arith.addf %181, %182 : vector<2x512xf32>
    %184 = vector.extract_strided_slice %183 {offsets = [0, 0], sizes = [2, 128], strides = [1, 1]} : vector<2x512xf32> to vector<2x128xf32>
    %cst_53 = arith.constant 0.000000e+00 : f32
    %185 = vector.broadcast %cst_53 : f32 to vector<2x128xf32>
    %186 = arith.subf %185, %184 : vector<2x128xf32>
    %187 = math.exp %186 : vector<2x128xf32>
    %cst_54 = arith.constant 1.000000e+00 : f32
    %188 = vector.broadcast %cst_54 : f32 to vector<2x128xf32>
    %189 = arith.addf %188, %187 : vector<2x128xf32>
    %cst_55 = arith.constant 1.000000e+00 : f32
    %190 = vector.broadcast %cst_55 : f32 to vector<2x128xf32>
    %191 = arith.divf %190, %189 : vector<2x128xf32>
    %192 = vector.extract_strided_slice %183 {offsets = [0, 128], sizes = [2, 128], strides = [1, 1]} : vector<2x512xf32> to vector<2x128xf32>
    %cst_56 = arith.constant 0.000000e+00 : f32
    %193 = vector.broadcast %cst_56 : f32 to vector<2x128xf32>
    %194 = arith.subf %193, %192 : vector<2x128xf32>
    %195 = math.exp %194 : vector<2x128xf32>
    %cst_57 = arith.constant 1.000000e+00 : f32
    %196 = vector.broadcast %cst_57 : f32 to vector<2x128xf32>
    %197 = arith.addf %196, %195 : vector<2x128xf32>
    %cst_58 = arith.constant 1.000000e+00 : f32
    %198 = vector.broadcast %cst_58 : f32 to vector<2x128xf32>
    %199 = arith.divf %198, %197 : vector<2x128xf32>
    %200 = vector.extract_strided_slice %183 {offsets = [0, 256], sizes = [2, 128], strides = [1, 1]} : vector<2x512xf32> to vector<2x128xf32>
    %201 = math.tanh %200 : vector<2x128xf32>
    %202 = vector.extract_strided_slice %183 {offsets = [0, 384], sizes = [2, 128], strides = [1, 1]} : vector<2x512xf32> to vector<2x128xf32>
    %cst_59 = arith.constant 0.000000e+00 : f32
    %203 = vector.broadcast %cst_59 : f32 to vector<2x128xf32>
    %204 = arith.subf %203, %202 : vector<2x128xf32>
    %205 = math.exp %204 : vector<2x128xf32>
    %cst_60 = arith.constant 1.000000e+00 : f32
    %206 = vector.broadcast %cst_60 : f32 to vector<2x128xf32>
    %207 = arith.addf %206, %205 : vector<2x128xf32>
    %cst_61 = arith.constant 1.000000e+00 : f32
    %208 = vector.broadcast %cst_61 : f32 to vector<2x128xf32>
    %209 = arith.divf %208, %207 : vector<2x128xf32>
    %210 = arith.mulf %199, %141 : vector<2x128xf32>
    %211 = arith.mulf %191, %201 : vector<2x128xf32>
    %212 = arith.addf %210, %211 : vector<2x128xf32>
    %213 = math.tanh %212 : vector<2x128xf32>
    %214 = arith.mulf %209, %213 : vector<2x128xf32>
    %215 = tpu.concatenate %214, %179 in 1 : vector<2x128xf32>, vector<2x128xf32> -> vector<2x256xf32>
    %cst_62 = arith.constant dense<0.000000e+00> : vector<2x1024xf32>
    %216 = tpu.matmul %215, %108, %cst_62 {dimension_numbers = #tpu.dot_dimension_numbers<[1], [0], [0], [1], [0, 0, 1, 1], [], []>} : vector<2x256xf32>, vector<256x1024xf32>, vector<2x1024xf32> -> vector<2x1024xf32>
    %217 = vector.extract_strided_slice %216 {offsets = [0, 512], sizes = [2, 512], strides = [1, 1]} : vector<2x1024xf32> to vector<2x512xf32>
    %218 = vector.broadcast %109 : vector<1x512xf32> to vector<2x512xf32>
    %219 = arith.addf %217, %218 : vector<2x512xf32>
    %220 = vector.extract_strided_slice %219 {offsets = [0, 0], sizes = [2, 128], strides = [1, 1]} : vector<2x512xf32> to vector<2x128xf32>
    %cst_63 = arith.constant 0.000000e+00 : f32
    %221 = vector.broadcast %cst_63 : f32 to vector<2x128xf32>
    %222 = arith.subf %221, %220 : vector<2x128xf32>
    %223 = math.exp %222 : vector<2x128xf32>
    %cst_64 = arith.constant 1.000000e+00 : f32
    %224 = vector.broadcast %cst_64 : f32 to vector<2x128xf32>
    %225 = arith.addf %224, %223 : vector<2x128xf32>
    %cst_65 = arith.constant 1.000000e+00 : f32
    %226 = vector.broadcast %cst_65 : f32 to vector<2x128xf32>
    %227 = arith.divf %226, %225 : vector<2x128xf32>
    %228 = vector.extract_strided_slice %219 {offsets = [0, 128], sizes = [2, 128], strides = [1, 1]} : vector<2x512xf32> to vector<2x128xf32>
    %cst_66 = arith.constant 0.000000e+00 : f32
    %229 = vector.broadcast %cst_66 : f32 to vector<2x128xf32>
    %230 = arith.subf %229, %228 : vector<2x128xf32>
    %231 = math.exp %230 : vector<2x128xf32>
    %cst_67 = arith.constant 1.000000e+00 : f32
    %232 = vector.broadcast %cst_67 : f32 to vector<2x128xf32>
    %233 = arith.addf %232, %231 : vector<2x128xf32>
    %cst_68 = arith.constant 1.000000e+00 : f32
    %234 = vector.broadcast %cst_68 : f32 to vector<2x128xf32>
    %235 = arith.divf %234, %233 : vector<2x128xf32>
    %236 = vector.extract_strided_slice %219 {offsets = [0, 256], sizes = [2, 128], strides = [1, 1]} : vector<2x512xf32> to vector<2x128xf32>
    %237 = math.tanh %236 : vector<2x128xf32>
    %238 = vector.extract_strided_slice %219 {offsets = [0, 384], sizes = [2, 128], strides = [1, 1]} : vector<2x512xf32> to vector<2x128xf32>
    %cst_69 = arith.constant 0.000000e+00 : f32
    %239 = vector.broadcast %cst_69 : f32 to vector<2x128xf32>
    %240 = arith.subf %239, %238 : vector<2x128xf32>
    %241 = math.exp %240 : vector<2x128xf32>
    %cst_70 = arith.constant 1.000000e+00 : f32
    %242 = vector.broadcast %cst_70 : f32 to vector<2x128xf32>
    %243 = arith.addf %242, %241 : vector<2x128xf32>
    %cst_71 = arith.constant 1.000000e+00 : f32
    %244 = vector.broadcast %cst_71 : f32 to vector<2x128xf32>
    %245 = arith.divf %244, %243 : vector<2x128xf32>
    %246 = arith.mulf %235, %177 : vector<2x128xf32>
    %247 = arith.mulf %227, %237 : vector<2x128xf32>
    %248 = arith.addf %246, %247 : vector<2x128xf32>
    %249 = math.tanh %248 : vector<2x128xf32>
    %250 = arith.mulf %245, %249 : vector<2x128xf32>
    %251 = vector.extract_strided_slice %107 {offsets = [0, 2, 0], sizes = [2, 1, 512], strides = [1, 1, 1]} : vector<2x16x512xf32> to vector<2x1x512xf32>
    %252 = vector.shape_cast %251 : vector<2x1x512xf32> to vector<2x512xf32>
    %253 = vector.extract_strided_slice %216 {offsets = [0, 0], sizes = [2, 512], strides = [1, 1]} : vector<2x1024xf32> to vector<2x512xf32>
    %254 = arith.addf %252, %253 : vector<2x512xf32>
    %255 = vector.extract_strided_slice %254 {offsets = [0, 0], sizes = [2, 128], strides = [1, 1]} : vector<2x512xf32> to vector<2x128xf32>
    %cst_72 = arith.constant 0.000000e+00 : f32
    %256 = vector.broadcast %cst_72 : f32 to vector<2x128xf32>
    %257 = arith.subf %256, %255 : vector<2x128xf32>
    %258 = math.exp %257 : vector<2x128xf32>
    %cst_73 = arith.constant 1.000000e+00 : f32
    %259 = vector.broadcast %cst_73 : f32 to vector<2x128xf32>
    %260 = arith.addf %259, %258 : vector<2x128xf32>
    %cst_74 = arith.constant 1.000000e+00 : f32
    %261 = vector.broadcast %cst_74 : f32 to vector<2x128xf32>
    %262 = arith.divf %261, %260 : vector<2x128xf32>
    %263 = vector.extract_strided_slice %254 {offsets = [0, 128], sizes = [2, 128], strides = [1, 1]} : vector<2x512xf32> to vector<2x128xf32>
    %cst_75 = arith.constant 0.000000e+00 : f32
    %264 = vector.broadcast %cst_75 : f32 to vector<2x128xf32>
    %265 = arith.subf %264, %263 : vector<2x128xf32>
    %266 = math.exp %265 : vector<2x128xf32>
    %cst_76 = arith.constant 1.000000e+00 : f32
    %267 = vector.broadcast %cst_76 : f32 to vector<2x128xf32>
    %268 = arith.addf %267, %266 : vector<2x128xf32>
    %cst_77 = arith.constant 1.000000e+00 : f32
    %269 = vector.broadcast %cst_77 : f32 to vector<2x128xf32>
    %270 = arith.divf %269, %268 : vector<2x128xf32>
    %271 = vector.extract_strided_slice %254 {offsets = [0, 256], sizes = [2, 128], strides = [1, 1]} : vector<2x512xf32> to vector<2x128xf32>
    %272 = math.tanh %271 : vector<2x128xf32>
    %273 = vector.extract_strided_slice %254 {offsets = [0, 384], sizes = [2, 128], strides = [1, 1]} : vector<2x512xf32> to vector<2x128xf32>
    %cst_78 = arith.constant 0.000000e+00 : f32
    %274 = vector.broadcast %cst_78 : f32 to vector<2x128xf32>
    %275 = arith.subf %274, %273 : vector<2x128xf32>
    %276 = math.exp %275 : vector<2x128xf32>
    %cst_79 = arith.constant 1.000000e+00 : f32
    %277 = vector.broadcast %cst_79 : f32 to vector<2x128xf32>
    %278 = arith.addf %277, %276 : vector<2x128xf32>
    %cst_80 = arith.constant 1.000000e+00 : f32
    %279 = vector.broadcast %cst_80 : f32 to vector<2x128xf32>
    %280 = arith.divf %279, %278 : vector<2x128xf32>
    %281 = arith.mulf %270, %212 : vector<2x128xf32>
    %282 = arith.mulf %262, %272 : vector<2x128xf32>
    %283 = arith.addf %281, %282 : vector<2x128xf32>
    %284 = math.tanh %283 : vector<2x128xf32>
    %285 = arith.mulf %280, %284 : vector<2x128xf32>
    %286 = tpu.concatenate %285, %250 in 1 : vector<2x128xf32>, vector<2x128xf32> -> vector<2x256xf32>
    %cst_81 = arith.constant dense<0.000000e+00> : vector<2x1024xf32>
    %287 = tpu.matmul %286, %108, %cst_81 {dimension_numbers = #tpu.dot_dimension_numbers<[1], [0], [0], [1], [0, 0, 1, 1], [], []>} : vector<2x256xf32>, vector<256x1024xf32>, vector<2x1024xf32> -> vector<2x1024xf32>
    %288 = vector.extract_strided_slice %287 {offsets = [0, 512], sizes = [2, 512], strides = [1, 1]} : vector<2x1024xf32> to vector<2x512xf32>
    %289 = vector.broadcast %109 : vector<1x512xf32> to vector<2x512xf32>
    %290 = arith.addf %288, %289 : vector<2x512xf32>
    %291 = vector.extract_strided_slice %290 {offsets = [0, 0], sizes = [2, 128], strides = [1, 1]} : vector<2x512xf32> to vector<2x128xf32>
    %cst_82 = arith.constant 0.000000e+00 : f32
    %292 = vector.broadcast %cst_82 : f32 to vector<2x128xf32>
    %293 = arith.subf %292, %291 : vector<2x128xf32>
    %294 = math.exp %293 : vector<2x128xf32>
    %cst_83 = arith.constant 1.000000e+00 : f32
    %295 = vector.broadcast %cst_83 : f32 to vector<2x128xf32>
    %296 = arith.addf %295, %294 : vector<2x128xf32>
    %cst_84 = arith.constant 1.000000e+00 : f32
    %297 = vector.broadcast %cst_84 : f32 to vector<2x128xf32>
    %298 = arith.divf %297, %296 : vector<2x128xf32>
    %299 = vector.extract_strided_slice %290 {offsets = [0, 128], sizes = [2, 128], strides = [1, 1]} : vector<2x512xf32> to vector<2x128xf32>
    %cst_85 = arith.constant 0.000000e+00 : f32
    %300 = vector.broadcast %cst_85 : f32 to vector<2x128xf32>
    %301 = arith.subf %300, %299 : vector<2x128xf32>
    %302 = math.exp %301 : vector<2x128xf32>
    %cst_86 = arith.constant 1.000000e+00 : f32
    %303 = vector.broadcast %cst_86 : f32 to vector<2x128xf32>
    %304 = arith.addf %303, %302 : vector<2x128xf32>
    %cst_87 = arith.constant 1.000000e+00 : f32
    %305 = vector.broadcast %cst_87 : f32 to vector<2x128xf32>
    %306 = arith.divf %305, %304 : vector<2x128xf32>
    %307 = vector.extract_strided_slice %290 {offsets = [0, 256], sizes = [2, 128], strides = [1, 1]} : vector<2x512xf32> to vector<2x128xf32>
    %308 = math.tanh %307 : vector<2x128xf32>
    %309 = vector.extract_strided_slice %290 {offsets = [0, 384], sizes = [2, 128], strides = [1, 1]} : vector<2x512xf32> to vector<2x128xf32>
    %cst_88 = arith.constant 0.000000e+00 : f32
    %310 = vector.broadcast %cst_88 : f32 to vector<2x128xf32>
    %311 = arith.subf %310, %309 : vector<2x128xf32>
    %312 = math.exp %311 : vector<2x128xf32>
    %cst_89 = arith.constant 1.000000e+00 : f32
    %313 = vector.broadcast %cst_89 : f32 to vector<2x128xf32>
    %314 = arith.addf %313, %312 : vector<2x128xf32>
    %cst_90 = arith.constant 1.000000e+00 : f32
    %315 = vector.broadcast %cst_90 : f32 to vector<2x128xf32>
    %316 = arith.divf %315, %314 : vector<2x128xf32>
    %317 = arith.mulf %306, %248 : vector<2x128xf32>
    %318 = arith.mulf %298, %308 : vector<2x128xf32>
    %319 = arith.addf %317, %318 : vector<2x128xf32>
    %320 = math.tanh %319 : vector<2x128xf32>
    %321 = arith.mulf %316, %320 : vector<2x128xf32>
    %322 = vector.extract_strided_slice %107 {offsets = [0, 3, 0], sizes = [2, 1, 512], strides = [1, 1, 1]} : vector<2x16x512xf32> to vector<2x1x512xf32>
    %323 = vector.shape_cast %322 : vector<2x1x512xf32> to vector<2x512xf32>
    %324 = vector.extract_strided_slice %287 {offsets = [0, 0], sizes = [2, 512], strides = [1, 1]} : vector<2x1024xf32> to vector<2x512xf32>
    %325 = arith.addf %323, %324 : vector<2x512xf32>
    %326 = vector.extract_strided_slice %325 {offsets = [0, 0], sizes = [2, 128], strides = [1, 1]} : vector<2x512xf32> to vector<2x128xf32>
    %cst_91 = arith.constant 0.000000e+00 : f32
    %327 = vector.broadcast %cst_91 : f32 to vector<2x128xf32>
    %328 = arith.subf %327, %326 : vector<2x128xf32>
    %329 = math.exp %328 : vector<2x128xf32>
    %cst_92 = arith.constant 1.000000e+00 : f32
    %330 = vector.broadcast %cst_92 : f32 to vector<2x128xf32>
    %331 = arith.addf %330, %329 : vector<2x128xf32>
    %cst_93 = arith.constant 1.000000e+00 : f32
    %332 = vector.broadcast %cst_93 : f32 to vector<2x128xf32>
    %333 = arith.divf %332, %331 : vector<2x128xf32>
    %334 = vector.extract_strided_slice %325 {offsets = [0, 128], sizes = [2, 128], strides = [1, 1]} : vector<2x512xf32> to vector<2x128xf32>
    %cst_94 = arith.constant 0.000000e+00 : f32
    %335 = vector.broadcast %cst_94 : f32 to vector<2x128xf32>
    %336 = arith.subf %335, %334 : vector<2x128xf32>
    %337 = math.exp %336 : vector<2x128xf32>
    %cst_95 = arith.constant 1.000000e+00 : f32
    %338 = vector.broadcast %cst_95 : f32 to vector<2x128xf32>
    %339 = arith.addf %338, %337 : vector<2x128xf32>
    %cst_96 = arith.constant 1.000000e+00 : f32
    %340 = vector.broadcast %cst_96 : f32 to vector<2x128xf32>
    %341 = arith.divf %340, %339 : vector<2x128xf32>
    %342 = vector.extract_strided_slice %325 {offsets = [0, 256], sizes = [2, 128], strides = [1, 1]} : vector<2x512xf32> to vector<2x128xf32>
    %343 = math.tanh %342 : vector<2x128xf32>
    %344 = vector.extract_strided_slice %325 {offsets = [0, 384], sizes = [2, 128], strides = [1, 1]} : vector<2x512xf32> to vector<2x128xf32>
    %cst_97 = arith.constant 0.000000e+00 : f32
    %345 = vector.broadcast %cst_97 : f32 to vector<2x128xf32>
    %346 = arith.subf %345, %344 : vector<2x128xf32>
    %347 = math.exp %346 : vector<2x128xf32>
    %cst_98 = arith.constant 1.000000e+00 : f32
    %348 = vector.broadcast %cst_98 : f32 to vector<2x128xf32>
    %349 = arith.addf %348, %347 : vector<2x128xf32>
    %cst_99 = arith.constant 1.000000e+00 : f32
    %350 = vector.broadcast %cst_99 : f32 to vector<2x128xf32>
    %351 = arith.divf %350, %349 : vector<2x128xf32>
    %352 = arith.mulf %341, %283 : vector<2x128xf32>
    %353 = arith.mulf %333, %343 : vector<2x128xf32>
    %354 = arith.addf %352, %353 : vector<2x128xf32>
    %355 = math.tanh %354 : vector<2x128xf32>
    %356 = arith.mulf %351, %355 : vector<2x128xf32>
    %357 = tpu.concatenate %356, %321 in 1 : vector<2x128xf32>, vector<2x128xf32> -> vector<2x256xf32>
    %cst_100 = arith.constant dense<0.000000e+00> : vector<2x1024xf32>
    %358 = tpu.matmul %357, %108, %cst_100 {dimension_numbers = #tpu.dot_dimension_numbers<[1], [0], [0], [1], [0, 0, 1, 1], [], []>} : vector<2x256xf32>, vector<256x1024xf32>, vector<2x1024xf32> -> vector<2x1024xf32>
    %359 = vector.extract_strided_slice %358 {offsets = [0, 512], sizes = [2, 512], strides = [1, 1]} : vector<2x1024xf32> to vector<2x512xf32>
    %360 = vector.broadcast %109 : vector<1x512xf32> to vector<2x512xf32>
    %361 = arith.addf %359, %360 : vector<2x512xf32>
    %362 = vector.extract_strided_slice %361 {offsets = [0, 0], sizes = [2, 128], strides = [1, 1]} : vector<2x512xf32> to vector<2x128xf32>
    %cst_101 = arith.constant 0.000000e+00 : f32
    %363 = vector.broadcast %cst_101 : f32 to vector<2x128xf32>
    %364 = arith.subf %363, %362 : vector<2x128xf32>
    %365 = math.exp %364 : vector<2x128xf32>
    %cst_102 = arith.constant 1.000000e+00 : f32
    %366 = vector.broadcast %cst_102 : f32 to vector<2x128xf32>
    %367 = arith.addf %366, %365 : vector<2x128xf32>
    %cst_103 = arith.constant 1.000000e+00 : f32
    %368 = vector.broadcast %cst_103 : f32 to vector<2x128xf32>
    %369 = arith.divf %368, %367 : vector<2x128xf32>
    %370 = vector.extract_strided_slice %361 {offsets = [0, 128], sizes = [2, 128], strides = [1, 1]} : vector<2x512xf32> to vector<2x128xf32>
    %cst_104 = arith.constant 0.000000e+00 : f32
    %371 = vector.broadcast %cst_104 : f32 to vector<2x128xf32>
    %372 = arith.subf %371, %370 : vector<2x128xf32>
    %373 = math.exp %372 : vector<2x128xf32>
    %cst_105 = arith.constant 1.000000e+00 : f32
    %374 = vector.broadcast %cst_105 : f32 to vector<2x128xf32>
    %375 = arith.addf %374, %373 : vector<2x128xf32>
    %cst_106 = arith.constant 1.000000e+00 : f32
    %376 = vector.broadcast %cst_106 : f32 to vector<2x128xf32>
    %377 = arith.divf %376, %375 : vector<2x128xf32>
    %378 = vector.extract_strided_slice %361 {offsets = [0, 256], sizes = [2, 128], strides = [1, 1]} : vector<2x512xf32> to vector<2x128xf32>
    %379 = math.tanh %378 : vector<2x128xf32>
    %380 = vector.extract_strided_slice %361 {offsets = [0, 384], sizes = [2, 128], strides = [1, 1]} : vector<2x512xf32> to vector<2x128xf32>
    %cst_107 = arith.constant 0.000000e+00 : f32
    %381 = vector.broadcast %cst_107 : f32 to vector<2x128xf32>
    %382 = arith.subf %381, %380 : vector<2x128xf32>
    %383 = math.exp %382 : vector<2x128xf32>
    %cst_108 = arith.constant 1.000000e+00 : f32
    %384 = vector.broadcast %cst_108 : f32 to vector<2x128xf32>
    %385 = arith.addf %384, %383 : vector<2x128xf32>
    %cst_109 = arith.constant 1.000000e+00 : f32
    %386 = vector.broadcast %cst_109 : f32 to vector<2x128xf32>
    %387 = arith.divf %386, %385 : vector<2x128xf32>
    %388 = arith.mulf %377, %319 : vector<2x128xf32>
    %389 = arith.mulf %369, %379 : vector<2x128xf32>
    %390 = arith.addf %388, %389 : vector<2x128xf32>
    %391 = math.tanh %390 : vector<2x128xf32>
    %392 = arith.mulf %387, %391 : vector<2x128xf32>
    %393 = vector.extract_strided_slice %107 {offsets = [0, 4, 0], sizes = [2, 1, 512], strides = [1, 1, 1]} : vector<2x16x512xf32> to vector<2x1x512xf32>
    %394 = vector.shape_cast %393 : vector<2x1x512xf32> to vector<2x512xf32>
    %395 = vector.extract_strided_slice %358 {offsets = [0, 0], sizes = [2, 512], strides = [1, 1]} : vector<2x1024xf32> to vector<2x512xf32>
    %396 = arith.addf %394, %395 : vector<2x512xf32>
    %397 = vector.extract_strided_slice %396 {offsets = [0, 0], sizes = [2, 128], strides = [1, 1]} : vector<2x512xf32> to vector<2x128xf32>
    %cst_110 = arith.constant 0.000000e+00 : f32
    %398 = vector.broadcast %cst_110 : f32 to vector<2x128xf32>
    %399 = arith.subf %398, %397 : vector<2x128xf32>
    %400 = math.exp %399 : vector<2x128xf32>
    %cst_111 = arith.constant 1.000000e+00 : f32
    %401 = vector.broadcast %cst_111 : f32 to vector<2x128xf32>
    %402 = arith.addf %401, %400 : vector<2x128xf32>
    %cst_112 = arith.constant 1.000000e+00 : f32
    %403 = vector.broadcast %cst_112 : f32 to vector<2x128xf32>
    %404 = arith.divf %403, %402 : vector<2x128xf32>
    %405 = vector.extract_strided_slice %396 {offsets = [0, 128], sizes = [2, 128], strides = [1, 1]} : vector<2x512xf32> to vector<2x128xf32>
    %cst_113 = arith.constant 0.000000e+00 : f32
    %406 = vector.broadcast %cst_113 : f32 to vector<2x128xf32>
    %407 = arith.subf %406, %405 : vector<2x128xf32>
    %408 = math.exp %407 : vector<2x128xf32>
    %cst_114 = arith.constant 1.000000e+00 : f32
    %409 = vector.broadcast %cst_114 : f32 to vector<2x128xf32>
    %410 = arith.addf %409, %408 : vector<2x128xf32>
    %cst_115 = arith.constant 1.000000e+00 : f32
    %411 = vector.broadcast %cst_115 : f32 to vector<2x128xf32>
    %412 = arith.divf %411, %410 : vector<2x128xf32>
    %413 = vector.extract_strided_slice %396 {offsets = [0, 256], sizes = [2, 128], strides = [1, 1]} : vector<2x512xf32> to vector<2x128xf32>
    %414 = math.tanh %413 : vector<2x128xf32>
    %415 = vector.extract_strided_slice %396 {offsets = [0, 384], sizes = [2, 128], strides = [1, 1]} : vector<2x512xf32> to vector<2x128xf32>
    %cst_116 = arith.constant 0.000000e+00 : f32
    %416 = vector.broadcast %cst_116 : f32 to vector<2x128xf32>
    %417 = arith.subf %416, %415 : vector<2x128xf32>
    %418 = math.exp %417 : vector<2x128xf32>
    %cst_117 = arith.constant 1.000000e+00 : f32
    %419 = vector.broadcast %cst_117 : f32 to vector<2x128xf32>
    %420 = arith.addf %419, %418 : vector<2x128xf32>
    %cst_118 = arith.constant 1.000000e+00 : f32
    %421 = vector.broadcast %cst_118 : f32 to vector<2x128xf32>
    %422 = arith.divf %421, %420 : vector<2x128xf32>
    %423 = arith.mulf %412, %354 : vector<2x128xf32>
    %424 = arith.mulf %404, %414 : vector<2x128xf32>
    %425 = arith.addf %423, %424 : vector<2x128xf32>
    %426 = math.tanh %425 : vector<2x128xf32>
    %427 = arith.mulf %422, %426 : vector<2x128xf32>
    %428 = tpu.concatenate %427, %392 in 1 : vector<2x128xf32>, vector<2x128xf32> -> vector<2x256xf32>
    %cst_119 = arith.constant dense<0.000000e+00> : vector<2x1024xf32>
    %429 = tpu.matmul %428, %108, %cst_119 {dimension_numbers = #tpu.dot_dimension_numbers<[1], [0], [0], [1], [0, 0, 1, 1], [], []>} : vector<2x256xf32>, vector<256x1024xf32>, vector<2x1024xf32> -> vector<2x1024xf32>
    %430 = vector.extract_strided_slice %429 {offsets = [0, 512], sizes = [2, 512], strides = [1, 1]} : vector<2x1024xf32> to vector<2x512xf32>
    %431 = vector.broadcast %109 : vector<1x512xf32> to vector<2x512xf32>
    %432 = arith.addf %430, %431 : vector<2x512xf32>
    %433 = vector.extract_strided_slice %432 {offsets = [0, 0], sizes = [2, 128], strides = [1, 1]} : vector<2x512xf32> to vector<2x128xf32>
    %cst_120 = arith.constant 0.000000e+00 : f32
    %434 = vector.broadcast %cst_120 : f32 to vector<2x128xf32>
    %435 = arith.subf %434, %433 : vector<2x128xf32>
    %436 = math.exp %435 : vector<2x128xf32>
    %cst_121 = arith.constant 1.000000e+00 : f32
    %437 = vector.broadcast %cst_121 : f32 to vector<2x128xf32>
    %438 = arith.addf %437, %436 : vector<2x128xf32>
    %cst_122 = arith.constant 1.000000e+00 : f32
    %439 = vector.broadcast %cst_122 : f32 to vector<2x128xf32>
    %440 = arith.divf %439, %438 : vector<2x128xf32>
    %441 = vector.extract_strided_slice %432 {offsets = [0, 128], sizes = [2, 128], strides = [1, 1]} : vector<2x512xf32> to vector<2x128xf32>
    %cst_123 = arith.constant 0.000000e+00 : f32
    %442 = vector.broadcast %cst_123 : f32 to vector<2x128xf32>
    %443 = arith.subf %442, %441 : vector<2x128xf32>
    %444 = math.exp %443 : vector<2x128xf32>
    %cst_124 = arith.constant 1.000000e+00 : f32
    %445 = vector.broadcast %cst_124 : f32 to vector<2x128xf32>
    %446 = arith.addf %445, %444 : vector<2x128xf32>
    %cst_125 = arith.constant 1.000000e+00 : f32
    %447 = vector.broadcast %cst_125 : f32 to vector<2x128xf32>
    %448 = arith.divf %447, %446 : vector<2x128xf32>
    %449 = vector.extract_strided_slice %432 {offsets = [0, 256], sizes = [2, 128], strides = [1, 1]} : vector<2x512xf32> to vector<2x128xf32>
    %450 = math.tanh %449 : vector<2x128xf32>
    %451 = vector.extract_strided_slice %432 {offsets = [0, 384], sizes = [2, 128], strides = [1, 1]} : vector<2x512xf32> to vector<2x128xf32>
    %cst_126 = arith.constant 0.000000e+00 : f32
    %452 = vector.broadcast %cst_126 : f32 to vector<2x128xf32>
    %453 = arith.subf %452, %451 : vector<2x128xf32>
    %454 = math.exp %453 : vector<2x128xf32>
    %cst_127 = arith.constant 1.000000e+00 : f32
    %455 = vector.broadcast %cst_127 : f32 to vector<2x128xf32>
    %456 = arith.addf %455, %454 : vector<2x128xf32>
    %cst_128 = arith.constant 1.000000e+00 : f32
    %457 = vector.broadcast %cst_128 : f32 to vector<2x128xf32>
    %458 = arith.divf %457, %456 : vector<2x128xf32>
    %459 = arith.mulf %448, %390 : vector<2x128xf32>
    %460 = arith.mulf %440, %450 : vector<2x128xf32>
    %461 = arith.addf %459, %460 : vector<2x128xf32>
    %462 = math.tanh %461 : vector<2x128xf32>
    %463 = arith.mulf %458, %462 : vector<2x128xf32>
    %464 = vector.extract_strided_slice %107 {offsets = [0, 5, 0], sizes = [2, 1, 512], strides = [1, 1, 1]} : vector<2x16x512xf32> to vector<2x1x512xf32>
    %465 = vector.shape_cast %464 : vector<2x1x512xf32> to vector<2x512xf32>
    %466 = vector.extract_strided_slice %429 {offsets = [0, 0], sizes = [2, 512], strides = [1, 1]} : vector<2x1024xf32> to vector<2x512xf32>
    %467 = arith.addf %465, %466 : vector<2x512xf32>
    %468 = vector.extract_strided_slice %467 {offsets = [0, 0], sizes = [2, 128], strides = [1, 1]} : vector<2x512xf32> to vector<2x128xf32>
    %cst_129 = arith.constant 0.000000e+00 : f32
    %469 = vector.broadcast %cst_129 : f32 to vector<2x128xf32>
    %470 = arith.subf %469, %468 : vector<2x128xf32>
    %471 = math.exp %470 : vector<2x128xf32>
    %cst_130 = arith.constant 1.000000e+00 : f32
    %472 = vector.broadcast %cst_130 : f32 to vector<2x128xf32>
    %473 = arith.addf %472, %471 : vector<2x128xf32>
    %cst_131 = arith.constant 1.000000e+00 : f32
    %474 = vector.broadcast %cst_131 : f32 to vector<2x128xf32>
    %475 = arith.divf %474, %473 : vector<2x128xf32>
    %476 = vector.extract_strided_slice %467 {offsets = [0, 128], sizes = [2, 128], strides = [1, 1]} : vector<2x512xf32> to vector<2x128xf32>
    %cst_132 = arith.constant 0.000000e+00 : f32
    %477 = vector.broadcast %cst_132 : f32 to vector<2x128xf32>
    %478 = arith.subf %477, %476 : vector<2x128xf32>
    %479 = math.exp %478 : vector<2x128xf32>
    %cst_133 = arith.constant 1.000000e+00 : f32
    %480 = vector.broadcast %cst_133 : f32 to vector<2x128xf32>
    %481 = arith.addf %480, %479 : vector<2x128xf32>
    %cst_134 = arith.constant 1.000000e+00 : f32
    %482 = vector.broadcast %cst_134 : f32 to vector<2x128xf32>
    %483 = arith.divf %482, %481 : vector<2x128xf32>
    %484 = vector.extract_strided_slice %467 {offsets = [0, 256], sizes = [2, 128], strides = [1, 1]} : vector<2x512xf32> to vector<2x128xf32>
    %485 = math.tanh %484 : vector<2x128xf32>
    %486 = vector.extract_strided_slice %467 {offsets = [0, 384], sizes = [2, 128], strides = [1, 1]} : vector<2x512xf32> to vector<2x128xf32>
    %cst_135 = arith.constant 0.000000e+00 : f32
    %487 = vector.broadcast %cst_135 : f32 to vector<2x128xf32>
    %488 = arith.subf %487, %486 : vector<2x128xf32>
    %489 = math.exp %488 : vector<2x128xf32>
    %cst_136 = arith.constant 1.000000e+00 : f32
    %490 = vector.broadcast %cst_136 : f32 to vector<2x128xf32>
    %491 = arith.addf %490, %489 : vector<2x128xf32>
    %cst_137 = arith.constant 1.000000e+00 : f32
    %492 = vector.broadcast %cst_137 : f32 to vector<2x128xf32>
    %493 = arith.divf %492, %491 : vector<2x128xf32>
    %494 = arith.mulf %483, %425 : vector<2x128xf32>
    %495 = arith.mulf %475, %485 : vector<2x128xf32>
    %496 = arith.addf %494, %495 : vector<2x128xf32>
    %497 = math.tanh %496 : vector<2x128xf32>
    %498 = arith.mulf %493, %497 : vector<2x128xf32>
    %499 = tpu.concatenate %498, %463 in 1 : vector<2x128xf32>, vector<2x128xf32> -> vector<2x256xf32>
    %cst_138 = arith.constant dense<0.000000e+00> : vector<2x1024xf32>
    %500 = tpu.matmul %499, %108, %cst_138 {dimension_numbers = #tpu.dot_dimension_numbers<[1], [0], [0], [1], [0, 0, 1, 1], [], []>} : vector<2x256xf32>, vector<256x1024xf32>, vector<2x1024xf32> -> vector<2x1024xf32>
    %501 = vector.extract_strided_slice %500 {offsets = [0, 512], sizes = [2, 512], strides = [1, 1]} : vector<2x1024xf32> to vector<2x512xf32>
    %502 = vector.broadcast %109 : vector<1x512xf32> to vector<2x512xf32>
    %503 = arith.addf %501, %502 : vector<2x512xf32>
    %504 = vector.extract_strided_slice %503 {offsets = [0, 0], sizes = [2, 128], strides = [1, 1]} : vector<2x512xf32> to vector<2x128xf32>
    %cst_139 = arith.constant 0.000000e+00 : f32
    %505 = vector.broadcast %cst_139 : f32 to vector<2x128xf32>
    %506 = arith.subf %505, %504 : vector<2x128xf32>
    %507 = math.exp %506 : vector<2x128xf32>
    %cst_140 = arith.constant 1.000000e+00 : f32
    %508 = vector.broadcast %cst_140 : f32 to vector<2x128xf32>
    %509 = arith.addf %508, %507 : vector<2x128xf32>
    %cst_141 = arith.constant 1.000000e+00 : f32
    %510 = vector.broadcast %cst_141 : f32 to vector<2x128xf32>
    %511 = arith.divf %510, %509 : vector<2x128xf32>
    %512 = vector.extract_strided_slice %503 {offsets = [0, 128], sizes = [2, 128], strides = [1, 1]} : vector<2x512xf32> to vector<2x128xf32>
    %cst_142 = arith.constant 0.000000e+00 : f32
    %513 = vector.broadcast %cst_142 : f32 to vector<2x128xf32>
    %514 = arith.subf %513, %512 : vector<2x128xf32>
    %515 = math.exp %514 : vector<2x128xf32>
    %cst_143 = arith.constant 1.000000e+00 : f32
    %516 = vector.broadcast %cst_143 : f32 to vector<2x128xf32>
    %517 = arith.addf %516, %515 : vector<2x128xf32>
    %cst_144 = arith.constant 1.000000e+00 : f32
    %518 = vector.broadcast %cst_144 : f32 to vector<2x128xf32>
    %519 = arith.divf %518, %517 : vector<2x128xf32>
    %520 = vector.extract_strided_slice %503 {offsets = [0, 256], sizes = [2, 128], strides = [1, 1]} : vector<2x512xf32> to vector<2x128xf32>
    %521 = math.tanh %520 : vector<2x128xf32>
    %522 = vector.extract_strided_slice %503 {offsets = [0, 384], sizes = [2, 128], strides = [1, 1]} : vector<2x512xf32> to vector<2x128xf32>
    %cst_145 = arith.constant 0.000000e+00 : f32
    %523 = vector.broadcast %cst_145 : f32 to vector<2x128xf32>
    %524 = arith.subf %523, %522 : vector<2x128xf32>
    %525 = math.exp %524 : vector<2x128xf32>
    %cst_146 = arith.constant 1.000000e+00 : f32
    %526 = vector.broadcast %cst_146 : f32 to vector<2x128xf32>
    %527 = arith.addf %526, %525 : vector<2x128xf32>
    %cst_147 = arith.constant 1.000000e+00 : f32
    %528 = vector.broadcast %cst_147 : f32 to vector<2x128xf32>
    %529 = arith.divf %528, %527 : vector<2x128xf32>
    %530 = arith.mulf %519, %461 : vector<2x128xf32>
    %531 = arith.mulf %511, %521 : vector<2x128xf32>
    %532 = arith.addf %530, %531 : vector<2x128xf32>
    %533 = math.tanh %532 : vector<2x128xf32>
    %534 = arith.mulf %529, %533 : vector<2x128xf32>
    %535 = vector.extract_strided_slice %107 {offsets = [0, 6, 0], sizes = [2, 1, 512], strides = [1, 1, 1]} : vector<2x16x512xf32> to vector<2x1x512xf32>
    %536 = vector.shape_cast %535 : vector<2x1x512xf32> to vector<2x512xf32>
    %537 = vector.extract_strided_slice %500 {offsets = [0, 0], sizes = [2, 512], strides = [1, 1]} : vector<2x1024xf32> to vector<2x512xf32>
    %538 = arith.addf %536, %537 : vector<2x512xf32>
    %539 = vector.extract_strided_slice %538 {offsets = [0, 0], sizes = [2, 128], strides = [1, 1]} : vector<2x512xf32> to vector<2x128xf32>
    %cst_148 = arith.constant 0.000000e+00 : f32
    %540 = vector.broadcast %cst_148 : f32 to vector<2x128xf32>
    %541 = arith.subf %540, %539 : vector<2x128xf32>
    %542 = math.exp %541 : vector<2x128xf32>
    %cst_149 = arith.constant 1.000000e+00 : f32
    %543 = vector.broadcast %cst_149 : f32 to vector<2x128xf32>
    %544 = arith.addf %543, %542 : vector<2x128xf32>
    %cst_150 = arith.constant 1.000000e+00 : f32
    %545 = vector.broadcast %cst_150 : f32 to vector<2x128xf32>
    %546 = arith.divf %545, %544 : vector<2x128xf32>
    %547 = vector.extract_strided_slice %538 {offsets = [0, 128], sizes = [2, 128], strides = [1, 1]} : vector<2x512xf32> to vector<2x128xf32>
    %cst_151 = arith.constant 0.000000e+00 : f32
    %548 = vector.broadcast %cst_151 : f32 to vector<2x128xf32>
    %549 = arith.subf %548, %547 : vector<2x128xf32>
    %550 = math.exp %549 : vector<2x128xf32>
    %cst_152 = arith.constant 1.000000e+00 : f32
    %551 = vector.broadcast %cst_152 : f32 to vector<2x128xf32>
    %552 = arith.addf %551, %550 : vector<2x128xf32>
    %cst_153 = arith.constant 1.000000e+00 : f32
    %553 = vector.broadcast %cst_153 : f32 to vector<2x128xf32>
    %554 = arith.divf %553, %552 : vector<2x128xf32>
    %555 = vector.extract_strided_slice %538 {offsets = [0, 256], sizes = [2, 128], strides = [1, 1]} : vector<2x512xf32> to vector<2x128xf32>
    %556 = math.tanh %555 : vector<2x128xf32>
    %557 = vector.extract_strided_slice %538 {offsets = [0, 384], sizes = [2, 128], strides = [1, 1]} : vector<2x512xf32> to vector<2x128xf32>
    %cst_154 = arith.constant 0.000000e+00 : f32
    %558 = vector.broadcast %cst_154 : f32 to vector<2x128xf32>
    %559 = arith.subf %558, %557 : vector<2x128xf32>
    %560 = math.exp %559 : vector<2x128xf32>
    %cst_155 = arith.constant 1.000000e+00 : f32
    %561 = vector.broadcast %cst_155 : f32 to vector<2x128xf32>
    %562 = arith.addf %561, %560 : vector<2x128xf32>
    %cst_156 = arith.constant 1.000000e+00 : f32
    %563 = vector.broadcast %cst_156 : f32 to vector<2x128xf32>
    %564 = arith.divf %563, %562 : vector<2x128xf32>
    %565 = arith.mulf %554, %496 : vector<2x128xf32>
    %566 = arith.mulf %546, %556 : vector<2x128xf32>
    %567 = arith.addf %565, %566 : vector<2x128xf32>
    %568 = math.tanh %567 : vector<2x128xf32>
    %569 = arith.mulf %564, %568 : vector<2x128xf32>
    %570 = tpu.concatenate %569, %534 in 1 : vector<2x128xf32>, vector<2x128xf32> -> vector<2x256xf32>
    %cst_157 = arith.constant dense<0.000000e+00> : vector<2x1024xf32>
    %571 = tpu.matmul %570, %108, %cst_157 {dimension_numbers = #tpu.dot_dimension_numbers<[1], [0], [0], [1], [0, 0, 1, 1], [], []>} : vector<2x256xf32>, vector<256x1024xf32>, vector<2x1024xf32> -> vector<2x1024xf32>
    %572 = vector.extract_strided_slice %571 {offsets = [0, 512], sizes = [2, 512], strides = [1, 1]} : vector<2x1024xf32> to vector<2x512xf32>
    %573 = vector.broadcast %109 : vector<1x512xf32> to vector<2x512xf32>
    %574 = arith.addf %572, %573 : vector<2x512xf32>
    %575 = vector.extract_strided_slice %574 {offsets = [0, 0], sizes = [2, 128], strides = [1, 1]} : vector<2x512xf32> to vector<2x128xf32>
    %cst_158 = arith.constant 0.000000e+00 : f32
    %576 = vector.broadcast %cst_158 : f32 to vector<2x128xf32>
    %577 = arith.subf %576, %575 : vector<2x128xf32>
    %578 = math.exp %577 : vector<2x128xf32>
    %cst_159 = arith.constant 1.000000e+00 : f32
    %579 = vector.broadcast %cst_159 : f32 to vector<2x128xf32>
    %580 = arith.addf %579, %578 : vector<2x128xf32>
    %cst_160 = arith.constant 1.000000e+00 : f32
    %581 = vector.broadcast %cst_160 : f32 to vector<2x128xf32>
    %582 = arith.divf %581, %580 : vector<2x128xf32>
    %583 = vector.extract_strided_slice %574 {offsets = [0, 128], sizes = [2, 128], strides = [1, 1]} : vector<2x512xf32> to vector<2x128xf32>
    %cst_161 = arith.constant 0.000000e+00 : f32
    %584 = vector.broadcast %cst_161 : f32 to vector<2x128xf32>
    %585 = arith.subf %584, %583 : vector<2x128xf32>
    %586 = math.exp %585 : vector<2x128xf32>
    %cst_162 = arith.constant 1.000000e+00 : f32
    %587 = vector.broadcast %cst_162 : f32 to vector<2x128xf32>
    %588 = arith.addf %587, %586 : vector<2x128xf32>
    %cst_163 = arith.constant 1.000000e+00 : f32
    %589 = vector.broadcast %cst_163 : f32 to vector<2x128xf32>
    %590 = arith.divf %589, %588 : vector<2x128xf32>
    %591 = vector.extract_strided_slice %574 {offsets = [0, 256], sizes = [2, 128], strides = [1, 1]} : vector<2x512xf32> to vector<2x128xf32>
    %592 = math.tanh %591 : vector<2x128xf32>
    %593 = vector.extract_strided_slice %574 {offsets = [0, 384], sizes = [2, 128], strides = [1, 1]} : vector<2x512xf32> to vector<2x128xf32>
    %cst_164 = arith.constant 0.000000e+00 : f32
    %594 = vector.broadcast %cst_164 : f32 to vector<2x128xf32>
    %595 = arith.subf %594, %593 : vector<2x128xf32>
    %596 = math.exp %595 : vector<2x128xf32>
    %cst_165 = arith.constant 1.000000e+00 : f32
    %597 = vector.broadcast %cst_165 : f32 to vector<2x128xf32>
    %598 = arith.addf %597, %596 : vector<2x128xf32>
    %cst_166 = arith.constant 1.000000e+00 : f32
    %599 = vector.broadcast %cst_166 : f32 to vector<2x128xf32>
    %600 = arith.divf %599, %598 : vector<2x128xf32>
    %601 = arith.mulf %590, %532 : vector<2x128xf32>
    %602 = arith.mulf %582, %592 : vector<2x128xf32>
    %603 = arith.addf %601, %602 : vector<2x128xf32>
    %604 = math.tanh %603 : vector<2x128xf32>
    %605 = arith.mulf %600, %604 : vector<2x128xf32>
    %606 = vector.extract_strided_slice %107 {offsets = [0, 7, 0], sizes = [2, 1, 512], strides = [1, 1, 1]} : vector<2x16x512xf32> to vector<2x1x512xf32>
    %607 = vector.shape_cast %606 : vector<2x1x512xf32> to vector<2x512xf32>
    %608 = vector.extract_strided_slice %571 {offsets = [0, 0], sizes = [2, 512], strides = [1, 1]} : vector<2x1024xf32> to vector<2x512xf32>
    %609 = arith.addf %607, %608 : vector<2x512xf32>
    %610 = vector.extract_strided_slice %609 {offsets = [0, 0], sizes = [2, 128], strides = [1, 1]} : vector<2x512xf32> to vector<2x128xf32>
    %cst_167 = arith.constant 0.000000e+00 : f32
    %611 = vector.broadcast %cst_167 : f32 to vector<2x128xf32>
    %612 = arith.subf %611, %610 : vector<2x128xf32>
    %613 = math.exp %612 : vector<2x128xf32>
    %cst_168 = arith.constant 1.000000e+00 : f32
    %614 = vector.broadcast %cst_168 : f32 to vector<2x128xf32>
    %615 = arith.addf %614, %613 : vector<2x128xf32>
    %cst_169 = arith.constant 1.000000e+00 : f32
    %616 = vector.broadcast %cst_169 : f32 to vector<2x128xf32>
    %617 = arith.divf %616, %615 : vector<2x128xf32>
    %618 = vector.extract_strided_slice %609 {offsets = [0, 128], sizes = [2, 128], strides = [1, 1]} : vector<2x512xf32> to vector<2x128xf32>
    %cst_170 = arith.constant 0.000000e+00 : f32
    %619 = vector.broadcast %cst_170 : f32 to vector<2x128xf32>
    %620 = arith.subf %619, %618 : vector<2x128xf32>
    %621 = math.exp %620 : vector<2x128xf32>
    %cst_171 = arith.constant 1.000000e+00 : f32
    %622 = vector.broadcast %cst_171 : f32 to vector<2x128xf32>
    %623 = arith.addf %622, %621 : vector<2x128xf32>
    %cst_172 = arith.constant 1.000000e+00 : f32
    %624 = vector.broadcast %cst_172 : f32 to vector<2x128xf32>
    %625 = arith.divf %624, %623 : vector<2x128xf32>
    %626 = vector.extract_strided_slice %609 {offsets = [0, 256], sizes = [2, 128], strides = [1, 1]} : vector<2x512xf32> to vector<2x128xf32>
    %627 = math.tanh %626 : vector<2x128xf32>
    %628 = vector.extract_strided_slice %609 {offsets = [0, 384], sizes = [2, 128], strides = [1, 1]} : vector<2x512xf32> to vector<2x128xf32>
    %cst_173 = arith.constant 0.000000e+00 : f32
    %629 = vector.broadcast %cst_173 : f32 to vector<2x128xf32>
    %630 = arith.subf %629, %628 : vector<2x128xf32>
    %631 = math.exp %630 : vector<2x128xf32>
    %cst_174 = arith.constant 1.000000e+00 : f32
    %632 = vector.broadcast %cst_174 : f32 to vector<2x128xf32>
    %633 = arith.addf %632, %631 : vector<2x128xf32>
    %cst_175 = arith.constant 1.000000e+00 : f32
    %634 = vector.broadcast %cst_175 : f32 to vector<2x128xf32>
    %635 = arith.divf %634, %633 : vector<2x128xf32>
    %636 = arith.mulf %625, %567 : vector<2x128xf32>
    %637 = arith.mulf %617, %627 : vector<2x128xf32>
    %638 = arith.addf %636, %637 : vector<2x128xf32>
    %639 = math.tanh %638 : vector<2x128xf32>
    %640 = arith.mulf %635, %639 : vector<2x128xf32>
    %641 = tpu.concatenate %640, %605 in 1 : vector<2x128xf32>, vector<2x128xf32> -> vector<2x256xf32>
    %cst_176 = arith.constant dense<0.000000e+00> : vector<2x1024xf32>
    %642 = tpu.matmul %641, %108, %cst_176 {dimension_numbers = #tpu.dot_dimension_numbers<[1], [0], [0], [1], [0, 0, 1, 1], [], []>} : vector<2x256xf32>, vector<256x1024xf32>, vector<2x1024xf32> -> vector<2x1024xf32>
    %643 = vector.extract_strided_slice %642 {offsets = [0, 512], sizes = [2, 512], strides = [1, 1]} : vector<2x1024xf32> to vector<2x512xf32>
    %644 = vector.broadcast %109 : vector<1x512xf32> to vector<2x512xf32>
    %645 = arith.addf %643, %644 : vector<2x512xf32>
    %646 = vector.extract_strided_slice %645 {offsets = [0, 0], sizes = [2, 128], strides = [1, 1]} : vector<2x512xf32> to vector<2x128xf32>
    %cst_177 = arith.constant 0.000000e+00 : f32
    %647 = vector.broadcast %cst_177 : f32 to vector<2x128xf32>
    %648 = arith.subf %647, %646 : vector<2x128xf32>
    %649 = math.exp %648 : vector<2x128xf32>
    %cst_178 = arith.constant 1.000000e+00 : f32
    %650 = vector.broadcast %cst_178 : f32 to vector<2x128xf32>
    %651 = arith.addf %650, %649 : vector<2x128xf32>
    %cst_179 = arith.constant 1.000000e+00 : f32
    %652 = vector.broadcast %cst_179 : f32 to vector<2x128xf32>
    %653 = arith.divf %652, %651 : vector<2x128xf32>
    %654 = vector.extract_strided_slice %645 {offsets = [0, 128], sizes = [2, 128], strides = [1, 1]} : vector<2x512xf32> to vector<2x128xf32>
    %cst_180 = arith.constant 0.000000e+00 : f32
    %655 = vector.broadcast %cst_180 : f32 to vector<2x128xf32>
    %656 = arith.subf %655, %654 : vector<2x128xf32>
    %657 = math.exp %656 : vector<2x128xf32>
    %cst_181 = arith.constant 1.000000e+00 : f32
    %658 = vector.broadcast %cst_181 : f32 to vector<2x128xf32>
    %659 = arith.addf %658, %657 : vector<2x128xf32>
    %cst_182 = arith.constant 1.000000e+00 : f32
    %660 = vector.broadcast %cst_182 : f32 to vector<2x128xf32>
    %661 = arith.divf %660, %659 : vector<2x128xf32>
    %662 = vector.extract_strided_slice %645 {offsets = [0, 256], sizes = [2, 128], strides = [1, 1]} : vector<2x512xf32> to vector<2x128xf32>
    %663 = math.tanh %662 : vector<2x128xf32>
    %664 = vector.extract_strided_slice %645 {offsets = [0, 384], sizes = [2, 128], strides = [1, 1]} : vector<2x512xf32> to vector<2x128xf32>
    %cst_183 = arith.constant 0.000000e+00 : f32
    %665 = vector.broadcast %cst_183 : f32 to vector<2x128xf32>
    %666 = arith.subf %665, %664 : vector<2x128xf32>
    %667 = math.exp %666 : vector<2x128xf32>
    %cst_184 = arith.constant 1.000000e+00 : f32
    %668 = vector.broadcast %cst_184 : f32 to vector<2x128xf32>
    %669 = arith.addf %668, %667 : vector<2x128xf32>
    %cst_185 = arith.constant 1.000000e+00 : f32
    %670 = vector.broadcast %cst_185 : f32 to vector<2x128xf32>
    %671 = arith.divf %670, %669 : vector<2x128xf32>
    %672 = arith.mulf %661, %603 : vector<2x128xf32>
    %673 = arith.mulf %653, %663 : vector<2x128xf32>
    %674 = arith.addf %672, %673 : vector<2x128xf32>
    %675 = math.tanh %674 : vector<2x128xf32>
    %676 = arith.mulf %671, %675 : vector<2x128xf32>
    %c0_186 = arith.constant 0 : index
    %c0_187 = arith.constant 0 : index
    %677 = vector.load %arg14[%c0_186, %c0_187] : memref<2x128xf32, #tpu.memory_space<vmem>>, vector<2x128xf32>
    tpu.vector_store %arg14[%c0_186, %c0_187], %676 {strides = array<i32>} : memref<2x128xf32, #tpu.memory_space<vmem>>, vector<2x128xf32>,
    return
  }
  func.func @transform_0(%arg0: i32) -> (i32, i32, i32) {
    %c0_i32 = arith.constant 0 : i32
    %c0_i32_0 = arith.constant 0 : i32
    %c0_i32_1 = arith.constant 0 : i32
    return %arg0, %c0_i32, %c0_i32_0 : i32, i32, i32
  }
  func.func @transform_1(%arg0: i32) -> (i32, i32) {
    %c0_i32 = arith.constant 0 : i32
    %c0_i32_0 = arith.constant 0 : i32
    %c0_i32_1 = arith.constant 0 : i32
    return %c0_i32, %c0_i32_0 : i32, i32
  }
  func.func @transform_2(%arg0: i32) -> (i32, i32) {
    %c0_i32 = arith.constant 0 : i32
    %c0_i32_0 = arith.constant 0 : i32
    %c0_i32_1 = arith.constant 0 : i32
    return %c0_i32, %c0_i32_0 : i32, i32
  }
  func.func @transform_3(%arg0: i32) -> (i32, i32) {
    %c0_i32 = arith.constant 0 : i32
    %c0_i32_0 = arith.constant 0 : i32
    %c0_i32_1 = arith.constant 0 : i32
    return %c0_i32, %c0_i32_0 : i32, i32
  }
  func.func @transform_4(%arg0: i32) -> (i32, i32) {
    %c0_i32 = arith.constant 0 : i32
    %c0_i32_0 = arith.constant 0 : i32
    %c0_i32_1 = arith.constant 0 : i32
    return %c0_i32, %c0_i32_0 : i32, i32
  }
  func.func @transform_5(%arg0: i32) -> (i32, i32) {
    %c0_i32 = arith.constant 0 : i32
    %c0_i32_0 = arith.constant 0 : i32
    %c0_i32_1 = arith.constant 0 : i32
    return %c0_i32, %c0_i32_0 : i32, i32
  }
  func.func @transform_6(%arg0: i32) -> (i32, i32) {
    %c0_i32 = arith.constant 0 : i32
    %c0_i32_0 = arith.constant 0 : i32
    %c0_i32_1 = arith.constant 0 : i32
    return %c0_i32, %c0_i32_0 : i32, i32
  }
  func.func @transform_7(%arg0: i32) -> (i32, i32) {
    %c0_i32 = arith.constant 0 : i32
    %c0_i32_0 = arith.constant 0 : i32
    %c0_i32_1 = arith.constant 0 : i32
    return %c0_i32, %c0_i32_0 : i32, i32
  }
  func.func @transform_8(%arg0: i32) -> (i32, i32) {
    %c0_i32 = arith.constant 0 : i32
    %c0_i32_0 = arith.constant 0 : i32
    %c0_i32_1 = arith.constant 0 : i32
    return %c0_i32, %c0_i32_0 : i32, i32
  }
  func.func @transform_9(%arg0: i32) -> (i32, i32) {
    %c0_i32 = arith.constant 0 : i32
    %c0_i32_0 = arith.constant 0 : i32
    %c0_i32_1 = arith.constant 0 : i32
    return %c0_i32, %c0_i32_0 : i32, i32
  }
  func.func @transform_10(%arg0: i32) -> (i32, i32) {
    %c0_i32 = arith.constant 0 : i32
    %c0_i32_0 = arith.constant 0 : i32
    %c0_i32_1 = arith.constant 0 : i32
    return %c0_i32, %c0_i32_0 : i32, i32
  }
  func.func @transform_11(%arg0: i32) -> (i32, i32) {
    %c0_i32 = arith.constant 0 : i32
    %c0_i32_0 = arith.constant 0 : i32
    %c0_i32_1 = arith.constant 0 : i32
    return %c0_i32, %c0_i32_0 : i32, i32
  }
  func.func @transform_12(%arg0: i32) -> (i32, i32) {
    %c0_i32 = arith.constant 0 : i32
    %c0_i32_0 = arith.constant 0 : i32
    %c0_i32_1 = arith.constant 0 : i32
    return %c0_i32, %c0_i32_0 : i32, i32
  }
  func.func @transform_13(%arg0: i32) -> (i32, i32) {
    %c0_i32 = arith.constant 0 : i32
    %c0_i32_0 = arith.constant 0 : i32
    return %arg0, %c0_i32 : i32, i32
  }
}

</mosaic_0001>

<llo_original>
// kernel: deepconvlstm_forward.1
$region0: #{deepconvlstm_forward.1}
  #allocation0 [shape = 'u32[]', space=smem, size = 0x4, offset = 0x4, fixed_abs, tag = 'smem constant byte address 0x4 - core index']
  #allocation1 [shape = 'u32[72,128]{1,0:T(1,128)}', space=vmem, size = 0x9000, scoped, tag = 'internal scratch']
  %s0 = inlined_call_operand.vmem [shape: f32[8,68,1], index: 0, kind: input, shape index: {}]
  %s1 = inlined_call_operand.vmem [shape: f32[5,64], index: 1, kind: input, shape index: {}]
  %s2 = inlined_call_operand.vmem [shape: f32[1,64], index: 2, kind: input, shape index: {}]
  %s3 = inlined_call_operand.vmem [shape: bf16[320,64], index: 3, kind: input, shape index: {}]
  %s4 = inlined_call_operand.vmem [shape: f32[1,64], index: 4, kind: input, shape index: {}]
  %s5 = inlined_call_operand.vmem [shape: bf16[320,64], index: 5, kind: input, shape index: {}]
  %s6 = inlined_call_operand.vmem [shape: f32[1,64], index: 6, kind: input, shape index: {}]
  %s7 = inlined_call_operand.vmem [shape: bf16[320,64], index: 7, kind: input, shape index: {}]
  %s8 = inlined_call_operand.vmem [shape: f32[1,64], index: 8, kind: input, shape index: {}]
  %s9 = inlined_call_operand.vmem [shape: bf16[256,512], index: 9, kind: input, shape index: {}]
  %s10 = inlined_call_operand.vmem [shape: f32[1,512], index: 10, kind: input, shape index: {}]
  %s11 = inlined_call_operand.vmem [shape: f32[256,1024], index: 11, kind: input, shape index: {}]
  %s12 = inlined_call_operand.vmem [shape: f32[1,512], index: 12, kind: input, shape index: {}]
  %s13 = inlined_call_operand.hbm [shape: f32[2,128], index: 13, kind: output, shape index: {}]
  %s14 = sld [smem:[#allocation0]]
  $region62: #{deepconvlstm_forward.1} parent=0
    _
  %s16 = ssub.s32 1, %s14
  %s17 = scalar_select 0, %s16, %s14
  $region1: #{deepconvlstm_forward.1} parent=0
    #allocation2 [shape = 'u8[1024]{0}', space=vmem, size = 0x400, scoped, tag = 'output window, operand 0, single buffered']
    #allocation3 [shape = 's32[1]{0}', space=sflag, size = 0x4, scoped, tag = 'scoped memory for deepconvlstm_forward.1']
    %18 = vsyncpa [#allocation3], 0
    // Predicated region
    $region2: #{deepconvlstm_forward.1} parent=1 // pred_check
      _
    $region3: #{deepconvlstm_forward.1} parent=1 // pred_check_branch
      %20 = sbr.rel (0) target = $region5
    $region4: #{deepconvlstm_forward.1} parent=1 // pred_region
      _
    $region5: #{deepconvlstm_forward.1} parent=1 // pred_fallthru
      _
    // Predicated region
    $region6: #{deepconvlstm_forward.1} parent=1 // pred_check
      _
    $region7: #{deepconvlstm_forward.1} parent=1 // pred_check_branch
      %22 = sbr.rel (0) target = $region9
    $region8: #{deepconvlstm_forward.1} parent=1 // pred_region
      _
    $region9: #{deepconvlstm_forward.1} parent=1 // pred_fallthru
      _
    // Predicated region
    $region10: #{deepconvlstm_forward.1} parent=1 // pred_check
      _
    $region11: #{deepconvlstm_forward.1} parent=1 // pred_check_branch
      %24 = sbr.rel (0) target = $region13
    $region12: #{deepconvlstm_forward.1} parent=1 // pred_region
      _
    $region13: #{deepconvlstm_forward.1} parent=1 // pred_fallthru
      _
    // Predicated region
    $region14: #{deepconvlstm_forward.1} parent=1 // pred_check
      _
    $region15: #{deepconvlstm_forward.1} parent=1 // pred_check_branch
      %26 = sbr.rel (0) target = $region17
    $region16: #{deepconvlstm_forward.1} parent=1 // pred_region
      _
    $region17: #{deepconvlstm_forward.1} parent=1 // pred_fallthru
      _
    // Predicated region
    $region18: #{deepconvlstm_forward.1} parent=1 // pred_check
      _
    $region19: #{deepconvlstm_forward.1} parent=1 // pred_check_branch
      %28 = sbr.rel (0) target = $region21
    $region20: #{deepconvlstm_forward.1} parent=1 // pred_region
      _
    $region21: #{deepconvlstm_forward.1} parent=1 // pred_fallthru
      _
    // Predicated region
    $region22: #{deepconvlstm_forward.1} parent=1 // pred_check
      _
    $region23: #{deepconvlstm_forward.1} parent=1 // pred_check_branch
      %30 = sbr.rel (0) target = $region25
    $region24: #{deepconvlstm_forward.1} parent=1 // pred_region
      _
    $region25: #{deepconvlstm_forward.1} parent=1 // pred_fallthru
      _
    // Predicated region
    $region26: #{deepconvlstm_forward.1} parent=1 // pred_check
      _
    $region27: #{deepconvlstm_forward.1} parent=1 // pred_check_branch
      %32 = sbr.rel (0) target = $region29
    $region28: #{deepconvlstm_forward.1} parent=1 // pred_region
      _
    $region29: #{deepconvlstm_forward.1} parent=1 // pred_fallthru
      _
    // Predicated region
    $region30: #{deepconvlstm_forward.1} parent=1 // pred_check
      _
    $region31: #{deepconvlstm_forward.1} parent=1 // pred_check_branch
      %34 = sbr.rel (0) target = $region33
    $region32: #{deepconvlstm_forward.1} parent=1 // pred_region
      _
    $region33: #{deepconvlstm_forward.1} parent=1 // pred_fallthru
      _
    // Predicated region
    $region34: #{deepconvlstm_forward.1} parent=1 // pred_check
      _
    $region35: #{deepconvlstm_forward.1} parent=1 // pred_check_branch
      %36 = sbr.rel (0) target = $region37
    $region36: #{deepconvlstm_forward.1} parent=1 // pred_region
      _
    $region37: #{deepconvlstm_forward.1} parent=1 // pred_fallthru
      _
    // Predicated region
    $region38: #{deepconvlstm_forward.1} parent=1 // pred_check
      _
    $region39: #{deepconvlstm_forward.1} parent=1 // pred_check_branch
      %38 = sbr.rel (0) target = $region41
    $region40: #{deepconvlstm_forward.1} parent=1 // pred_region
      _
    $region41: #{deepconvlstm_forward.1} parent=1 // pred_fallthru
      _
    // Predicated region
    $region42: #{deepconvlstm_forward.1} parent=1 // pred_check
      _
    $region43: #{deepconvlstm_forward.1} parent=1 // pred_check_branch
      %40 = sbr.rel (0) target = $region45
    $region44: #{deepconvlstm_forward.1} parent=1 // pred_region
      _
    $region45: #{deepconvlstm_forward.1} parent=1 // pred_fallthru
      _
    // Predicated region
    $region46: #{deepconvlstm_forward.1} parent=1 // pred_check
      _
    $region47: #{deepconvlstm_forward.1} parent=1 // pred_check_branch
      %42 = sbr.rel (0) target = $region49
    $region48: #{deepconvlstm_forward.1} parent=1 // pred_region
      _
    $region49: #{deepconvlstm_forward.1} parent=1 // pred_fallthru
      _
    // Predicated region
    $region50: #{deepconvlstm_forward.1} parent=1 // pred_check
      _
    $region51: #{deepconvlstm_forward.1} parent=1 // pred_check_branch
      %44 = sbr.rel (0) target = $region53
    $region52: #{deepconvlstm_forward.1} parent=1 // pred_region
      _
    $region53: #{deepconvlstm_forward.1} parent=1 // pred_fallthru
      _
    %v46 = vld [vmem:[%s0] sm:$0xff]
    %v47 = vld [vmem:[%s0 + $0x8] sm:$0xff]
    %v48 = vld [vmem:[%s0 + $0x10] sm:$0xff]
    %v49 = vld [vmem:[%s0 + $0x18] sm:$0xff]
    %v50 = vld [vmem:[%s0 + $0x20] sm:$0xff]
    %v51 = vld [vmem:[%s0 + $0x28] sm:$0xff]
    %v52 = vld [vmem:[%s0 + $0x30] sm:$0xff]
    %v53 = vld [vmem:[%s0 + $0x38] sm:$0xff]
    %v54 = vld [vmem:[%s0 + $0x48] sm:$0xff]
    %v55 = vld [vmem:[%s0 + $0x50] sm:$0xff]
    %v56 = vld [vmem:[%s0 + $0x58] sm:$0xff]
    %v57 = vld [vmem:[%s0 + $0x60] sm:$0xff]
    %v58 = vld [vmem:[%s0 + $0x68] sm:$0xff]
    %v59 = vld [vmem:[%s0 + $0x70] sm:$0xff]
    %v60 = vld [vmem:[%s0 + $0x78] sm:$0xff]
    %v61 = vld [vmem:[%s0 + $0x80] sm:$0xff]
    %v62 = vld [vmem:[%s0 + $0x90] sm:$0xff]
    %v63 = vld [vmem:[%s0 + $0x98] sm:$0xff]
    %v64 = vld [vmem:[%s0 + $0xa0] sm:$0xff]
    %v65 = vld [vmem:[%s0 + $0xa8] sm:$0xff]
    %v66 = vld [vmem:[%s0 + $0xb0] sm:$0xff]
    %v67 = vld [vmem:[%s0 + $0xb8] sm:$0xff]
    %v68 = vld [vmem:[%s0 + $0xc0] sm:$0xff]
    %v69 = vld [vmem:[%s0 + $0xc8] sm:$0xff]
    %v70 = vld [vmem:[%s0 + $0xd8] sm:$0xff]
    %v71 = vld [vmem:[%s0 + $0xe0] sm:$0xff]
    %v72 = vld [vmem:[%s0 + $0xe8] sm:$0xff]
    %v73 = vld [vmem:[%s0 + $0xf0] sm:$0xff]
    %v74 = vld [vmem:[%s0 + $0xf8] sm:$0xff]
    %v75 = vld [vmem:[%s0 + $0x100] sm:$0xff]
    %v76 = vld [vmem:[%s0 + $0x108] sm:$0xff]
    %v77 = vld [vmem:[%s0 + $0x110] sm:$0xff]
    %v78 = vld [vmem:[%s0 + $0x120] sm:$0xff]
    %v79 = vld [vmem:[%s0 + $0x128] sm:$0xff]
    %v80 = vld [vmem:[%s0 + $0x130] sm:$0xff]
    %v81 = vld [vmem:[%s0 + $0x138] sm:$0xff]
    %v82 = vld [vmem:[%s0 + $0x140] sm:$0xff]
    %v83 = vld [vmem:[%s0 + $0x148] sm:$0xff]
    %v84 = vld [vmem:[%s0 + $0x150] sm:$0xff]
    %v85 = vld [vmem:[%s0 + $0x158] sm:$0xff]
    %v86 = vld [vmem:[%s0 + $0x168] sm:$0xff]
    %v87 = vld [vmem:[%s0 + $0x170] sm:$0xff]
    %v88 = vld [vmem:[%s0 + $0x178] sm:$0xff]
    %v89 = vld [vmem:[%s0 + $0x180] sm:$0xff]
    %v90 = vld [vmem:[%s0 + $0x188] sm:$0xff]
    %v91 = vld [vmem:[%s0 + $0x190] sm:$0xff]
    %v92 = vld [vmem:[%s0 + $0x198] sm:$0xff]
    %v93 = vld [vmem:[%s0 + $0x1a0] sm:$0xff]
    %v94 = vld [vmem:[%s0 + $0x1b0] sm:$0xff]
    %v95 = vld [vmem:[%s0 + $0x1b8] sm:$0xff]
    %v96 = vld [vmem:[%s0 + $0x1c0] sm:$0xff]
    %v97 = vld [vmem:[%s0 + $0x1c8] sm:$0xff]
    %v98 = vld [vmem:[%s0 + $0x1d0] sm:$0xff]
    %v99 = vld [vmem:[%s0 + $0x1d8] sm:$0xff]
    %v100 = vld [vmem:[%s0 + $0x1e0] sm:$0xff]
    %v101 = vld [vmem:[%s0 + $0x1e8] sm:$0xff]
    %v102 = vld [vmem:[%s0 + $0x1f8] sm:$0xff]
    %v103 = vld [vmem:[%s0 + $0x200] sm:$0xff]
    %v104 = vld [vmem:[%s0 + $0x208] sm:$0xff]
    %v105 = vld [vmem:[%s0 + $0x210] sm:$0xff]
    %v106 = vld [vmem:[%s0 + $0x218] sm:$0xff]
    %v107 = vld [vmem:[%s0 + $0x220] sm:$0xff]
    %v108 = vld [vmem:[%s0 + $0x228] sm:$0xff]
    %v109 = vld [vmem:[%s0 + $0x230] sm:$0xff]
    %v110 = vld [vmem:[%s1] sm:$0x1f]
    %v111 = vld [vmem:[%s2] sm:$0x1]
    %113 = vset.pattern.permute.xlu0 0
    %114 = vperm.xlu0 %113, %v46
    %v115 = vpop.permute.xlu0 %114
    %118 = vset.pattern.permute.xlu0 0
    %119 = vperm.xlu0 %118, %v47
    %v120 = vpop.permute.xlu0 %119
    %123 = vset.pattern.permute.xlu0 0
    %124 = vperm.xlu0 %123, %v48
    %v125 = vpop.permute.xlu0 %124
    %128 = vset.pattern.permute.xlu0 0
    %129 = vperm.xlu0 %128, %v49
    %v130 = vpop.permute.xlu0 %129
    %133 = vset.pattern.permute.xlu0 0
    %134 = vperm.xlu0 %133, %v50
    %v135 = vpop.permute.xlu0 %134
    %138 = vset.pattern.permute.xlu0 0
    %139 = vperm.xlu0 %138, %v51
    %v140 = vpop.permute.xlu0 %139
    %143 = vset.pattern.permute.xlu0 0
    %144 = vperm.xlu0 %143, %v52
    %v145 = vpop.permute.xlu0 %144
    %148 = vset.pattern.permute.xlu0 0
    %149 = vperm.xlu0 %148, %v54
    %v150 = vpop.permute.xlu0 %149
    %153 = vset.pattern.permute.xlu0 0
    %154 = vperm.xlu0 %153, %v55
    %v155 = vpop.permute.xlu0 %154
    %158 = vset.pattern.permute.xlu0 0
    %159 = vperm.xlu0 %158, %v56
    %v160 = vpop.permute.xlu0 %159
    %163 = vset.pattern.permute.xlu0 0
    %164 = vperm.xlu0 %163, %v57
    %v165 = vpop.permute.xlu0 %164
    %168 = vset.pattern.permute.xlu0 0
    %169 = vperm.xlu0 %168, %v58
    %v170 = vpop.permute.xlu0 %169
    %173 = vset.pattern.permute.xlu0 0
    %174 = vperm.xlu0 %173, %v59
    %v175 = vpop.permute.xlu0 %174
    %178 = vset.pattern.permute.xlu0 0
    %179 = vperm.xlu0 %178, %v60
    %v180 = vpop.permute.xlu0 %179
    %183 = vset.pattern.permute.xlu0 0
    %184 = vperm.xlu0 %183, %v62
    %v185 = vpop.permute.xlu0 %184
    %188 = vset.pattern.permute.xlu0 0
    %189 = vperm.xlu0 %188, %v63
    %v190 = vpop.permute.xlu0 %189
    %193 = vset.pattern.permute.xlu0 0
    %194 = vperm.xlu0 %193, %v64
    %v195 = vpop.permute.xlu0 %194
    %198 = vset.pattern.permute.xlu0 0
    %199 = vperm.xlu0 %198, %v65
    %v200 = vpop.permute.xlu0 %199
    %203 = vset.pattern.permute.xlu0 0
    %204 = vperm.xlu0 %203, %v66
    %v205 = vpop.permute.xlu0 %204
    %208 = vset.pattern.permute.xlu0 0
    %209 = vperm.xlu0 %208, %v67
    %v210 = vpop.permute.xlu0 %209
    %213 = vset.pattern.permute.xlu0 0
    %214 = vperm.xlu0 %213, %v68
    %v215 = vpop.permute.xlu0 %214
    %218 = vset.pattern.permute.xlu0 0
    %219 = vperm.xlu0 %218, %v70
    %v220 = vpop.permute.xlu0 %219
    %223 = vset.pattern.permute.xlu0 0
    %224 = vperm.xlu0 %223, %v71
    %v225 = vpop.permute.xlu0 %224
    %228 = vset.pattern.permute.xlu0 0
    %229 = vperm.xlu0 %228, %v72
    %v230 = vpop.permute.xlu0 %229
    %233 = vset.pattern.permute.xlu0 0
    %234 = vperm.xlu0 %233, %v73
    %v235 = vpop.permute.xlu0 %234
    %238 = vset.pattern.permute.xlu0 0
    %239 = vperm.xlu0 %238, %v74
    %v240 = vpop.permute.xlu0 %239
    %243 = vset.pattern.permute.xlu0 0
    %244 = vperm.xlu0 %243, %v75
    %v245 = vpop.permute.xlu0 %244
    %248 = vset.pattern.permute.xlu0 0
    %249 = vperm.xlu0 %248, %v76
    %v250 = vpop.permute.xlu0 %249
    %253 = vset.pattern.permute.xlu0 0
    %254 = vperm.xlu0 %253, %v78
    %v255 = vpop.permute.xlu0 %254
    %258 = vset.pattern.permute.xlu0 0
    %259 = vperm.xlu0 %258, %v79
    %v260 = vpop.permute.xlu0 %259
    %263 = vset.pattern.permute.xlu0 0
    %264 = vperm.xlu0 %263, %v80
    %v265 = vpop.permute.xlu0 %264
    %268 = vset.pattern.permute.xlu0 0
    %269 = vperm.xlu0 %268, %v81
    %v270 = vpop.permute.xlu0 %269
    %273 = vset.pattern.permute.xlu0 0
    %274 = vperm.xlu0 %273, %v82
    %v275 = vpop.permute.xlu0 %274
    %278 = vset.pattern.permute.xlu0 0
    %279 = vperm.xlu0 %278, %v83
    %v280 = vpop.permute.xlu0 %279
    %283 = vset.pattern.permute.xlu0 0
    %284 = vperm.xlu0 %283, %v84
    %v285 = vpop.permute.xlu0 %284
    %288 = vset.pattern.permute.xlu0 0
    %289 = vperm.xlu0 %288, %v86
    %v290 = vpop.permute.xlu0 %289
    %293 = vset.pattern.permute.xlu0 0
    %294 = vperm.xlu0 %293, %v87
    %v295 = vpop.permute.xlu0 %294
    %298 = vset.pattern.permute.xlu0 0
    %299 = vperm.xlu0 %298, %v88
    %v300 = vpop.permute.xlu0 %299
    %303 = vset.pattern.permute.xlu0 0
    %304 = vperm.xlu0 %303, %v89
    %v305 = vpop.permute.xlu0 %304
    %308 = vset.pattern.permute.xlu0 0
    %309 = vperm.xlu0 %308, %v90
    %v310 = vpop.permute.xlu0 %309
    %313 = vset.pattern.permute.xlu0 0
    %314 = vperm.xlu0 %313, %v91
    %v315 = vpop.permute.xlu0 %314
    %318 = vset.pattern.permute.xlu0 0
    %319 = vperm.xlu0 %318, %v92
    %v320 = vpop.permute.xlu0 %319
    %323 = vset.pattern.permute.xlu0 0
    %324 = vperm.xlu0 %323, %v94
    %v325 = vpop.permute.xlu0 %324
    %328 = vset.pattern.permute.xlu0 0
    %329 = vperm.xlu0 %328, %v95
    %v330 = vpop.permute.xlu0 %329
    %333 = vset.pattern.permute.xlu0 0
    %334 = vperm.xlu0 %333, %v96
    %v335 = vpop.permute.xlu0 %334
    %338 = vset.pattern.permute.xlu0 0
    %339 = vperm.xlu0 %338, %v97
    %v340 = vpop.permute.xlu0 %339
    %343 = vset.pattern.permute.xlu0 0
    %344 = vperm.xlu0 %343, %v98
    %v345 = vpop.permute.xlu0 %344
    %348 = vset.pattern.permute.xlu0 0
    %349 = vperm.xlu0 %348, %v99
    %v350 = vpop.permute.xlu0 %349
    %353 = vset.pattern.permute.xlu0 0
    %354 = vperm.xlu0 %353, %v100
    %v355 = vpop.permute.xlu0 %354
    %358 = vset.pattern.permute.xlu0 0
    %359 = vperm.xlu0 %358, %v102
    %v360 = vpop.permute.xlu0 %359
    %363 = vset.pattern.permute.xlu0 0
    %364 = vperm.xlu0 %363, %v103
    %v365 = vpop.permute.xlu0 %364
    %368 = vset.pattern.permute.xlu0 0
    %369 = vperm.xlu0 %368, %v104
    %v370 = vpop.permute.xlu0 %369
    %373 = vset.pattern.permute.xlu0 0
    %374 = vperm.xlu0 %373, %v105
    %v375 = vpop.permute.xlu0 %374
    %378 = vset.pattern.permute.xlu0 0
    %379 = vperm.xlu0 %378, %v106
    %v380 = vpop.permute.xlu0 %379
    %383 = vset.pattern.permute.xlu0 0
    %384 = vperm.xlu0 %383, %v107
    %v385 = vpop.permute.xlu0 %384
    %388 = vset.pattern.permute.xlu0 0
    %389 = vperm.xlu0 %388, %v108
    %v390 = vpop.permute.xlu0 %389
    %v392 = vperm.slane %v110, 0
    %v393 = vmul.f32 %v115, %v392
    %v394 = vmul.f32 %v120, %v392
    %v395 = vmul.f32 %v125, %v392
    %v396 = vmul.f32 %v130, %v392
    %v397 = vmul.f32 %v135, %v392
    %v398 = vmul.f32 %v140, %v392
    %v399 = vmul.f32 %v145, %v392
    %v400 = vmul.f32 %v150, %v392
    %v401 = vmul.f32 %v155, %v392
    %v402 = vmul.f32 %v160, %v392
    %v403 = vmul.f32 %v165, %v392
    %v404 = vmul.f32 %v170, %v392
    %v405 = vmul.f32 %v175, %v392
    %v406 = vmul.f32 %v180, %v392
    %v407 = vmul.f32 %v185, %v392
    %v408 = vmul.f32 %v190, %v392
    %v409 = vmul.f32 %v195, %v392
    %v410 = vmul.f32 %v200, %v392
    %v411 = vmul.f32 %v205, %v392
    %v412 = vmul.f32 %v210, %v392
    %v413 = vmul.f32 %v215, %v392
    %v414 = vmul.f32 %v220, %v392
    %v415 = vmul.f32 %v225, %v392
    %v416 = vmul.f32 %v230, %v392
    %v417 = vmul.f32 %v235, %v392
    %v418 = vmul.f32 %v240, %v392
    %v419 = vmul.f32 %v245, %v392
    %v420 = vmul.f32 %v250, %v392
    %v421 = vmul.f32 %v255, %v392
    %v422 = vmul.f32 %v260, %v392
    %v423 = vmul.f32 %v265, %v392
    %v424 = vmul.f32 %v270, %v392
    %v425 = vmul.f32 %v275, %v392
    %v426 = vmul.f32 %v280, %v392
    %v427 = vmul.f32 %v285, %v392
    %v428 = vmul.f32 %v290, %v392
    %v429 = vmul.f32 %v295, %v392
    %v430 = vmul.f32 %v300, %v392
    %v431 = vmul.f32 %v305, %v392
    %v432 = vmul.f32 %v310, %v392
    %v433 = vmul.f32 %v315, %v392
    %v434 = vmul.f32 %v320, %v392
    %v435 = vmul.f32 %v325, %v392
    %v436 = vmul.f32 %v330, %v392
    %v437 = vmul.f32 %v335, %v392
    %v438 = vmul.f32 %v340, %v392
    %v439 = vmul.f32 %v345, %v392
    %v440 = vmul.f32 %v350, %v392
    %v441 = vmul.f32 %v355, %v392
    %v442 = vmul.f32 %v360, %v392
    %v443 = vmul.f32 %v365, %v392
    %v444 = vmul.f32 %v370, %v392
    %v445 = vmul.f32 %v375, %v392
    %v446 = vmul.f32 %v380, %v392
    %v447 = vmul.f32 %v385, %v392
    %v448 = vmul.f32 %v390, %v392
    %v450 = vperm.slane %v111, 0
    %v452 = vadd.f32 %v450, %v393
    %v453 = vadd.f32 %v450, %v394
    %v454 = vadd.f32 %v450, %v395
    %v455 = vadd.f32 %v450, %v396
    %v456 = vadd.f32 %v450, %v397
    %v457 = vadd.f32 %v450, %v398
    %v458 = vadd.f32 %v450, %v399
    %v459 = vadd.f32 %v450, %v400
    %v460 = vadd.f32 %v450, %v401
    %v461 = vadd.f32 %v450, %v402
    %v462 = vadd.f32 %v450, %v403
    %v463 = vadd.f32 %v450, %v404
    %v464 = vadd.f32 %v450, %v405
    %v465 = vadd.f32 %v450, %v406
    %v466 = vadd.f32 %v450, %v407
    %v467 = vadd.f32 %v450, %v408
    %v468 = vadd.f32 %v450, %v409
    %v469 = vadd.f32 %v450, %v410
    %v470 = vadd.f32 %v450, %v411
    %v471 = vadd.f32 %v450, %v412
    %v472 = vadd.f32 %v450, %v413
    %v473 = vadd.f32 %v450, %v414
    %v474 = vadd.f32 %v450, %v415
    %v475 = vadd.f32 %v450, %v416
    %v476 = vadd.f32 %v450, %v417
    %v477 = vadd.f32 %v450, %v418
    %v478 = vadd.f32 %v450, %v419
    %v479 = vadd.f32 %v450, %v420
    %v480 = vadd.f32 %v450, %v421
    %v481 = vadd.f32 %v450, %v422
    %v482 = vadd.f32 %v450, %v423
    %v483 = vadd.f32 %v450, %v424
    %v484 = vadd.f32 %v450, %v425
    %v485 = vadd.f32 %v450, %v426
    %v486 = vadd.f32 %v450, %v427
    %v487 = vadd.f32 %v450, %v428
    %v488 = vadd.f32 %v450, %v429
    %v489 = vadd.f32 %v450, %v430
    %v490 = vadd.f32 %v450, %v431
    %v491 = vadd.f32 %v450, %v432
    %v492 = vadd.f32 %v450, %v433
    %v493 = vadd.f32 %v450, %v434
    %v494 = vadd.f32 %v450, %v435
    %v495 = vadd.f32 %v450, %v436
    %v496 = vadd.f32 %v450, %v437
    %v497 = vadd.f32 %v450, %v438
    %v498 = vadd.f32 %v450, %v439
    %v499 = vadd.f32 %v450, %v440
    %v500 = vadd.f32 %v450, %v441
    %v501 = vadd.f32 %v450, %v442
    %v502 = vadd.f32 %v450, %v443
    %v503 = vadd.f32 %v450, %v444
    %v504 = vadd.f32 %v450, %v445
    %v505 = vadd.f32 %v450, %v446
    %v506 = vadd.f32 %v450, %v447
    %v507 = vadd.f32 %v450, %v448
    %509 = vset.pattern.permute.xlu0 0
    %510 = vperm.xlu0 %509, %v53
    %v511 = vpop.permute.xlu0 %510
    %514 = vset.pattern.permute.xlu0 0
    %515 = vperm.xlu0 %514, %v61
    %v516 = vpop.permute.xlu0 %515
    %519 = vset.pattern.permute.xlu0 0
    %520 = vperm.xlu0 %519, %v69
    %v521 = vpop.permute.xlu0 %520
    %524 = vset.pattern.permute.xlu0 0
    %525 = vperm.xlu0 %524, %v77
    %v526 = vpop.permute.xlu0 %525
    %529 = vset.pattern.permute.xlu0 0
    %530 = vperm.xlu0 %529, %v85
    %v531 = vpop.permute.xlu0 %530
    %534 = vset.pattern.permute.xlu0 0
    %535 = vperm.xlu0 %534, %v93
    %v536 = vpop.permute.xlu0 %535
    %539 = vset.pattern.permute.xlu0 0
    %540 = vperm.xlu0 %539, %v101
    %v541 = vpop.permute.xlu0 %540
    %544 = vset.pattern.permute.xlu0 0
    %545 = vperm.xlu0 %544, %v109
    %v546 = vpop.permute.xlu0 %545
    %v548 = vperm.slane %v110, 1
    %v549 = vmul.f32 %v115, %v548
    %v550 = vmul.f32 %v120, %v548
    %v551 = vmul.f32 %v125, %v548
    %v552 = vmul.f32 %v130, %v548
    %v553 = vmul.f32 %v135, %v548
    %v554 = vmul.f32 %v140, %v548
    %v555 = vmul.f32 %v145, %v548
    %v556 = vmul.f32 %v511, %v548
    %v557 = vmul.f32 %v150, %v548
    %v558 = vmul.f32 %v155, %v548
    %v559 = vmul.f32 %v160, %v548
    %v560 = vmul.f32 %v165, %v548
    %v561 = vmul.f32 %v170, %v548
    %v562 = vmul.f32 %v175, %v548
    %v563 = vmul.f32 %v180, %v548
    %v564 = vmul.f32 %v516, %v548
    %v565 = vmul.f32 %v185, %v548
    %v566 = vmul.f32 %v190, %v548
    %v567 = vmul.f32 %v195, %v548
    %v568 = vmul.f32 %v200, %v548
    %v569 = vmul.f32 %v205, %v548
    %v570 = vmul.f32 %v210, %v548
    %v571 = vmul.f32 %v215, %v548
    %v572 = vmul.f32 %v521, %v548
    %v573 = vmul.f32 %v220, %v548
    %v574 = vmul.f32 %v225, %v548
    %v575 = vmul.f32 %v230, %v548
    %v576 = vmul.f32 %v235, %v548
    %v577 = vmul.f32 %v240, %v548
    %v578 = vmul.f32 %v245, %v548
    %v579 = vmul.f32 %v250, %v548
    %v580 = vmul.f32 %v526, %v548
    %v581 = vmul.f32 %v255, %v548
    %v582 = vmul.f32 %v260, %v548
    %v583 = vmul.f32 %v265, %v548
    %v584 = vmul.f32 %v270, %v548
    %v585 = vmul.f32 %v275, %v548
    %v586 = vmul.f32 %v280, %v548
    %v587 = vmul.f32 %v285, %v548
    %v588 = vmul.f32 %v531, %v548
    %v589 = vmul.f32 %v290, %v548
    %v590 = vmul.f32 %v295, %v548
    %v591 = vmul.f32 %v300, %v548
    %v592 = vmul.f32 %v305, %v548
    %v593 = vmul.f32 %v310, %v548
    %v594 = vmul.f32 %v315, %v548
    %v595 = vmul.f32 %v320, %v548
    %v596 = vmul.f32 %v536, %v548
    %v597 = vmul.f32 %v325, %v548
    %v598 = vmul.f32 %v330, %v548
    %v599 = vmul.f32 %v335, %v548
    %v600 = vmul.f32 %v340, %v548
    %v601 = vmul.f32 %v345, %v548
    %v602 = vmul.f32 %v350, %v548
    %v603 = vmul.f32 %v355, %v548
    %v604 = vmul.f32 %v541, %v548
    %v605 = vmul.f32 %v360, %v548
    %v606 = vmul.f32 %v365, %v548
    %v607 = vmul.f32 %v370, %v548
    %v608 = vmul.f32 %v375, %v548
    %v609 = vmul.f32 %v380, %v548
    %v610 = vmul.f32 %v385, %v548
    %v611 = vmul.f32 %v390, %v548
    %v612 = vmul.f32 %v546, %v548
    %vm677 = vcmask 1046528
    %v678 = vrot.slane %v549, 1
    %v679 = vrot.slane %v550, 1
    %v680 = vsel %vm677, %v678, %v679
    %v681 = vrot.slane %v551, 1
    %v682 = vsel %vm677, %v679, %v681
    %v683 = vrot.slane %v552, 1
    %v684 = vsel %vm677, %v681, %v683
    %v685 = vrot.slane %v553, 1
    %v686 = vsel %vm677, %v683, %v685
    %v687 = vrot.slane %v554, 1
    %v688 = vsel %vm677, %v685, %v687
    %v689 = vrot.slane %v555, 1
    %v690 = vsel %vm677, %v687, %v689
    %v691 = vrot.slane %v556, 1
    %v692 = vsel %vm677, %v689, %v691
    %v693 = vrot.slane %v557, 1
    %v694 = vrot.slane %v558, 1
    %v695 = vsel %vm677, %v693, %v694
    %v696 = vrot.slane %v559, 1
    %v697 = vsel %vm677, %v694, %v696
    %v698 = vrot.slane %v560, 1
    %v699 = vsel %vm677, %v696, %v698
    %v700 = vrot.slane %v561, 1
    %v701 = vsel %vm677, %v698, %v700
    %v702 = vrot.slane %v562, 1
    %v703 = vsel %vm677, %v700, %v702
    %v704 = vrot.slane %v563, 1
    %v705 = vsel %vm677, %v702, %v704
    %v706 = vrot.slane %v564, 1
    %v707 = vsel %vm677, %v704, %v706
    %v708 = vrot.slane %v565, 1
    %v709 = vrot.slane %v566, 1
    %v710 = vsel %vm677, %v708, %v709
    %v711 = vrot.slane %v567, 1
    %v712 = vsel %vm677, %v709, %v711
    %v713 = vrot.slane %v568, 1
    %v714 = vsel %vm677, %v711, %v713
    %v715 = vrot.slane %v569, 1
    %v716 = vsel %vm677, %v713, %v715
    %v717 = vrot.slane %v570, 1
    %v718 = vsel %vm677, %v715, %v717
    %v719 = vrot.slane %v571, 1
    %v720 = vsel %vm677, %v717, %v719
    %v721 = vrot.slane %v572, 1
    %v722 = vsel %vm677, %v719, %v721
    %v723 = vrot.slane %v573, 1
    %v724 = vrot.slane %v574, 1
    %v725 = vsel %vm677, %v723, %v724
    %v726 = vrot.slane %v575, 1
    %v727 = vsel %vm677, %v724, %v726
    %v728 = vrot.slane %v576, 1
    %v729 = vsel %vm677, %v726, %v728
    %v730 = vrot.slane %v577, 1
    %v731 = vsel %vm677, %v728, %v730
    %v732 = vrot.slane %v578, 1
    %v733 = vsel %vm677, %v730, %v732
    %v734 = vrot.slane %v579, 1
    %v735 = vsel %vm677, %v732, %v734
    %v736 = vrot.slane %v580, 1
    %v737 = vsel %vm677, %v734, %v736
    %v738 = vrot.slane %v581, 1
    %v739 = vrot.slane %v582, 1
    %v740 = vsel %vm677, %v738, %v739
    %v741 = vrot.slane %v583, 1
    %v742 = vsel %vm677, %v739, %v741
    %v743 = vrot.slane %v584, 1
    %v744 = vsel %vm677, %v741, %v743
    %v745 = vrot.slane %v585, 1
    %v746 = vsel %vm677, %v743, %v745
    %v747 = vrot.slane %v586, 1
    %v748 = vsel %vm677, %v745, %v747
    %v749 = vrot.slane %v587, 1
    %v750 = vsel %vm677, %v747, %v749
    %v751 = vrot.slane %v588, 1
    %v752 = vsel %vm677, %v749, %v751
    %v753 = vrot.slane %v589, 1
    %v754 = vrot.slane %v590, 1
    %v755 = vsel %vm677, %v753, %v754
    %v756 = vrot.slane %v591, 1
    %v757 = vsel %vm677, %v754, %v756
    %v758 = vrot.slane %v592, 1
    %v759 = vsel %vm677, %v756, %v758
    %v760 = vrot.slane %v593, 1
    %v761 = vsel %vm677, %v758, %v760
    %v762 = vrot.slane %v594, 1
    %v763 = vsel %vm677, %v760, %v762
    %v764 = vrot.slane %v595, 1
    %v765 = vsel %vm677, %v762, %v764
    %v766 = vrot.slane %v596, 1
    %v767 = vsel %vm677, %v764, %v766
    %v768 = vrot.slane %v597, 1
    %v769 = vrot.slane %v598, 1
    %v770 = vsel %vm677, %v768, %v769
    %v771 = vrot.slane %v599, 1
    %v772 = vsel %vm677, %v769, %v771
    %v773 = vrot.slane %v600, 1
    %v774 = vsel %vm677, %v771, %v773
    %v775 = vrot.slane %v601, 1
    %v776 = vsel %vm677, %v773, %v775
    %v777 = vrot.slane %v602, 1
    %v778 = vsel %vm677, %v775, %v777
    %v779 = vrot.slane %v603, 1
    %v780 = vsel %vm677, %v777, %v779
    %v781 = vrot.slane %v604, 1
    %v782 = vsel %vm677, %v779, %v781
    %v783 = vrot.slane %v605, 1
    %v784 = vrot.slane %v606, 1
    %v785 = vsel %vm677, %v783, %v784
    %v786 = vrot.slane %v607, 1
    %v787 = vsel %vm677, %v784, %v786
    %v788 = vrot.slane %v608, 1
    %v789 = vsel %vm677, %v786, %v788
    %v790 = vrot.slane %v609, 1
    %v791 = vsel %vm677, %v788, %v790
    %v792 = vrot.slane %v610, 1
    %v793 = vsel %vm677, %v790, %v792
    %v794 = vrot.slane %v611, 1
    %v795 = vsel %vm677, %v792, %v794
    %v796 = vrot.slane %v612, 1
    %v797 = vsel %vm677, %v794, %v796
    %v854 = vadd.f32 %v452, %v680
    %v855 = vadd.f32 %v453, %v682
    %v856 = vadd.f32 %v454, %v684
    %v857 = vadd.f32 %v455, %v686
    %v858 = vadd.f32 %v456, %v688
    %v859 = vadd.f32 %v457, %v690
    %v860 = vadd.f32 %v458, %v692
    %v861 = vadd.f32 %v459, %v695
    %v862 = vadd.f32 %v460, %v697
    %v863 = vadd.f32 %v461, %v699
    %v864 = vadd.f32 %v462, %v701
    %v865 = vadd.f32 %v463, %v703
    %v866 = vadd.f32 %v464, %v705
    %v867 = vadd.f32 %v465, %v707
    %v868 = vadd.f32 %v466, %v710
    %v869 = vadd.f32 %v467, %v712
    %v870 = vadd.f32 %v468, %v714
    %v871 = vadd.f32 %v469, %v716
    %v872 = vadd.f32 %v470, %v718
    %v873 = vadd.f32 %v471, %v720
    %v874 = vadd.f32 %v472, %v722
    %v875 = vadd.f32 %v473, %v725
    %v876 = vadd.f32 %v474, %v727
    %v877 = vadd.f32 %v475, %v729
    %v878 = vadd.f32 %v476, %v731
    %v879 = vadd.f32 %v477, %v733
    %v880 = vadd.f32 %v478, %v735
    %v881 = vadd.f32 %v479, %v737
    %v882 = vadd.f32 %v480, %v740
    %v883 = vadd.f32 %v481, %v742
    %v884 = vadd.f32 %v482, %v744
    %v885 = vadd.f32 %v483, %v746
    %v886 = vadd.f32 %v484, %v748
    %v887 = vadd.f32 %v485, %v750
    %v888 = vadd.f32 %v486, %v752
    %v889 = vadd.f32 %v487, %v755
    %v890 = vadd.f32 %v488, %v757
    %v891 = vadd.f32 %v489, %v759
    %v892 = vadd.f32 %v490, %v761
    %v893 = vadd.f32 %v491, %v763
    %v894 = vadd.f32 %v492, %v765
    %v895 = vadd.f32 %v493, %v767
    %v896 = vadd.f32 %v494, %v770
    %v897 = vadd.f32 %v495, %v772
    %v898 = vadd.f32 %v496, %v774
    %v899 = vadd.f32 %v497, %v776
    %v900 = vadd.f32 %v498, %v778
    %v901 = vadd.f32 %v499, %v780
    %v902 = vadd.f32 %v500, %v782
    %v903 = vadd.f32 %v501, %v785
    %v904 = vadd.f32 %v502, %v787
    %v905 = vadd.f32 %v503, %v789
    %v906 = vadd.f32 %v504, %v791
    %v907 = vadd.f32 %v505, %v793
    %v908 = vadd.f32 %v506, %v795
    %v909 = vadd.f32 %v507, %v797
    %v910 = vperm.slane %v110, 2
    %v911 = vmul.f32 %v115, %v910
    %v912 = vmul.f32 %v120, %v910
    %v913 = vmul.f32 %v125, %v910
    %v914 = vmul.f32 %v130, %v910
    %v915 = vmul.f32 %v135, %v910
    %v916 = vmul.f32 %v140, %v910
    %v917 = vmul.f32 %v145, %v910
    %v918 = vmul.f32 %v511, %v910
    %v919 = vmul.f32 %v150, %v910
    %v920 = vmul.f32 %v155, %v910
    %v921 = vmul.f32 %v160, %v910
    %v922 = vmul.f32 %v165, %v910
    %v923 = vmul.f32 %v170, %v910
    %v924 = vmul.f32 %v175, %v910
    %v925 = vmul.f32 %v180, %v910
    %v926 = vmul.f32 %v516, %v910
    %v927 = vmul.f32 %v185, %v910
    %v928 = vmul.f32 %v190, %v910
    %v929 = vmul.f32 %v195, %v910
    %v930 = vmul.f32 %v200, %v910
    %v931 = vmul.f32 %v205, %v910
    %v932 = vmul.f32 %v210, %v910
    %v933 = vmul.f32 %v215, %v910
    %v934 = vmul.f32 %v521, %v910
    %v935 = vmul.f32 %v220, %v910
    %v936 = vmul.f32 %v225, %v910
    %v937 = vmul.f32 %v230, %v910
    %v938 = vmul.f32 %v235, %v910
    %v939 = vmul.f32 %v240, %v910
    %v940 = vmul.f32 %v245, %v910
    %v941 = vmul.f32 %v250, %v910
    %v942 = vmul.f32 %v526, %v910
    %v943 = vmul.f32 %v255, %v910
    %v944 = vmul.f32 %v260, %v910
    %v945 = vmul.f32 %v265, %v910
    %v946 = vmul.f32 %v270, %v910
    %v947 = vmul.f32 %v275, %v910
    %v948 = vmul.f32 %v280, %v910
    %v949 = vmul.f32 %v285, %v910
    %v950 = vmul.f32 %v531, %v910
    %v951 = vmul.f32 %v290, %v910
    %v952 = vmul.f32 %v295, %v910
    %v953 = vmul.f32 %v300, %v910
    %v954 = vmul.f32 %v305, %v910
    %v955 = vmul.f32 %v310, %v910
    %v956 = vmul.f32 %v315, %v910
    %v957 = vmul.f32 %v320, %v910
    %v958 = vmul.f32 %v536, %v910
    %v959 = vmul.f32 %v325, %v910
    %v960 = vmul.f32 %v330, %v910
    %v961 = vmul.f32 %v335, %v910
    %v962 = vmul.f32 %v340, %v910
    %v963 = vmul.f32 %v345, %v910
    %v964 = vmul.f32 %v350, %v910
    %v965 = vmul.f32 %v355, %v910
    %v966 = vmul.f32 %v541, %v910
    %v967 = vmul.f32 %v360, %v910
    %v968 = vmul.f32 %v365, %v910
    %v969 = vmul.f32 %v370, %v910
    %v970 = vmul.f32 %v375, %v910
    %v971 = vmul.f32 %v380, %v910
    %v972 = vmul.f32 %v385, %v910
    %v973 = vmul.f32 %v390, %v910
    %v974 = vmul.f32 %v546, %v910
    %vm1039 = vcmask 1045504
    %v1040 = vrot.slane %v911, 2
    %v1041 = vrot.slane %v912, 2
    %v1042 = vsel %vm1039, %v1040, %v1041
    %v1043 = vrot.slane %v913, 2
    %v1044 = vsel %vm1039, %v1041, %v1043
    %v1045 = vrot.slane %v914, 2
    %v1046 = vsel %vm1039, %v1043, %v1045
    %v1047 = vrot.slane %v915, 2
    %v1048 = vsel %vm1039, %v1045, %v1047
    %v1049 = vrot.slane %v916, 2
    %v1050 = vsel %vm1039, %v1047, %v1049
    %v1051 = vrot.slane %v917, 2
    %v1052 = vsel %vm1039, %v1049, %v1051
    %v1053 = vrot.slane %v918, 2
    %v1054 = vsel %vm1039, %v1051, %v1053
    %v1055 = vrot.slane %v919, 2
    %v1056 = vrot.slane %v920, 2
    %v1057 = vsel %vm1039, %v1055, %v1056
    %v1058 = vrot.slane %v921, 2
    %v1059 = vsel %vm1039, %v1056, %v1058
    %v1060 = vrot.slane %v922, 2
    %v1061 = vsel %vm1039, %v1058, %v1060
    %v1062 = vrot.slane %v923, 2
    %v1063 = vsel %vm1039, %v1060, %v1062
    %v1064 = vrot.slane %v924, 2
    %v1065 = vsel %vm1039, %v1062, %v1064
    %v1066 = vrot.slane %v925, 2
    %v1067 = vsel %vm1039, %v1064, %v1066
    %v1068 = vrot.slane %v926, 2
    %v1069 = vsel %vm1039, %v1066, %v1068
    %v1070 = vrot.slane %v927, 2
    %v1071 = vrot.slane %v928, 2
    %v1072 = vsel %vm1039, %v1070, %v1071
    %v1073 = vrot.slane %v929, 2
    %v1074 = vsel %vm1039, %v1071, %v1073
    %v1075 = vrot.slane %v930, 2
    %v1076 = vsel %vm1039, %v1073, %v1075
    %v1077 = vrot.slane %v931, 2
    %v1078 = vsel %vm1039, %v1075, %v1077
    %v1079 = vrot.slane %v932, 2
    %v1080 = vsel %vm1039, %v1077, %v1079
    %v1081 = vrot.slane %v933, 2
    %v1082 = vsel %vm1039, %v1079, %v1081
    %v1083 = vrot.slane %v934, 2
    %v1084 = vsel %vm1039, %v1081, %v1083
    %v1085 = vrot.slane %v935, 2
    %v1086 = vrot.slane %v936, 2
    %v1087 = vsel %vm1039, %v1085, %v1086
    %v1088 = vrot.slane %v937, 2
    %v1089 = vsel %vm1039, %v1086, %v1088
    %v1090 = vrot.slane %v938, 2
    %v1091 = vsel %vm1039, %v1088, %v1090
    %v1092 = vrot.slane %v939, 2
    %v1093 = vsel %vm1039, %v1090, %v1092
    %v1094 = vrot.slane %v940, 2
    %v1095 = vsel %vm1039, %v1092, %v1094
    %v1096 = vrot.slane %v941, 2
    %v1097 = vsel %vm1039, %v1094, %v1096
    %v1098 = vrot.slane %v942, 2
    %v1099 = vsel %vm1039, %v1096, %v1098
    %v1100 = vrot.slane %v943, 2
    %v1101 = vrot.slane %v944, 2
    %v1102 = vsel %vm1039, %v1100, %v1101
    %v1103 = vrot.slane %v945, 2
    %v1104 = vsel %vm1039, %v1101, %v1103
    %v1105 = vrot.slane %v946, 2
    %v1106 = vsel %vm1039, %v1103, %v1105
    %v1107 = vrot.slane %v947, 2
    %v1108 = vsel %vm1039, %v1105, %v1107
    %v1109 = vrot.slane %v948, 2
    %v1110 = vsel %vm1039, %v1107, %v1109
    %v1111 = vrot.slane %v949, 2
    %v1112 = vsel %vm1039, %v1109, %v1111
    %v1113 = vrot.slane %v950, 2
    %v1114 = vsel %vm1039, %v1111, %v1113
    %v1115 = vrot.slane %v951, 2
    %v1116 = vrot.slane %v952, 2
    %v1117 = vsel %vm1039, %v1115, %v1116
    %v1118 = vrot.slane %v953, 2
    %v1119 = vsel %vm1039, %v1116, %v1118
    %v1120 = vrot.slane %v954, 2
    %v1121 = vsel %vm1039, %v1118, %v1120
    %v1122 = vrot.slane %v955, 2
    %v1123 = vsel %vm1039, %v1120, %v1122
    %v1124 = vrot.slane %v956, 2
    %v1125 = vsel %vm1039, %v1122, %v1124
    %v1126 = vrot.slane %v957, 2
    %v1127 = vsel %vm1039, %v1124, %v1126
    %v1128 = vrot.slane %v958, 2
    %v1129 = vsel %vm1039, %v1126, %v1128
    %v1130 = vrot.slane %v959, 2
    %v1131 = vrot.slane %v960, 2
    %v1132 = vsel %vm1039, %v1130, %v1131
    %v1133 = vrot.slane %v961, 2
    %v1134 = vsel %vm1039, %v1131, %v1133
    %v1135 = vrot.slane %v962, 2
    %v1136 = vsel %vm1039, %v1133, %v1135
    %v1137 = vrot.slane %v963, 2
    %v1138 = vsel %vm1039, %v1135, %v1137
    %v1139 = vrot.slane %v964, 2
    %v1140 = vsel %vm1039, %v1137, %v1139
    %v1141 = vrot.slane %v965, 2
    %v1142 = vsel %vm1039, %v1139, %v1141
    %v1143 = vrot.slane %v966, 2
    %v1144 = vsel %vm1039, %v1141, %v1143
    %v1145 = vrot.slane %v967, 2
    %v1146 = vrot.slane %v968, 2
    %v1147 = vsel %vm1039, %v1145, %v1146
    %v1148 = vrot.slane %v969, 2
    %v1149 = vsel %vm1039, %v1146, %v1148
    %v1150 = vrot.slane %v970, 2
    %v1151 = vsel %vm1039, %v1148, %v1150
    %v1152 = vrot.slane %v971, 2
    %v1153 = vsel %vm1039, %v1150, %v1152
    %v1154 = vrot.slane %v972, 2
    %v1155 = vsel %vm1039, %v1152, %v1154
    %v1156 = vrot.slane %v973, 2
    %v1157 = vsel %vm1039, %v1154, %v1156
    %v1158 = vrot.slane %v974, 2
    %v1159 = vsel %vm1039, %v1156, %v1158
    %v1216 = vadd.f32 %v854, %v1042
    %v1217 = vadd.f32 %v855, %v1044
    %v1218 = vadd.f32 %v856, %v1046
    %v1219 = vadd.f32 %v857, %v1048
    %v1220 = vadd.f32 %v858, %v1050
    %v1221 = vadd.f32 %v859, %v1052
    %v1222 = vadd.f32 %v860, %v1054
    %v1223 = vadd.f32 %v861, %v1057
    %v1224 = vadd.f32 %v862, %v1059
    %v1225 = vadd.f32 %v863, %v1061
    %v1226 = vadd.f32 %v864, %v1063
    %v1227 = vadd.f32 %v865, %v1065
    %v1228 = vadd.f32 %v866, %v1067
    %v1229 = vadd.f32 %v867, %v1069
    %v1230 = vadd.f32 %v868, %v1072
    %v1231 = vadd.f32 %v869, %v1074
    %v1232 = vadd.f32 %v870, %v1076
    %v1233 = vadd.f32 %v871, %v1078
    %v1234 = vadd.f32 %v872, %v1080
    %v1235 = vadd.f32 %v873, %v1082
    %v1236 = vadd.f32 %v874, %v1084
    %v1237 = vadd.f32 %v875, %v1087
    %v1238 = vadd.f32 %v876, %v1089
    %v1239 = vadd.f32 %v877, %v1091
    %v1240 = vadd.f32 %v878, %v1093
    %v1241 = vadd.f32 %v879, %v1095
    %v1242 = vadd.f32 %v880, %v1097
    %v1243 = vadd.f32 %v881, %v1099
    %v1244 = vadd.f32 %v882, %v1102
    %v1245 = vadd.f32 %v883, %v1104
    %v1246 = vadd.f32 %v884, %v1106
    %v1247 = vadd.f32 %v885, %v1108
    %v1248 = vadd.f32 %v886, %v1110
    %v1249 = vadd.f32 %v887, %v1112
    %v1250 = vadd.f32 %v888, %v1114
    %v1251 = vadd.f32 %v889, %v1117
    %v1252 = vadd.f32 %v890, %v1119
    %v1253 = vadd.f32 %v891, %v1121
    %v1254 = vadd.f32 %v892, %v1123
    %v1255 = vadd.f32 %v893, %v1125
    %v1256 = vadd.f32 %v894, %v1127
    %v1257 = vadd.f32 %v895, %v1129
    %v1258 = vadd.f32 %v896, %v1132
    %v1259 = vadd.f32 %v897, %v1134
    %v1260 = vadd.f32 %v898, %v1136
    %v1261 = vadd.f32 %v899, %v1138
    %v1262 = vadd.f32 %v900, %v1140
    %v1263 = vadd.f32 %v901, %v1142
    %v1264 = vadd.f32 %v902, %v1144
    %v1265 = vadd.f32 %v903, %v1147
    %v1266 = vadd.f32 %v904, %v1149
    %v1267 = vadd.f32 %v905, %v1151
    %v1268 = vadd.f32 %v906, %v1153
    %v1269 = vadd.f32 %v907, %v1155
    %v1270 = vadd.f32 %v908, %v1157
    %v1271 = vadd.f32 %v909, %v1159
    %v1272 = vperm.slane %v110, 3
    %v1273 = vmul.f32 %v115, %v1272
    %v1274 = vmul.f32 %v120, %v1272
    %v1275 = vmul.f32 %v125, %v1272
    %v1276 = vmul.f32 %v130, %v1272
    %v1277 = vmul.f32 %v135, %v1272
    %v1278 = vmul.f32 %v140, %v1272
    %v1279 = vmul.f32 %v145, %v1272
    %v1280 = vmul.f32 %v511, %v1272
    %v1281 = vmul.f32 %v150, %v1272
    %v1282 = vmul.f32 %v155, %v1272
    %v1283 = vmul.f32 %v160, %v1272
    %v1284 = vmul.f32 %v165, %v1272
    %v1285 = vmul.f32 %v170, %v1272
    %v1286 = vmul.f32 %v175, %v1272
    %v1287 = vmul.f32 %v180, %v1272
    %v1288 = vmul.f32 %v516, %v1272
    %v1289 = vmul.f32 %v185, %v1272
    %v1290 = vmul.f32 %v190, %v1272
    %v1291 = vmul.f32 %v195, %v1272
    %v1292 = vmul.f32 %v200, %v1272
    %v1293 = vmul.f32 %v205, %v1272
    %v1294 = vmul.f32 %v210, %v1272
    %v1295 = vmul.f32 %v215, %v1272
    %v1296 = vmul.f32 %v521, %v1272
    %v1297 = vmul.f32 %v220, %v1272
    %v1298 = vmul.f32 %v225, %v1272
    %v1299 = vmul.f32 %v230, %v1272
    %v1300 = vmul.f32 %v235, %v1272
    %v1301 = vmul.f32 %v240, %v1272
    %v1302 = vmul.f32 %v245, %v1272
    %v1303 = vmul.f32 %v250, %v1272
    %v1304 = vmul.f32 %v526, %v1272
    %v1305 = vmul.f32 %v255, %v1272
    %v1306 = vmul.f32 %v260, %v1272
    %v1307 = vmul.f32 %v265, %v1272
    %v1308 = vmul.f32 %v270, %v1272
    %v1309 = vmul.f32 %v275, %v1272
    %v1310 = vmul.f32 %v280, %v1272
    %v1311 = vmul.f32 %v285, %v1272
    %v1312 = vmul.f32 %v531, %v1272
    %v1313 = vmul.f32 %v290, %v1272
    %v1314 = vmul.f32 %v295, %v1272
    %v1315 = vmul.f32 %v300, %v1272
    %v1316 = vmul.f32 %v305, %v1272
    %v1317 = vmul.f32 %v310, %v1272
    %v1318 = vmul.f32 %v315, %v1272
    %v1319 = vmul.f32 %v320, %v1272
    %v1320 = vmul.f32 %v536, %v1272
    %v1321 = vmul.f32 %v325, %v1272
    %v1322 = vmul.f32 %v330, %v1272
    %v1323 = vmul.f32 %v335, %v1272
    %v1324 = vmul.f32 %v340, %v1272
    %v1325 = vmul.f32 %v345, %v1272
    %v1326 = vmul.f32 %v350, %v1272
    %v1327 = vmul.f32 %v355, %v1272
    %v1328 = vmul.f32 %v541, %v1272
    %v1329 = vmul.f32 %v360, %v1272
    %v1330 = vmul.f32 %v365, %v1272
    %v1331 = vmul.f32 %v370, %v1272
    %v1332 = vmul.f32 %v375, %v1272
    %v1333 = vmul.f32 %v380, %v1272
    %v1334 = vmul.f32 %v385, %v1272
    %v1335 = vmul.f32 %v390, %v1272
    %v1336 = vmul.f32 %v546, %v1272
    %vm1401 = vcmask 1044480
    %v1402 = vrot.slane %v1273, 3
    %v1403 = vrot.slane %v1274, 3
    %v1404 = vsel %vm1401, %v1402, %v1403
    %v1405 = vrot.slane %v1275, 3
    %v1406 = vsel %vm1401, %v1403, %v1405
    %v1407 = vrot.slane %v1276, 3
    %v1408 = vsel %vm1401, %v1405, %v1407
    %v1409 = vrot.slane %v1277, 3
    %v1410 = vsel %vm1401, %v1407, %v1409
    %v1411 = vrot.slane %v1278, 3
    %v1412 = vsel %vm1401, %v1409, %v1411
    %v1413 = vrot.slane %v1279, 3
    %v1414 = vsel %vm1401, %v1411, %v1413
    %v1415 = vrot.slane %v1280, 3
    %v1416 = vsel %vm1401, %v1413, %v1415
    %v1417 = vrot.slane %v1281, 3
    %v1418 = vrot.slane %v1282, 3
    %v1419 = vsel %vm1401, %v1417, %v1418
    %v1420 = vrot.slane %v1283, 3
    %v1421 = vsel %vm1401, %v1418, %v1420
    %v1422 = vrot.slane %v1284, 3
    %v1423 = vsel %vm1401, %v1420, %v1422
    %v1424 = vrot.slane %v1285, 3
    %v1425 = vsel %vm1401, %v1422, %v1424
    %v1426 = vrot.slane %v1286, 3
    %v1427 = vsel %vm1401, %v1424, %v1426
    %v1428 = vrot.slane %v1287, 3
    %v1429 = vsel %vm1401, %v1426, %v1428
    %v1430 = vrot.slane %v1288, 3
    %v1431 = vsel %vm1401, %v1428, %v1430
    %v1432 = vrot.slane %v1289, 3
    %v1433 = vrot.slane %v1290, 3
    %v1434 = vsel %vm1401, %v1432, %v1433
    %v1435 = vrot.slane %v1291, 3
    %v1436 = vsel %vm1401, %v1433, %v1435
    %v1437 = vrot.slane %v1292, 3
    %v1438 = vsel %vm1401, %v1435, %v1437
    %v1439 = vrot.slane %v1293, 3
    %v1440 = vsel %vm1401, %v1437, %v1439
    %v1441 = vrot.slane %v1294, 3
    %v1442 = vsel %vm1401, %v1439, %v1441
    %v1443 = vrot.slane %v1295, 3
    %v1444 = vsel %vm1401, %v1441, %v1443
    %v1445 = vrot.slane %v1296, 3
    %v1446 = vsel %vm1401, %v1443, %v1445
    %v1447 = vrot.slane %v1297, 3
    %v1448 = vrot.slane %v1298, 3
    %v1449 = vsel %vm1401, %v1447, %v1448
    %v1450 = vrot.slane %v1299, 3
    %v1451 = vsel %vm1401, %v1448, %v1450
    %v1452 = vrot.slane %v1300, 3
    %v1453 = vsel %vm1401, %v1450, %v1452
    %v1454 = vrot.slane %v1301, 3
    %v1455 = vsel %vm1401, %v1452, %v1454
    %v1456 = vrot.slane %v1302, 3
    %v1457 = vsel %vm1401, %v1454, %v1456
    %v1458 = vrot.slane %v1303, 3
    %v1459 = vsel %vm1401, %v1456, %v1458
    %v1460 = vrot.slane %v1304, 3
    %v1461 = vsel %vm1401, %v1458, %v1460
    %v1462 = vrot.slane %v1305, 3
    %v1463 = vrot.slane %v1306, 3
    %v1464 = vsel %vm1401, %v1462, %v1463
    %v1465 = vrot.slane %v1307, 3
    %v1466 = vsel %vm1401, %v1463, %v1465
    %v1467 = vrot.slane %v1308, 3
    %v1468 = vsel %vm1401, %v1465, %v1467
    %v1469 = vrot.slane %v1309, 3
    %v1470 = vsel %vm1401, %v1467, %v1469
    %v1471 = vrot.slane %v1310, 3
    %v1472 = vsel %vm1401, %v1469, %v1471
    %v1473 = vrot.slane %v1311, 3
    %v1474 = vsel %vm1401, %v1471, %v1473
    %v1475 = vrot.slane %v1312, 3
    %v1476 = vsel %vm1401, %v1473, %v1475
    %v1477 = vrot.slane %v1313, 3
    %v1478 = vrot.slane %v1314, 3
    %v1479 = vsel %vm1401, %v1477, %v1478
    %v1480 = vrot.slane %v1315, 3
    %v1481 = vsel %vm1401, %v1478, %v1480
    %v1482 = vrot.slane %v1316, 3
    %v1483 = vsel %vm1401, %v1480, %v1482
    %v1484 = vrot.slane %v1317, 3
    %v1485 = vsel %vm1401, %v1482, %v1484
    %v1486 = vrot.slane %v1318, 3
    %v1487 = vsel %vm1401, %v1484, %v1486
    %v1488 = vrot.slane %v1319, 3
    %v1489 = vsel %vm1401, %v1486, %v1488
    %v1490 = vrot.slane %v1320, 3
    %v1491 = vsel %vm1401, %v1488, %v1490
    %v1492 = vrot.slane %v1321, 3
    %v1493 = vrot.slane %v1322, 3
    %v1494 = vsel %vm1401, %v1492, %v1493
    %v1495 = vrot.slane %v1323, 3
    %v1496 = vsel %vm1401, %v1493, %v1495
    %v1497 = vrot.slane %v1324, 3
    %v1498 = vsel %vm1401, %v1495, %v1497
    %v1499 = vrot.slane %v1325, 3
    %v1500 = vsel %vm1401, %v1497, %v1499
    %v1501 = vrot.slane %v1326, 3
    %v1502 = vsel %vm1401, %v1499, %v1501
    %v1503 = vrot.slane %v1327, 3
    %v1504 = vsel %vm1401, %v1501, %v1503
    %v1505 = vrot.slane %v1328, 3
    %v1506 = vsel %vm1401, %v1503, %v1505
    %v1507 = vrot.slane %v1329, 3
    %v1508 = vrot.slane %v1330, 3
    %v1509 = vsel %vm1401, %v1507, %v1508
    %v1510 = vrot.slane %v1331, 3
    %v1511 = vsel %vm1401, %v1508, %v1510
    %v1512 = vrot.slane %v1332, 3
    %v1513 = vsel %vm1401, %v1510, %v1512
    %v1514 = vrot.slane %v1333, 3
    %v1515 = vsel %vm1401, %v1512, %v1514
    %v1516 = vrot.slane %v1334, 3
    %v1517 = vsel %vm1401, %v1514, %v1516
    %v1518 = vrot.slane %v1335, 3
    %v1519 = vsel %vm1401, %v1516, %v1518
    %v1520 = vrot.slane %v1336, 3
    %v1521 = vsel %vm1401, %v1518, %v1520
    %v1578 = vadd.f32 %v1216, %v1404
    %v1579 = vadd.f32 %v1217, %v1406
    %v1580 = vadd.f32 %v1218, %v1408
    %v1581 = vadd.f32 %v1219, %v1410
    %v1582 = vadd.f32 %v1220, %v1412
    %v1583 = vadd.f32 %v1221, %v1414
    %v1584 = vadd.f32 %v1222, %v1416
    %v1585 = vadd.f32 %v1223, %v1419
    %v1586 = vadd.f32 %v1224, %v1421
    %v1587 = vadd.f32 %v1225, %v1423
    %v1588 = vadd.f32 %v1226, %v1425
    %v1589 = vadd.f32 %v1227, %v1427
    %v1590 = vadd.f32 %v1228, %v1429
    %v1591 = vadd.f32 %v1229, %v1431
    %v1592 = vadd.f32 %v1230, %v1434
    %v1593 = vadd.f32 %v1231, %v1436
    %v1594 = vadd.f32 %v1232, %v1438
    %v1595 = vadd.f32 %v1233, %v1440
    %v1596 = vadd.f32 %v1234, %v1442
    %v1597 = vadd.f32 %v1235, %v1444
    %v1598 = vadd.f32 %v1236, %v1446
    %v1599 = vadd.f32 %v1237, %v1449
    %v1600 = vadd.f32 %v1238, %v1451
    %v1601 = vadd.f32 %v1239, %v1453
    %v1602 = vadd.f32 %v1240, %v1455
    %v1603 = vadd.f32 %v1241, %v1457
    %v1604 = vadd.f32 %v1242, %v1459
    %v1605 = vadd.f32 %v1243, %v1461
    %v1606 = vadd.f32 %v1244, %v1464
    %v1607 = vadd.f32 %v1245, %v1466
    %v1608 = vadd.f32 %v1246, %v1468
    %v1609 = vadd.f32 %v1247, %v1470
    %v1610 = vadd.f32 %v1248, %v1472
    %v1611 = vadd.f32 %v1249, %v1474
    %v1612 = vadd.f32 %v1250, %v1476
    %v1613 = vadd.f32 %v1251, %v1479
    %v1614 = vadd.f32 %v1252, %v1481
    %v1615 = vadd.f32 %v1253, %v1483
    %v1616 = vadd.f32 %v1254, %v1485
    %v1617 = vadd.f32 %v1255, %v1487
    %v1618 = vadd.f32 %v1256, %v1489
    %v1619 = vadd.f32 %v1257, %v1491
    %v1620 = vadd.f32 %v1258, %v1494
    %v1621 = vadd.f32 %v1259, %v1496
    %v1622 = vadd.f32 %v1260, %v1498
    %v1623 = vadd.f32 %v1261, %v1500
    %v1624 = vadd.f32 %v1262, %v1502
    %v1625 = vadd.f32 %v1263, %v1504
    %v1626 = vadd.f32 %v1264, %v1506
    %v1627 = vadd.f32 %v1265, %v1509
    %v1628 = vadd.f32 %v1266, %v1511
    %v1629 = vadd.f32 %v1267, %v1513
    %v1630 = vadd.f32 %v1268, %v1515
    %v1631 = vadd.f32 %v1269, %v1517
    %v1632 = vadd.f32 %v1270, %v1519
    %v1633 = vadd.f32 %v1271, %v1521
    %v1634 = vperm.slane %v110, 4
    %v1635 = vmul.f32 %v115, %v1634
    %v1636 = vmul.f32 %v120, %v1634
    %v1637 = vmul.f32 %v125, %v1634
    %v1638 = vmul.f32 %v130, %v1634
    %v1639 = vmul.f32 %v135, %v1634
    %v1640 = vmul.f32 %v140, %v1634
    %v1641 = vmul.f32 %v145, %v1634
    %v1642 = vmul.f32 %v511, %v1634
    %v1643 = vmul.f32 %v150, %v1634
    %v1644 = vmul.f32 %v155, %v1634
    %v1645 = vmul.f32 %v160, %v1634
    %v1646 = vmul.f32 %v165, %v1634
    %v1647 = vmul.f32 %v170, %v1634
    %v1648 = vmul.f32 %v175, %v1634
    %v1649 = vmul.f32 %v180, %v1634
    %v1650 = vmul.f32 %v516, %v1634
    %v1651 = vmul.f32 %v185, %v1634
    %v1652 = vmul.f32 %v190, %v1634
    %v1653 = vmul.f32 %v195, %v1634
    %v1654 = vmul.f32 %v200, %v1634
    %v1655 = vmul.f32 %v205, %v1634
    %v1656 = vmul.f32 %v210, %v1634
    %v1657 = vmul.f32 %v215, %v1634
    %v1658 = vmul.f32 %v521, %v1634
    %v1659 = vmul.f32 %v220, %v1634
    %v1660 = vmul.f32 %v225, %v1634
    %v1661 = vmul.f32 %v230, %v1634
    %v1662 = vmul.f32 %v235, %v1634
    %v1663 = vmul.f32 %v240, %v1634
    %v1664 = vmul.f32 %v245, %v1634
    %v1665 = vmul.f32 %v250, %v1634
    %v1666 = vmul.f32 %v526, %v1634
    %v1667 = vmul.f32 %v255, %v1634
    %v1668 = vmul.f32 %v260, %v1634
    %v1669 = vmul.f32 %v265, %v1634
    %v1670 = vmul.f32 %v270, %v1634
    %v1671 = vmul.f32 %v275, %v1634
    %v1672 = vmul.f32 %v280, %v1634
    %v1673 = vmul.f32 %v285, %v1634
    %v1674 = vmul.f32 %v531, %v1634
    %v1675 = vmul.f32 %v290, %v1634
    %v1676 = vmul.f32 %v295, %v1634
    %v1677 = vmul.f32 %v300, %v1634
    %v1678 = vmul.f32 %v305, %v1634
    %v1679 = vmul.f32 %v310, %v1634
    %v1680 = vmul.f32 %v315, %v1634
    %v1681 = vmul.f32 %v320, %v1634
    %v1682 = vmul.f32 %v536, %v1634
    %v1683 = vmul.f32 %v325, %v1634
    %v1684 = vmul.f32 %v330, %v1634
    %v1685 = vmul.f32 %v335, %v1634
    %v1686 = vmul.f32 %v340, %v1634
    %v1687 = vmul.f32 %v345, %v1634
    %v1688 = vmul.f32 %v350, %v1634
    %v1689 = vmul.f32 %v355, %v1634
    %v1690 = vmul.f32 %v541, %v1634
    %v1691 = vmul.f32 %v360, %v1634
    %v1692 = vmul.f32 %v365, %v1634
    %v1693 = vmul.f32 %v370, %v1634
    %v1694 = vmul.f32 %v375, %v1634
    %v1695 = vmul.f32 %v380, %v1634
    %v1696 = vmul.f32 %v385, %v1634
    %v1697 = vmul.f32 %v390, %v1634
    %v1698 = vmul.f32 %v546, %v1634
    %vm1763 = vcmask 1043456
    %v1764 = vrot.slane %v1635, 4
    %v1765 = vrot.slane %v1636, 4
    %v1766 = vsel %vm1763, %v1764, %v1765
    %v1767 = vrot.slane %v1637, 4
    %v1768 = vsel %vm1763, %v1765, %v1767
    %v1769 = vrot.slane %v1638, 4
    %v1770 = vsel %vm1763, %v1767, %v1769
    %v1771 = vrot.slane %v1639, 4
    %v1772 = vsel %vm1763, %v1769, %v1771
    %v1773 = vrot.slane %v1640, 4
    %v1774 = vsel %vm1763, %v1771, %v1773
    %v1775 = vrot.slane %v1641, 4
    %v1776 = vsel %vm1763, %v1773, %v1775
    %v1777 = vrot.slane %v1642, 4
    %v1778 = vsel %vm1763, %v1775, %v1777
    %v1779 = vrot.slane %v1643, 4
    %v1780 = vrot.slane %v1644, 4
    %v1781 = vsel %vm1763, %v1779, %v1780
    %v1782 = vrot.slane %v1645, 4
    %v1783 = vsel %vm1763, %v1780, %v1782
    %v1784 = vrot.slane %v1646, 4
    %v1785 = vsel %vm1763, %v1782, %v1784
    %v1786 = vrot.slane %v1647, 4
    %v1787 = vsel %vm1763, %v1784, %v1786
    %v1788 = vrot.slane %v1648, 4
    %v1789 = vsel %vm1763, %v1786, %v1788
    %v1790 = vrot.slane %v1649, 4
    %v1791 = vsel %vm1763, %v1788, %v1790
    %v1792 = vrot.slane %v1650, 4
    %v1793 = vsel %vm1763, %v1790, %v1792
    %v1794 = vrot.slane %v1651, 4
    %v1795 = vrot.slane %v1652, 4
    %v1796 = vsel %vm1763, %v1794, %v1795
    %v1797 = vrot.slane %v1653, 4
    %v1798 = vsel %vm1763, %v1795, %v1797
    %v1799 = vrot.slane %v1654, 4
    %v1800 = vsel %vm1763, %v1797, %v1799
    %v1801 = vrot.slane %v1655, 4
    %v1802 = vsel %vm1763, %v1799, %v1801
    %v1803 = vrot.slane %v1656, 4
    %v1804 = vsel %vm1763, %v1801, %v1803
    %v1805 = vrot.slane %v1657, 4
    %v1806 = vsel %vm1763, %v1803, %v1805
    %v1807 = vrot.slane %v1658, 4
    %v1808 = vsel %vm1763, %v1805, %v1807
    %v1809 = vrot.slane %v1659, 4
    %v1810 = vrot.slane %v1660, 4
    %v1811 = vsel %vm1763, %v1809, %v1810
    %v1812 = vrot.slane %v1661, 4
    %v1813 = vsel %vm1763, %v1810, %v1812
    %v1814 = vrot.slane %v1662, 4
    %v1815 = vsel %vm1763, %v1812, %v1814
    %v1816 = vrot.slane %v1663, 4
    %v1817 = vsel %vm1763, %v1814, %v1816
    %v1818 = vrot.slane %v1664, 4
    %v1819 = vsel %vm1763, %v1816, %v1818
    %v1820 = vrot.slane %v1665, 4
    %v1821 = vsel %vm1763, %v1818, %v1820
    %v1822 = vrot.slane %v1666, 4
    %v1823 = vsel %vm1763, %v1820, %v1822
    %v1824 = vrot.slane %v1667, 4
    %v1825 = vrot.slane %v1668, 4
    %v1826 = vsel %vm1763, %v1824, %v1825
    %v1827 = vrot.slane %v1669, 4
    %v1828 = vsel %vm1763, %v1825, %v1827
    %v1829 = vrot.slane %v1670, 4
    %v1830 = vsel %vm1763, %v1827, %v1829
    %v1831 = vrot.slane %v1671, 4
    %v1832 = vsel %vm1763, %v1829, %v1831
    %v1833 = vrot.slane %v1672, 4
    %v1834 = vsel %vm1763, %v1831, %v1833
    %v1835 = vrot.slane %v1673, 4
    %v1836 = vsel %vm1763, %v1833, %v1835
    %v1837 = vrot.slane %v1674, 4
    %v1838 = vsel %vm1763, %v1835, %v1837
    %v1839 = vrot.slane %v1675, 4
    %v1840 = vrot.slane %v1676, 4
    %v1841 = vsel %vm1763, %v1839, %v1840
    %v1842 = vrot.slane %v1677, 4
    %v1843 = vsel %vm1763, %v1840, %v1842
    %v1844 = vrot.slane %v1678, 4
    %v1845 = vsel %vm1763, %v1842, %v1844
    %v1846 = vrot.slane %v1679, 4
    %v1847 = vsel %vm1763, %v1844, %v1846
    %v1848 = vrot.slane %v1680, 4
    %v1849 = vsel %vm1763, %v1846, %v1848
    %v1850 = vrot.slane %v1681, 4
    %v1851 = vsel %vm1763, %v1848, %v1850
    %v1852 = vrot.slane %v1682, 4
    %v1853 = vsel %vm1763, %v1850, %v1852
    %v1854 = vrot.slane %v1683, 4
    %v1855 = vrot.slane %v1684, 4
    %v1856 = vsel %vm1763, %v1854, %v1855
    %v1857 = vrot.slane %v1685, 4
    %v1858 = vsel %vm1763, %v1855, %v1857
    %v1859 = vrot.slane %v1686, 4
    %v1860 = vsel %vm1763, %v1857, %v1859
    %v1861 = vrot.slane %v1687, 4
    %v1862 = vsel %vm1763, %v1859, %v1861
    %v1863 = vrot.slane %v1688, 4
    %v1864 = vsel %vm1763, %v1861, %v1863
    %v1865 = vrot.slane %v1689, 4
    %v1866 = vsel %vm1763, %v1863, %v1865
    %v1867 = vrot.slane %v1690, 4
    %v1868 = vsel %vm1763, %v1865, %v1867
    %v1869 = vrot.slane %v1691, 4
    %v1870 = vrot.slane %v1692, 4
    %v1871 = vsel %vm1763, %v1869, %v1870
    %v1872 = vrot.slane %v1693, 4
    %v1873 = vsel %vm1763, %v1870, %v1872
    %v1874 = vrot.slane %v1694, 4
    %v1875 = vsel %vm1763, %v1872, %v1874
    %v1876 = vrot.slane %v1695, 4
    %v1877 = vsel %vm1763, %v1874, %v1876
    %v1878 = vrot.slane %v1696, 4
    %v1879 = vsel %vm1763, %v1876, %v1878
    %v1880 = vrot.slane %v1697, 4
    %v1881 = vsel %vm1763, %v1878, %v1880
    %v1882 = vrot.slane %v1698, 4
    %v1883 = vsel %vm1763, %v1880, %v1882
    %v1940 = vadd.f32 %v1578, %v1766
    %v1941 = vadd.f32 %v1579, %v1768
    %v1942 = vadd.f32 %v1580, %v1770
    %v1943 = vadd.f32 %v1581, %v1772
    %v1944 = vadd.f32 %v1582, %v1774
    %v1945 = vadd.f32 %v1583, %v1776
    %v1946 = vadd.f32 %v1584, %v1778
    %v1947 = vadd.f32 %v1585, %v1781
    %v1948 = vadd.f32 %v1586, %v1783
    %v1949 = vadd.f32 %v1587, %v1785
    %v1950 = vadd.f32 %v1588, %v1787
    %v1951 = vadd.f32 %v1589, %v1789
    %v1952 = vadd.f32 %v1590, %v1791
    %v1953 = vadd.f32 %v1591, %v1793
    %v1954 = vadd.f32 %v1592, %v1796
    %v1955 = vadd.f32 %v1593, %v1798
    %v1956 = vadd.f32 %v1594, %v1800
    %v1957 = vadd.f32 %v1595, %v1802
    %v1958 = vadd.f32 %v1596, %v1804
    %v1959 = vadd.f32 %v1597, %v1806
    %v1960 = vadd.f32 %v1598, %v1808
    %v1961 = vadd.f32 %v1599, %v1811
    %v1962 = vadd.f32 %v1600, %v1813
    %v1963 = vadd.f32 %v1601, %v1815
    %v1964 = vadd.f32 %v1602, %v1817
    %v1965 = vadd.f32 %v1603, %v1819
    %v1966 = vadd.f32 %v1604, %v1821
    %v1967 = vadd.f32 %v1605, %v1823
    %v1968 = vadd.f32 %v1606, %v1826
    %v1969 = vadd.f32 %v1607, %v1828
    %v1970 = vadd.f32 %v1608, %v1830
    %v1971 = vadd.f32 %v1609, %v1832
    %v1972 = vadd.f32 %v1610, %v1834
    %v1973 = vadd.f32 %v1611, %v1836
    %v1974 = vadd.f32 %v1612, %v1838
    %v1975 = vadd.f32 %v1613, %v1841
    %v1976 = vadd.f32 %v1614, %v1843
    %v1977 = vadd.f32 %v1615, %v1845
    %v1978 = vadd.f32 %v1616, %v1847
    %v1979 = vadd.f32 %v1617, %v1849
    %v1980 = vadd.f32 %v1618, %v1851
    %v1981 = vadd.f32 %v1619, %v1853
    %v1982 = vadd.f32 %v1620, %v1856
    %v1983 = vadd.f32 %v1621, %v1858
    %v1984 = vadd.f32 %v1622, %v1860
    %v1985 = vadd.f32 %v1623, %v1862
    %v1986 = vadd.f32 %v1624, %v1864
    %v1987 = vadd.f32 %v1625, %v1866
    %v1988 = vadd.f32 %v1626, %v1868
    %v1989 = vadd.f32 %v1627, %v1871
    %v1990 = vadd.f32 %v1628, %v1873
    %v1991 = vadd.f32 %v1629, %v1875
    %v1992 = vadd.f32 %v1630, %v1877
    %v1993 = vadd.f32 %v1631, %v1879
    %v1994 = vadd.f32 %v1632, %v1881
    %v1995 = vadd.f32 %v1633, %v1883
    %v1996 = vmax.f32 %v1940, 0.0
    %v1997 = vmax.f32 %v1941, 0.0
    %v1998 = vmax.f32 %v1942, 0.0
    %v1999 = vmax.f32 %v1943, 0.0
    %v2000 = vmax.f32 %v1944, 0.0
    %v2001 = vmax.f32 %v1945, 0.0
    %v2002 = vmax.f32 %v1946, 0.0
    %v2003 = vmax.f32 %v1947, 0.0
    %v2004 = vmax.f32 %v1948, 0.0
    %v2005 = vmax.f32 %v1949, 0.0
    %v2006 = vmax.f32 %v1950, 0.0
    %v2007 = vmax.f32 %v1951, 0.0
    %v2008 = vmax.f32 %v1952, 0.0
    %v2009 = vmax.f32 %v1953, 0.0
    %v2010 = vmax.f32 %v1954, 0.0
    %v2011 = vmax.f32 %v1955, 0.0
    %v2012 = vmax.f32 %v1956, 0.0
    %v2013 = vmax.f32 %v1957, 0.0
    %v2014 = vmax.f32 %v1958, 0.0
    %v2015 = vmax.f32 %v1959, 0.0
    %v2016 = vmax.f32 %v1960, 0.0
    %v2017 = vmax.f32 %v1961, 0.0
    %v2018 = vmax.f32 %v1962, 0.0
    %v2019 = vmax.f32 %v1963, 0.0
    %v2020 = vmax.f32 %v1964, 0.0
    %v2021 = vmax.f32 %v1965, 0.0
    %v2022 = vmax.f32 %v1966, 0.0
    %v2023 = vmax.f32 %v1967, 0.0
    %v2024 = vmax.f32 %v1968, 0.0
    %v2025 = vmax.f32 %v1969, 0.0
    %v2026 = vmax.f32 %v1970, 0.0
    %v2027 = vmax.f32 %v1971, 0.0
    %v2028 = vmax.f32 %v1972, 0.0
    %v2029 = vmax.f32 %v1973, 0.0
    %v2030 = vmax.f32 %v1974, 0.0
    %v2031 = vmax.f32 %v1975, 0.0
    %v2032 = vmax.f32 %v1976, 0.0
    %v2033 = vmax.f32 %v1977, 0.0
    %v2034 = vmax.f32 %v1978, 0.0
    %v2035 = vmax.f32 %v1979, 0.0
    %v2036 = vmax.f32 %v1980, 0.0
    %v2037 = vmax.f32 %v1981, 0.0
    %v2038 = vmax.f32 %v1982, 0.0
    %v2039 = vmax.f32 %v1983, 0.0
    %v2040 = vmax.f32 %v1984, 0.0
    %v2041 = vmax.f32 %v1985, 0.0
    %v2042 = vmax.f32 %v1986, 0.0
    %v2043 = vmax.f32 %v1987, 0.0
    %v2044 = vmax.f32 %v1988, 0.0
    %v2045 = vmax.f32 %v1989, 0.0
    %v2046 = vmax.f32 %v1990, 0.0
    %v2047 = vmax.f32 %v1991, 0.0
    %v2048 = vmax.f32 %v1992, 0.0
    %v2049 = vmax.f32 %v1993, 0.0
    %v2050 = vmax.f32 %v1994, 0.0
    %v2051 = vmax.f32 %v1995, 0.0
    %v2052 = vpack.c.bf16 %v1996, %v1996
    %v2053 = vpack.c.bf16 %v1997, %v1997
    %v2054 = vpack.c.bf16 %v1998, %v1998
    %v2055 = vpack.c.bf16 %v1999, %v1999
    %v2056 = vpack.c.bf16 %v2000, %v2000
    %v2057 = vpack.c.bf16 %v2001, %v2001
    %v2058 = vpack.c.bf16 %v2002, %v2002
    %v2059 = vpack.c.bf16 %v2003, %v2003
    %v2060 = vpack.c.bf16 %v2004, %v2004
    %v2061 = vpack.c.bf16 %v2005, %v2005
    %v2062 = vpack.c.bf16 %v2006, %v2006
    %v2063 = vpack.c.bf16 %v2007, %v2007
    %v2064 = vpack.c.bf16 %v2008, %v2008
    %v2065 = vpack.c.bf16 %v2009, %v2009
    %v2066 = vpack.c.bf16 %v2010, %v2010
    %v2067 = vpack.c.bf16 %v2011, %v2011
    %v2068 = vpack.c.bf16 %v2012, %v2012
    %v2069 = vpack.c.bf16 %v2013, %v2013
    %v2070 = vpack.c.bf16 %v2014, %v2014
    %v2071 = vpack.c.bf16 %v2015, %v2015
    %v2072 = vpack.c.bf16 %v2016, %v2016
    %v2073 = vpack.c.bf16 %v2017, %v2017
    %v2074 = vpack.c.bf16 %v2018, %v2018
    %v2075 = vpack.c.bf16 %v2019, %v2019
    %v2076 = vpack.c.bf16 %v2020, %v2020
    %v2077 = vpack.c.bf16 %v2021, %v2021
    %v2078 = vpack.c.bf16 %v2022, %v2022
    %v2079 = vpack.c.bf16 %v2023, %v2023
    %v2080 = vpack.c.bf16 %v2024, %v2024
    %v2081 = vpack.c.bf16 %v2025, %v2025
    %v2082 = vpack.c.bf16 %v2026, %v2026
    %v2083 = vpack.c.bf16 %v2027, %v2027
    %v2084 = vpack.c.bf16 %v2028, %v2028
    %v2085 = vpack.c.bf16 %v2029, %v2029
    %v2086 = vpack.c.bf16 %v2030, %v2030
    %v2087 = vpack.c.bf16 %v2031, %v2031
    %v2088 = vpack.c.bf16 %v2032, %v2032
    %v2089 = vpack.c.bf16 %v2033, %v2033
    %v2090 = vpack.c.bf16 %v2034, %v2034
    %v2091 = vpack.c.bf16 %v2035, %v2035
    %v2092 = vpack.c.bf16 %v2036, %v2036
    %v2093 = vpack.c.bf16 %v2037, %v2037
    %v2094 = vpack.c.bf16 %v2038, %v2038
    %v2095 = vpack.c.bf16 %v2039, %v2039
    %v2096 = vpack.c.bf16 %v2040, %v2040
    %v2097 = vpack.c.bf16 %v2041, %v2041
    %v2098 = vpack.c.bf16 %v2042, %v2042
    %v2099 = vpack.c.bf16 %v2043, %v2043
    %v2100 = vpack.c.bf16 %v2044, %v2044
    %v2101 = vpack.c.bf16 %v2045, %v2045
    %v2102 = vpack.c.bf16 %v2046, %v2046
    %v2103 = vpack.c.bf16 %v2047, %v2047
    %v2104 = vpack.c.bf16 %v2048, %v2048
    %v2105 = vpack.c.bf16 %v2049, %v2049
    %v2106 = vpack.c.bf16 %v2050, %v2050
    %v2107 = vpack.c.bf16 %v2051, %v2051
    %v2156 = vunpack.c.l.b16 %v2052
    %v2157 = vunpack.c.l.b16 %v2053
    %v2158 = vunpack.c.l.b16 %v2054
    %v2159 = vunpack.c.l.b16 %v2055
    %v2160 = vunpack.c.l.b16 %v2056
    %v2161 = vunpack.c.l.b16 %v2057
    %v2162 = vunpack.c.l.b16 %v2059
    %v2163 = vunpack.c.l.b16 %v2060
    %v2164 = vunpack.c.l.b16 %v2061
    %v2165 = vunpack.c.l.b16 %v2062
    %v2166 = vunpack.c.l.b16 %v2063
    %v2167 = vunpack.c.l.b16 %v2064
    %v2168 = vunpack.c.l.b16 %v2066
    %v2169 = vunpack.c.l.b16 %v2067
    %v2170 = vunpack.c.l.b16 %v2068
    %v2171 = vunpack.c.l.b16 %v2069
    %v2172 = vunpack.c.l.b16 %v2070
    %v2173 = vunpack.c.l.b16 %v2071
    %v2174 = vunpack.c.l.b16 %v2073
    %v2175 = vunpack.c.l.b16 %v2074
    %v2176 = vunpack.c.l.b16 %v2075
    %v2177 = vunpack.c.l.b16 %v2076
    %v2178 = vunpack.c.l.b16 %v2077
    %v2179 = vunpack.c.l.b16 %v2078
    %v2180 = vunpack.c.l.b16 %v2080
    %v2181 = vunpack.c.l.b16 %v2081
    %v2182 = vunpack.c.l.b16 %v2082
    %v2183 = vunpack.c.l.b16 %v2083
    %v2184 = vunpack.c.l.b16 %v2084
    %v2185 = vunpack.c.l.b16 %v2085
    %v2186 = vunpack.c.l.b16 %v2087
    %v2187 = vunpack.c.l.b16 %v2088
    %v2188 = vunpack.c.l.b16 %v2089
    %v2189 = vunpack.c.l.b16 %v2090
    %v2190 = vunpack.c.l.b16 %v2091
    %v2191 = vunpack.c.l.b16 %v2092
    %v2192 = vunpack.c.l.b16 %v2094
    %v2193 = vunpack.c.l.b16 %v2095
    %v2194 = vunpack.c.l.b16 %v2096
    %v2195 = vunpack.c.l.b16 %v2097
    %v2196 = vunpack.c.l.b16 %v2098
    %v2197 = vunpack.c.l.b16 %v2099
    %v2198 = vunpack.c.l.b16 %v2101
    %v2199 = vunpack.c.l.b16 %v2102
    %v2200 = vunpack.c.l.b16 %v2103
    %v2201 = vunpack.c.l.b16 %v2104
    %v2202 = vunpack.c.l.b16 %v2105
    %v2203 = vunpack.c.l.b16 %v2106
    %v2204 = vpack.c.b16 %v2157, %v2156
    %v2205 = vpack.c.b16 %v2159, %v2158
    %v2206 = vpack.c.b16 %v2161, %v2160
    %v2207 = vpack.c.b16 %v2163, %v2162
    %v2208 = vpack.c.b16 %v2165, %v2164
    %v2209 = vpack.c.b16 %v2167, %v2166
    %v2210 = vpack.c.b16 %v2169, %v2168
    %v2211 = vpack.c.b16 %v2171, %v2170
    %v2212 = vpack.c.b16 %v2173, %v2172
    %v2213 = vpack.c.b16 %v2175, %v2174
    %v2214 = vpack.c.b16 %v2177, %v2176
    %v2215 = vpack.c.b16 %v2179, %v2178
    %v2216 = vpack.c.b16 %v2181, %v2180
    %v2217 = vpack.c.b16 %v2183, %v2182
    %v2218 = vpack.c.b16 %v2185, %v2184
    %v2219 = vpack.c.b16 %v2187, %v2186
    %v2220 = vpack.c.b16 %v2189, %v2188
    %v2221 = vpack.c.b16 %v2191, %v2190
    %v2222 = vpack.c.b16 %v2193, %v2192
    %v2223 = vpack.c.b16 %v2195, %v2194
    %v2224 = vpack.c.b16 %v2197, %v2196
    %v2225 = vpack.c.b16 %v2199, %v2198
    %v2226 = vpack.c.b16 %v2201, %v2200
    %v2227 = vpack.c.b16 %v2203, %v2202
    %v2236 = vunpack.c.l.b16 %v2058
    %v2237 = vunpack.c.l.b16 %v2065
    %v2238 = vunpack.c.l.b16 %v2072
    %v2239 = vunpack.c.l.b16 %v2079
    %v2240 = vunpack.c.l.b16 %v2086
    %v2241 = vunpack.c.l.b16 %v2093
    %v2242 = vunpack.c.l.b16 %v2100
    %v2243 = vunpack.c.l.b16 %v2107
    %v2244 = vpack.c.b16 %v2236, %v2236
    %v2245 = vpack.c.b16 %v2237, %v2237
    %v2246 = vpack.c.b16 %v2238, %v2238
    %v2247 = vpack.c.b16 %v2239, %v2239
    %v2248 = vpack.c.b16 %v2240, %v2240
    %v2249 = vpack.c.b16 %v2241, %v2241
    %v2250 = vpack.c.b16 %v2242, %v2242
    %v2251 = vpack.c.b16 %v2243, %v2243
    %vm2252 = vsmask.f32 7424
    %v2254 = vshrl.u32 %v2204, 16
    %v2256 = vshll.u32 %v2204, 16
    %v2258 = vrot.slane %v2256, 1
    %v2259 = vor.u32 %v2254, %v2258
    %v2261 = vshll.u32 %v2205, 16
    %v2263 = vrot.slane %v2261, 1
    %v2264 = vsel %vm2252, %v2259, %v2263
    %v2265 = vshrl.u32 %v2205, 16
    %v2267 = vor.u32 %v2265, %v2263
    %v2269 = vshll.u32 %v2206, 16
    %v2271 = vrot.slane %v2269, 1
    %v2272 = vsel %vm2252, %v2267, %v2271
    %v2273 = vshrl.u32 %v2206, 16
    %v2275 = vor.u32 %v2273, %v2271
    %v2277 = vshll.u32 %v2244, 16
    %v2279 = vrot.slane %v2277, 1
    %v2280 = vsel %vm2252, %v2275, %v2279
    %v2282 = vshrl.u32 %v2207, 16
    %v2284 = vshll.u32 %v2207, 16
    %v2286 = vrot.slane %v2284, 1
    %v2287 = vor.u32 %v2282, %v2286
    %v2289 = vshll.u32 %v2208, 16
    %v2291 = vrot.slane %v2289, 1
    %v2292 = vsel %vm2252, %v2287, %v2291
    %v2293 = vshrl.u32 %v2208, 16
    %v2295 = vor.u32 %v2293, %v2291
    %v2297 = vshll.u32 %v2209, 16
    %v2299 = vrot.slane %v2297, 1
    %v2300 = vsel %vm2252, %v2295, %v2299
    %v2301 = vshrl.u32 %v2209, 16
    %v2303 = vor.u32 %v2301, %v2299
    %v2305 = vshll.u32 %v2245, 16
    %v2307 = vrot.slane %v2305, 1
    %v2308 = vsel %vm2252, %v2303, %v2307
    %v2310 = vshrl.u32 %v2210, 16
    %v2312 = vshll.u32 %v2210, 16
    %v2314 = vrot.slane %v2312, 1
    %v2315 = vor.u32 %v2310, %v2314
    %v2317 = vshll.u32 %v2211, 16
    %v2319 = vrot.slane %v2317, 1
    %v2320 = vsel %vm2252, %v2315, %v2319
    %v2321 = vshrl.u32 %v2211, 16
    %v2323 = vor.u32 %v2321, %v2319
    %v2325 = vshll.u32 %v2212, 16
    %v2327 = vrot.slane %v2325, 1
    %v2328 = vsel %vm2252, %v2323, %v2327
    %v2329 = vshrl.u32 %v2212, 16
    %v2331 = vor.u32 %v2329, %v2327
    %v2333 = vshll.u32 %v2246, 16
    %v2335 = vrot.slane %v2333, 1
    %v2336 = vsel %vm2252, %v2331, %v2335
    %v2338 = vshrl.u32 %v2213, 16
    %v2340 = vshll.u32 %v2213, 16
    %v2342 = vrot.slane %v2340, 1
    %v2343 = vor.u32 %v2338, %v2342
    %v2345 = vshll.u32 %v2214, 16
    %v2347 = vrot.slane %v2345, 1
    %v2348 = vsel %vm2252, %v2343, %v2347
    %v2349 = vshrl.u32 %v2214, 16
    %v2351 = vor.u32 %v2349, %v2347
    %v2353 = vshll.u32 %v2215, 16
    %v2355 = vrot.slane %v2353, 1
    %v2356 = vsel %vm2252, %v2351, %v2355
    %v2357 = vshrl.u32 %v2215, 16
    %v2359 = vor.u32 %v2357, %v2355
    %v2361 = vshll.u32 %v2247, 16
    %v2363 = vrot.slane %v2361, 1
    %v2364 = vsel %vm2252, %v2359, %v2363
    %v2366 = vshrl.u32 %v2216, 16
    %v2368 = vshll.u32 %v2216, 16
    %v2370 = vrot.slane %v2368, 1
    %v2371 = vor.u32 %v2366, %v2370
    %v2373 = vshll.u32 %v2217, 16
    %v2375 = vrot.slane %v2373, 1
    %v2376 = vsel %vm2252, %v2371, %v2375
    %v2377 = vshrl.u32 %v2217, 16
    %v2379 = vor.u32 %v2377, %v2375
    %v2381 = vshll.u32 %v2218, 16
    %v2383 = vrot.slane %v2381, 1
    %v2384 = vsel %vm2252, %v2379, %v2383
    %v2385 = vshrl.u32 %v2218, 16
    %v2387 = vor.u32 %v2385, %v2383
    %v2389 = vshll.u32 %v2248, 16
    %v2391 = vrot.slane %v2389, 1
    %v2392 = vsel %vm2252, %v2387, %v2391
    %v2394 = vshrl.u32 %v2219, 16
    %v2396 = vshll.u32 %v2219, 16
    %v2398 = vrot.slane %v2396, 1
    %v2399 = vor.u32 %v2394, %v2398
    %v2401 = vshll.u32 %v2220, 16
    %v2403 = vrot.slane %v2401, 1
    %v2404 = vsel %vm2252, %v2399, %v2403
    %v2405 = vshrl.u32 %v2220, 16
    %v2407 = vor.u32 %v2405, %v2403
    %v2409 = vshll.u32 %v2221, 16
    %v2411 = vrot.slane %v2409, 1
    %v2412 = vsel %vm2252, %v2407, %v2411
    %v2413 = vshrl.u32 %v2221, 16
    %v2415 = vor.u32 %v2413, %v2411
    %v2417 = vshll.u32 %v2249, 16
    %v2419 = vrot.slane %v2417, 1
    %v2420 = vsel %vm2252, %v2415, %v2419
    %v2422 = vshrl.u32 %v2222, 16
    %v2424 = vshll.u32 %v2222, 16
    %v2426 = vrot.slane %v2424, 1
    %v2427 = vor.u32 %v2422, %v2426
    %v2429 = vshll.u32 %v2223, 16
    %v2431 = vrot.slane %v2429, 1
    %v2432 = vsel %vm2252, %v2427, %v2431
    %v2433 = vshrl.u32 %v2223, 16
    %v2435 = vor.u32 %v2433, %v2431
    %v2437 = vshll.u32 %v2224, 16
    %v2439 = vrot.slane %v2437, 1
    %v2440 = vsel %vm2252, %v2435, %v2439
    %v2441 = vshrl.u32 %v2224, 16
    %v2443 = vor.u32 %v2441, %v2439
    %v2445 = vshll.u32 %v2250, 16
    %v2447 = vrot.slane %v2445, 1
    %v2448 = vsel %vm2252, %v2443, %v2447
    %v2450 = vshrl.u32 %v2225, 16
    %v2452 = vshll.u32 %v2225, 16
    %v2454 = vrot.slane %v2452, 1
    %v2455 = vor.u32 %v2450, %v2454
    %v2457 = vshll.u32 %v2226, 16
    %v2459 = vrot.slane %v2457, 1
    %v2460 = vsel %vm2252, %v2455, %v2459
    %v2461 = vshrl.u32 %v2226, 16
    %v2463 = vor.u32 %v2461, %v2459
    %v2465 = vshll.u32 %v2227, 16
    %v2467 = vrot.slane %v2465, 1
    %v2468 = vsel %vm2252, %v2463, %v2467
    %v2469 = vshrl.u32 %v2227, 16
    %v2471 = vor.u32 %v2469, %v2467
    %v2473 = vshll.u32 %v2251, 16
    %v2475 = vrot.slane %v2473, 1
    %v2476 = vsel %vm2252, %v2471, %v2475
    %2477 = vrot.lane.b32.xlu0 %v2264, 64
    %v2478 = vpop.permute.xlu0 %2477
    %2479 = vrot.lane.b32.xlu0 %v2272, 64
    %v2480 = vpop.permute.xlu0 %2479
    %2481 = vrot.lane.b32.xlu0 %v2280, 64
    %v2482 = vpop.permute.xlu0 %2481
    %2483 = vrot.lane.b32.xlu0 %v2292, 64
    %v2484 = vpop.permute.xlu0 %2483
    %2485 = vrot.lane.b32.xlu0 %v2300, 64
    %v2486 = vpop.permute.xlu0 %2485
    %2487 = vrot.lane.b32.xlu0 %v2308, 64
    %v2488 = vpop.permute.xlu0 %2487
    %2489 = vrot.lane.b32.xlu0 %v2320, 64
    %v2490 = vpop.permute.xlu0 %2489
    %2491 = vrot.lane.b32.xlu0 %v2328, 64
    %v2492 = vpop.permute.xlu0 %2491
    %2493 = vrot.lane.b32.xlu0 %v2336, 64
    %v2494 = vpop.permute.xlu0 %2493
    %2495 = vrot.lane.b32.xlu0 %v2348, 64
    %v2496 = vpop.permute.xlu0 %2495
    %2497 = vrot.lane.b32.xlu0 %v2356, 64
    %v2498 = vpop.permute.xlu0 %2497
    %2499 = vrot.lane.b32.xlu0 %v2364, 64
    %v2500 = vpop.permute.xlu0 %2499
    %2501 = vrot.lane.b32.xlu0 %v2376, 64
    %v2502 = vpop.permute.xlu0 %2501
    %2503 = vrot.lane.b32.xlu0 %v2384, 64
    %v2504 = vpop.permute.xlu0 %2503
    %2505 = vrot.lane.b32.xlu0 %v2392, 64
    %v2506 = vpop.permute.xlu0 %2505
    %2507 = vrot.lane.b32.xlu0 %v2404, 64
    %v2508 = vpop.permute.xlu0 %2507
    %2509 = vrot.lane.b32.xlu0 %v2412, 64
    %v2510 = vpop.permute.xlu0 %2509
    %2511 = vrot.lane.b32.xlu0 %v2420, 64
    %v2512 = vpop.permute.xlu0 %2511
    %2513 = vrot.lane.b32.xlu0 %v2432, 64
    %v2514 = vpop.permute.xlu0 %2513
    %2515 = vrot.lane.b32.xlu0 %v2440, 64
    %v2516 = vpop.permute.xlu0 %2515
    %2517 = vrot.lane.b32.xlu0 %v2448, 64
    %v2518 = vpop.permute.xlu0 %2517
    %2519 = vrot.lane.b32.xlu0 %v2460, 64
    %v2520 = vpop.permute.xlu0 %2519
    %2521 = vrot.lane.b32.xlu0 %v2468, 64
    %v2522 = vpop.permute.xlu0 %2521
    %2523 = vrot.lane.b32.xlu0 %v2476, 64
    %v2524 = vpop.permute.xlu0 %2523
    %vm2525 = vcmask 1046528
    %v2526 = vrot.slane %v2204, 1
    %v2527 = vrot.slane %v2205, 1
    %v2528 = vsel %vm2525, %v2526, %v2527
    %v2529 = vrot.slane %v2206, 1
    %v2530 = vsel %vm2525, %v2527, %v2529
    %v2531 = vrot.slane %v2244, 1
    %v2532 = vsel %vm2525, %v2529, %v2531
    %v2533 = vrot.slane %v2207, 1
    %v2534 = vrot.slane %v2208, 1
    %v2535 = vsel %vm2525, %v2533, %v2534
    %v2536 = vrot.slane %v2209, 1
    %v2537 = vsel %vm2525, %v2534, %v2536
    %v2538 = vrot.slane %v2245, 1
    %v2539 = vsel %vm2525, %v2536, %v2538
    %v2540 = vrot.slane %v2210, 1
    %v2541 = vrot.slane %v2211, 1
    %v2542 = vsel %vm2525, %v2540, %v2541
    %v2543 = vrot.slane %v2212, 1
    %v2544 = vsel %vm2525, %v2541, %v2543
    %v2545 = vrot.slane %v2246, 1
    %v2546 = vsel %vm2525, %v2543, %v2545
    %v2547 = vrot.slane %v2213, 1
    %v2548 = vrot.slane %v2214, 1
    %v2549 = vsel %vm2525, %v2547, %v2548
    %v2550 = vrot.slane %v2215, 1
    %v2551 = vsel %vm2525, %v2548, %v2550
    %v2552 = vrot.slane %v2247, 1
    %v2553 = vsel %vm2525, %v2550, %v2552
    %v2554 = vrot.slane %v2216, 1
    %v2555 = vrot.slane %v2217, 1
    %v2556 = vsel %vm2525, %v2554, %v2555
    %v2557 = vrot.slane %v2218, 1
    %v2558 = vsel %vm2525, %v2555, %v2557
    %v2559 = vrot.slane %v2248, 1
    %v2560 = vsel %vm2525, %v2557, %v2559
    %v2561 = vrot.slane %v2219, 1
    %v2562 = vrot.slane %v2220, 1
    %v2563 = vsel %vm2525, %v2561, %v2562
    %v2564 = vrot.slane %v2221, 1
    %v2565 = vsel %vm2525, %v2562, %v2564
    %v2566 = vrot.slane %v2249, 1
    %v2567 = vsel %vm2525, %v2564, %v2566
    %v2568 = vrot.slane %v2222, 1
    %v2569 = vrot.slane %v2223, 1
    %v2570 = vsel %vm2525, %v2568, %v2569
    %v2571 = vrot.slane %v2224, 1
    %v2572 = vsel %vm2525, %v2569, %v2571
    %v2573 = vrot.slane %v2250, 1
    %v2574 = vsel %vm2525, %v2571, %v2573
    %v2575 = vrot.slane %v2225, 1
    %v2576 = vrot.slane %v2226, 1
    %v2577 = vsel %vm2525, %v2575, %v2576
    %v2578 = vrot.slane %v2227, 1
    %v2579 = vsel %vm2525, %v2576, %v2578
    %v2580 = vrot.slane %v2251, 1
    %v2581 = vsel %vm2525, %v2578, %v2580
    %vm2582 = vsmask.f32 6400
    %v2583 = vrot.slane %v2254, 1
    %v2584 = vrot.slane %v2256, 2
    %v2585 = vor.u32 %v2583, %v2584
    %v2586 = vrot.slane %v2265, 1
    %v2587 = vrot.slane %v2261, 2
    %v2588 = vor.u32 %v2586, %v2587
    %v2589 = vsel %vm2582, %v2585, %v2588
    %v2590 = vrot.slane %v2273, 1
    %v2591 = vrot.slane %v2269, 2
    %v2592 = vor.u32 %v2590, %v2591
    %v2593 = vsel %vm2582, %v2588, %v2592
    %v2594 = vshrl.u32 %v2244, 16
    %v2596 = vrot.slane %v2594, 1
    %v2597 = vrot.slane %v2277, 2
    %v2598 = vor.u32 %v2596, %v2597
    %v2599 = vsel %vm2582, %v2592, %v2598
    %v2600 = vrot.slane %v2282, 1
    %v2601 = vrot.slane %v2284, 2
    %v2602 = vor.u32 %v2600, %v2601
    %v2603 = vrot.slane %v2293, 1
    %v2604 = vrot.slane %v2289, 2
    %v2605 = vor.u32 %v2603, %v2604
    %v2606 = vsel %vm2582, %v2602, %v2605
    %v2607 = vrot.slane %v2301, 1
    %v2608 = vrot.slane %v2297, 2
    %v2609 = vor.u32 %v2607, %v2608
    %v2610 = vsel %vm2582, %v2605, %v2609
    %v2611 = vshrl.u32 %v2245, 16
    %v2613 = vrot.slane %v2611, 1
    %v2614 = vrot.slane %v2305, 2
    %v2615 = vor.u32 %v2613, %v2614
    %v2616 = vsel %vm2582, %v2609, %v2615
    %v2617 = vrot.slane %v2310, 1
    %v2618 = vrot.slane %v2312, 2
    %v2619 = vor.u32 %v2617, %v2618
    %v2620 = vrot.slane %v2321, 1
    %v2621 = vrot.slane %v2317, 2
    %v2622 = vor.u32 %v2620, %v2621
    %v2623 = vsel %vm2582, %v2619, %v2622
    %v2624 = vrot.slane %v2329, 1
    %v2625 = vrot.slane %v2325, 2
    %v2626 = vor.u32 %v2624, %v2625
    %v2627 = vsel %vm2582, %v2622, %v2626
    %v2628 = vshrl.u32 %v2246, 16
    %v2630 = vrot.slane %v2628, 1
    %v2631 = vrot.slane %v2333, 2
    %v2632 = vor.u32 %v2630, %v2631
    %v2633 = vsel %vm2582, %v2626, %v2632
    %v2634 = vrot.slane %v2338, 1
    %v2635 = vrot.slane %v2340, 2
    %v2636 = vor.u32 %v2634, %v2635
    %v2637 = vrot.slane %v2349, 1
    %v2638 = vrot.slane %v2345, 2
    %v2639 = vor.u32 %v2637, %v2638
    %v2640 = vsel %vm2582, %v2636, %v2639
    %v2641 = vrot.slane %v2357, 1
    %v2642 = vrot.slane %v2353, 2
    %v2643 = vor.u32 %v2641, %v2642
    %v2644 = vsel %vm2582, %v2639, %v2643
    %v2645 = vshrl.u32 %v2247, 16
    %v2647 = vrot.slane %v2645, 1
    %v2648 = vrot.slane %v2361, 2
    %v2649 = vor.u32 %v2647, %v2648
    %v2650 = vsel %vm2582, %v2643, %v2649
    %v2651 = vrot.slane %v2366, 1
    %v2652 = vrot.slane %v2368, 2
    %v2653 = vor.u32 %v2651, %v2652
    %v2654 = vrot.slane %v2377, 1
    %v2655 = vrot.slane %v2373, 2
    %v2656 = vor.u32 %v2654, %v2655
    %v2657 = vsel %vm2582, %v2653, %v2656
    %v2658 = vrot.slane %v2385, 1
    %v2659 = vrot.slane %v2381, 2
    %v2660 = vor.u32 %v2658, %v2659
    %v2661 = vsel %vm2582, %v2656, %v2660
    %v2662 = vshrl.u32 %v2248, 16
    %v2664 = vrot.slane %v2662, 1
    %v2665 = vrot.slane %v2389, 2
    %v2666 = vor.u32 %v2664, %v2665
    %v2667 = vsel %vm2582, %v2660, %v2666
    %v2668 = vrot.slane %v2394, 1
    %v2669 = vrot.slane %v2396, 2
    %v2670 = vor.u32 %v2668, %v2669
    %v2671 = vrot.slane %v2405, 1
    %v2672 = vrot.slane %v2401, 2
    %v2673 = vor.u32 %v2671, %v2672
    %v2674 = vsel %vm2582, %v2670, %v2673
    %v2675 = vrot.slane %v2413, 1
    %v2676 = vrot.slane %v2409, 2
    %v2677 = vor.u32 %v2675, %v2676
    %v2678 = vsel %vm2582, %v2673, %v2677
    %v2679 = vshrl.u32 %v2249, 16
    %v2681 = vrot.slane %v2679, 1
    %v2682 = vrot.slane %v2417, 2
    %v2683 = vor.u32 %v2681, %v2682
    %v2684 = vsel %vm2582, %v2677, %v2683
    %v2685 = vrot.slane %v2422, 1
    %v2686 = vrot.slane %v2424, 2
    %v2687 = vor.u32 %v2685, %v2686
    %v2688 = vrot.slane %v2433, 1
    %v2689 = vrot.slane %v2429, 2
    %v2690 = vor.u32 %v2688, %v2689
    %v2691 = vsel %vm2582, %v2687, %v2690
    %v2692 = vrot.slane %v2441, 1
    %v2693 = vrot.slane %v2437, 2
    %v2694 = vor.u32 %v2692, %v2693
    %v2695 = vsel %vm2582, %v2690, %v2694
    %v2696 = vshrl.u32 %v2250, 16
    %v2698 = vrot.slane %v2696, 1
    %v2699 = vrot.slane %v2445, 2
    %v2700 = vor.u32 %v2698, %v2699
    %v2701 = vsel %vm2582, %v2694, %v2700
    %v2702 = vrot.slane %v2450, 1
    %v2703 = vrot.slane %v2452, 2
    %v2704 = vor.u32 %v2702, %v2703
    %v2705 = vrot.slane %v2461, 1
    %v2706 = vrot.slane %v2457, 2
    %v2707 = vor.u32 %v2705, %v2706
    %v2708 = vsel %vm2582, %v2704, %v2707
    %v2709 = vrot.slane %v2469, 1
    %v2710 = vrot.slane %v2465, 2
    %v2711 = vor.u32 %v2709, %v2710
    %v2712 = vsel %vm2582, %v2707, %v2711
    %v2713 = vshrl.u32 %v2251, 16
    %v2715 = vrot.slane %v2713, 1
    %v2716 = vrot.slane %v2473, 2
    %v2717 = vor.u32 %v2715, %v2716
    %v2718 = vsel %vm2582, %v2711, %v2717
    %2719 = vrot.lane.b32.xlu0 %v2589, 64
    %v2720 = vpop.permute.xlu0 %2719
    %2721 = vrot.lane.b32.xlu0 %v2593, 64
    %v2722 = vpop.permute.xlu0 %2721
    %2723 = vrot.lane.b32.xlu0 %v2599, 64
    %v2724 = vpop.permute.xlu0 %2723
    %2725 = vrot.lane.b32.xlu0 %v2606, 64
    %v2726 = vpop.permute.xlu0 %2725
    %2727 = vrot.lane.b32.xlu0 %v2610, 64
    %v2728 = vpop.permute.xlu0 %2727
    %2729 = vrot.lane.b32.xlu0 %v2616, 64
    %v2730 = vpop.permute.xlu0 %2729
    %2731 = vrot.lane.b32.xlu0 %v2623, 64
    %v2732 = vpop.permute.xlu0 %2731
    %2733 = vrot.lane.b32.xlu0 %v2627, 64
    %v2734 = vpop.permute.xlu0 %2733
    %2735 = vrot.lane.b32.xlu0 %v2633, 64
    %v2736 = vpop.permute.xlu0 %2735
    %2737 = vrot.lane.b32.xlu0 %v2640, 64
    %v2738 = vpop.permute.xlu0 %2737
    %2739 = vrot.lane.b32.xlu0 %v2644, 64
    %v2740 = vpop.permute.xlu0 %2739
    %2741 = vrot.lane.b32.xlu0 %v2650, 64
    %v2742 = vpop.permute.xlu0 %2741
    %2743 = vrot.lane.b32.xlu0 %v2657, 64
    %v2744 = vpop.permute.xlu0 %2743
    %2745 = vrot.lane.b32.xlu0 %v2661, 64
    %v2746 = vpop.permute.xlu0 %2745
    %2747 = vrot.lane.b32.xlu0 %v2667, 64
    %v2748 = vpop.permute.xlu0 %2747
    %2749 = vrot.lane.b32.xlu0 %v2674, 64
    %v2750 = vpop.permute.xlu0 %2749
    %2751 = vrot.lane.b32.xlu0 %v2678, 64
    %v2752 = vpop.permute.xlu0 %2751
    %2753 = vrot.lane.b32.xlu0 %v2684, 64
    %v2754 = vpop.permute.xlu0 %2753
    %2755 = vrot.lane.b32.xlu0 %v2691, 64
    %v2756 = vpop.permute.xlu0 %2755
    %2757 = vrot.lane.b32.xlu0 %v2695, 64
    %v2758 = vpop.permute.xlu0 %2757
    %2759 = vrot.lane.b32.xlu0 %v2701, 64
    %v2760 = vpop.permute.xlu0 %2759
    %2761 = vrot.lane.b32.xlu0 %v2708, 64
    %v2762 = vpop.permute.xlu0 %2761
    %2763 = vrot.lane.b32.xlu0 %v2712, 64
    %v2764 = vpop.permute.xlu0 %2763
    %2765 = vrot.lane.b32.xlu0 %v2718, 64
    %v2766 = vpop.permute.xlu0 %2765
    %vm2767 = vcmask 1045504
    %v2768 = vrot.slane %v2204, 2
    %v2769 = vrot.slane %v2205, 2
    %v2770 = vsel %vm2767, %v2768, %v2769
    %v2771 = vrot.slane %v2206, 2
    %v2772 = vsel %vm2767, %v2769, %v2771
    %v2773 = vrot.slane %v2244, 2
    %v2774 = vsel %vm2767, %v2771, %v2773
    %v2775 = vrot.slane %v2207, 2
    %v2776 = vrot.slane %v2208, 2
    %v2777 = vsel %vm2767, %v2775, %v2776
    %v2778 = vrot.slane %v2209, 2
    %v2779 = vsel %vm2767, %v2776, %v2778
    %v2780 = vrot.slane %v2245, 2
    %v2781 = vsel %vm2767, %v2778, %v2780
    %v2782 = vrot.slane %v2210, 2
    %v2783 = vrot.slane %v2211, 2
    %v2784 = vsel %vm2767, %v2782, %v2783
    %v2785 = vrot.slane %v2212, 2
    %v2786 = vsel %vm2767, %v2783, %v2785
    %v2787 = vrot.slane %v2246, 2
    %v2788 = vsel %vm2767, %v2785, %v2787
    %v2789 = vrot.slane %v2213, 2
    %v2790 = vrot.slane %v2214, 2
    %v2791 = vsel %vm2767, %v2789, %v2790
    %v2792 = vrot.slane %v2215, 2
    %v2793 = vsel %vm2767, %v2790, %v2792
    %v2794 = vrot.slane %v2247, 2
    %v2795 = vsel %vm2767, %v2792, %v2794
    %v2796 = vrot.slane %v2216, 2
    %v2797 = vrot.slane %v2217, 2
    %v2798 = vsel %vm2767, %v2796, %v2797
    %v2799 = vrot.slane %v2218, 2
    %v2800 = vsel %vm2767, %v2797, %v2799
    %v2801 = vrot.slane %v2248, 2
    %v2802 = vsel %vm2767, %v2799, %v2801
    %v2803 = vrot.slane %v2219, 2
    %v2804 = vrot.slane %v2220, 2
    %v2805 = vsel %vm2767, %v2803, %v2804
    %v2806 = vrot.slane %v2221, 2
    %v2807 = vsel %vm2767, %v2804, %v2806
    %v2808 = vrot.slane %v2249, 2
    %v2809 = vsel %vm2767, %v2806, %v2808
    %v2810 = vrot.slane %v2222, 2
    %v2811 = vrot.slane %v2223, 2
    %v2812 = vsel %vm2767, %v2810, %v2811
    %v2813 = vrot.slane %v2224, 2
    %v2814 = vsel %vm2767, %v2811, %v2813
    %v2815 = vrot.slane %v2250, 2
    %v2816 = vsel %vm2767, %v2813, %v2815
    %v2817 = vrot.slane %v2225, 2
    %v2818 = vrot.slane %v2226, 2
    %v2819 = vsel %vm2767, %v2817, %v2818
    %v2820 = vrot.slane %v2227, 2
    %v2821 = vsel %vm2767, %v2818, %v2820
    %v2822 = vrot.slane %v2251, 2
    %v2823 = vsel %vm2767, %v2820, %v2822
    %vm2824 = vcmask 523264
    %v2826 = vsel %vm2824, %v2204, %v2478
    %v2829 = vsel %vm2824, %v2205, %v2480
    %v2832 = vsel %vm2824, %v2206, %v2482
    %v2835 = vsel %vm2824, %v2207, %v2484
    %v2838 = vsel %vm2824, %v2208, %v2486
    %v2841 = vsel %vm2824, %v2209, %v2488
    %v2844 = vsel %vm2824, %v2210, %v2490
    %v2847 = vsel %vm2824, %v2211, %v2492
    %v2850 = vsel %vm2824, %v2212, %v2494
    %v2853 = vsel %vm2824, %v2213, %v2496
    %v2856 = vsel %vm2824, %v2214, %v2498
    %v2859 = vsel %vm2824, %v2215, %v2500
    %v2862 = vsel %vm2824, %v2216, %v2502
    %v2865 = vsel %vm2824, %v2217, %v2504
    %v2868 = vsel %vm2824, %v2218, %v2506
    %v2871 = vsel %vm2824, %v2219, %v2508
    %v2874 = vsel %vm2824, %v2220, %v2510
    %v2877 = vsel %vm2824, %v2221, %v2512
    %v2880 = vsel %vm2824, %v2222, %v2514
    %v2883 = vsel %vm2824, %v2223, %v2516
    %v2886 = vsel %vm2824, %v2224, %v2518
    %v2889 = vsel %vm2824, %v2225, %v2520
    %v2892 = vsel %vm2824, %v2226, %v2522
    %v2895 = vsel %vm2824, %v2227, %v2524
    %v2899 = vsel %vm2824, %v2528, %v2720
    %v2903 = vsel %vm2824, %v2530, %v2722
    %v2907 = vsel %vm2824, %v2532, %v2724
    %v2911 = vsel %vm2824, %v2535, %v2726
    %v2915 = vsel %vm2824, %v2537, %v2728
    %v2919 = vsel %vm2824, %v2539, %v2730
    %v2923 = vsel %vm2824, %v2542, %v2732
    %v2927 = vsel %vm2824, %v2544, %v2734
    %v2931 = vsel %vm2824, %v2546, %v2736
    %v2935 = vsel %vm2824, %v2549, %v2738
    %v2939 = vsel %vm2824, %v2551, %v2740
    %v2943 = vsel %vm2824, %v2553, %v2742
    %v2947 = vsel %vm2824, %v2556, %v2744
    %v2951 = vsel %vm2824, %v2558, %v2746
    %v2955 = vsel %vm2824, %v2560, %v2748
    %v2959 = vsel %vm2824, %v2563, %v2750
    %v2963 = vsel %vm2824, %v2565, %v2752
    %v2967 = vsel %vm2824, %v2567, %v2754
    %v2971 = vsel %vm2824, %v2570, %v2756
    %v2975 = vsel %vm2824, %v2572, %v2758
    %v2979 = vsel %vm2824, %v2574, %v2760
    %v2983 = vsel %vm2824, %v2577, %v2762
    %v2987 = vsel %vm2824, %v2579, %v2764
    %v2991 = vsel %vm2824, %v2581, %v2766
    %v2993 = vld [vmem:[%s3] sm:$0xf]
    %v2994 = vld [vmem:[%s3 + $0x4] sm:$0xf]
    %v2995 = vld [vmem:[%s3 + $0x8] sm:$0xf]
    %v2996 = vld [vmem:[%s3 + $0xc] sm:$0xf]
    %v2997 = vld [vmem:[%s3 + $0x10] sm:$0xf]
    %v2998 = vld [vmem:[%s3 + $0x14] sm:$0xf]
    %v2999 = vld [vmem:[%s3 + $0x18] sm:$0xf]
    %v3000 = vld [vmem:[%s3 + $0x1c] sm:$0xf]
    %v3001 = vld [vmem:[%s3 + $0x20] sm:$0xf]
    %v3002 = vld [vmem:[%s3 + $0x24] sm:$0xf]
    %v3003 = vld [vmem:[%s3 + $0x28] sm:$0xf]
    %v3004 = vld [vmem:[%s3 + $0x2c] sm:$0xf]
    %v3005 = vld [vmem:[%s3 + $0x30] sm:$0xf]
    %v3006 = vld [vmem:[%s3 + $0x34] sm:$0xf]
    %v3007 = vld [vmem:[%s3 + $0x38] sm:$0xf]
    %v3008 = vld [vmem:[%s3 + $0x3c] sm:$0xf]
    %v3009 = vld [vmem:[%s3 + $0x40] sm:$0xf]
    %v3010 = vld [vmem:[%s3 + $0x44] sm:$0xf]
    %v3011 = vld [vmem:[%s3 + $0x48] sm:$0xf]
    %v3012 = vld [vmem:[%s3 + $0x4c] sm:$0xf]
    %v3013 = vld [vmem:[%s3 + $0x50] sm:$0xf]
    %v3014 = vld [vmem:[%s3 + $0x54] sm:$0xf]
    %v3015 = vld [vmem:[%s3 + $0x58] sm:$0xf]
    %v3016 = vld [vmem:[%s3 + $0x5c] sm:$0xf]
    %v3017 = vld [vmem:[%s3 + $0x60] sm:$0xf]
    %v3018 = vld [vmem:[%s3 + $0x64] sm:$0xf]
    %v3019 = vld [vmem:[%s3 + $0x68] sm:$0xf]
    %v3020 = vld [vmem:[%s3 + $0x6c] sm:$0xf]
    %v3021 = vld [vmem:[%s3 + $0x70] sm:$0xf]
    %v3022 = vld [vmem:[%s3 + $0x74] sm:$0xf]
    %v3023 = vld [vmem:[%s3 + $0x78] sm:$0xf]
    %v3024 = vld [vmem:[%s3 + $0x7c] sm:$0xf]
    %v3025 = vld [vmem:[%s3 + $0x80] sm:$0xf]
    %v3026 = vld [vmem:[%s3 + $0x84] sm:$0xf]
    %v3027 = vld [vmem:[%s3 + $0x88] sm:$0xf]
    %v3028 = vld [vmem:[%s3 + $0x8c] sm:$0xf]
    %v3029 = vld [vmem:[%s3 + $0x90] sm:$0xf]
    %v3030 = vld [vmem:[%s3 + $0x94] sm:$0xf]
    %v3031 = vld [vmem:[%s3 + $0x98] sm:$0xf]
    %v3032 = vld [vmem:[%s3 + $0x9c] sm:$0xf]
    %v3033 = vld [vmem:[%s4] sm:$0x1]
    %v3035 = vperm.slane %v3033, 0
    %v3077 = vunpack.c.l.b16 %v2993
    %v3078 = vunpack.c.l.b16 %v2994
    %v3079 = vunpack.c.l.b16 %v2995
    %v3080 = vunpack.c.l.b16 %v2996
    %v3081 = vunpack.c.l.b16 %v2997
    %v3082 = vunpack.c.l.b16 %v2998
    %v3083 = vunpack.c.l.b16 %v2999
    %v3084 = vunpack.c.l.b16 %v3000
    %v3085 = vunpack.c.l.b16 %v3001
    %v3086 = vunpack.c.l.b16 %v3002
    %v3087 = vunpack.c.l.b16 %v3003
    %v3088 = vunpack.c.l.b16 %v3004
    %v3089 = vunpack.c.l.b16 %v3005
    %v3090 = vunpack.c.l.b16 %v3006
    %v3091 = vunpack.c.l.b16 %v3007
    %v3092 = vunpack.c.l.b16 %v3008
    %v3093 = vunpack.c.l.b16 %v3009
    %v3094 = vunpack.c.l.b16 %v3010
    %v3095 = vunpack.c.l.b16 %v3011
    %v3096 = vunpack.c.l.b16 %v3012
    %v3097 = vunpack.c.l.b16 %v3013
    %v3098 = vunpack.c.l.b16 %v3014
    %v3099 = vunpack.c.l.b16 %v3015
    %v3100 = vunpack.c.l.b16 %v3016
    %v3101 = vunpack.c.l.b16 %v3017
    %v3102 = vunpack.c.l.b16 %v3018
    %v3103 = vunpack.c.l.b16 %v3019
    %v3104 = vunpack.c.l.b16 %v3020
    %v3105 = vunpack.c.l.b16 %v3021
    %v3106 = vunpack.c.l.b16 %v3022
    %v3107 = vunpack.c.l.b16 %v3023
    %v3108 = vunpack.c.l.b16 %v3024
    %v3109 = vunpack.c.l.b16 %v3025
    %v3110 = vunpack.c.l.b16 %v3026
    %v3111 = vunpack.c.l.b16 %v3027
    %v3112 = vunpack.c.l.b16 %v3028
    %v3113 = vunpack.c.l.b16 %v3029
    %v3114 = vunpack.c.l.b16 %v3030
    %v3115 = vunpack.c.l.b16 %v3031
    %v3116 = vunpack.c.l.b16 %v3032
    %v3117 = vpack.c.b16 %v3078, %v3077
    %v3118 = vpack.c.b16 %v3080, %v3079
    %v3119 = vpack.c.b16 %v3082, %v3081
    %v3120 = vpack.c.b16 %v3084, %v3083
    %v3121 = vpack.c.b16 %v3086, %v3085
    %v3122 = vpack.c.b16 %v3088, %v3087
    %v3123 = vpack.c.b16 %v3090, %v3089
    %v3124 = vpack.c.b16 %v3092, %v3091
    %v3125 = vpack.c.b16 %v3094, %v3093
    %v3126 = vpack.c.b16 %v3096, %v3095
    %v3127 = vpack.c.b16 %v3098, %v3097
    %v3128 = vpack.c.b16 %v3100, %v3099
    %v3129 = vpack.c.b16 %v3102, %v3101
    %v3130 = vpack.c.b16 %v3104, %v3103
    %v3131 = vpack.c.b16 %v3106, %v3105
    %v3132 = vpack.c.b16 %v3108, %v3107
    %v3133 = vpack.c.b16 %v3110, %v3109
    %v3134 = vpack.c.b16 %v3112, %v3111
    %v3135 = vpack.c.b16 %v3114, %v3113
    %v3136 = vpack.c.b16 %v3116, %v3115
    %v3158 = vsel %vm2824, %v2770, 0
    %v3161 = vsel %vm2824, %v2772, 0
    %v3164 = vsel %vm2824, %v2774, 0
    %v3167 = vsel %vm2824, %v2777, 0
    %v3170 = vsel %vm2824, %v2779, 0
    %v3173 = vsel %vm2824, %v2781, 0
    %v3176 = vsel %vm2824, %v2784, 0
    %v3179 = vsel %vm2824, %v2786, 0
    %v3182 = vsel %vm2824, %v2788, 0
    %v3185 = vsel %vm2824, %v2791, 0
    %v3188 = vsel %vm2824, %v2793, 0
    %v3191 = vsel %vm2824, %v2795, 0
    %v3194 = vsel %vm2824, %v2798, 0
    %v3197 = vsel %vm2824, %v2800, 0
    %v3200 = vsel %vm2824, %v2802, 0
    %v3203 = vsel %vm2824, %v2805, 0
    %v3206 = vsel %vm2824, %v2807, 0
    %v3209 = vsel %vm2824, %v2809, 0
    %v3212 = vsel %vm2824, %v2812, 0
    %v3215 = vsel %vm2824, %v2814, 0
    %v3218 = vsel %vm2824, %v2816, 0
    %v3221 = vsel %vm2824, %v2819, 0
    %v3224 = vsel %vm2824, %v2821, 0
    %v3227 = vsel %vm2824, %v2823, 0
    %3229 = vmatpush.bf16.msra.mxu0 %v3124
    %3230 = vmatpush.bf16.msra.mxu0 %v3123
    %3231 = vmatpush.bf16.msra.mxu0 %v3122
    %3232 = vmatpush.bf16.msra.mxu0 %v3121
    %3233 = vmatpush.bf16.msra.mxu0 %v3120
    %3234 = vmatpush.bf16.msra.mxu0 %v3119
    %3235 = vmatpush.bf16.msra.mxu0 %v3118
    %3236 = vmatpush.bf16.msra.mxu0 %v3117
    %3237 = vmatmul.bf16.gmra.mxu0 %v2826
    %v3238 = vpop.f32.mrf.mxu0
    %v3239 = vadd.f32 %v3035, %v3238
    %v3240 = vpop.f32.mrf.mxu0
    %v3241 = vadd.f32 %v3035, %v3240
    %3242 = vmatmul.bf16.gmra.mxu0 %v2829
    %v3243 = vpop.f32.mrf.mxu0
    %v3244 = vadd.f32 %v3035, %v3243
    %v3245 = vpop.f32.mrf.mxu0
    %v3246 = vadd.f32 %v3035, %v3245
    %3247 = vmatmul.bf16.gmra.mxu0 %v2832
    %v3248 = vpop.f32.mrf.mxu0
    %v3249 = vadd.f32 %v3035, %v3248
    %v3250 = vpop.f32.mrf.mxu0
    %3251 = vmatmul.bf16.gmra.mxu0 %v2835
    %v3252 = vpop.f32.mrf.mxu0
    %v3253 = vadd.f32 %v3035, %v3252
    %v3254 = vpop.f32.mrf.mxu0
    %v3255 = vadd.f32 %v3035, %v3254
    %3256 = vmatmul.bf16.gmra.mxu0 %v2838
    %v3257 = vpop.f32.mrf.mxu0
    %v3258 = vadd.f32 %v3035, %v3257
    %v3259 = vpop.f32.mrf.mxu0
    %v3260 = vadd.f32 %v3035, %v3259
    %3261 = vmatmul.bf16.gmra.mxu0 %v2841
    %v3262 = vpop.f32.mrf.mxu0
    %v3263 = vadd.f32 %v3035, %v3262
    %v3264 = vpop.f32.mrf.mxu0
    %3265 = vmatmul.bf16.gmra.mxu0 %v2844
    %v3266 = vpop.f32.mrf.mxu0
    %v3267 = vadd.f32 %v3035, %v3266
    %v3268 = vpop.f32.mrf.mxu0
    %v3269 = vadd.f32 %v3035, %v3268
    %3270 = vmatmul.bf16.gmra.mxu0 %v2847
    %v3271 = vpop.f32.mrf.mxu0
    %v3272 = vadd.f32 %v3035, %v3271
    %v3273 = vpop.f32.mrf.mxu0
    %v3274 = vadd.f32 %v3035, %v3273
    %3275 = vmatmul.bf16.gmra.mxu0 %v2850
    %v3276 = vpop.f32.mrf.mxu0
    %v3277 = vadd.f32 %v3035, %v3276
    %v3278 = vpop.f32.mrf.mxu0
    %3279 = vmatmul.bf16.gmra.mxu0 %v2853
    %v3280 = vpop.f32.mrf.mxu0
    %v3281 = vadd.f32 %v3035, %v3280
    %v3282 = vpop.f32.mrf.mxu0
    %v3283 = vadd.f32 %v3035, %v3282
    %3284 = vmatmul.bf16.gmra.mxu0 %v2856
    %v3285 = vpop.f32.mrf.mxu0
    %v3286 = vadd.f32 %v3035, %v3285
    %v3287 = vpop.f32.mrf.mxu0
    %v3288 = vadd.f32 %v3035, %v3287
    %3289 = vmatmul.bf16.gmra.mxu0 %v2859
    %v3290 = vpop.f32.mrf.mxu0
    %v3291 = vadd.f32 %v3035, %v3290
    %v3292 = vpop.f32.mrf.mxu0
    %3293 = vmatmul.bf16.gmra.mxu0 %v2862
    %v3294 = vpop.f32.mrf.mxu0
    %v3295 = vadd.f32 %v3035, %v3294
    %v3296 = vpop.f32.mrf.mxu0
    %v3297 = vadd.f32 %v3035, %v3296
    %3298 = vmatmul.bf16.gmra.mxu0 %v2865
    %v3299 = vpop.f32.mrf.mxu0
    %v3300 = vadd.f32 %v3035, %v3299
    %v3301 = vpop.f32.mrf.mxu0
    %v3302 = vadd.f32 %v3035, %v3301
    %3303 = vmatmul.bf16.gmra.mxu0 %v2868
    %v3304 = vpop.f32.mrf.mxu0
    %v3305 = vadd.f32 %v3035, %v3304
    %v3306 = vpop.f32.mrf.mxu0
    %3307 = vmatmul.bf16.gmra.mxu0 %v2871
    %v3308 = vpop.f32.mrf.mxu0
    %v3309 = vadd.f32 %v3035, %v3308
    %v3310 = vpop.f32.mrf.mxu0
    %v3311 = vadd.f32 %v3035, %v3310
    %3312 = vmatmul.bf16.gmra.mxu0 %v2874
    %v3313 = vpop.f32.mrf.mxu0
    %v3314 = vadd.f32 %v3035, %v3313
    %v3315 = vpop.f32.mrf.mxu0
    %v3316 = vadd.f32 %v3035, %v3315
    %3317 = vmatmul.bf16.gmra.mxu0 %v2877
    %v3318 = vpop.f32.mrf.mxu0
    %v3319 = vadd.f32 %v3035, %v3318
    %v3320 = vpop.f32.mrf.mxu0
    %3321 = vmatmul.bf16.gmra.mxu0 %v2880
    %v3322 = vpop.f32.mrf.mxu0
    %v3323 = vadd.f32 %v3035, %v3322
    %v3324 = vpop.f32.mrf.mxu0
    %v3325 = vadd.f32 %v3035, %v3324
    %3326 = vmatmul.bf16.gmra.mxu0 %v2883
    %v3327 = vpop.f32.mrf.mxu0
    %v3328 = vadd.f32 %v3035, %v3327
    %v3329 = vpop.f32.mrf.mxu0
    %v3330 = vadd.f32 %v3035, %v3329
    %3331 = vmatmul.bf16.gmra.mxu0 %v2886
    %v3332 = vpop.f32.mrf.mxu0
    %v3333 = vadd.f32 %v3035, %v3332
    %v3334 = vpop.f32.mrf.mxu0
    %3335 = vmatmul.bf16.gmra.mxu0 %v2889
    %v3336 = vpop.f32.mrf.mxu0
    %v3337 = vadd.f32 %v3035, %v3336
    %v3338 = vpop.f32.mrf.mxu0
    %v3339 = vadd.f32 %v3035, %v3338
    %3340 = vmatmul.bf16.gmra.mxu0 %v2892
    %v3341 = vpop.f32.mrf.mxu0
    %v3342 = vadd.f32 %v3035, %v3341
    %v3343 = vpop.f32.mrf.mxu0
    %v3344 = vadd.f32 %v3035, %v3343
    %3345 = vmatmul.bf16.gmra.mxu0 %v2895
    %v3346 = vpop.f32.mrf.mxu0
    %v3347 = vadd.f32 %v3035, %v3346
    %v3348 = vpop.f32.mrf.mxu0
    %3349 = vdwg.mxu0
    %3350 = vmatpush.bf16.msra.mxu0 %v3132
    %3351 = vmatpush.bf16.msra.mxu0 %v3131
    %3352 = vmatpush.bf16.msra.mxu0 %v3130
    %3353 = vmatpush.bf16.msra.mxu0 %v3129
    %3354 = vmatpush.bf16.msra.mxu0 %v3128
    %3355 = vmatpush.bf16.msra.mxu0 %v3127
    %3356 = vmatpush.bf16.msra.mxu0 %v3126
    %3357 = vmatpush.bf16.msra.mxu0 %v3125
    %3358 = vmatmul.bf16.gmra.mxu0 %v2899
    %v3359 = vpop.f32.mrf.mxu0
    %v3360 = vadd.f32 %v3239, %v3359
    %v3361 = vpop.f32.mrf.mxu0
    %v3362 = vadd.f32 %v3241, %v3361
    %3363 = vmatmul.bf16.gmra.mxu0 %v2903
    %v3364 = vpop.f32.mrf.mxu0
    %v3365 = vadd.f32 %v3244, %v3364
    %v3366 = vpop.f32.mrf.mxu0
    %v3367 = vadd.f32 %v3246, %v3366
    %3368 = vmatmul.bf16.gmra.mxu0 %v2907
    %v3369 = vpop.f32.mrf.mxu0
    %v3370 = vadd.f32 %v3249, %v3369
    %v3371 = vpop.f32.mrf.mxu0
    %3372 = vmatmul.bf16.gmra.mxu0 %v2911
    %v3373 = vpop.f32.mrf.mxu0
    %v3374 = vadd.f32 %v3253, %v3373
    %v3375 = vpop.f32.mrf.mxu0
    %v3376 = vadd.f32 %v3255, %v3375
    %3377 = vmatmul.bf16.gmra.mxu0 %v2915
    %v3378 = vpop.f32.mrf.mxu0
    %v3379 = vadd.f32 %v3258, %v3378
    %v3380 = vpop.f32.mrf.mxu0
    %v3381 = vadd.f32 %v3260, %v3380
    %3382 = vmatmul.bf16.gmra.mxu0 %v2919
    %v3383 = vpop.f32.mrf.mxu0
    %v3384 = vadd.f32 %v3263, %v3383
    %v3385 = vpop.f32.mrf.mxu0
    %3386 = vmatmul.bf16.gmra.mxu0 %v2923
    %v3387 = vpop.f32.mrf.mxu0
    %v3388 = vadd.f32 %v3267, %v3387
    %v3389 = vpop.f32.mrf.mxu0
    %v3390 = vadd.f32 %v3269, %v3389
    %3391 = vmatmul.bf16.gmra.mxu0 %v2927
    %v3392 = vpop.f32.mrf.mxu0
    %v3393 = vadd.f32 %v3272, %v3392
    %v3394 = vpop.f32.mrf.mxu0
    %v3395 = vadd.f32 %v3274, %v3394
    %3396 = vmatmul.bf16.gmra.mxu0 %v2931
    %v3397 = vpop.f32.mrf.mxu0
    %v3398 = vadd.f32 %v3277, %v3397
    %v3399 = vpop.f32.mrf.mxu0
    %3400 = vmatmul.bf16.gmra.mxu0 %v2935
    %v3401 = vpop.f32.mrf.mxu0
    %v3402 = vadd.f32 %v3281, %v3401
    %v3403 = vpop.f32.mrf.mxu0
    %v3404 = vadd.f32 %v3283, %v3403
    %3405 = vmatmul.bf16.gmra.mxu0 %v2939
    %v3406 = vpop.f32.mrf.mxu0
    %v3407 = vadd.f32 %v3286, %v3406
    %v3408 = vpop.f32.mrf.mxu0
    %v3409 = vadd.f32 %v3288, %v3408
    %3410 = vmatmul.bf16.gmra.mxu0 %v2943
    %v3411 = vpop.f32.mrf.mxu0
    %v3412 = vadd.f32 %v3291, %v3411
    %v3413 = vpop.f32.mrf.mxu0
    %3414 = vmatmul.bf16.gmra.mxu0 %v2947
    %v3415 = vpop.f32.mrf.mxu0
    %v3416 = vadd.f32 %v3295, %v3415
    %v3417 = vpop.f32.mrf.mxu0
    %v3418 = vadd.f32 %v3297, %v3417
    %3419 = vmatmul.bf16.gmra.mxu0 %v2951
    %v3420 = vpop.f32.mrf.mxu0
    %v3421 = vadd.f32 %v3300, %v3420
    %v3422 = vpop.f32.mrf.mxu0
    %v3423 = vadd.f32 %v3302, %v3422
    %3424 = vmatmul.bf16.gmra.mxu0 %v2955
    %v3425 = vpop.f32.mrf.mxu0
    %v3426 = vadd.f32 %v3305, %v3425
    %v3427 = vpop.f32.mrf.mxu0
    %3428 = vmatmul.bf16.gmra.mxu0 %v2959
    %v3429 = vpop.f32.mrf.mxu0
    %v3430 = vadd.f32 %v3309, %v3429
    %v3431 = vpop.f32.mrf.mxu0
    %v3432 = vadd.f32 %v3311, %v3431
    %3433 = vmatmul.bf16.gmra.mxu0 %v2963
    %v3434 = vpop.f32.mrf.mxu0
    %v3435 = vadd.f32 %v3314, %v3434
    %v3436 = vpop.f32.mrf.mxu0
    %v3437 = vadd.f32 %v3316, %v3436
    %3438 = vmatmul.bf16.gmra.mxu0 %v2967
    %v3439 = vpop.f32.mrf.mxu0
    %v3440 = vadd.f32 %v3319, %v3439
    %v3441 = vpop.f32.mrf.mxu0
    %3442 = vmatmul.bf16.gmra.mxu0 %v2971
    %v3443 = vpop.f32.mrf.mxu0
    %v3444 = vadd.f32 %v3323, %v3443
    %v3445 = vpop.f32.mrf.mxu0
    %v3446 = vadd.f32 %v3325, %v3445
    %3447 = vmatmul.bf16.gmra.mxu0 %v2975
    %v3448 = vpop.f32.mrf.mxu0
    %v3449 = vadd.f32 %v3328, %v3448
    %v3450 = vpop.f32.mrf.mxu0
    %v3451 = vadd.f32 %v3330, %v3450
    %3452 = vmatmul.bf16.gmra.mxu0 %v2979
    %v3453 = vpop.f32.mrf.mxu0
    %v3454 = vadd.f32 %v3333, %v3453
    %v3455 = vpop.f32.mrf.mxu0
    %3456 = vmatmul.bf16.gmra.mxu0 %v2983
    %v3457 = vpop.f32.mrf.mxu0
    %v3458 = vadd.f32 %v3337, %v3457
    %v3459 = vpop.f32.mrf.mxu0
    %v3460 = vadd.f32 %v3339, %v3459
    %3461 = vmatmul.bf16.gmra.mxu0 %v2987
    %v3462 = vpop.f32.mrf.mxu0
    %v3463 = vadd.f32 %v3342, %v3462
    %v3464 = vpop.f32.mrf.mxu0
    %v3465 = vadd.f32 %v3344, %v3464
    %3466 = vmatmul.bf16.gmra.mxu0 %v2991
    %v3467 = vpop.f32.mrf.mxu0
    %v3468 = vadd.f32 %v3347, %v3467
    %v3469 = vpop.f32.mrf.mxu0
    %3470 = vdwg.mxu0
    %3471 = vmatpush.bf16.msra.mxu0 0
    %3472 = vmatpush.bf16.msra.mxu0 0
    %3473 = vmatpush.bf16.msra.mxu0 0
    %3474 = vmatpush.bf16.msra.mxu0 0
    %3475 = vmatpush.bf16.msra.mxu0 %v3136
    %3476 = vmatpush.bf16.msra.mxu0 %v3135
    %3477 = vmatpush.bf16.msra.mxu0 %v3134
    %3478 = vmatpush.bf16.msra.mxu0 %v3133
    %3479 = vmatmul.bf16.gmra.mxu0 %v3158
    %v3480 = vpop.f32.mrf.mxu0
    %v3481 = vadd.f32 %v3360, %v3480
    %v3482 = vpop.f32.mrf.mxu0
    %v3483 = vadd.f32 %v3362, %v3482
    %3484 = vmatmul.bf16.gmra.mxu0 %v3161
    %v3485 = vpop.f32.mrf.mxu0
    %v3486 = vadd.f32 %v3365, %v3485
    %v3487 = vpop.f32.mrf.mxu0
    %v3488 = vadd.f32 %v3367, %v3487
    %3489 = vmatmul.bf16.gmra.mxu0 %v3164
    %v3490 = vpop.f32.mrf.mxu0
    %v3491 = vadd.f32 %v3370, %v3490
    %v3492 = vpop.f32.mrf.mxu0
    %3493 = vmatmul.bf16.gmra.mxu0 %v3167
    %v3494 = vpop.f32.mrf.mxu0
    %v3495 = vadd.f32 %v3374, %v3494
    %v3496 = vpop.f32.mrf.mxu0
    %v3497 = vadd.f32 %v3376, %v3496
    %3498 = vmatmul.bf16.gmra.mxu0 %v3170
    %v3499 = vpop.f32.mrf.mxu0
    %v3500 = vadd.f32 %v3379, %v3499
    %v3501 = vpop.f32.mrf.mxu0
    %v3502 = vadd.f32 %v3381, %v3501
    %3503 = vmatmul.bf16.gmra.mxu0 %v3173
    %v3504 = vpop.f32.mrf.mxu0
    %v3505 = vadd.f32 %v3384, %v3504
    %v3506 = vpop.f32.mrf.mxu0
    %3507 = vmatmul.bf16.gmra.mxu0 %v3176
    %v3508 = vpop.f32.mrf.mxu0
    %v3509 = vadd.f32 %v3388, %v3508
    %v3510 = vpop.f32.mrf.mxu0
    %v3511 = vadd.f32 %v3390, %v3510
    %3512 = vmatmul.bf16.gmra.mxu0 %v3179
    %v3513 = vpop.f32.mrf.mxu0
    %v3514 = vadd.f32 %v3393, %v3513
    %v3515 = vpop.f32.mrf.mxu0
    %v3516 = vadd.f32 %v3395, %v3515
    %3517 = vmatmul.bf16.gmra.mxu0 %v3182
    %v3518 = vpop.f32.mrf.mxu0
    %v3519 = vadd.f32 %v3398, %v3518
    %v3520 = vpop.f32.mrf.mxu0
    %3521 = vmatmul.bf16.gmra.mxu0 %v3185
    %v3522 = vpop.f32.mrf.mxu0
    %v3523 = vadd.f32 %v3402, %v3522
    %v3524 = vpop.f32.mrf.mxu0
    %v3525 = vadd.f32 %v3404, %v3524
    %3526 = vmatmul.bf16.gmra.mxu0 %v3188
    %v3527 = vpop.f32.mrf.mxu0
    %v3528 = vadd.f32 %v3407, %v3527
    %v3529 = vpop.f32.mrf.mxu0
    %v3530 = vadd.f32 %v3409, %v3529
    %3531 = vmatmul.bf16.gmra.mxu0 %v3191
    %v3532 = vpop.f32.mrf.mxu0
    %v3533 = vadd.f32 %v3412, %v3532
    %v3534 = vpop.f32.mrf.mxu0
    %3535 = vmatmul.bf16.gmra.mxu0 %v3194
    %v3536 = vpop.f32.mrf.mxu0
    %v3537 = vadd.f32 %v3416, %v3536
    %v3538 = vpop.f32.mrf.mxu0
    %v3539 = vadd.f32 %v3418, %v3538
    %3540 = vmatmul.bf16.gmra.mxu0 %v3197
    %v3541 = vpop.f32.mrf.mxu0
    %v3542 = vadd.f32 %v3421, %v3541
    %v3543 = vpop.f32.mrf.mxu0
    %v3544 = vadd.f32 %v3423, %v3543
    %3545 = vmatmul.bf16.gmra.mxu0 %v3200
    %v3546 = vpop.f32.mrf.mxu0
    %v3547 = vadd.f32 %v3426, %v3546
    %v3548 = vpop.f32.mrf.mxu0
    %3549 = vmatmul.bf16.gmra.mxu0 %v3203
    %v3550 = vpop.f32.mrf.mxu0
    %v3551 = vadd.f32 %v3430, %v3550
    %v3552 = vpop.f32.mrf.mxu0
    %v3553 = vadd.f32 %v3432, %v3552
    %3554 = vmatmul.bf16.gmra.mxu0 %v3206
    %v3555 = vpop.f32.mrf.mxu0
    %v3556 = vadd.f32 %v3435, %v3555
    %v3557 = vpop.f32.mrf.mxu0
    %v3558 = vadd.f32 %v3437, %v3557
    %3559 = vmatmul.bf16.gmra.mxu0 %v3209
    %v3560 = vpop.f32.mrf.mxu0
    %v3561 = vadd.f32 %v3440, %v3560
    %v3562 = vpop.f32.mrf.mxu0
    %3563 = vmatmul.bf16.gmra.mxu0 %v3212
    %v3564 = vpop.f32.mrf.mxu0
    %v3565 = vadd.f32 %v3444, %v3564
    %v3566 = vpop.f32.mrf.mxu0
    %v3567 = vadd.f32 %v3446, %v3566
    %3568 = vmatmul.bf16.gmra.mxu0 %v3215
    %v3569 = vpop.f32.mrf.mxu0
    %v3570 = vadd.f32 %v3449, %v3569
    %v3571 = vpop.f32.mrf.mxu0
    %v3572 = vadd.f32 %v3451, %v3571
    %3573 = vmatmul.bf16.gmra.mxu0 %v3218
    %v3574 = vpop.f32.mrf.mxu0
    %v3575 = vadd.f32 %v3454, %v3574
    %v3576 = vpop.f32.mrf.mxu0
    %3577 = vmatmul.bf16.gmra.mxu0 %v3221
    %v3578 = vpop.f32.mrf.mxu0
    %v3579 = vadd.f32 %v3458, %v3578
    %v3580 = vpop.f32.mrf.mxu0
    %v3581 = vadd.f32 %v3460, %v3580
    %3582 = vmatmul.bf16.gmra.mxu0 %v3224
    %v3583 = vpop.f32.mrf.mxu0
    %v3584 = vadd.f32 %v3463, %v3583
    %v3585 = vpop.f32.mrf.mxu0
    %v3586 = vadd.f32 %v3465, %v3585
    %3587 = vmatmul.bf16.gmra.mxu0 %v3227
    %v3588 = vpop.f32.mrf.mxu0
    %v3589 = vadd.f32 %v3468, %v3588
    %v3590 = vpop.f32.mrf.mxu0
    %3591 = vdwg.mxu0
    %v3592 = vmax.f32 %v3481, 0.0
    %v3593 = vmax.f32 %v3483, 0.0
    %v3594 = vmax.f32 %v3486, 0.0
    %v3595 = vmax.f32 %v3488, 0.0
    %v3596 = vmax.f32 %v3491, 0.0
    %v3597 = vmax.f32 %v3495, 0.0
    %v3598 = vmax.f32 %v3497, 0.0
    %v3599 = vmax.f32 %v3500, 0.0
    %v3600 = vmax.f32 %v3502, 0.0
    %v3601 = vmax.f32 %v3505, 0.0
    %v3602 = vmax.f32 %v3509, 0.0
    %v3603 = vmax.f32 %v3511, 0.0
    %v3604 = vmax.f32 %v3514, 0.0
    %v3605 = vmax.f32 %v3516, 0.0
    %v3606 = vmax.f32 %v3519, 0.0
    %v3607 = vmax.f32 %v3523, 0.0
    %v3608 = vmax.f32 %v3525, 0.0
    %v3609 = vmax.f32 %v3528, 0.0
    %v3610 = vmax.f32 %v3530, 0.0
    %v3611 = vmax.f32 %v3533, 0.0
    %v3612 = vmax.f32 %v3537, 0.0
    %v3613 = vmax.f32 %v3539, 0.0
    %v3614 = vmax.f32 %v3542, 0.0
    %v3615 = vmax.f32 %v3544, 0.0
    %v3616 = vmax.f32 %v3547, 0.0
    %v3617 = vmax.f32 %v3551, 0.0
    %v3618 = vmax.f32 %v3553, 0.0
    %v3619 = vmax.f32 %v3556, 0.0
    %v3620 = vmax.f32 %v3558, 0.0
    %v3621 = vmax.f32 %v3561, 0.0
    %v3622 = vmax.f32 %v3565, 0.0
    %v3623 = vmax.f32 %v3567, 0.0
    %v3624 = vmax.f32 %v3570, 0.0
    %v3625 = vmax.f32 %v3572, 0.0
    %v3626 = vmax.f32 %v3575, 0.0
    %v3627 = vmax.f32 %v3579, 0.0
    %v3628 = vmax.f32 %v3581, 0.0
    %v3629 = vmax.f32 %v3584, 0.0
    %v3630 = vmax.f32 %v3586, 0.0
    %v3631 = vmax.f32 %v3589, 0.0
    %v3632 = vpack.c.bf16 %v3592, %v3592
    %v3633 = vpack.c.bf16 %v3593, %v3593
    %v3634 = vpack.c.bf16 %v3594, %v3594
    %v3635 = vpack.c.bf16 %v3595, %v3595
    %v3636 = vpack.c.bf16 %v3596, %v3596
    %v3637 = vpack.c.bf16 %v3597, %v3597
    %v3638 = vpack.c.bf16 %v3598, %v3598
    %v3639 = vpack.c.bf16 %v3599, %v3599
    %v3640 = vpack.c.bf16 %v3600, %v3600
    %v3641 = vpack.c.bf16 %v3601, %v3601
    %v3642 = vpack.c.bf16 %v3602, %v3602
    %v3643 = vpack.c.bf16 %v3603, %v3603
    %v3644 = vpack.c.bf16 %v3604, %v3604
    %v3645 = vpack.c.bf16 %v3605, %v3605
    %v3646 = vpack.c.bf16 %v3606, %v3606
    %v3647 = vpack.c.bf16 %v3607, %v3607
    %v3648 = vpack.c.bf16 %v3608, %v3608
    %v3649 = vpack.c.bf16 %v3609, %v3609
    %v3650 = vpack.c.bf16 %v3610, %v3610
    %v3651 = vpack.c.bf16 %v3611, %v3611
    %v3652 = vpack.c.bf16 %v3612, %v3612
    %v3653 = vpack.c.bf16 %v3613, %v3613
    %v3654 = vpack.c.bf16 %v3614, %v3614
    %v3655 = vpack.c.bf16 %v3615, %v3615
    %v3656 = vpack.c.bf16 %v3616, %v3616
    %v3657 = vpack.c.bf16 %v3617, %v3617
    %v3658 = vpack.c.bf16 %v3618, %v3618
    %v3659 = vpack.c.bf16 %v3619, %v3619
    %v3660 = vpack.c.bf16 %v3620, %v3620
    %v3661 = vpack.c.bf16 %v3621, %v3621
    %v3662 = vpack.c.bf16 %v3622, %v3622
    %v3663 = vpack.c.bf16 %v3623, %v3623
    %v3664 = vpack.c.bf16 %v3624, %v3624
    %v3665 = vpack.c.bf16 %v3625, %v3625
    %v3666 = vpack.c.bf16 %v3626, %v3626
    %v3667 = vpack.c.bf16 %v3627, %v3627
    %v3668 = vpack.c.bf16 %v3628, %v3628
    %v3669 = vpack.c.bf16 %v3629, %v3629
    %v3670 = vpack.c.bf16 %v3630, %v3630
    %v3671 = vpack.c.bf16 %v3631, %v3631
    %v3704 = vunpack.c.l.b16 %v3632
    %v3705 = vunpack.c.l.b16 %v3633
    %v3706 = vunpack.c.l.b16 %v3634
    %v3707 = vunpack.c.l.b16 %v3635
    %v3708 = vunpack.c.l.b16 %v3637
    %v3709 = vunpack.c.l.b16 %v3638
    %v3710 = vunpack.c.l.b16 %v3639
    %v3711 = vunpack.c.l.b16 %v3640
    %v3712 = vunpack.c.l.b16 %v3642
    %v3713 = vunpack.c.l.b16 %v3643
    %v3714 = vunpack.c.l.b16 %v3644
    %v3715 = vunpack.c.l.b16 %v3645
    %v3716 = vunpack.c.l.b16 %v3647
    %v3717 = vunpack.c.l.b16 %v3648
    %v3718 = vunpack.c.l.b16 %v3649
    %v3719 = vunpack.c.l.b16 %v3650
    %v3720 = vunpack.c.l.b16 %v3652
    %v3721 = vunpack.c.l.b16 %v3653
    %v3722 = vunpack.c.l.b16 %v3654
    %v3723 = vunpack.c.l.b16 %v3655
    %v3724 = vunpack.c.l.b16 %v3657
    %v3725 = vunpack.c.l.b16 %v3658
    %v3726 = vunpack.c.l.b16 %v3659
    %v3727 = vunpack.c.l.b16 %v3660
    %v3728 = vunpack.c.l.b16 %v3662
    %v3729 = vunpack.c.l.b16 %v3663
    %v3730 = vunpack.c.l.b16 %v3664
    %v3731 = vunpack.c.l.b16 %v3665
    %v3732 = vunpack.c.l.b16 %v3667
    %v3733 = vunpack.c.l.b16 %v3668
    %v3734 = vunpack.c.l.b16 %v3669
    %v3735 = vunpack.c.l.b16 %v3670
    %v3736 = vpack.c.b16 %v3705, %v3704
    %v3737 = vpack.c.b16 %v3707, %v3706
    %v3738 = vpack.c.b16 %v3709, %v3708
    %v3739 = vpack.c.b16 %v3711, %v3710
    %v3740 = vpack.c.b16 %v3713, %v3712
    %v3741 = vpack.c.b16 %v3715, %v3714
    %v3742 = vpack.c.b16 %v3717, %v3716
    %v3743 = vpack.c.b16 %v3719, %v3718
    %v3744 = vpack.c.b16 %v3721, %v3720
    %v3745 = vpack.c.b16 %v3723, %v3722
    %v3746 = vpack.c.b16 %v3725, %v3724
    %v3747 = vpack.c.b16 %v3727, %v3726
    %v3748 = vpack.c.b16 %v3729, %v3728
    %v3749 = vpack.c.b16 %v3731, %v3730
    %v3750 = vpack.c.b16 %v3733, %v3732
    %v3751 = vpack.c.b16 %v3735, %v3734
    %v3760 = vunpack.c.l.b16 %v3636
    %v3761 = vunpack.c.l.b16 %v3641
    %v3762 = vunpack.c.l.b16 %v3646
    %v3763 = vunpack.c.l.b16 %v3651
    %v3764 = vunpack.c.l.b16 %v3656
    %v3765 = vunpack.c.l.b16 %v3661
    %v3766 = vunpack.c.l.b16 %v3666
    %v3767 = vunpack.c.l.b16 %v3671
    %v3768 = vpack.c.b16 %v3760, %v3760
    %v3769 = vpack.c.b16 %v3761, %v3761
    %v3770 = vpack.c.b16 %v3762, %v3762
    %v3771 = vpack.c.b16 %v3763, %v3763
    %v3772 = vpack.c.b16 %v3764, %v3764
    %v3773 = vpack.c.b16 %v3765, %v3765
    %v3774 = vpack.c.b16 %v3766, %v3766
    %v3775 = vpack.c.b16 %v3767, %v3767
    %v3777 = vshrl.u32 %v3736, 16
    %v3779 = vshll.u32 %v3736, 16
    %v3781 = vrot.slane %v3779, 1
    %v3782 = vor.u32 %v3777, %v3781
    %v3784 = vshll.u32 %v3737, 16
    %v3786 = vrot.slane %v3784, 1
    %v3787 = vsel %vm2252, %v3782, %v3786
    %v3788 = vshrl.u32 %v3737, 16
    %v3790 = vor.u32 %v3788, %v3786
    %v3792 = vshll.u32 %v3768, 16
    %v3794 = vrot.slane %v3792, 1
    %v3795 = vsel %vm2252, %v3790, %v3794
    %v3797 = vshrl.u32 %v3738, 16
    %v3799 = vshll.u32 %v3738, 16
    %v3801 = vrot.slane %v3799, 1
    %v3802 = vor.u32 %v3797, %v3801
    %v3804 = vshll.u32 %v3739, 16
    %v3806 = vrot.slane %v3804, 1
    %v3807 = vsel %vm2252, %v3802, %v3806
    %v3808 = vshrl.u32 %v3739, 16
    %v3810 = vor.u32 %v3808, %v3806
    %v3812 = vshll.u32 %v3769, 16
    %v3814 = vrot.slane %v3812, 1
    %v3815 = vsel %vm2252, %v3810, %v3814
    %v3817 = vshrl.u32 %v3740, 16
    %v3819 = vshll.u32 %v3740, 16
    %v3821 = vrot.slane %v3819, 1
    %v3822 = vor.u32 %v3817, %v3821
    %v3824 = vshll.u32 %v3741, 16
    %v3826 = vrot.slane %v3824, 1
    %v3827 = vsel %vm2252, %v3822, %v3826
    %v3828 = vshrl.u32 %v3741, 16
    %v3830 = vor.u32 %v3828, %v3826
    %v3832 = vshll.u32 %v3770, 16
    %v3834 = vrot.slane %v3832, 1
    %v3835 = vsel %vm2252, %v3830, %v3834
    %v3837 = vshrl.u32 %v3742, 16
    %v3839 = vshll.u32 %v3742, 16
    %v3841 = vrot.slane %v3839, 1
    %v3842 = vor.u32 %v3837, %v3841
    %v3844 = vshll.u32 %v3743, 16
    %v3846 = vrot.slane %v3844, 1
    %v3847 = vsel %vm2252, %v3842, %v3846
    %v3848 = vshrl.u32 %v3743, 16
    %v3850 = vor.u32 %v3848, %v3846
    %v3852 = vshll.u32 %v3771, 16
    %v3854 = vrot.slane %v3852, 1
    %v3855 = vsel %vm2252, %v3850, %v3854
    %v3857 = vshrl.u32 %v3744, 16
    %v3859 = vshll.u32 %v3744, 16
    %v3861 = vrot.slane %v3859, 1
    %v3862 = vor.u32 %v3857, %v3861
    %v3864 = vshll.u32 %v3745, 16
    %v3866 = vrot.slane %v3864, 1
    %v3867 = vsel %vm2252, %v3862, %v3866
    %v3868 = vshrl.u32 %v3745, 16
    %v3870 = vor.u32 %v3868, %v3866
    %v3872 = vshll.u32 %v3772, 16
    %v3874 = vrot.slane %v3872, 1
    %v3875 = vsel %vm2252, %v3870, %v3874
    %v3877 = vshrl.u32 %v3746, 16
    %v3879 = vshll.u32 %v3746, 16
    %v3881 = vrot.slane %v3879, 1
    %v3882 = vor.u32 %v3877, %v3881
    %v3884 = vshll.u32 %v3747, 16
    %v3886 = vrot.slane %v3884, 1
    %v3887 = vsel %vm2252, %v3882, %v3886
    %v3888 = vshrl.u32 %v3747, 16
    %v3890 = vor.u32 %v3888, %v3886
    %v3892 = vshll.u32 %v3773, 16
    %v3894 = vrot.slane %v3892, 1
    %v3895 = vsel %vm2252, %v3890, %v3894
    %v3897 = vshrl.u32 %v3748, 16
    %v3899 = vshll.u32 %v3748, 16
    %v3901 = vrot.slane %v3899, 1
    %v3902 = vor.u32 %v3897, %v3901
    %v3904 = vshll.u32 %v3749, 16
    %v3906 = vrot.slane %v3904, 1
    %v3907 = vsel %vm2252, %v3902, %v3906
    %v3908 = vshrl.u32 %v3749, 16
    %v3910 = vor.u32 %v3908, %v3906
    %v3912 = vshll.u32 %v3774, 16
    %v3914 = vrot.slane %v3912, 1
    %v3915 = vsel %vm2252, %v3910, %v3914
    %v3917 = vshrl.u32 %v3750, 16
    %v3919 = vshll.u32 %v3750, 16
    %v3921 = vrot.slane %v3919, 1
    %v3922 = vor.u32 %v3917, %v3921
    %v3924 = vshll.u32 %v3751, 16
    %v3926 = vrot.slane %v3924, 1
    %v3927 = vsel %vm2252, %v3922, %v3926
    %v3928 = vshrl.u32 %v3751, 16
    %v3930 = vor.u32 %v3928, %v3926
    %v3932 = vshll.u32 %v3775, 16
    %v3934 = vrot.slane %v3932, 1
    %v3935 = vsel %vm2252, %v3930, %v3934
    %3936 = vrot.lane.b32.xlu0 %v3787, 64
    %v3937 = vpop.permute.xlu0 %3936
    %3938 = vrot.lane.b32.xlu0 %v3795, 64
    %v3939 = vpop.permute.xlu0 %3938
    %3940 = vrot.lane.b32.xlu0 %v3807, 64
    %v3941 = vpop.permute.xlu0 %3940
    %3942 = vrot.lane.b32.xlu0 %v3815, 64
    %v3943 = vpop.permute.xlu0 %3942
    %3944 = vrot.lane.b32.xlu0 %v3827, 64
    %v3945 = vpop.permute.xlu0 %3944
    %3946 = vrot.lane.b32.xlu0 %v3835, 64
    %v3947 = vpop.permute.xlu0 %3946
    %3948 = vrot.lane.b32.xlu0 %v3847, 64
    %v3949 = vpop.permute.xlu0 %3948
    %3950 = vrot.lane.b32.xlu0 %v3855, 64
    %v3951 = vpop.permute.xlu0 %3950
    %3952 = vrot.lane.b32.xlu0 %v3867, 64
    %v3953 = vpop.permute.xlu0 %3952
    %3954 = vrot.lane.b32.xlu0 %v3875, 64
    %v3955 = vpop.permute.xlu0 %3954
    %3956 = vrot.lane.b32.xlu0 %v3887, 64
    %v3957 = vpop.permute.xlu0 %3956
    %3958 = vrot.lane.b32.xlu0 %v3895, 64
    %v3959 = vpop.permute.xlu0 %3958
    %3960 = vrot.lane.b32.xlu0 %v3907, 64
    %v3961 = vpop.permute.xlu0 %3960
    %3962 = vrot.lane.b32.xlu0 %v3915, 64
    %v3963 = vpop.permute.xlu0 %3962
    %3964 = vrot.lane.b32.xlu0 %v3927, 64
    %v3965 = vpop.permute.xlu0 %3964
    %3966 = vrot.lane.b32.xlu0 %v3935, 64
    %v3967 = vpop.permute.xlu0 %3966
    %v3968 = vrot.slane %v3736, 1
    %v3969 = vrot.slane %v3737, 1
    %v3970 = vsel %vm2525, %v3968, %v3969
    %v3971 = vrot.slane %v3768, 1
    %v3972 = vsel %vm2525, %v3969, %v3971
    %v3973 = vrot.slane %v3738, 1
    %v3974 = vrot.slane %v3739, 1
    %v3975 = vsel %vm2525, %v3973, %v3974
    %v3976 = vrot.slane %v3769, 1
    %v3977 = vsel %vm2525, %v3974, %v3976
    %v3978 = vrot.slane %v3740, 1
    %v3979 = vrot.slane %v3741, 1
    %v3980 = vsel %vm2525, %v3978, %v3979
    %v3981 = vrot.slane %v3770, 1
    %v3982 = vsel %vm2525, %v3979, %v3981
    %v3983 = vrot.slane %v3742, 1
    %v3984 = vrot.slane %v3743, 1
    %v3985 = vsel %vm2525, %v3983, %v3984
    %v3986 = vrot.slane %v3771, 1
    %v3987 = vsel %vm2525, %v3984, %v3986
    %v3988 = vrot.slane %v3744, 1
    %v3989 = vrot.slane %v3745, 1
    %v3990 = vsel %vm2525, %v3988, %v3989
    %v3991 = vrot.slane %v3772, 1
    %v3992 = vsel %vm2525, %v3989, %v3991
    %v3993 = vrot.slane %v3746, 1
    %v3994 = vrot.slane %v3747, 1
    %v3995 = vsel %vm2525, %v3993, %v3994
    %v3996 = vrot.slane %v3773, 1
    %v3997 = vsel %vm2525, %v3994, %v3996
    %v3998 = vrot.slane %v3748, 1
    %v3999 = vrot.slane %v3749, 1
    %v4000 = vsel %vm2525, %v3998, %v3999
    %v4001 = vrot.slane %v3774, 1
    %v4002 = vsel %vm2525, %v3999, %v4001
    %v4003 = vrot.slane %v3750, 1
    %v4004 = vrot.slane %v3751, 1
    %v4005 = vsel %vm2525, %v4003, %v4004
    %v4006 = vrot.slane %v3775, 1
    %v4007 = vsel %vm2525, %v4004, %v4006
    %v4008 = vrot.slane %v3777, 1
    %v4009 = vrot.slane %v3779, 2
    %v4010 = vor.u32 %v4008, %v4009
    %v4011 = vrot.slane %v3788, 1
    %v4012 = vrot.slane %v3784, 2
    %v4013 = vor.u32 %v4011, %v4012
    %v4014 = vsel %vm2582, %v4010, %v4013
    %v4015 = vshrl.u32 %v3768, 16
    %v4017 = vrot.slane %v4015, 1
    %v4018 = vrot.slane %v3792, 2
    %v4019 = vor.u32 %v4017, %v4018
    %v4020 = vsel %vm2582, %v4013, %v4019
    %v4021 = vrot.slane %v3797, 1
    %v4022 = vrot.slane %v3799, 2
    %v4023 = vor.u32 %v4021, %v4022
    %v4024 = vrot.slane %v3808, 1
    %v4025 = vrot.slane %v3804, 2
    %v4026 = vor.u32 %v4024, %v4025
    %v4027 = vsel %vm2582, %v4023, %v4026
    %v4028 = vshrl.u32 %v3769, 16
    %v4030 = vrot.slane %v4028, 1
    %v4031 = vrot.slane %v3812, 2
    %v4032 = vor.u32 %v4030, %v4031
    %v4033 = vsel %vm2582, %v4026, %v4032
    %v4034 = vrot.slane %v3817, 1
    %v4035 = vrot.slane %v3819, 2
    %v4036 = vor.u32 %v4034, %v4035
    %v4037 = vrot.slane %v3828, 1
    %v4038 = vrot.slane %v3824, 2
    %v4039 = vor.u32 %v4037, %v4038
    %v4040 = vsel %vm2582, %v4036, %v4039
    %v4041 = vshrl.u32 %v3770, 16
    %v4043 = vrot.slane %v4041, 1
    %v4044 = vrot.slane %v3832, 2
    %v4045 = vor.u32 %v4043, %v4044
    %v4046 = vsel %vm2582, %v4039, %v4045
    %v4047 = vrot.slane %v3837, 1
    %v4048 = vrot.slane %v3839, 2
    %v4049 = vor.u32 %v4047, %v4048
    %v4050 = vrot.slane %v3848, 1
    %v4051 = vrot.slane %v3844, 2
    %v4052 = vor.u32 %v4050, %v4051
    %v4053 = vsel %vm2582, %v4049, %v4052
    %v4054 = vshrl.u32 %v3771, 16
    %v4056 = vrot.slane %v4054, 1
    %v4057 = vrot.slane %v3852, 2
    %v4058 = vor.u32 %v4056, %v4057
    %v4059 = vsel %vm2582, %v4052, %v4058
    %v4060 = vrot.slane %v3857, 1
    %v4061 = vrot.slane %v3859, 2
    %v4062 = vor.u32 %v4060, %v4061
    %v4063 = vrot.slane %v3868, 1
    %v4064 = vrot.slane %v3864, 2
    %v4065 = vor.u32 %v4063, %v4064
    %v4066 = vsel %vm2582, %v4062, %v4065
    %v4067 = vshrl.u32 %v3772, 16
    %v4069 = vrot.slane %v4067, 1
    %v4070 = vrot.slane %v3872, 2
    %v4071 = vor.u32 %v4069, %v4070
    %v4072 = vsel %vm2582, %v4065, %v4071
    %v4073 = vrot.slane %v3877, 1
    %v4074 = vrot.slane %v3879, 2
    %v4075 = vor.u32 %v4073, %v4074
    %v4076 = vrot.slane %v3888, 1
    %v4077 = vrot.slane %v3884, 2
    %v4078 = vor.u32 %v4076, %v4077
    %v4079 = vsel %vm2582, %v4075, %v4078
    %v4080 = vshrl.u32 %v3773, 16
    %v4082 = vrot.slane %v4080, 1
    %v4083 = vrot.slane %v3892, 2
    %v4084 = vor.u32 %v4082, %v4083
    %v4085 = vsel %vm2582, %v4078, %v4084
    %v4086 = vrot.slane %v3897, 1
    %v4087 = vrot.slane %v3899, 2
    %v4088 = vor.u32 %v4086, %v4087
    %v4089 = vrot.slane %v3908, 1
    %v4090 = vrot.slane %v3904, 2
    %v4091 = vor.u32 %v4089, %v4090
    %v4092 = vsel %vm2582, %v4088, %v4091
    %v4093 = vshrl.u32 %v3774, 16
    %v4095 = vrot.slane %v4093, 1
    %v4096 = vrot.slane %v3912, 2
    %v4097 = vor.u32 %v4095, %v4096
    %v4098 = vsel %vm2582, %v4091, %v4097
    %v4099 = vrot.slane %v3917, 1
    %v4100 = vrot.slane %v3919, 2
    %v4101 = vor.u32 %v4099, %v4100
    %v4102 = vrot.slane %v3928, 1
    %v4103 = vrot.slane %v3924, 2
    %v4104 = vor.u32 %v4102, %v4103
    %v4105 = vsel %vm2582, %v4101, %v4104
    %v4106 = vshrl.u32 %v3775, 16
    %v4108 = vrot.slane %v4106, 1
    %v4109 = vrot.slane %v3932, 2
    %v4110 = vor.u32 %v4108, %v4109
    %v4111 = vsel %vm2582, %v4104, %v4110
    %4112 = vrot.lane.b32.xlu0 %v4014, 64
    %v4113 = vpop.permute.xlu0 %4112
    %4114 = vrot.lane.b32.xlu0 %v4020, 64
    %v4115 = vpop.permute.xlu0 %4114
    %4116 = vrot.lane.b32.xlu0 %v4027, 64
    %v4117 = vpop.permute.xlu0 %4116
    %4118 = vrot.lane.b32.xlu0 %v4033, 64
    %v4119 = vpop.permute.xlu0 %4118
    %4120 = vrot.lane.b32.xlu0 %v4040, 64
    %v4121 = vpop.permute.xlu0 %4120
    %4122 = vrot.lane.b32.xlu0 %v4046, 64
    %v4123 = vpop.permute.xlu0 %4122
    %4124 = vrot.lane.b32.xlu0 %v4053, 64
    %v4125 = vpop.permute.xlu0 %4124
    %4126 = vrot.lane.b32.xlu0 %v4059, 64
    %v4127 = vpop.permute.xlu0 %4126
    %4128 = vrot.lane.b32.xlu0 %v4066, 64
    %v4129 = vpop.permute.xlu0 %4128
    %4130 = vrot.lane.b32.xlu0 %v4072, 64
    %v4131 = vpop.permute.xlu0 %4130
    %4132 = vrot.lane.b32.xlu0 %v4079, 64
    %v4133 = vpop.permute.xlu0 %4132
    %4134 = vrot.lane.b32.xlu0 %v4085, 64
    %v4135 = vpop.permute.xlu0 %4134
    %4136 = vrot.lane.b32.xlu0 %v4092, 64
    %v4137 = vpop.permute.xlu0 %4136
    %4138 = vrot.lane.b32.xlu0 %v4098, 64
    %v4139 = vpop.permute.xlu0 %4138
    %4140 = vrot.lane.b32.xlu0 %v4105, 64
    %v4141 = vpop.permute.xlu0 %4140
    %4142 = vrot.lane.b32.xlu0 %v4111, 64
    %v4143 = vpop.permute.xlu0 %4142
    %v4144 = vrot.slane %v3736, 2
    %v4145 = vrot.slane %v3737, 2
    %v4146 = vsel %vm2767, %v4144, %v4145
    %v4147 = vrot.slane %v3768, 2
    %v4148 = vsel %vm2767, %v4145, %v4147
    %v4149 = vrot.slane %v3738, 2
    %v4150 = vrot.slane %v3739, 2
    %v4151 = vsel %vm2767, %v4149, %v4150
    %v4152 = vrot.slane %v3769, 2
    %v4153 = vsel %vm2767, %v4150, %v4152
    %v4154 = vrot.slane %v3740, 2
    %v4155 = vrot.slane %v3741, 2
    %v4156 = vsel %vm2767, %v4154, %v4155
    %v4157 = vrot.slane %v3770, 2
    %v4158 = vsel %vm2767, %v4155, %v4157
    %v4159 = vrot.slane %v3742, 2
    %v4160 = vrot.slane %v3743, 2
    %v4161 = vsel %vm2767, %v4159, %v4160
    %v4162 = vrot.slane %v3771, 2
    %v4163 = vsel %vm2767, %v4160, %v4162
    %v4164 = vrot.slane %v3744, 2
    %v4165 = vrot.slane %v3745, 2
    %v4166 = vsel %vm2767, %v4164, %v4165
    %v4167 = vrot.slane %v3772, 2
    %v4168 = vsel %vm2767, %v4165, %v4167
    %v4169 = vrot.slane %v3746, 2
    %v4170 = vrot.slane %v3747, 2
    %v4171 = vsel %vm2767, %v4169, %v4170
    %v4172 = vrot.slane %v3773, 2
    %v4173 = vsel %vm2767, %v4170, %v4172
    %v4174 = vrot.slane %v3748, 2
    %v4175 = vrot.slane %v3749, 2
    %v4176 = vsel %vm2767, %v4174, %v4175
    %v4177 = vrot.slane %v3774, 2
    %v4178 = vsel %vm2767, %v4175, %v4177
    %v4179 = vrot.slane %v3750, 2
    %v4180 = vrot.slane %v3751, 2
    %v4181 = vsel %vm2767, %v4179, %v4180
    %v4182 = vrot.slane %v3775, 2
    %v4183 = vsel %vm2767, %v4180, %v4182
    %v4185 = vsel %vm2824, %v3736, %v3937
    %v4188 = vsel %vm2824, %v3737, %v3939
    %v4191 = vsel %vm2824, %v3738, %v3941
    %v4194 = vsel %vm2824, %v3739, %v3943
    %v4197 = vsel %vm2824, %v3740, %v3945
    %v4200 = vsel %vm2824, %v3741, %v3947
    %v4203 = vsel %vm2824, %v3742, %v3949
    %v4206 = vsel %vm2824, %v3743, %v3951
    %v4209 = vsel %vm2824, %v3744, %v3953
    %v4212 = vsel %vm2824, %v3745, %v3955
    %v4215 = vsel %vm2824, %v3746, %v3957
    %v4218 = vsel %vm2824, %v3747, %v3959
    %v4221 = vsel %vm2824, %v3748, %v3961
    %v4224 = vsel %vm2824, %v3749, %v3963
    %v4227 = vsel %vm2824, %v3750, %v3965
    %v4230 = vsel %vm2824, %v3751, %v3967
    %v4234 = vsel %vm2824, %v3970, %v4113
    %v4238 = vsel %vm2824, %v3972, %v4115
    %v4242 = vsel %vm2824, %v3975, %v4117
    %v4246 = vsel %vm2824, %v3977, %v4119
    %v4250 = vsel %vm2824, %v3980, %v4121
    %v4254 = vsel %vm2824, %v3982, %v4123
    %v4258 = vsel %vm2824, %v3985, %v4125
    %v4262 = vsel %vm2824, %v3987, %v4127
    %v4266 = vsel %vm2824, %v3990, %v4129
    %v4270 = vsel %vm2824, %v3992, %v4131
    %v4274 = vsel %vm2824, %v3995, %v4133
    %v4278 = vsel %vm2824, %v3997, %v4135
    %v4282 = vsel %vm2824, %v4000, %v4137
    %v4286 = vsel %vm2824, %v4002, %v4139
    %v4290 = vsel %vm2824, %v4005, %v4141
    %v4294 = vsel %vm2824, %v4007, %v4143
    %v4296 = vld [vmem:[%s5] sm:$0xf]
    %v4297 = vld [vmem:[%s5 + $0x4] sm:$0xf]
    %v4298 = vld [vmem:[%s5 + $0x8] sm:$0xf]
    %v4299 = vld [vmem:[%s5 + $0xc] sm:$0xf]
    %v4300 = vld [vmem:[%s5 + $0x10] sm:$0xf]
    %v4301 = vld [vmem:[%s5 + $0x14] sm:$0xf]
    %v4302 = vld [vmem:[%s5 + $0x18] sm:$0xf]
    %v4303 = vld [vmem:[%s5 + $0x1c] sm:$0xf]
    %v4304 = vld [vmem:[%s5 + $0x20] sm:$0xf]
    %v4305 = vld [vmem:[%s5 + $0x24] sm:$0xf]
    %v4306 = vld [vmem:[%s5 + $0x28] sm:$0xf]
    %v4307 = vld [vmem:[%s5 + $0x2c] sm:$0xf]
    %v4308 = vld [vmem:[%s5 + $0x30] sm:$0xf]
    %v4309 = vld [vmem:[%s5 + $0x34] sm:$0xf]
    %v4310 = vld [vmem:[%s5 + $0x38] sm:$0xf]
    %v4311 = vld [vmem:[%s5 + $0x3c] sm:$0xf]
    %v4312 = vld [vmem:[%s5 + $0x40] sm:$0xf]
    %v4313 = vld [vmem:[%s5 + $0x44] sm:$0xf]
    %v4314 = vld [vmem:[%s5 + $0x48] sm:$0xf]
    %v4315 = vld [vmem:[%s5 + $0x4c] sm:$0xf]
    %v4316 = vld [vmem:[%s5 + $0x50] sm:$0xf]
    %v4317 = vld [vmem:[%s5 + $0x54] sm:$0xf]
    %v4318 = vld [vmem:[%s5 + $0x58] sm:$0xf]
    %v4319 = vld [vmem:[%s5 + $0x5c] sm:$0xf]
    %v4320 = vld [vmem:[%s5 + $0x60] sm:$0xf]
    %v4321 = vld [vmem:[%s5 + $0x64] sm:$0xf]
    %v4322 = vld [vmem:[%s5 + $0x68] sm:$0xf]
    %v4323 = vld [vmem:[%s5 + $0x6c] sm:$0xf]
    %v4324 = vld [vmem:[%s5 + $0x70] sm:$0xf]
    %v4325 = vld [vmem:[%s5 + $0x74] sm:$0xf]
    %v4326 = vld [vmem:[%s5 + $0x78] sm:$0xf]
    %v4327 = vld [vmem:[%s5 + $0x7c] sm:$0xf]
    %v4328 = vld [vmem:[%s5 + $0x80] sm:$0xf]
    %v4329 = vld [vmem:[%s5 + $0x84] sm:$0xf]
    %v4330 = vld [vmem:[%s5 + $0x88] sm:$0xf]
    %v4331 = vld [vmem:[%s5 + $0x8c] sm:$0xf]
    %v4332 = vld [vmem:[%s5 + $0x90] sm:$0xf]
    %v4333 = vld [vmem:[%s5 + $0x94] sm:$0xf]
    %v4334 = vld [vmem:[%s5 + $0x98] sm:$0xf]
    %v4335 = vld [vmem:[%s5 + $0x9c] sm:$0xf]
    %v4336 = vld [vmem:[%s6] sm:$0x1]
    %v4338 = vperm.slane %v4336, 0
    %v4380 = vunpack.c.l.b16 %v4296
    %v4381 = vunpack.c.l.b16 %v4297
    %v4382 = vunpack.c.l.b16 %v4298
    %v4383 = vunpack.c.l.b16 %v4299
    %v4384 = vunpack.c.l.b16 %v4300
    %v4385 = vunpack.c.l.b16 %v4301
    %v4386 = vunpack.c.l.b16 %v4302
    %v4387 = vunpack.c.l.b16 %v4303
    %v4388 = vunpack.c.l.b16 %v4304
    %v4389 = vunpack.c.l.b16 %v4305
    %v4390 = vunpack.c.l.b16 %v4306
    %v4391 = vunpack.c.l.b16 %v4307
    %v4392 = vunpack.c.l.b16 %v4308
    %v4393 = vunpack.c.l.b16 %v4309
    %v4394 = vunpack.c.l.b16 %v4310
    %v4395 = vunpack.c.l.b16 %v4311
    %v4396 = vunpack.c.l.b16 %v4312
    %v4397 = vunpack.c.l.b16 %v4313
    %v4398 = vunpack.c.l.b16 %v4314
    %v4399 = vunpack.c.l.b16 %v4315
    %v4400 = vunpack.c.l.b16 %v4316
    %v4401 = vunpack.c.l.b16 %v4317
    %v4402 = vunpack.c.l.b16 %v4318
    %v4403 = vunpack.c.l.b16 %v4319
    %v4404 = vunpack.c.l.b16 %v4320
    %v4405 = vunpack.c.l.b16 %v4321
    %v4406 = vunpack.c.l.b16 %v4322
    %v4407 = vunpack.c.l.b16 %v4323
    %v4408 = vunpack.c.l.b16 %v4324
    %v4409 = vunpack.c.l.b16 %v4325
    %v4410 = vunpack.c.l.b16 %v4326
    %v4411 = vunpack.c.l.b16 %v4327
    %v4412 = vunpack.c.l.b16 %v4328
    %v4413 = vunpack.c.l.b16 %v4329
    %v4414 = vunpack.c.l.b16 %v4330
    %v4415 = vunpack.c.l.b16 %v4331
    %v4416 = vunpack.c.l.b16 %v4332
    %v4417 = vunpack.c.l.b16 %v4333
    %v4418 = vunpack.c.l.b16 %v4334
    %v4419 = vunpack.c.l.b16 %v4335
    %v4420 = vpack.c.b16 %v4381, %v4380
    %v4421 = vpack.c.b16 %v4383, %v4382
    %v4422 = vpack.c.b16 %v4385, %v4384
    %v4423 = vpack.c.b16 %v4387, %v4386
    %v4424 = vpack.c.b16 %v4389, %v4388
    %v4425 = vpack.c.b16 %v4391, %v4390
    %v4426 = vpack.c.b16 %v4393, %v4392
    %v4427 = vpack.c.b16 %v4395, %v4394
    %v4428 = vpack.c.b16 %v4397, %v4396
    %v4429 = vpack.c.b16 %v4399, %v4398
    %v4430 = vpack.c.b16 %v4401, %v4400
    %v4431 = vpack.c.b16 %v4403, %v4402
    %v4432 = vpack.c.b16 %v4405, %v4404
    %v4433 = vpack.c.b16 %v4407, %v4406
    %v4434 = vpack.c.b16 %v4409, %v4408
    %v4435 = vpack.c.b16 %v4411, %v4410
    %v4436 = vpack.c.b16 %v4413, %v4412
    %v4437 = vpack.c.b16 %v4415, %v4414
    %v4438 = vpack.c.b16 %v4417, %v4416
    %v4439 = vpack.c.b16 %v4419, %v4418
    %v4461 = vsel %vm2824, %v4146, 0
    %v4464 = vsel %vm2824, %v4148, 0
    %v4467 = vsel %vm2824, %v4151, 0
    %v4470 = vsel %vm2824, %v4153, 0
    %v4473 = vsel %vm2824, %v4156, 0
    %v4476 = vsel %vm2824, %v4158, 0
    %v4479 = vsel %vm2824, %v4161, 0
    %v4482 = vsel %vm2824, %v4163, 0
    %v4485 = vsel %vm2824, %v4166, 0
    %v4488 = vsel %vm2824, %v4168, 0
    %v4491 = vsel %vm2824, %v4171, 0
    %v4494 = vsel %vm2824, %v4173, 0
    %v4497 = vsel %vm2824, %v4176, 0
    %v4500 = vsel %vm2824, %v4178, 0
    %v4503 = vsel %vm2824, %v4181, 0
    %v4506 = vsel %vm2824, %v4183, 0
    %4508 = vmatpush.bf16.msra.mxu0 %v4427
    %4509 = vmatpush.bf16.msra.mxu0 %v4426
    %4510 = vmatpush.bf16.msra.mxu0 %v4425
    %4511 = vmatpush.bf16.msra.mxu0 %v4424
    %4512 = vmatpush.bf16.msra.mxu0 %v4423
    %4513 = vmatpush.bf16.msra.mxu0 %v4422
    %4514 = vmatpush.bf16.msra.mxu0 %v4421
    %4515 = vmatpush.bf16.msra.mxu0 %v4420
    %4516 = vmatmul.bf16.gmra.mxu0 %v4185
    %v4517 = vpop.f32.mrf.mxu0
    %v4518 = vadd.f32 %v4338, %v4517
    %v4519 = vpop.f32.mrf.mxu0
    %v4520 = vadd.f32 %v4338, %v4519
    %4521 = vmatmul.bf16.gmra.mxu0 %v4188
    %v4522 = vpop.f32.mrf.mxu0
    %v4523 = vadd.f32 %v4338, %v4522
    %v4524 = vpop.f32.mrf.mxu0
    %4525 = vmatmul.bf16.gmra.mxu0 %v4191
    %v4526 = vpop.f32.mrf.mxu0
    %v4527 = vadd.f32 %v4338, %v4526
    %v4528 = vpop.f32.mrf.mxu0
    %v4529 = vadd.f32 %v4338, %v4528
    %4530 = vmatmul.bf16.gmra.mxu0 %v4194
    %v4531 = vpop.f32.mrf.mxu0
    %v4532 = vadd.f32 %v4338, %v4531
    %v4533 = vpop.f32.mrf.mxu0
    %4534 = vmatmul.bf16.gmra.mxu0 %v4197
    %v4535 = vpop.f32.mrf.mxu0
    %v4536 = vadd.f32 %v4338, %v4535
    %v4537 = vpop.f32.mrf.mxu0
    %v4538 = vadd.f32 %v4338, %v4537
    %4539 = vmatmul.bf16.gmra.mxu0 %v4200
    %v4540 = vpop.f32.mrf.mxu0
    %v4541 = vadd.f32 %v4338, %v4540
    %v4542 = vpop.f32.mrf.mxu0
    %4543 = vmatmul.bf16.gmra.mxu0 %v4203
    %v4544 = vpop.f32.mrf.mxu0
    %v4545 = vadd.f32 %v4338, %v4544
    %v4546 = vpop.f32.mrf.mxu0
    %v4547 = vadd.f32 %v4338, %v4546
    %4548 = vmatmul.bf16.gmra.mxu0 %v4206
    %v4549 = vpop.f32.mrf.mxu0
    %v4550 = vadd.f32 %v4338, %v4549
    %v4551 = vpop.f32.mrf.mxu0
    %4552 = vmatmul.bf16.gmra.mxu0 %v4209
    %v4553 = vpop.f32.mrf.mxu0
    %v4554 = vadd.f32 %v4338, %v4553
    %v4555 = vpop.f32.mrf.mxu0
    %v4556 = vadd.f32 %v4338, %v4555
    %4557 = vmatmul.bf16.gmra.mxu0 %v4212
    %v4558 = vpop.f32.mrf.mxu0
    %v4559 = vadd.f32 %v4338, %v4558
    %v4560 = vpop.f32.mrf.mxu0
    %4561 = vmatmul.bf16.gmra.mxu0 %v4215
    %v4562 = vpop.f32.mrf.mxu0
    %v4563 = vadd.f32 %v4338, %v4562
    %v4564 = vpop.f32.mrf.mxu0
    %v4565 = vadd.f32 %v4338, %v4564
    %4566 = vmatmul.bf16.gmra.mxu0 %v4218
    %v4567 = vpop.f32.mrf.mxu0
    %v4568 = vadd.f32 %v4338, %v4567
    %v4569 = vpop.f32.mrf.mxu0
    %4570 = vmatmul.bf16.gmra.mxu0 %v4221
    %v4571 = vpop.f32.mrf.mxu0
    %v4572 = vadd.f32 %v4338, %v4571
    %v4573 = vpop.f32.mrf.mxu0
    %v4574 = vadd.f32 %v4338, %v4573
    %4575 = vmatmul.bf16.gmra.mxu0 %v4224
    %v4576 = vpop.f32.mrf.mxu0
    %v4577 = vadd.f32 %v4338, %v4576
    %v4578 = vpop.f32.mrf.mxu0
    %4579 = vmatmul.bf16.gmra.mxu0 %v4227
    %v4580 = vpop.f32.mrf.mxu0
    %v4581 = vadd.f32 %v4338, %v4580
    %v4582 = vpop.f32.mrf.mxu0
    %v4583 = vadd.f32 %v4338, %v4582
    %4584 = vmatmul.bf16.gmra.mxu0 %v4230
    %v4585 = vpop.f32.mrf.mxu0
    %v4586 = vadd.f32 %v4338, %v4585
    %v4587 = vpop.f32.mrf.mxu0
    %4588 = vdwg.mxu0
    %4589 = vmatpush.bf16.msra.mxu0 %v4435
    %4590 = vmatpush.bf16.msra.mxu0 %v4434
    %4591 = vmatpush.bf16.msra.mxu0 %v4433
    %4592 = vmatpush.bf16.msra.mxu0 %v4432
    %4593 = vmatpush.bf16.msra.mxu0 %v4431
    %4594 = vmatpush.bf16.msra.mxu0 %v4430
    %4595 = vmatpush.bf16.msra.mxu0 %v4429
    %4596 = vmatpush.bf16.msra.mxu0 %v4428
    %4597 = vmatmul.bf16.gmra.mxu0 %v4234
    %v4598 = vpop.f32.mrf.mxu0
    %v4599 = vadd.f32 %v4518, %v4598
    %v4600 = vpop.f32.mrf.mxu0
    %v4601 = vadd.f32 %v4520, %v4600
    %4602 = vmatmul.bf16.gmra.mxu0 %v4238
    %v4603 = vpop.f32.mrf.mxu0
    %v4604 = vadd.f32 %v4523, %v4603
    %v4605 = vpop.f32.mrf.mxu0
    %4606 = vmatmul.bf16.gmra.mxu0 %v4242
    %v4607 = vpop.f32.mrf.mxu0
    %v4608 = vadd.f32 %v4527, %v4607
    %v4609 = vpop.f32.mrf.mxu0
    %v4610 = vadd.f32 %v4529, %v4609
    %4611 = vmatmul.bf16.gmra.mxu0 %v4246
    %v4612 = vpop.f32.mrf.mxu0
    %v4613 = vadd.f32 %v4532, %v4612
    %v4614 = vpop.f32.mrf.mxu0
    %4615 = vmatmul.bf16.gmra.mxu0 %v4250
    %v4616 = vpop.f32.mrf.mxu0
    %v4617 = vadd.f32 %v4536, %v4616
    %v4618 = vpop.f32.mrf.mxu0
    %v4619 = vadd.f32 %v4538, %v4618
    %4620 = vmatmul.bf16.gmra.mxu0 %v4254
    %v4621 = vpop.f32.mrf.mxu0
    %v4622 = vadd.f32 %v4541, %v4621
    %v4623 = vpop.f32.mrf.mxu0
    %4624 = vmatmul.bf16.gmra.mxu0 %v4258
    %v4625 = vpop.f32.mrf.mxu0
    %v4626 = vadd.f32 %v4545, %v4625
    %v4627 = vpop.f32.mrf.mxu0
    %v4628 = vadd.f32 %v4547, %v4627
    %4629 = vmatmul.bf16.gmra.mxu0 %v4262
    %v4630 = vpop.f32.mrf.mxu0
    %v4631 = vadd.f32 %v4550, %v4630
    %v4632 = vpop.f32.mrf.mxu0
    %4633 = vmatmul.bf16.gmra.mxu0 %v4266
    %v4634 = vpop.f32.mrf.mxu0
    %v4635 = vadd.f32 %v4554, %v4634
    %v4636 = vpop.f32.mrf.mxu0
    %v4637 = vadd.f32 %v4556, %v4636
    %4638 = vmatmul.bf16.gmra.mxu0 %v4270
    %v4639 = vpop.f32.mrf.mxu0
    %v4640 = vadd.f32 %v4559, %v4639
    %v4641 = vpop.f32.mrf.mxu0
    %4642 = vmatmul.bf16.gmra.mxu0 %v4274
    %v4643 = vpop.f32.mrf.mxu0
    %v4644 = vadd.f32 %v4563, %v4643
    %v4645 = vpop.f32.mrf.mxu0
    %v4646 = vadd.f32 %v4565, %v4645
    %4647 = vmatmul.bf16.gmra.mxu0 %v4278
    %v4648 = vpop.f32.mrf.mxu0
    %v4649 = vadd.f32 %v4568, %v4648
    %v4650 = vpop.f32.mrf.mxu0
    %4651 = vmatmul.bf16.gmra.mxu0 %v4282
    %v4652 = vpop.f32.mrf.mxu0
    %v4653 = vadd.f32 %v4572, %v4652
    %v4654 = vpop.f32.mrf.mxu0
    %v4655 = vadd.f32 %v4574, %v4654
    %4656 = vmatmul.bf16.gmra.mxu0 %v4286
    %v4657 = vpop.f32.mrf.mxu0
    %v4658 = vadd.f32 %v4577, %v4657
    %v4659 = vpop.f32.mrf.mxu0
    %4660 = vmatmul.bf16.gmra.mxu0 %v4290
    %v4661 = vpop.f32.mrf.mxu0
    %v4662 = vadd.f32 %v4581, %v4661
    %v4663 = vpop.f32.mrf.mxu0
    %v4664 = vadd.f32 %v4583, %v4663
    %4665 = vmatmul.bf16.gmra.mxu0 %v4294
    %v4666 = vpop.f32.mrf.mxu0
    %v4667 = vadd.f32 %v4586, %v4666
    %v4668 = vpop.f32.mrf.mxu0
    %4669 = vdwg.mxu0
    %4670 = vmatpush.bf16.msra.mxu0 0
    %4671 = vmatpush.bf16.msra.mxu0 0
    %4672 = vmatpush.bf16.msra.mxu0 0
    %4673 = vmatpush.bf16.msra.mxu0 0
    %4674 = vmatpush.bf16.msra.mxu0 %v4439
    %4675 = vmatpush.bf16.msra.mxu0 %v4438
    %4676 = vmatpush.bf16.msra.mxu0 %v4437
    %4677 = vmatpush.bf16.msra.mxu0 %v4436
    %4678 = vmatmul.bf16.gmra.mxu0 %v4461
    %v4679 = vpop.f32.mrf.mxu0
    %v4680 = vadd.f32 %v4599, %v4679
    %v4681 = vpop.f32.mrf.mxu0
    %v4682 = vadd.f32 %v4601, %v4681
    %4683 = vmatmul.bf16.gmra.mxu0 %v4464
    %v4684 = vpop.f32.mrf.mxu0
    %v4685 = vadd.f32 %v4604, %v4684
    %v4686 = vpop.f32.mrf.mxu0
    %4687 = vmatmul.bf16.gmra.mxu0 %v4467
    %v4688 = vpop.f32.mrf.mxu0
    %v4689 = vadd.f32 %v4608, %v4688
    %v4690 = vpop.f32.mrf.mxu0
    %v4691 = vadd.f32 %v4610, %v4690
    %4692 = vmatmul.bf16.gmra.mxu0 %v4470
    %v4693 = vpop.f32.mrf.mxu0
    %v4694 = vadd.f32 %v4613, %v4693
    %v4695 = vpop.f32.mrf.mxu0
    %4696 = vmatmul.bf16.gmra.mxu0 %v4473
    %v4697 = vpop.f32.mrf.mxu0
    %v4698 = vadd.f32 %v4617, %v4697
    %v4699 = vpop.f32.mrf.mxu0
    %v4700 = vadd.f32 %v4619, %v4699
    %4701 = vmatmul.bf16.gmra.mxu0 %v4476
    %v4702 = vpop.f32.mrf.mxu0
    %v4703 = vadd.f32 %v4622, %v4702
    %v4704 = vpop.f32.mrf.mxu0
    %4705 = vmatmul.bf16.gmra.mxu0 %v4479
    %v4706 = vpop.f32.mrf.mxu0
    %v4707 = vadd.f32 %v4626, %v4706
    %v4708 = vpop.f32.mrf.mxu0
    %v4709 = vadd.f32 %v4628, %v4708
    %4710 = vmatmul.bf16.gmra.mxu0 %v4482
    %v4711 = vpop.f32.mrf.mxu0
    %v4712 = vadd.f32 %v4631, %v4711
    %v4713 = vpop.f32.mrf.mxu0
    %4714 = vmatmul.bf16.gmra.mxu0 %v4485
    %v4715 = vpop.f32.mrf.mxu0
    %v4716 = vadd.f32 %v4635, %v4715
    %v4717 = vpop.f32.mrf.mxu0
    %v4718 = vadd.f32 %v4637, %v4717
    %4719 = vmatmul.bf16.gmra.mxu0 %v4488
    %v4720 = vpop.f32.mrf.mxu0
    %v4721 = vadd.f32 %v4640, %v4720
    %v4722 = vpop.f32.mrf.mxu0
    %4723 = vmatmul.bf16.gmra.mxu0 %v4491
    %v4724 = vpop.f32.mrf.mxu0
    %v4725 = vadd.f32 %v4644, %v4724
    %v4726 = vpop.f32.mrf.mxu0
    %v4727 = vadd.f32 %v4646, %v4726
    %4728 = vmatmul.bf16.gmra.mxu0 %v4494
    %v4729 = vpop.f32.mrf.mxu0
    %v4730 = vadd.f32 %v4649, %v4729
    %v4731 = vpop.f32.mrf.mxu0
    %4732 = vmatmul.bf16.gmra.mxu0 %v4497
    %v4733 = vpop.f32.mrf.mxu0
    %v4734 = vadd.f32 %v4653, %v4733
    %v4735 = vpop.f32.mrf.mxu0
    %v4736 = vadd.f32 %v4655, %v4735
    %4737 = vmatmul.bf16.gmra.mxu0 %v4500
    %v4738 = vpop.f32.mrf.mxu0
    %v4739 = vadd.f32 %v4658, %v4738
    %v4740 = vpop.f32.mrf.mxu0
    %4741 = vmatmul.bf16.gmra.mxu0 %v4503
    %v4742 = vpop.f32.mrf.mxu0
    %v4743 = vadd.f32 %v4662, %v4742
    %v4744 = vpop.f32.mrf.mxu0
    %v4745 = vadd.f32 %v4664, %v4744
    %4746 = vmatmul.bf16.gmra.mxu0 %v4506
    %v4747 = vpop.f32.mrf.mxu0
    %v4748 = vadd.f32 %v4667, %v4747
    %v4749 = vpop.f32.mrf.mxu0
    %4750 = vdwg.mxu0
    %v4751 = vmax.f32 %v4680, 0.0
    %v4752 = vmax.f32 %v4682, 0.0
    %v4753 = vmax.f32 %v4685, 0.0
    %v4754 = vmax.f32 %v4689, 0.0
    %v4755 = vmax.f32 %v4691, 0.0
    %v4756 = vmax.f32 %v4694, 0.0
    %v4757 = vmax.f32 %v4698, 0.0
    %v4758 = vmax.f32 %v4700, 0.0
    %v4759 = vmax.f32 %v4703, 0.0
    %v4760 = vmax.f32 %v4707, 0.0
    %v4761 = vmax.f32 %v4709, 0.0
    %v4762 = vmax.f32 %v4712, 0.0
    %v4763 = vmax.f32 %v4716, 0.0
    %v4764 = vmax.f32 %v4718, 0.0
    %v4765 = vmax.f32 %v4721, 0.0
    %v4766 = vmax.f32 %v4725, 0.0
    %v4767 = vmax.f32 %v4727, 0.0
    %v4768 = vmax.f32 %v4730, 0.0
    %v4769 = vmax.f32 %v4734, 0.0
    %v4770 = vmax.f32 %v4736, 0.0
    %v4771 = vmax.f32 %v4739, 0.0
    %v4772 = vmax.f32 %v4743, 0.0
    %v4773 = vmax.f32 %v4745, 0.0
    %v4774 = vmax.f32 %v4748, 0.0
    %v4775 = vpack.c.bf16 %v4751, %v4751
    %v4776 = vpack.c.bf16 %v4752, %v4752
    %v4777 = vpack.c.bf16 %v4753, %v4753
    %v4778 = vpack.c.bf16 %v4754, %v4754
    %v4779 = vpack.c.bf16 %v4755, %v4755
    %v4780 = vpack.c.bf16 %v4756, %v4756
    %v4781 = vpack.c.bf16 %v4757, %v4757
    %v4782 = vpack.c.bf16 %v4758, %v4758
    %v4783 = vpack.c.bf16 %v4759, %v4759
    %v4784 = vpack.c.bf16 %v4760, %v4760
    %v4785 = vpack.c.bf16 %v4761, %v4761
    %v4786 = vpack.c.bf16 %v4762, %v4762
    %v4787 = vpack.c.bf16 %v4763, %v4763
    %v4788 = vpack.c.bf16 %v4764, %v4764
    %v4789 = vpack.c.bf16 %v4765, %v4765
    %v4790 = vpack.c.bf16 %v4766, %v4766
    %v4791 = vpack.c.bf16 %v4767, %v4767
    %v4792 = vpack.c.bf16 %v4768, %v4768
    %v4793 = vpack.c.bf16 %v4769, %v4769
    %v4794 = vpack.c.bf16 %v4770, %v4770
    %v4795 = vpack.c.bf16 %v4771, %v4771
    %v4796 = vpack.c.bf16 %v4772, %v4772
    %v4797 = vpack.c.bf16 %v4773, %v4773
    %v4798 = vpack.c.bf16 %v4774, %v4774
    %v4815 = vunpack.c.l.b16 %v4775
    %v4816 = vunpack.c.l.b16 %v4776
    %v4817 = vunpack.c.l.b16 %v4778
    %v4818 = vunpack.c.l.b16 %v4779
    %v4819 = vunpack.c.l.b16 %v4781
    %v4820 = vunpack.c.l.b16 %v4782
    %v4821 = vunpack.c.l.b16 %v4784
    %v4822 = vunpack.c.l.b16 %v4785
    %v4823 = vunpack.c.l.b16 %v4787
    %v4824 = vunpack.c.l.b16 %v4788
    %v4825 = vunpack.c.l.b16 %v4790
    %v4826 = vunpack.c.l.b16 %v4791
    %v4827 = vunpack.c.l.b16 %v4793
    %v4828 = vunpack.c.l.b16 %v4794
    %v4829 = vunpack.c.l.b16 %v4796
    %v4830 = vunpack.c.l.b16 %v4797
    %v4831 = vpack.c.b16 %v4816, %v4815
    %v4832 = vpack.c.b16 %v4818, %v4817
    %v4833 = vpack.c.b16 %v4820, %v4819
    %v4834 = vpack.c.b16 %v4822, %v4821
    %v4835 = vpack.c.b16 %v4824, %v4823
    %v4836 = vpack.c.b16 %v4826, %v4825
    %v4837 = vpack.c.b16 %v4828, %v4827
    %v4838 = vpack.c.b16 %v4830, %v4829
    %v4847 = vunpack.c.l.b16 %v4777
    %v4848 = vunpack.c.l.b16 %v4780
    %v4849 = vunpack.c.l.b16 %v4783
    %v4850 = vunpack.c.l.b16 %v4786
    %v4851 = vunpack.c.l.b16 %v4789
    %v4852 = vunpack.c.l.b16 %v4792
    %v4853 = vunpack.c.l.b16 %v4795
    %v4854 = vunpack.c.l.b16 %v4798
    %v4855 = vpack.c.b16 %v4847, %v4847
    %v4856 = vpack.c.b16 %v4848, %v4848
    %v4857 = vpack.c.b16 %v4849, %v4849
    %v4858 = vpack.c.b16 %v4850, %v4850
    %v4859 = vpack.c.b16 %v4851, %v4851
    %v4860 = vpack.c.b16 %v4852, %v4852
    %v4861 = vpack.c.b16 %v4853, %v4853
    %v4862 = vpack.c.b16 %v4854, %v4854
    %v4864 = vshrl.u32 %v4831, 16
    %v4866 = vshll.u32 %v4831, 16
    %v4868 = vrot.slane %v4866, 1
    %v4869 = vor.u32 %v4864, %v4868
    %v4871 = vshll.u32 %v4855, 16
    %v4873 = vrot.slane %v4871, 1
    %v4874 = vsel %vm2252, %v4869, %v4873
    %v4876 = vshrl.u32 %v4832, 16
    %v4878 = vshll.u32 %v4832, 16
    %v4880 = vrot.slane %v4878, 1
    %v4881 = vor.u32 %v4876, %v4880
    %v4883 = vshll.u32 %v4856, 16
    %v4885 = vrot.slane %v4883, 1
    %v4886 = vsel %vm2252, %v4881, %v4885
    %v4888 = vshrl.u32 %v4833, 16
    %v4890 = vshll.u32 %v4833, 16
    %v4892 = vrot.slane %v4890, 1
    %v4893 = vor.u32 %v4888, %v4892
    %v4895 = vshll.u32 %v4857, 16
    %v4897 = vrot.slane %v4895, 1
    %v4898 = vsel %vm2252, %v4893, %v4897
    %v4900 = vshrl.u32 %v4834, 16
    %v4902 = vshll.u32 %v4834, 16
    %v4904 = vrot.slane %v4902, 1
    %v4905 = vor.u32 %v4900, %v4904
    %v4907 = vshll.u32 %v4858, 16
    %v4909 = vrot.slane %v4907, 1
    %v4910 = vsel %vm2252, %v4905, %v4909
    %v4912 = vshrl.u32 %v4835, 16
    %v4914 = vshll.u32 %v4835, 16
    %v4916 = vrot.slane %v4914, 1
    %v4917 = vor.u32 %v4912, %v4916
    %v4919 = vshll.u32 %v4859, 16
    %v4921 = vrot.slane %v4919, 1
    %v4922 = vsel %vm2252, %v4917, %v4921
    %v4924 = vshrl.u32 %v4836, 16
    %v4926 = vshll.u32 %v4836, 16
    %v4928 = vrot.slane %v4926, 1
    %v4929 = vor.u32 %v4924, %v4928
    %v4931 = vshll.u32 %v4860, 16
    %v4933 = vrot.slane %v4931, 1
    %v4934 = vsel %vm2252, %v4929, %v4933
    %v4936 = vshrl.u32 %v4837, 16
    %v4938 = vshll.u32 %v4837, 16
    %v4940 = vrot.slane %v4938, 1
    %v4941 = vor.u32 %v4936, %v4940
    %v4943 = vshll.u32 %v4861, 16
    %v4945 = vrot.slane %v4943, 1
    %v4946 = vsel %vm2252, %v4941, %v4945
    %v4948 = vshrl.u32 %v4838, 16
    %v4950 = vshll.u32 %v4838, 16
    %v4952 = vrot.slane %v4950, 1
    %v4953 = vor.u32 %v4948, %v4952
    %v4955 = vshll.u32 %v4862, 16
    %v4957 = vrot.slane %v4955, 1
    %v4958 = vsel %vm2252, %v4953, %v4957
    %4959 = vrot.lane.b32.xlu0 %v4874, 64
    %v4960 = vpop.permute.xlu0 %4959
    %4961 = vrot.lane.b32.xlu0 %v4886, 64
    %v4962 = vpop.permute.xlu0 %4961
    %4963 = vrot.lane.b32.xlu0 %v4898, 64
    %v4964 = vpop.permute.xlu0 %4963
    %4965 = vrot.lane.b32.xlu0 %v4910, 64
    %v4966 = vpop.permute.xlu0 %4965
    %4967 = vrot.lane.b32.xlu0 %v4922, 64
    %v4968 = vpop.permute.xlu0 %4967
    %4969 = vrot.lane.b32.xlu0 %v4934, 64
    %v4970 = vpop.permute.xlu0 %4969
    %4971 = vrot.lane.b32.xlu0 %v4946, 64
    %v4972 = vpop.permute.xlu0 %4971
    %4973 = vrot.lane.b32.xlu0 %v4958, 64
    %v4974 = vpop.permute.xlu0 %4973
    %v4975 = vrot.slane %v4831, 1
    %v4976 = vrot.slane %v4855, 1
    %v4977 = vsel %vm2525, %v4975, %v4976
    %v4978 = vrot.slane %v4832, 1
    %v4979 = vrot.slane %v4856, 1
    %v4980 = vsel %vm2525, %v4978, %v4979
    %v4981 = vrot.slane %v4833, 1
    %v4982 = vrot.slane %v4857, 1
    %v4983 = vsel %vm2525, %v4981, %v4982
    %v4984 = vrot.slane %v4834, 1
    %v4985 = vrot.slane %v4858, 1
    %v4986 = vsel %vm2525, %v4984, %v4985
    %v4987 = vrot.slane %v4835, 1
    %v4988 = vrot.slane %v4859, 1
    %v4989 = vsel %vm2525, %v4987, %v4988
    %v4990 = vrot.slane %v4836, 1
    %v4991 = vrot.slane %v4860, 1
    %v4992 = vsel %vm2525, %v4990, %v4991
    %v4993 = vrot.slane %v4837, 1
    %v4994 = vrot.slane %v4861, 1
    %v4995 = vsel %vm2525, %v4993, %v4994
    %v4996 = vrot.slane %v4838, 1
    %v4997 = vrot.slane %v4862, 1
    %v4998 = vsel %vm2525, %v4996, %v4997
    %v4999 = vrot.slane %v4864, 1
    %v5000 = vrot.slane %v4866, 2
    %v5001 = vor.u32 %v4999, %v5000
    %v5002 = vshrl.u32 %v4855, 16
    %v5004 = vrot.slane %v5002, 1
    %v5005 = vrot.slane %v4871, 2
    %v5006 = vor.u32 %v5004, %v5005
    %v5007 = vsel %vm2582, %v5001, %v5006
    %v5008 = vrot.slane %v4876, 1
    %v5009 = vrot.slane %v4878, 2
    %v5010 = vor.u32 %v5008, %v5009
    %v5011 = vshrl.u32 %v4856, 16
    %v5013 = vrot.slane %v5011, 1
    %v5014 = vrot.slane %v4883, 2
    %v5015 = vor.u32 %v5013, %v5014
    %v5016 = vsel %vm2582, %v5010, %v5015
    %v5017 = vrot.slane %v4888, 1
    %v5018 = vrot.slane %v4890, 2
    %v5019 = vor.u32 %v5017, %v5018
    %v5020 = vshrl.u32 %v4857, 16
    %v5022 = vrot.slane %v5020, 1
    %v5023 = vrot.slane %v4895, 2
    %v5024 = vor.u32 %v5022, %v5023
    %v5025 = vsel %vm2582, %v5019, %v5024
    %v5026 = vrot.slane %v4900, 1
    %v5027 = vrot.slane %v4902, 2
    %v5028 = vor.u32 %v5026, %v5027
    %v5029 = vshrl.u32 %v4858, 16
    %v5031 = vrot.slane %v5029, 1
    %v5032 = vrot.slane %v4907, 2
    %v5033 = vor.u32 %v5031, %v5032
    %v5034 = vsel %vm2582, %v5028, %v5033
    %v5035 = vrot.slane %v4912, 1
    %v5036 = vrot.slane %v4914, 2
    %v5037 = vor.u32 %v5035, %v5036
    %v5038 = vshrl.u32 %v4859, 16
    %v5040 = vrot.slane %v5038, 1
    %v5041 = vrot.slane %v4919, 2
    %v5042 = vor.u32 %v5040, %v5041
    %v5043 = vsel %vm2582, %v5037, %v5042
    %v5044 = vrot.slane %v4924, 1
    %v5045 = vrot.slane %v4926, 2
    %v5046 = vor.u32 %v5044, %v5045
    %v5047 = vshrl.u32 %v4860, 16
    %v5049 = vrot.slane %v5047, 1
    %v5050 = vrot.slane %v4931, 2
    %v5051 = vor.u32 %v5049, %v5050
    %v5052 = vsel %vm2582, %v5046, %v5051
    %v5053 = vrot.slane %v4936, 1
    %v5054 = vrot.slane %v4938, 2
    %v5055 = vor.u32 %v5053, %v5054
    %v5056 = vshrl.u32 %v4861, 16
    %v5058 = vrot.slane %v5056, 1
    %v5059 = vrot.slane %v4943, 2
    %v5060 = vor.u32 %v5058, %v5059
    %v5061 = vsel %vm2582, %v5055, %v5060
    %v5062 = vrot.slane %v4948, 1
    %v5063 = vrot.slane %v4950, 2
    %v5064 = vor.u32 %v5062, %v5063
    %v5065 = vshrl.u32 %v4862, 16
    %v5067 = vrot.slane %v5065, 1
    %v5068 = vrot.slane %v4955, 2
    %v5069 = vor.u32 %v5067, %v5068
    %v5070 = vsel %vm2582, %v5064, %v5069
    %5071 = vrot.lane.b32.xlu0 %v5007, 64
    %v5072 = vpop.permute.xlu0 %5071
    %5073 = vrot.lane.b32.xlu0 %v5016, 64
    %v5074 = vpop.permute.xlu0 %5073
    %5075 = vrot.lane.b32.xlu0 %v5025, 64
    %v5076 = vpop.permute.xlu0 %5075
    %5077 = vrot.lane.b32.xlu0 %v5034, 64
    %v5078 = vpop.permute.xlu0 %5077
    %5079 = vrot.lane.b32.xlu0 %v5043, 64
    %v5080 = vpop.permute.xlu0 %5079
    %5081 = vrot.lane.b32.xlu0 %v5052, 64
    %v5082 = vpop.permute.xlu0 %5081
    %5083 = vrot.lane.b32.xlu0 %v5061, 64
    %v5084 = vpop.permute.xlu0 %5083
    %5085 = vrot.lane.b32.xlu0 %v5070, 64
    %v5086 = vpop.permute.xlu0 %5085
    %v5087 = vrot.slane %v4831, 2
    %v5088 = vrot.slane %v4855, 2
    %v5089 = vsel %vm2767, %v5087, %v5088
    %v5090 = vrot.slane %v4832, 2
    %v5091 = vrot.slane %v4856, 2
    %v5092 = vsel %vm2767, %v5090, %v5091
    %v5093 = vrot.slane %v4833, 2
    %v5094 = vrot.slane %v4857, 2
    %v5095 = vsel %vm2767, %v5093, %v5094
    %v5096 = vrot.slane %v4834, 2
    %v5097 = vrot.slane %v4858, 2
    %v5098 = vsel %vm2767, %v5096, %v5097
    %v5099 = vrot.slane %v4835, 2
    %v5100 = vrot.slane %v4859, 2
    %v5101 = vsel %vm2767, %v5099, %v5100
    %v5102 = vrot.slane %v4836, 2
    %v5103 = vrot.slane %v4860, 2
    %v5104 = vsel %vm2767, %v5102, %v5103
    %v5105 = vrot.slane %v4837, 2
    %v5106 = vrot.slane %v4861, 2
    %v5107 = vsel %vm2767, %v5105, %v5106
    %v5108 = vrot.slane %v4838, 2
    %v5109 = vrot.slane %v4862, 2
    %v5110 = vsel %vm2767, %v5108, %v5109
    %v5112 = vsel %vm2824, %v4831, %v4960
    %v5115 = vsel %vm2824, %v4832, %v4962
    %v5118 = vsel %vm2824, %v4833, %v4964
    %v5121 = vsel %vm2824, %v4834, %v4966
    %v5124 = vsel %vm2824, %v4835, %v4968
    %v5127 = vsel %vm2824, %v4836, %v4970
    %v5130 = vsel %vm2824, %v4837, %v4972
    %v5133 = vsel %vm2824, %v4838, %v4974
    %v5137 = vsel %vm2824, %v4977, %v5072
    %v5141 = vsel %vm2824, %v4980, %v5074
    %v5145 = vsel %vm2824, %v4983, %v5076
    %v5149 = vsel %vm2824, %v4986, %v5078
    %v5153 = vsel %vm2824, %v4989, %v5080
    %v5157 = vsel %vm2824, %v4992, %v5082
    %v5161 = vsel %vm2824, %v4995, %v5084
    %v5165 = vsel %vm2824, %v4998, %v5086
    %v5167 = vld [vmem:[%s7] sm:$0xf]
    %v5168 = vld [vmem:[%s7 + $0x4] sm:$0xf]
    %v5169 = vld [vmem:[%s7 + $0x8] sm:$0xf]
    %v5170 = vld [vmem:[%s7 + $0xc] sm:$0xf]
    %v5171 = vld [vmem:[%s7 + $0x10] sm:$0xf]
    %v5172 = vld [vmem:[%s7 + $0x14] sm:$0xf]
    %v5173 = vld [vmem:[%s7 + $0x18] sm:$0xf]
    %v5174 = vld [vmem:[%s7 + $0x1c] sm:$0xf]
    %v5175 = vld [vmem:[%s7 + $0x20] sm:$0xf]
    %v5176 = vld [vmem:[%s7 + $0x24] sm:$0xf]
    %v5177 = vld [vmem:[%s7 + $0x28] sm:$0xf]
    %v5178 = vld [vmem:[%s7 + $0x2c] sm:$0xf]
    %v5179 = vld [vmem:[%s7 + $0x30] sm:$0xf]
    %v5180 = vld [vmem:[%s7 + $0x34] sm:$0xf]
    %v5181 = vld [vmem:[%s7 + $0x38] sm:$0xf]
    %v5182 = vld [vmem:[%s7 + $0x3c] sm:$0xf]
    %v5183 = vld [vmem:[%s7 + $0x40] sm:$0xf]
    %v5184 = vld [vmem:[%s7 + $0x44] sm:$0xf]
    %v5185 = vld [vmem:[%s7 + $0x48] sm:$0xf]
    %v5186 = vld [vmem:[%s7 + $0x4c] sm:$0xf]
    %v5187 = vld [vmem:[%s7 + $0x50] sm:$0xf]
    %v5188 = vld [vmem:[%s7 + $0x54] sm:$0xf]
    %v5189 = vld [vmem:[%s7 + $0x58] sm:$0xf]
    %v5190 = vld [vmem:[%s7 + $0x5c] sm:$0xf]
    %v5191 = vld [vmem:[%s7 + $0x60] sm:$0xf]
    %v5192 = vld [vmem:[%s7 + $0x64] sm:$0xf]
    %v5193 = vld [vmem:[%s7 + $0x68] sm:$0xf]
    %v5194 = vld [vmem:[%s7 + $0x6c] sm:$0xf]
    %v5195 = vld [vmem:[%s7 + $0x70] sm:$0xf]
    %v5196 = vld [vmem:[%s7 + $0x74] sm:$0xf]
    %v5197 = vld [vmem:[%s7 + $0x78] sm:$0xf]
    %v5198 = vld [vmem:[%s7 + $0x7c] sm:$0xf]
    %v5199 = vld [vmem:[%s7 + $0x80] sm:$0xf]
    %v5200 = vld [vmem:[%s7 + $0x84] sm:$0xf]
    %v5201 = vld [vmem:[%s7 + $0x88] sm:$0xf]
    %v5202 = vld [vmem:[%s7 + $0x8c] sm:$0xf]
    %v5203 = vld [vmem:[%s7 + $0x90] sm:$0xf]
    %v5204 = vld [vmem:[%s7 + $0x94] sm:$0xf]
    %v5205 = vld [vmem:[%s7 + $0x98] sm:$0xf]
    %v5206 = vld [vmem:[%s7 + $0x9c] sm:$0xf]
    %v5207 = vld [vmem:[%s8] sm:$0x1]
    %v5209 = vperm.slane %v5207, 0
    %v5251 = vunpack.c.l.b16 %v5167
    %v5252 = vunpack.c.l.b16 %v5168
    %v5253 = vunpack.c.l.b16 %v5169
    %v5254 = vunpack.c.l.b16 %v5170
    %v5255 = vunpack.c.l.b16 %v5171
    %v5256 = vunpack.c.l.b16 %v5172
    %v5257 = vunpack.c.l.b16 %v5173
    %v5258 = vunpack.c.l.b16 %v5174
    %v5259 = vunpack.c.l.b16 %v5175
    %v5260 = vunpack.c.l.b16 %v5176
    %v5261 = vunpack.c.l.b16 %v5177
    %v5262 = vunpack.c.l.b16 %v5178
    %v5263 = vunpack.c.l.b16 %v5179
    %v5264 = vunpack.c.l.b16 %v5180
    %v5265 = vunpack.c.l.b16 %v5181
    %v5266 = vunpack.c.l.b16 %v5182
    %v5267 = vunpack.c.l.b16 %v5183
    %v5268 = vunpack.c.l.b16 %v5184
    %v5269 = vunpack.c.l.b16 %v5185
    %v5270 = vunpack.c.l.b16 %v5186
    %v5271 = vunpack.c.l.b16 %v5187
    %v5272 = vunpack.c.l.b16 %v5188
    %v5273 = vunpack.c.l.b16 %v5189
    %v5274 = vunpack.c.l.b16 %v5190
    %v5275 = vunpack.c.l.b16 %v5191
    %v5276 = vunpack.c.l.b16 %v5192
    %v5277 = vunpack.c.l.b16 %v5193
    %v5278 = vunpack.c.l.b16 %v5194
    %v5279 = vunpack.c.l.b16 %v5195
    %v5280 = vunpack.c.l.b16 %v5196
    %v5281 = vunpack.c.l.b16 %v5197
    %v5282 = vunpack.c.l.b16 %v5198
    %v5283 = vunpack.c.l.b16 %v5199
    %v5284 = vunpack.c.l.b16 %v5200
    %v5285 = vunpack.c.l.b16 %v5201
    %v5286 = vunpack.c.l.b16 %v5202
    %v5287 = vunpack.c.l.b16 %v5203
    %v5288 = vunpack.c.l.b16 %v5204
    %v5289 = vunpack.c.l.b16 %v5205
    %v5290 = vunpack.c.l.b16 %v5206
    %v5291 = vpack.c.b16 %v5252, %v5251
    %v5292 = vpack.c.b16 %v5254, %v5253
    %v5293 = vpack.c.b16 %v5256, %v5255
    %v5294 = vpack.c.b16 %v5258, %v5257
    %v5295 = vpack.c.b16 %v5260, %v5259
    %v5296 = vpack.c.b16 %v5262, %v5261
    %v5297 = vpack.c.b16 %v5264, %v5263
    %v5298 = vpack.c.b16 %v5266, %v5265
    %v5299 = vpack.c.b16 %v5268, %v5267
    %v5300 = vpack.c.b16 %v5270, %v5269
    %v5301 = vpack.c.b16 %v5272, %v5271
    %v5302 = vpack.c.b16 %v5274, %v5273
    %v5303 = vpack.c.b16 %v5276, %v5275
    %v5304 = vpack.c.b16 %v5278, %v5277
    %v5305 = vpack.c.b16 %v5280, %v5279
    %v5306 = vpack.c.b16 %v5282, %v5281
    %v5307 = vpack.c.b16 %v5284, %v5283
    %v5308 = vpack.c.b16 %v5286, %v5285
    %v5309 = vpack.c.b16 %v5288, %v5287
    %v5310 = vpack.c.b16 %v5290, %v5289
    %v5332 = vsel %vm2824, %v5089, 0
    %v5335 = vsel %vm2824, %v5092, 0
    %v5338 = vsel %vm2824, %v5095, 0
    %v5341 = vsel %vm2824, %v5098, 0
    %v5344 = vsel %vm2824, %v5101, 0
    %v5347 = vsel %vm2824, %v5104, 0
    %v5350 = vsel %vm2824, %v5107, 0
    %v5353 = vsel %vm2824, %v5110, 0
    %5355 = vmatpush.bf16.msra.mxu0 %v5298
    %5356 = vmatpush.bf16.msra.mxu0 %v5297
    %5357 = vmatpush.bf16.msra.mxu0 %v5296
    %5358 = vmatpush.bf16.msra.mxu0 %v5295
    %5359 = vmatpush.bf16.msra.mxu0 %v5294
    %5360 = vmatpush.bf16.msra.mxu0 %v5293
    %5361 = vmatpush.bf16.msra.mxu0 %v5292
    %5362 = vmatpush.bf16.msra.mxu0 %v5291
    %5363 = vmatmul.bf16.gmra.mxu0 %v5112
    %v5364 = vpop.f32.mrf.mxu0
    %v5365 = vadd.f32 %v5209, %v5364
    %v5366 = vpop.f32.mrf.mxu0
    %v5367 = vadd.f32 %v5209, %v5366
    %5368 = vmatmul.bf16.gmra.mxu0 %v5115
    %v5369 = vpop.f32.mrf.mxu0
    %v5370 = vadd.f32 %v5209, %v5369
    %v5371 = vpop.f32.mrf.mxu0
    %v5372 = vadd.f32 %v5209, %v5371
    %5373 = vmatmul.bf16.gmra.mxu0 %v5118
    %v5374 = vpop.f32.mrf.mxu0
    %v5375 = vadd.f32 %v5209, %v5374
    %v5376 = vpop.f32.mrf.mxu0
    %v5377 = vadd.f32 %v5209, %v5376
    %5378 = vmatmul.bf16.gmra.mxu0 %v5121
    %v5379 = vpop.f32.mrf.mxu0
    %v5380 = vadd.f32 %v5209, %v5379
    %v5381 = vpop.f32.mrf.mxu0
    %v5382 = vadd.f32 %v5209, %v5381
    %5383 = vmatmul.bf16.gmra.mxu0 %v5124
    %v5384 = vpop.f32.mrf.mxu0
    %v5385 = vadd.f32 %v5209, %v5384
    %v5386 = vpop.f32.mrf.mxu0
    %v5387 = vadd.f32 %v5209, %v5386
    %5388 = vmatmul.bf16.gmra.mxu0 %v5127
    %v5389 = vpop.f32.mrf.mxu0
    %v5390 = vadd.f32 %v5209, %v5389
    %v5391 = vpop.f32.mrf.mxu0
    %v5392 = vadd.f32 %v5209, %v5391
    %5393 = vmatmul.bf16.gmra.mxu0 %v5130
    %v5394 = vpop.f32.mrf.mxu0
    %v5395 = vadd.f32 %v5209, %v5394
    %v5396 = vpop.f32.mrf.mxu0
    %v5397 = vadd.f32 %v5209, %v5396
    %5398 = vmatmul.bf16.gmra.mxu0 %v5133
    %v5399 = vpop.f32.mrf.mxu0
    %v5400 = vadd.f32 %v5209, %v5399
    %v5401 = vpop.f32.mrf.mxu0
    %v5402 = vadd.f32 %v5209, %v5401
    %5403 = vdwg.mxu0
    %5404 = vmatpush.bf16.msra.mxu0 %v5306
    %5405 = vmatpush.bf16.msra.mxu0 %v5305
    %5406 = vmatpush.bf16.msra.mxu0 %v5304
    %5407 = vmatpush.bf16.msra.mxu0 %v5303
    %5408 = vmatpush.bf16.msra.mxu0 %v5302
    %5409 = vmatpush.bf16.msra.mxu0 %v5301
    %5410 = vmatpush.bf16.msra.mxu0 %v5300
    %5411 = vmatpush.bf16.msra.mxu0 %v5299
    %5412 = vmatmul.bf16.gmra.mxu0 %v5137
    %v5413 = vpop.f32.mrf.mxu0
    %v5414 = vadd.f32 %v5365, %v5413
    %v5415 = vpop.f32.mrf.mxu0
    %v5416 = vadd.f32 %v5367, %v5415
    %5417 = vmatmul.bf16.gmra.mxu0 %v5141
    %v5418 = vpop.f32.mrf.mxu0
    %v5419 = vadd.f32 %v5370, %v5418
    %v5420 = vpop.f32.mrf.mxu0
    %v5421 = vadd.f32 %v5372, %v5420
    %5422 = vmatmul.bf16.gmra.mxu0 %v5145
    %v5423 = vpop.f32.mrf.mxu0
    %v5424 = vadd.f32 %v5375, %v5423
    %v5425 = vpop.f32.mrf.mxu0
    %v5426 = vadd.f32 %v5377, %v5425
    %5427 = vmatmul.bf16.gmra.mxu0 %v5149
    %v5428 = vpop.f32.mrf.mxu0
    %v5429 = vadd.f32 %v5380, %v5428
    %v5430 = vpop.f32.mrf.mxu0
    %v5431 = vadd.f32 %v5382, %v5430
    %5432 = vmatmul.bf16.gmra.mxu0 %v5153
    %v5433 = vpop.f32.mrf.mxu0
    %v5434 = vadd.f32 %v5385, %v5433
    %v5435 = vpop.f32.mrf.mxu0
    %v5436 = vadd.f32 %v5387, %v5435
    %5437 = vmatmul.bf16.gmra.mxu0 %v5157
    %v5438 = vpop.f32.mrf.mxu0
    %v5439 = vadd.f32 %v5390, %v5438
    %v5440 = vpop.f32.mrf.mxu0
    %v5441 = vadd.f32 %v5392, %v5440
    %5442 = vmatmul.bf16.gmra.mxu0 %v5161
    %v5443 = vpop.f32.mrf.mxu0
    %v5444 = vadd.f32 %v5395, %v5443
    %v5445 = vpop.f32.mrf.mxu0
    %v5446 = vadd.f32 %v5397, %v5445
    %5447 = vmatmul.bf16.gmra.mxu0 %v5165
    %v5448 = vpop.f32.mrf.mxu0
    %v5449 = vadd.f32 %v5400, %v5448
    %v5450 = vpop.f32.mrf.mxu0
    %v5451 = vadd.f32 %v5402, %v5450
    %5452 = vdwg.mxu0
    %5453 = vmatpush.bf16.msra.mxu0 0
    %5454 = vmatpush.bf16.msra.mxu0 0
    %5455 = vmatpush.bf16.msra.mxu0 0
    %5456 = vmatpush.bf16.msra.mxu0 0
    %5457 = vmatpush.bf16.msra.mxu0 %v5310
    %5458 = vmatpush.bf16.msra.mxu0 %v5309
    %5459 = vmatpush.bf16.msra.mxu0 %v5308
    %5460 = vmatpush.bf16.msra.mxu0 %v5307
    %5461 = vmatmul.bf16.gmra.mxu0 %v5332
    %v5462 = vpop.f32.mrf.mxu0
    %v5463 = vadd.f32 %v5414, %v5462
    %v5464 = vpop.f32.mrf.mxu0
    %v5465 = vadd.f32 %v5416, %v5464
    %5466 = vmatmul.bf16.gmra.mxu0 %v5335
    %v5467 = vpop.f32.mrf.mxu0
    %v5468 = vadd.f32 %v5419, %v5467
    %v5469 = vpop.f32.mrf.mxu0
    %v5470 = vadd.f32 %v5421, %v5469
    %5471 = vmatmul.bf16.gmra.mxu0 %v5338
    %v5472 = vpop.f32.mrf.mxu0
    %v5473 = vadd.f32 %v5424, %v5472
    %v5474 = vpop.f32.mrf.mxu0
    %v5475 = vadd.f32 %v5426, %v5474
    %5476 = vmatmul.bf16.gmra.mxu0 %v5341
    %v5477 = vpop.f32.mrf.mxu0
    %v5478 = vadd.f32 %v5429, %v5477
    %v5479 = vpop.f32.mrf.mxu0
    %v5480 = vadd.f32 %v5431, %v5479
    %5481 = vmatmul.bf16.gmra.mxu0 %v5344
    %v5482 = vpop.f32.mrf.mxu0
    %v5483 = vadd.f32 %v5434, %v5482
    %v5484 = vpop.f32.mrf.mxu0
    %v5485 = vadd.f32 %v5436, %v5484
    %5486 = vmatmul.bf16.gmra.mxu0 %v5347
    %v5487 = vpop.f32.mrf.mxu0
    %v5488 = vadd.f32 %v5439, %v5487
    %v5489 = vpop.f32.mrf.mxu0
    %v5490 = vadd.f32 %v5441, %v5489
    %5491 = vmatmul.bf16.gmra.mxu0 %v5350
    %v5492 = vpop.f32.mrf.mxu0
    %v5493 = vadd.f32 %v5444, %v5492
    %v5494 = vpop.f32.mrf.mxu0
    %v5495 = vadd.f32 %v5446, %v5494
    %5496 = vmatmul.bf16.gmra.mxu0 %v5353
    %v5497 = vpop.f32.mrf.mxu0
    %v5498 = vadd.f32 %v5449, %v5497
    %v5499 = vpop.f32.mrf.mxu0
    %v5500 = vadd.f32 %v5451, %v5499
    %5501 = vdwg.mxu0
    %v5502 = vmax.f32 %v5463, 0.0
    %v5503 = vmax.f32 %v5465, 0.0
    %v5504 = vmax.f32 %v5468, 0.0
    %v5505 = vmax.f32 %v5470, 0.0
    %v5506 = vmax.f32 %v5473, 0.0
    %v5507 = vmax.f32 %v5475, 0.0
    %v5508 = vmax.f32 %v5478, 0.0
    %v5509 = vmax.f32 %v5480, 0.0
    %v5510 = vmax.f32 %v5483, 0.0
    %v5511 = vmax.f32 %v5485, 0.0
    %v5512 = vmax.f32 %v5488, 0.0
    %v5513 = vmax.f32 %v5490, 0.0
    %v5514 = vmax.f32 %v5493, 0.0
    %v5515 = vmax.f32 %v5495, 0.0
    %v5516 = vmax.f32 %v5498, 0.0
    %v5517 = vmax.f32 %v5500, 0.0
    %v5518 = vpack.c.bf16 %v5502, %v5502
    %v5519 = vpack.c.bf16 %v5503, %v5503
    %v5520 = vpack.c.bf16 %v5504, %v5504
    %v5521 = vpack.c.bf16 %v5505, %v5505
    %v5522 = vpack.c.bf16 %v5506, %v5506
    %v5523 = vpack.c.bf16 %v5507, %v5507
    %v5524 = vpack.c.bf16 %v5508, %v5508
    %v5525 = vpack.c.bf16 %v5509, %v5509
    %v5526 = vpack.c.bf16 %v5510, %v5510
    %v5527 = vpack.c.bf16 %v5511, %v5511
    %v5528 = vpack.c.bf16 %v5512, %v5512
    %v5529 = vpack.c.bf16 %v5513, %v5513
    %v5530 = vpack.c.bf16 %v5514, %v5514
    %v5531 = vpack.c.bf16 %v5515, %v5515
    %v5532 = vpack.c.bf16 %v5516, %v5516
    %v5533 = vpack.c.bf16 %v5517, %v5517
    %v5538 = vunpack.c.l.b16 %v5518
    %v5539 = vunpack.c.l.b16 %v5519
    %v5540 = vunpack.c.l.b16 %v5526
    %v5541 = vunpack.c.l.b16 %v5527
    %v5542 = vpack.c.b16 %v5539, %v5538
    %v5543 = vpack.c.b16 %v5541, %v5540
    %v5548 = vunpack.c.l.b16 %v5520
    %v5549 = vunpack.c.l.b16 %v5521
    %v5550 = vunpack.c.l.b16 %v5528
    %v5551 = vunpack.c.l.b16 %v5529
    %v5552 = vpack.c.b16 %v5549, %v5548
    %v5553 = vpack.c.b16 %v5551, %v5550
    %5554 = vrot.lane.b32.xlu0 %v5552, 64
    %v5555 = vpop.permute.xlu0 %5554
    %5556 = vrot.lane.b32.xlu0 %v5553, 64
    %v5557 = vpop.permute.xlu0 %5556
    %v5562 = vunpack.c.l.b16 %v5522
    %v5563 = vunpack.c.l.b16 %v5523
    %v5564 = vunpack.c.l.b16 %v5530
    %v5565 = vunpack.c.l.b16 %v5531
    %v5566 = vpack.c.b16 %v5563, %v5562
    %v5567 = vpack.c.b16 %v5565, %v5564
    %v5572 = vunpack.c.l.b16 %v5524
    %v5573 = vunpack.c.l.b16 %v5525
    %v5574 = vunpack.c.l.b16 %v5532
    %v5575 = vunpack.c.l.b16 %v5533
    %v5576 = vpack.c.b16 %v5573, %v5572
    %v5577 = vpack.c.b16 %v5575, %v5574
    %5578 = vrot.lane.b32.xlu0 %v5576, 64
    %v5579 = vpop.permute.xlu0 %5578
    %5580 = vrot.lane.b32.xlu0 %v5577, 64
    %v5581 = vpop.permute.xlu0 %5580
    %v5584 = vsel %vm2824, %v5542, %v5555
    %v5588 = vsel %vm2824, %v5543, %v5557
    %v5592 = vsel %vm2824, %v5566, %v5579
    %v5596 = vsel %vm2824, %v5567, %v5581
    %v5598 = vld [vmem:[%s9] sm:$0xff]
    %v5599 = vld [vmem:[%s9 + $0x8] sm:$0xff]
    %v5600 = vld [vmem:[%s9 + $0x10] sm:$0xff]
    %v5601 = vld [vmem:[%s9 + $0x18] sm:$0xff]
    %v5602 = vld [vmem:[%s9 + $0x20] sm:$0xff]
    %v5603 = vld [vmem:[%s9 + $0x28] sm:$0xff]
    %v5604 = vld [vmem:[%s9 + $0x30] sm:$0xff]
    %v5605 = vld [vmem:[%s9 + $0x38] sm:$0xff]
    %v5606 = vld [vmem:[%s9 + $0x40] sm:$0xff]
    %v5607 = vld [vmem:[%s9 + $0x48] sm:$0xff]
    %v5608 = vld [vmem:[%s9 + $0x50] sm:$0xff]
    %v5609 = vld [vmem:[%s9 + $0x58] sm:$0xff]
    %v5610 = vld [vmem:[%s9 + $0x60] sm:$0xff]
    %v5611 = vld [vmem:[%s9 + $0x68] sm:$0xff]
    %v5612 = vld [vmem:[%s9 + $0x70] sm:$0xff]
    %v5613 = vld [vmem:[%s9 + $0x78] sm:$0xff]
    %v5614 = vld [vmem:[%s9 + $0x80] sm:$0xff]
    %v5615 = vld [vmem:[%s9 + $0x88] sm:$0xff]
    %v5616 = vld [vmem:[%s9 + $0x90] sm:$0xff]
    %v5617 = vld [vmem:[%s9 + $0x98] sm:$0xff]
    %v5618 = vld [vmem:[%s9 + $0xa0] sm:$0xff]
    %v5619 = vld [vmem:[%s9 + $0xa8] sm:$0xff]
    %v5620 = vld [vmem:[%s9 + $0xb0] sm:$0xff]
    %v5621 = vld [vmem:[%s9 + $0xb8] sm:$0xff]
    %v5622 = vld [vmem:[%s9 + $0xc0] sm:$0xff]
    %v5623 = vld [vmem:[%s9 + $0xc8] sm:$0xff]
    %v5624 = vld [vmem:[%s9 + $0xd0] sm:$0xff]
    %v5625 = vld [vmem:[%s9 + $0xd8] sm:$0xff]
    %v5626 = vld [vmem:[%s9 + $0xe0] sm:$0xff]
    %v5627 = vld [vmem:[%s9 + $0xe8] sm:$0xff]
    %v5628 = vld [vmem:[%s9 + $0xf0] sm:$0xff]
    %v5629 = vld [vmem:[%s9 + $0xf8] sm:$0xff]
    %v5630 = vld [vmem:[%s9 + $0x100] sm:$0xff]
    %v5631 = vld [vmem:[%s9 + $0x108] sm:$0xff]
    %v5632 = vld [vmem:[%s9 + $0x110] sm:$0xff]
    %v5633 = vld [vmem:[%s9 + $0x118] sm:$0xff]
    %v5634 = vld [vmem:[%s9 + $0x120] sm:$0xff]
    %v5635 = vld [vmem:[%s9 + $0x128] sm:$0xff]
    %v5636 = vld [vmem:[%s9 + $0x130] sm:$0xff]
    %v5637 = vld [vmem:[%s9 + $0x138] sm:$0xff]
    %v5638 = vld [vmem:[%s9 + $0x140] sm:$0xff]
    %v5639 = vld [vmem:[%s9 + $0x148] sm:$0xff]
    %v5640 = vld [vmem:[%s9 + $0x150] sm:$0xff]
    %v5641 = vld [vmem:[%s9 + $0x158] sm:$0xff]
    %v5642 = vld [vmem:[%s9 + $0x160] sm:$0xff]
    %v5643 = vld [vmem:[%s9 + $0x168] sm:$0xff]
    %v5644 = vld [vmem:[%s9 + $0x170] sm:$0xff]
    %v5645 = vld [vmem:[%s9 + $0x178] sm:$0xff]
    %v5646 = vld [vmem:[%s9 + $0x180] sm:$0xff]
    %v5647 = vld [vmem:[%s9 + $0x188] sm:$0xff]
    %v5648 = vld [vmem:[%s9 + $0x190] sm:$0xff]
    %v5649 = vld [vmem:[%s9 + $0x198] sm:$0xff]
    %v5650 = vld [vmem:[%s9 + $0x1a0] sm:$0xff]
    %v5651 = vld [vmem:[%s9 + $0x1a8] sm:$0xff]
    %v5652 = vld [vmem:[%s9 + $0x1b0] sm:$0xff]
    %v5653 = vld [vmem:[%s9 + $0x1b8] sm:$0xff]
    %v5654 = vld [vmem:[%s9 + $0x1c0] sm:$0xff]
    %v5655 = vld [vmem:[%s9 + $0x1c8] sm:$0xff]
    %v5656 = vld [vmem:[%s9 + $0x1d0] sm:$0xff]
    %v5657 = vld [vmem:[%s9 + $0x1d8] sm:$0xff]
    %v5658 = vld [vmem:[%s9 + $0x1e0] sm:$0xff]
    %v5659 = vld [vmem:[%s9 + $0x1e8] sm:$0xff]
    %v5660 = vld [vmem:[%s9 + $0x1f0] sm:$0xff]
    %v5661 = vld [vmem:[%s9 + $0x1f8] sm:$0xff]
    %v5662 = vld [vmem:[%s10] sm:$0xf]
    %v5664 = vperm.slane %v5662, 0
    %v5665 = vperm.slane %v5662, 1
    %v5666 = vperm.slane %v5662, 2
    %v5667 = vperm.slane %v5662, 3
    %v5736 = vunpack.c.l.b16 %v5598
    %v5737 = vunpack.c.h.b16 %v5598
    %v5738 = vunpack.c.l.b16 %v5599
    %v5739 = vunpack.c.h.b16 %v5599
    %v5740 = vunpack.c.l.b16 %v5600
    %v5741 = vunpack.c.h.b16 %v5600
    %v5742 = vunpack.c.l.b16 %v5601
    %v5743 = vunpack.c.h.b16 %v5601
    %v5744 = vunpack.c.l.b16 %v5602
    %v5745 = vunpack.c.h.b16 %v5602
    %v5746 = vunpack.c.l.b16 %v5603
    %v5747 = vunpack.c.h.b16 %v5603
    %v5748 = vunpack.c.l.b16 %v5604
    %v5749 = vunpack.c.h.b16 %v5604
    %v5750 = vunpack.c.l.b16 %v5605
    %v5751 = vunpack.c.h.b16 %v5605
    %v5752 = vunpack.c.l.b16 %v5606
    %v5753 = vunpack.c.h.b16 %v5606
    %v5754 = vunpack.c.l.b16 %v5607
    %v5755 = vunpack.c.h.b16 %v5607
    %v5756 = vunpack.c.l.b16 %v5608
    %v5757 = vunpack.c.h.b16 %v5608
    %v5758 = vunpack.c.l.b16 %v5609
    %v5759 = vunpack.c.h.b16 %v5609
    %v5760 = vunpack.c.l.b16 %v5610
    %v5761 = vunpack.c.h.b16 %v5610
    %v5762 = vunpack.c.l.b16 %v5611
    %v5763 = vunpack.c.h.b16 %v5611
    %v5764 = vunpack.c.l.b16 %v5612
    %v5765 = vunpack.c.h.b16 %v5612
    %v5766 = vunpack.c.l.b16 %v5613
    %v5767 = vunpack.c.h.b16 %v5613
    %v5768 = vunpack.c.l.b16 %v5614
    %v5769 = vunpack.c.h.b16 %v5614
    %v5770 = vunpack.c.l.b16 %v5615
    %v5771 = vunpack.c.h.b16 %v5615
    %v5772 = vunpack.c.l.b16 %v5616
    %v5773 = vunpack.c.h.b16 %v5616
    %v5774 = vunpack.c.l.b16 %v5617
    %v5775 = vunpack.c.h.b16 %v5617
    %v5776 = vunpack.c.l.b16 %v5618
    %v5777 = vunpack.c.h.b16 %v5618
    %v5778 = vunpack.c.l.b16 %v5619
    %v5779 = vunpack.c.h.b16 %v5619
    %v5780 = vunpack.c.l.b16 %v5620
    %v5781 = vunpack.c.h.b16 %v5620
    %v5782 = vunpack.c.l.b16 %v5621
    %v5783 = vunpack.c.h.b16 %v5621
    %v5784 = vunpack.c.l.b16 %v5622
    %v5785 = vunpack.c.h.b16 %v5622
    %v5786 = vunpack.c.l.b16 %v5623
    %v5787 = vunpack.c.h.b16 %v5623
    %v5788 = vunpack.c.l.b16 %v5624
    %v5789 = vunpack.c.h.b16 %v5624
    %v5790 = vunpack.c.l.b16 %v5625
    %v5791 = vunpack.c.h.b16 %v5625
    %v5792 = vunpack.c.l.b16 %v5626
    %v5793 = vunpack.c.h.b16 %v5626
    %v5794 = vunpack.c.l.b16 %v5627
    %v5795 = vunpack.c.h.b16 %v5627
    %v5796 = vunpack.c.l.b16 %v5628
    %v5797 = vunpack.c.h.b16 %v5628
    %v5798 = vunpack.c.l.b16 %v5629
    %v5799 = vunpack.c.h.b16 %v5629
    %v5800 = vunpack.c.l.b16 %v5630
    %v5801 = vunpack.c.h.b16 %v5630
    %v5802 = vunpack.c.l.b16 %v5631
    %v5803 = vunpack.c.h.b16 %v5631
    %v5804 = vunpack.c.l.b16 %v5632
    %v5805 = vunpack.c.h.b16 %v5632
    %v5806 = vunpack.c.l.b16 %v5633
    %v5807 = vunpack.c.h.b16 %v5633
    %v5808 = vunpack.c.l.b16 %v5634
    %v5809 = vunpack.c.h.b16 %v5634
    %v5810 = vunpack.c.l.b16 %v5635
    %v5811 = vunpack.c.h.b16 %v5635
    %v5812 = vunpack.c.l.b16 %v5636
    %v5813 = vunpack.c.h.b16 %v5636
    %v5814 = vunpack.c.l.b16 %v5637
    %v5815 = vunpack.c.h.b16 %v5637
    %v5816 = vunpack.c.l.b16 %v5638
    %v5817 = vunpack.c.h.b16 %v5638
    %v5818 = vunpack.c.l.b16 %v5639
    %v5819 = vunpack.c.h.b16 %v5639
    %v5820 = vunpack.c.l.b16 %v5640
    %v5821 = vunpack.c.h.b16 %v5640
    %v5822 = vunpack.c.l.b16 %v5641
    %v5823 = vunpack.c.h.b16 %v5641
    %v5824 = vunpack.c.l.b16 %v5642
    %v5825 = vunpack.c.h.b16 %v5642
    %v5826 = vunpack.c.l.b16 %v5643
    %v5827 = vunpack.c.h.b16 %v5643
    %v5828 = vunpack.c.l.b16 %v5644
    %v5829 = vunpack.c.h.b16 %v5644
    %v5830 = vunpack.c.l.b16 %v5645
    %v5831 = vunpack.c.h.b16 %v5645
    %v5832 = vunpack.c.l.b16 %v5646
    %v5833 = vunpack.c.h.b16 %v5646
    %v5834 = vunpack.c.l.b16 %v5647
    %v5835 = vunpack.c.h.b16 %v5647
    %v5836 = vunpack.c.l.b16 %v5648
    %v5837 = vunpack.c.h.b16 %v5648
    %v5838 = vunpack.c.l.b16 %v5649
    %v5839 = vunpack.c.h.b16 %v5649
    %v5840 = vunpack.c.l.b16 %v5650
    %v5841 = vunpack.c.h.b16 %v5650
    %v5842 = vunpack.c.l.b16 %v5651
    %v5843 = vunpack.c.h.b16 %v5651
    %v5844 = vunpack.c.l.b16 %v5652
    %v5845 = vunpack.c.h.b16 %v5652
    %v5846 = vunpack.c.l.b16 %v5653
    %v5847 = vunpack.c.h.b16 %v5653
    %v5848 = vunpack.c.l.b16 %v5654
    %v5849 = vunpack.c.h.b16 %v5654
    %v5850 = vunpack.c.l.b16 %v5655
    %v5851 = vunpack.c.h.b16 %v5655
    %v5852 = vunpack.c.l.b16 %v5656
    %v5853 = vunpack.c.h.b16 %v5656
    %v5854 = vunpack.c.l.b16 %v5657
    %v5855 = vunpack.c.h.b16 %v5657
    %v5856 = vunpack.c.l.b16 %v5658
    %v5857 = vunpack.c.h.b16 %v5658
    %v5858 = vunpack.c.l.b16 %v5659
    %v5859 = vunpack.c.h.b16 %v5659
    %v5860 = vunpack.c.l.b16 %v5660
    %v5861 = vunpack.c.h.b16 %v5660
    %v5862 = vunpack.c.l.b16 %v5661
    %v5863 = vunpack.c.h.b16 %v5661
    %v5864 = vpack.c.b16 %v5740, %v5736
    %v5865 = vpack.c.b16 %v5741, %v5737
    %v5866 = vpack.c.b16 %v5742, %v5738
    %v5867 = vpack.c.b16 %v5743, %v5739
    %v5868 = vpack.c.b16 %v5748, %v5744
    %v5869 = vpack.c.b16 %v5749, %v5745
    %v5870 = vpack.c.b16 %v5750, %v5746
    %v5871 = vpack.c.b16 %v5751, %v5747
    %v5872 = vpack.c.b16 %v5756, %v5752
    %v5873 = vpack.c.b16 %v5757, %v5753
    %v5874 = vpack.c.b16 %v5758, %v5754
    %v5875 = vpack.c.b16 %v5759, %v5755
    %v5876 = vpack.c.b16 %v5764, %v5760
    %v5877 = vpack.c.b16 %v5765, %v5761
    %v5878 = vpack.c.b16 %v5766, %v5762
    %v5879 = vpack.c.b16 %v5767, %v5763
    %v5880 = vpack.c.b16 %v5772, %v5768
    %v5881 = vpack.c.b16 %v5773, %v5769
    %v5882 = vpack.c.b16 %v5774, %v5770
    %v5883 = vpack.c.b16 %v5775, %v5771
    %v5884 = vpack.c.b16 %v5780, %v5776
    %v5885 = vpack.c.b16 %v5781, %v5777
    %v5886 = vpack.c.b16 %v5782, %v5778
    %v5887 = vpack.c.b16 %v5783, %v5779
    %v5888 = vpack.c.b16 %v5788, %v5784
    %v5889 = vpack.c.b16 %v5789, %v5785
    %v5890 = vpack.c.b16 %v5790, %v5786
    %v5891 = vpack.c.b16 %v5791, %v5787
    %v5892 = vpack.c.b16 %v5796, %v5792
    %v5893 = vpack.c.b16 %v5797, %v5793
    %v5894 = vpack.c.b16 %v5798, %v5794
    %v5895 = vpack.c.b16 %v5799, %v5795
    %v5896 = vpack.c.b16 %v5804, %v5800
    %v5897 = vpack.c.b16 %v5805, %v5801
    %v5898 = vpack.c.b16 %v5806, %v5802
    %v5899 = vpack.c.b16 %v5807, %v5803
    %v5900 = vpack.c.b16 %v5812, %v5808
    %v5901 = vpack.c.b16 %v5813, %v5809
    %v5902 = vpack.c.b16 %v5814, %v5810
    %v5903 = vpack.c.b16 %v5815, %v5811
    %v5904 = vpack.c.b16 %v5820, %v5816
    %v5905 = vpack.c.b16 %v5821, %v5817
    %v5906 = vpack.c.b16 %v5822, %v5818
    %v5907 = vpack.c.b16 %v5823, %v5819
    %v5908 = vpack.c.b16 %v5828, %v5824
    %v5909 = vpack.c.b16 %v5829, %v5825
    %v5910 = vpack.c.b16 %v5830, %v5826
    %v5911 = vpack.c.b16 %v5831, %v5827
    %v5912 = vpack.c.b16 %v5836, %v5832
    %v5913 = vpack.c.b16 %v5837, %v5833
    %v5914 = vpack.c.b16 %v5838, %v5834
    %v5915 = vpack.c.b16 %v5839, %v5835
    %v5916 = vpack.c.b16 %v5844, %v5840
    %v5917 = vpack.c.b16 %v5845, %v5841
    %v5918 = vpack.c.b16 %v5846, %v5842
    %v5919 = vpack.c.b16 %v5847, %v5843
    %v5920 = vpack.c.b16 %v5852, %v5848
    %v5921 = vpack.c.b16 %v5853, %v5849
    %v5922 = vpack.c.b16 %v5854, %v5850
    %v5923 = vpack.c.b16 %v5855, %v5851
    %v5924 = vpack.c.b16 %v5860, %v5856
    %v5925 = vpack.c.b16 %v5861, %v5857
    %v5926 = vpack.c.b16 %v5862, %v5858
    %v5927 = vpack.c.b16 %v5863, %v5859
    %5992 = vmatpush.bf16.msra.mxu0 %v5892
    %5993 = vmatpush.bf16.msra.mxu0 %v5888
    %5994 = vmatpush.bf16.msra.mxu0 %v5884
    %5995 = vmatpush.bf16.msra.mxu0 %v5880
    %5996 = vmatpush.bf16.msra.mxu0 %v5876
    %5997 = vmatpush.bf16.msra.mxu0 %v5872
    %5998 = vmatpush.bf16.msra.mxu0 %v5868
    %5999 = vmatpush.bf16.msra.mxu0 %v5864
    %6000 = vmatmul.bf16.gmra.mxu0 %v5584
    %v6001 = vpop.f32.mrf.mxu0
    %v6002 = vadd.f32 %v5664, %v6001
    %v6003 = vpop.f32.mrf.mxu0
    %6004 = vmatmul.bf16.gmra.mxu0 %v5588
    %v6005 = vpop.f32.mrf.mxu0
    %v6006 = vadd.f32 %v5664, %v6005
    %v6007 = vpop.f32.mrf.mxu0
    %6008 = vdwg.mxu0
    %6009 = vmatpush.bf16.msra.mxu0 %v5924
    %6010 = vmatpush.bf16.msra.mxu0 %v5920
    %6011 = vmatpush.bf16.msra.mxu0 %v5916
    %6012 = vmatpush.bf16.msra.mxu0 %v5912
    %6013 = vmatpush.bf16.msra.mxu0 %v5908
    %6014 = vmatpush.bf16.msra.mxu0 %v5904
    %6015 = vmatpush.bf16.msra.mxu0 %v5900
    %6016 = vmatpush.bf16.msra.mxu0 %v5896
    %6017 = vmatmul.bf16.gmra.mxu0 %v5592
    %v6018 = vpop.f32.mrf.mxu0
    %v6019 = vadd.f32 %v6002, %v6018
    %v6020 = vpop.f32.mrf.mxu0
    %6021 = vmatmul.bf16.gmra.mxu0 %v5596
    %v6022 = vpop.f32.mrf.mxu0
    %v6023 = vadd.f32 %v6006, %v6022
    %v6024 = vpop.f32.mrf.mxu0
    %6025 = vdwg.mxu0
    %6026 = vmatpush.bf16.msra.mxu0 %v5893
    %6027 = vmatpush.bf16.msra.mxu0 %v5889
    %6028 = vmatpush.bf16.msra.mxu0 %v5885
    %6029 = vmatpush.bf16.msra.mxu0 %v5881
    %6030 = vmatpush.bf16.msra.mxu0 %v5877
    %6031 = vmatpush.bf16.msra.mxu0 %v5873
    %6032 = vmatpush.bf16.msra.mxu0 %v5869
    %6033 = vmatpush.bf16.msra.mxu0 %v5865
    %6034 = vmatmul.bf16.gmra.mxu0 %v5584
    %v6035 = vpop.f32.mrf.mxu0
    %v6036 = vadd.f32 %v5665, %v6035
    %v6037 = vpop.f32.mrf.mxu0
    %6038 = vmatmul.bf16.gmra.mxu0 %v5588
    %v6039 = vpop.f32.mrf.mxu0
    %v6040 = vadd.f32 %v5665, %v6039
    %v6041 = vpop.f32.mrf.mxu0
    %6042 = vdwg.mxu0
    %6043 = vmatpush.bf16.msra.mxu0 %v5925
    %6044 = vmatpush.bf16.msra.mxu0 %v5921
    %6045 = vmatpush.bf16.msra.mxu0 %v5917
    %6046 = vmatpush.bf16.msra.mxu0 %v5913
    %6047 = vmatpush.bf16.msra.mxu0 %v5909
    %6048 = vmatpush.bf16.msra.mxu0 %v5905
    %6049 = vmatpush.bf16.msra.mxu0 %v5901
    %6050 = vmatpush.bf16.msra.mxu0 %v5897
    %6051 = vmatmul.bf16.gmra.mxu0 %v5592
    %v6052 = vpop.f32.mrf.mxu0
    %v6053 = vadd.f32 %v6036, %v6052
    %v6054 = vpop.f32.mrf.mxu0
    %6055 = vmatmul.bf16.gmra.mxu0 %v5596
    %v6056 = vpop.f32.mrf.mxu0
    %v6057 = vadd.f32 %v6040, %v6056
    %v6058 = vpop.f32.mrf.mxu0
    %6059 = vdwg.mxu0
    %6060 = vmatpush.bf16.msra.mxu0 %v5894
    %6061 = vmatpush.bf16.msra.mxu0 %v5890
    %6062 = vmatpush.bf16.msra.mxu0 %v5886
    %6063 = vmatpush.bf16.msra.mxu0 %v5882
    %6064 = vmatpush.bf16.msra.mxu0 %v5878
    %6065 = vmatpush.bf16.msra.mxu0 %v5874
    %6066 = vmatpush.bf16.msra.mxu0 %v5870
    %6067 = vmatpush.bf16.msra.mxu0 %v5866
    %6068 = vmatmul.bf16.gmra.mxu0 %v5584
    %v6069 = vpop.f32.mrf.mxu0
    %v6070 = vadd.f32 %v5666, %v6069
    %v6071 = vpop.f32.mrf.mxu0
    %6072 = vmatmul.bf16.gmra.mxu0 %v5588
    %v6073 = vpop.f32.mrf.mxu0
    %v6074 = vadd.f32 %v5666, %v6073
    %v6075 = vpop.f32.mrf.mxu0
    %6076 = vdwg.mxu0
    %6077 = vmatpush.bf16.msra.mxu0 %v5926
    %6078 = vmatpush.bf16.msra.mxu0 %v5922
    %6079 = vmatpush.bf16.msra.mxu0 %v5918
    %6080 = vmatpush.bf16.msra.mxu0 %v5914
    %6081 = vmatpush.bf16.msra.mxu0 %v5910
    %6082 = vmatpush.bf16.msra.mxu0 %v5906
    %6083 = vmatpush.bf16.msra.mxu0 %v5902
    %6084 = vmatpush.bf16.msra.mxu0 %v5898
    %6085 = vmatmul.bf16.gmra.mxu0 %v5592
    %v6086 = vpop.f32.mrf.mxu0
    %v6087 = vadd.f32 %v6070, %v6086
    %v6088 = vpop.f32.mrf.mxu0
    %6089 = vmatmul.bf16.gmra.mxu0 %v5596
    %v6090 = vpop.f32.mrf.mxu0
    %v6091 = vadd.f32 %v6074, %v6090
    %v6092 = vpop.f32.mrf.mxu0
    %6093 = vdwg.mxu0
    %6094 = vmatpush.bf16.msra.mxu0 %v5895
    %6095 = vmatpush.bf16.msra.mxu0 %v5891
    %6096 = vmatpush.bf16.msra.mxu0 %v5887
    %6097 = vmatpush.bf16.msra.mxu0 %v5883
    %6098 = vmatpush.bf16.msra.mxu0 %v5879
    %6099 = vmatpush.bf16.msra.mxu0 %v5875
    %6100 = vmatpush.bf16.msra.mxu0 %v5871
    %6101 = vmatpush.bf16.msra.mxu0 %v5867
    %6102 = vmatmul.bf16.gmra.mxu0 %v5584
    %v6103 = vpop.f32.mrf.mxu0
    %v6104 = vadd.f32 %v5667, %v6103
    %v6105 = vpop.f32.mrf.mxu0
    %6106 = vmatmul.bf16.gmra.mxu0 %v5588
    %v6107 = vpop.f32.mrf.mxu0
    %v6108 = vadd.f32 %v5667, %v6107
    %v6109 = vpop.f32.mrf.mxu0
    %6110 = vdwg.mxu0
    %6111 = vmatpush.bf16.msra.mxu0 %v5927
    %6112 = vmatpush.bf16.msra.mxu0 %v5923
    %6113 = vmatpush.bf16.msra.mxu0 %v5919
    %6114 = vmatpush.bf16.msra.mxu0 %v5915
    %6115 = vmatpush.bf16.msra.mxu0 %v5911
    %6116 = vmatpush.bf16.msra.mxu0 %v5907
    %6117 = vmatpush.bf16.msra.mxu0 %v5903
    %6118 = vmatpush.bf16.msra.mxu0 %v5899
    %6119 = vmatmul.bf16.gmra.mxu0 %v5592
    %v6120 = vpop.f32.mrf.mxu0
    %v6121 = vadd.f32 %v6104, %v6120
    %v6122 = vpop.f32.mrf.mxu0
    %6123 = vmatmul.bf16.gmra.mxu0 %v5596
    %v6124 = vpop.f32.mrf.mxu0
    %v6125 = vadd.f32 %v6108, %v6124
    %v6126 = vpop.f32.mrf.mxu0
    %6127 = vdwg.mxu0
    %v6128 = vld [vmem:[%s11] sm:$0xff]
    %v6129 = vld [vmem:[%s11 + $0x8] sm:$0xff]
    %v6130 = vld [vmem:[%s11 + $0x10] sm:$0xff]
    %v6131 = vld [vmem:[%s11 + $0x18] sm:$0xff]
    %v6132 = vld [vmem:[%s11 + $0x20] sm:$0xff]
    %v6133 = vld [vmem:[%s11 + $0x28] sm:$0xff]
    %v6134 = vld [vmem:[%s11 + $0x30] sm:$0xff]
    %v6135 = vld [vmem:[%s11 + $0x38] sm:$0xff]
    %v6136 = vld [vmem:[%s11 + $0x40] sm:$0xff]
    %v6137 = vld [vmem:[%s11 + $0x48] sm:$0xff]
    %v6138 = vld [vmem:[%s11 + $0x50] sm:$0xff]
    %v6139 = vld [vmem:[%s11 + $0x58] sm:$0xff]
    %v6140 = vld [vmem:[%s11 + $0x60] sm:$0xff]
    %v6141 = vld [vmem:[%s11 + $0x68] sm:$0xff]
    %v6142 = vld [vmem:[%s11 + $0x70] sm:$0xff]
    %v6143 = vld [vmem:[%s11 + $0x78] sm:$0xff]
    %v6144 = vld [vmem:[%s11 + $0x80] sm:$0xff]
    %v6145 = vld [vmem:[%s11 + $0x88] sm:$0xff]
    %v6146 = vld [vmem:[%s11 + $0x90] sm:$0xff]
    %v6147 = vld [vmem:[%s11 + $0x98] sm:$0xff]
    %v6148 = vld [vmem:[%s11 + $0xa0] sm:$0xff]
    %v6149 = vld [vmem:[%s11 + $0xa8] sm:$0xff]
    %v6150 = vld [vmem:[%s11 + $0xb0] sm:$0xff]
    %v6151 = vld [vmem:[%s11 + $0xb8] sm:$0xff]
    %v6152 = vld [vmem:[%s11 + $0xc0] sm:$0xff]
    %v6153 = vld [vmem:[%s11 + $0xc8] sm:$0xff]
    %v6154 = vld [vmem:[%s11 + $0xd0] sm:$0xff]
    %v6155 = vld [vmem:[%s11 + $0xd8] sm:$0xff]
    %v6156 = vld [vmem:[%s11 + $0xe0] sm:$0xff]
    %v6157 = vld [vmem:[%s11 + $0xe8] sm:$0xff]
    %v6158 = vld [vmem:[%s11 + $0xf0] sm:$0xff]
    %v6159 = vld [vmem:[%s11 + $0xf8] sm:$0xff]
    %v6160 = vld [vmem:[%s11 + $0x100] sm:$0xff]
    %v6161 = vld [vmem:[%s11 + $0x108] sm:$0xff]
    %v6162 = vld [vmem:[%s11 + $0x110] sm:$0xff]
    %v6163 = vld [vmem:[%s11 + $0x118] sm:$0xff]
    %v6164 = vld [vmem:[%s11 + $0x120] sm:$0xff]
    %v6165 = vld [vmem:[%s11 + $0x128] sm:$0xff]
    %v6166 = vld [vmem:[%s11 + $0x130] sm:$0xff]
    %v6167 = vld [vmem:[%s11 + $0x138] sm:$0xff]
    %v6168 = vld [vmem:[%s11 + $0x140] sm:$0xff]
    %v6169 = vld [vmem:[%s11 + $0x148] sm:$0xff]
    %v6170 = vld [vmem:[%s11 + $0x150] sm:$0xff]
    %v6171 = vld [vmem:[%s11 + $0x158] sm:$0xff]
    %v6172 = vld [vmem:[%s11 + $0x160] sm:$0xff]
    %v6173 = vld [vmem:[%s11 + $0x168] sm:$0xff]
    %v6174 = vld [vmem:[%s11 + $0x170] sm:$0xff]
    %v6175 = vld [vmem:[%s11 + $0x178] sm:$0xff]
    %v6176 = vld [vmem:[%s11 + $0x180] sm:$0xff]
    %v6177 = vld [vmem:[%s11 + $0x188] sm:$0xff]
    %v6178 = vld [vmem:[%s11 + $0x190] sm:$0xff]
    %v6179 = vld [vmem:[%s11 + $0x198] sm:$0xff]
    %v6180 = vld [vmem:[%s11 + $0x1a0] sm:$0xff]
    %v6181 = vld [vmem:[%s11 + $0x1a8] sm:$0xff]
    %v6182 = vld [vmem:[%s11 + $0x1b0] sm:$0xff]
    %v6183 = vld [vmem:[%s11 + $0x1b8] sm:$0xff]
    %v6184 = vld [vmem:[%s11 + $0x1c0] sm:$0xff]
    %v6185 = vld [vmem:[%s11 + $0x1c8] sm:$0xff]
    %v6186 = vld [vmem:[%s11 + $0x1d0] sm:$0xff]
    %v6187 = vld [vmem:[%s11 + $0x1d8] sm:$0xff]
    %v6188 = vld [vmem:[%s11 + $0x1e0] sm:$0xff]
    %v6189 = vld [vmem:[%s11 + $0x1e8] sm:$0xff]
    %v6190 = vld [vmem:[%s11 + $0x1f0] sm:$0xff]
    %v6191 = vld [vmem:[%s11 + $0x1f8] sm:$0xff]
    %v6192 = vld [vmem:[%s11 + $0x200] sm:$0xff]
    %v6193 = vld [vmem:[%s11 + $0x208] sm:$0xff]
    %v6194 = vld [vmem:[%s11 + $0x210] sm:$0xff]
    %v6195 = vld [vmem:[%s11 + $0x218] sm:$0xff]
    %v6196 = vld [vmem:[%s11 + $0x220] sm:$0xff]
    %v6197 = vld [vmem:[%s11 + $0x228] sm:$0xff]
    %v6198 = vld [vmem:[%s11 + $0x230] sm:$0xff]
    %v6199 = vld [vmem:[%s11 + $0x238] sm:$0xff]
    %v6200 = vld [vmem:[%s11 + $0x240] sm:$0xff]
    %v6201 = vld [vmem:[%s11 + $0x248] sm:$0xff]
    %v6202 = vld [vmem:[%s11 + $0x250] sm:$0xff]
    %v6203 = vld [vmem:[%s11 + $0x258] sm:$0xff]
    %v6204 = vld [vmem:[%s11 + $0x260] sm:$0xff]
    %v6205 = vld [vmem:[%s11 + $0x268] sm:$0xff]
    %v6206 = vld [vmem:[%s11 + $0x270] sm:$0xff]
    %v6207 = vld [vmem:[%s11 + $0x278] sm:$0xff]
    %v6208 = vld [vmem:[%s11 + $0x280] sm:$0xff]
    %v6209 = vld [vmem:[%s11 + $0x288] sm:$0xff]
    %v6210 = vld [vmem:[%s11 + $0x290] sm:$0xff]
    %v6211 = vld [vmem:[%s11 + $0x298] sm:$0xff]
    %v6212 = vld [vmem:[%s11 + $0x2a0] sm:$0xff]
    %v6213 = vld [vmem:[%s11 + $0x2a8] sm:$0xff]
    %v6214 = vld [vmem:[%s11 + $0x2b0] sm:$0xff]
    %v6215 = vld [vmem:[%s11 + $0x2b8] sm:$0xff]
    %v6216 = vld [vmem:[%s11 + $0x2c0] sm:$0xff]
    %v6217 = vld [vmem:[%s11 + $0x2c8] sm:$0xff]
    %v6218 = vld [vmem:[%s11 + $0x2d0] sm:$0xff]
    %v6219 = vld [vmem:[%s11 + $0x2d8] sm:$0xff]
    %v6220 = vld [vmem:[%s11 + $0x2e0] sm:$0xff]
    %v6221 = vld [vmem:[%s11 + $0x2e8] sm:$0xff]
    %v6222 = vld [vmem:[%s11 + $0x2f0] sm:$0xff]
    %v6223 = vld [vmem:[%s11 + $0x2f8] sm:$0xff]
    %v6224 = vld [vmem:[%s11 + $0x300] sm:$0xff]
    %v6225 = vld [vmem:[%s11 + $0x308] sm:$0xff]
    %v6226 = vld [vmem:[%s11 + $0x310] sm:$0xff]
    %v6227 = vld [vmem:[%s11 + $0x318] sm:$0xff]
    %v6228 = vld [vmem:[%s11 + $0x320] sm:$0xff]
    %v6229 = vld [vmem:[%s11 + $0x328] sm:$0xff]
    %v6230 = vld [vmem:[%s11 + $0x330] sm:$0xff]
    %v6231 = vld [vmem:[%s11 + $0x338] sm:$0xff]
    %v6232 = vld [vmem:[%s11 + $0x340] sm:$0xff]
    %v6233 = vld [vmem:[%s11 + $0x348] sm:$0xff]
    %v6234 = vld [vmem:[%s11 + $0x350] sm:$0xff]
    %v6235 = vld [vmem:[%s11 + $0x358] sm:$0xff]
    %v6236 = vld [vmem:[%s11 + $0x360] sm:$0xff]
    %v6237 = vld [vmem:[%s11 + $0x368] sm:$0xff]
    %v6238 = vld [vmem:[%s11 + $0x370] sm:$0xff]
    %v6239 = vld [vmem:[%s11 + $0x378] sm:$0xff]
    %v6240 = vld [vmem:[%s11 + $0x380] sm:$0xff]
    %v6241 = vld [vmem:[%s11 + $0x388] sm:$0xff]
    %v6242 = vld [vmem:[%s11 + $0x390] sm:$0xff]
    %v6243 = vld [vmem:[%s11 + $0x398] sm:$0xff]
    %v6244 = vld [vmem:[%s11 + $0x3a0] sm:$0xff]
    %v6245 = vld [vmem:[%s11 + $0x3a8] sm:$0xff]
    %v6246 = vld [vmem:[%s11 + $0x3b0] sm:$0xff]
    %v6247 = vld [vmem:[%s11 + $0x3b8] sm:$0xff]
    %v6248 = vld [vmem:[%s11 + $0x3c0] sm:$0xff]
    %v6249 = vld [vmem:[%s11 + $0x3c8] sm:$0xff]
    %v6250 = vld [vmem:[%s11 + $0x3d0] sm:$0xff]
    %v6251 = vld [vmem:[%s11 + $0x3d8] sm:$0xff]
    %v6252 = vld [vmem:[%s11 + $0x3e0] sm:$0xff]
    %v6253 = vld [vmem:[%s11 + $0x3e8] sm:$0xff]
    %v6254 = vld [vmem:[%s11 + $0x3f0] sm:$0xff]
    %v6255 = vld [vmem:[%s11 + $0x3f8] sm:$0xff]
    %v6256 = vld [vmem:[%s11 + $0x400] sm:$0xff]
    %v6257 = vld [vmem:[%s11 + $0x408] sm:$0xff]
    %v6258 = vld [vmem:[%s11 + $0x410] sm:$0xff]
    %v6259 = vld [vmem:[%s11 + $0x418] sm:$0xff]
    %v6260 = vld [vmem:[%s11 + $0x420] sm:$0xff]
    %v6261 = vld [vmem:[%s11 + $0x428] sm:$0xff]
    %v6262 = vld [vmem:[%s11 + $0x430] sm:$0xff]
    %v6263 = vld [vmem:[%s11 + $0x438] sm:$0xff]
    %v6264 = vld [vmem:[%s11 + $0x440] sm:$0xff]
    %v6265 = vld [vmem:[%s11 + $0x448] sm:$0xff]
    %v6266 = vld [vmem:[%s11 + $0x450] sm:$0xff]
    %v6267 = vld [vmem:[%s11 + $0x458] sm:$0xff]
    %v6268 = vld [vmem:[%s11 + $0x460] sm:$0xff]
    %v6269 = vld [vmem:[%s11 + $0x468] sm:$0xff]
    %v6270 = vld [vmem:[%s11 + $0x470] sm:$0xff]
    %v6271 = vld [vmem:[%s11 + $0x478] sm:$0xff]
    %v6272 = vld [vmem:[%s11 + $0x480] sm:$0xff]
    %v6273 = vld [vmem:[%s11 + $0x488] sm:$0xff]
    %v6274 = vld [vmem:[%s11 + $0x490] sm:$0xff]
    %v6275 = vld [vmem:[%s11 + $0x498] sm:$0xff]
    %v6276 = vld [vmem:[%s11 + $0x4a0] sm:$0xff]
    %v6277 = vld [vmem:[%s11 + $0x4a8] sm:$0xff]
    %v6278 = vld [vmem:[%s11 + $0x4b0] sm:$0xff]
    %v6279 = vld [vmem:[%s11 + $0x4b8] sm:$0xff]
    %v6280 = vld [vmem:[%s11 + $0x4c0] sm:$0xff]
    %v6281 = vld [vmem:[%s11 + $0x4c8] sm:$0xff]
    %v6282 = vld [vmem:[%s11 + $0x4d0] sm:$0xff]
    %v6283 = vld [vmem:[%s11 + $0x4d8] sm:$0xff]
    %v6284 = vld [vmem:[%s11 + $0x4e0] sm:$0xff]
    %v6285 = vld [vmem:[%s11 + $0x4e8] sm:$0xff]
    %v6286 = vld [vmem:[%s11 + $0x4f0] sm:$0xff]
    %v6287 = vld [vmem:[%s11 + $0x4f8] sm:$0xff]
    %v6288 = vld [vmem:[%s11 + $0x500] sm:$0xff]
    %v6289 = vld [vmem:[%s11 + $0x508] sm:$0xff]
    %v6290 = vld [vmem:[%s11 + $0x510] sm:$0xff]
    %v6291 = vld [vmem:[%s11 + $0x518] sm:$0xff]
    %v6292 = vld [vmem:[%s11 + $0x520] sm:$0xff]
    %v6293 = vld [vmem:[%s11 + $0x528] sm:$0xff]
    %v6294 = vld [vmem:[%s11 + $0x530] sm:$0xff]
    %v6295 = vld [vmem:[%s11 + $0x538] sm:$0xff]
    %v6296 = vld [vmem:[%s11 + $0x540] sm:$0xff]
    %v6297 = vld [vmem:[%s11 + $0x548] sm:$0xff]
    %v6298 = vld [vmem:[%s11 + $0x550] sm:$0xff]
    %v6299 = vld [vmem:[%s11 + $0x558] sm:$0xff]
    %v6300 = vld [vmem:[%s11 + $0x560] sm:$0xff]
    %v6301 = vld [vmem:[%s11 + $0x568] sm:$0xff]
    %v6302 = vld [vmem:[%s11 + $0x570] sm:$0xff]
    %v6303 = vld [vmem:[%s11 + $0x578] sm:$0xff]
    %v6304 = vld [vmem:[%s11 + $0x580] sm:$0xff]
    %v6305 = vld [vmem:[%s11 + $0x588] sm:$0xff]
    %v6306 = vld [vmem:[%s11 + $0x590] sm:$0xff]
    %v6307 = vld [vmem:[%s11 + $0x598] sm:$0xff]
    %v6308 = vld [vmem:[%s11 + $0x5a0] sm:$0xff]
    %v6309 = vld [vmem:[%s11 + $0x5a8] sm:$0xff]
    %v6310 = vld [vmem:[%s11 + $0x5b0] sm:$0xff]
    %v6311 = vld [vmem:[%s11 + $0x5b8] sm:$0xff]
    %v6312 = vld [vmem:[%s11 + $0x5c0] sm:$0xff]
    %v6313 = vld [vmem:[%s11 + $0x5c8] sm:$0xff]
    %v6314 = vld [vmem:[%s11 + $0x5d0] sm:$0xff]
    %v6315 = vld [vmem:[%s11 + $0x5d8] sm:$0xff]
    %v6316 = vld [vmem:[%s11 + $0x5e0] sm:$0xff]
    %v6317 = vld [vmem:[%s11 + $0x5e8] sm:$0xff]
    %v6318 = vld [vmem:[%s11 + $0x5f0] sm:$0xff]
    %v6319 = vld [vmem:[%s11 + $0x5f8] sm:$0xff]
    %v6320 = vld [vmem:[%s11 + $0x600] sm:$0xff]
    %v6321 = vld [vmem:[%s11 + $0x608] sm:$0xff]
    %v6322 = vld [vmem:[%s11 + $0x610] sm:$0xff]
    %v6323 = vld [vmem:[%s11 + $0x618] sm:$0xff]
    %v6324 = vld [vmem:[%s11 + $0x620] sm:$0xff]
    %v6325 = vld [vmem:[%s11 + $0x628] sm:$0xff]
    %v6326 = vld [vmem:[%s11 + $0x630] sm:$0xff]
    %v6327 = vld [vmem:[%s11 + $0x638] sm:$0xff]
    %v6328 = vld [vmem:[%s11 + $0x640] sm:$0xff]
    %v6329 = vld [vmem:[%s11 + $0x648] sm:$0xff]
    %v6330 = vld [vmem:[%s11 + $0x650] sm:$0xff]
    %v6331 = vld [vmem:[%s11 + $0x658] sm:$0xff]
    %v6332 = vld [vmem:[%s11 + $0x660] sm:$0xff]
    %v6333 = vld [vmem:[%s11 + $0x668] sm:$0xff]
    %v6334 = vld [vmem:[%s11 + $0x670] sm:$0xff]
    %v6335 = vld [vmem:[%s11 + $0x678] sm:$0xff]
    %v6336 = vld [vmem:[%s11 + $0x680] sm:$0xff]
    %v6337 = vld [vmem:[%s11 + $0x688] sm:$0xff]
    %v6338 = vld [vmem:[%s11 + $0x690] sm:$0xff]
    %v6339 = vld [vmem:[%s11 + $0x698] sm:$0xff]
    %v6340 = vld [vmem:[%s11 + $0x6a0] sm:$0xff]
    %v6341 = vld [vmem:[%s11 + $0x6a8] sm:$0xff]
    %v6342 = vld [vmem:[%s11 + $0x6b0] sm:$0xff]
    %v6343 = vld [vmem:[%s11 + $0x6b8] sm:$0xff]
    %v6344 = vld [vmem:[%s11 + $0x6c0] sm:$0xff]
    %v6345 = vld [vmem:[%s11 + $0x6c8] sm:$0xff]
    %v6346 = vld [vmem:[%s11 + $0x6d0] sm:$0xff]
    %v6347 = vld [vmem:[%s11 + $0x6d8] sm:$0xff]
    %v6348 = vld [vmem:[%s11 + $0x6e0] sm:$0xff]
    %v6349 = vld [vmem:[%s11 + $0x6e8] sm:$0xff]
    %v6350 = vld [vmem:[%s11 + $0x6f0] sm:$0xff]
    %v6351 = vld [vmem:[%s11 + $0x6f8] sm:$0xff]
    %v6352 = vld [vmem:[%s11 + $0x700] sm:$0xff]
    %v6353 = vld [vmem:[%s11 + $0x708] sm:$0xff]
    %v6354 = vld [vmem:[%s11 + $0x710] sm:$0xff]
    %v6355 = vld [vmem:[%s11 + $0x718] sm:$0xff]
    %v6356 = vld [vmem:[%s11 + $0x720] sm:$0xff]
    %v6357 = vld [vmem:[%s11 + $0x728] sm:$0xff]
    %v6358 = vld [vmem:[%s11 + $0x730] sm:$0xff]
    %v6359 = vld [vmem:[%s11 + $0x738] sm:$0xff]
    %v6360 = vld [vmem:[%s11 + $0x740] sm:$0xff]
    %v6361 = vld [vmem:[%s11 + $0x748] sm:$0xff]
    %v6362 = vld [vmem:[%s11 + $0x750] sm:$0xff]
    %v6363 = vld [vmem:[%s11 + $0x758] sm:$0xff]
    %v6364 = vld [vmem:[%s11 + $0x760] sm:$0xff]
    %v6365 = vld [vmem:[%s11 + $0x768] sm:$0xff]
    %v6366 = vld [vmem:[%s11 + $0x770] sm:$0xff]
    %v6367 = vld [vmem:[%s11 + $0x778] sm:$0xff]
    %v6368 = vld [vmem:[%s11 + $0x780] sm:$0xff]
    %v6369 = vld [vmem:[%s11 + $0x788] sm:$0xff]
    %v6370 = vld [vmem:[%s11 + $0x790] sm:$0xff]
    %v6371 = vld [vmem:[%s11 + $0x798] sm:$0xff]
    %v6372 = vld [vmem:[%s11 + $0x7a0] sm:$0xff]
    %v6373 = vld [vmem:[%s11 + $0x7a8] sm:$0xff]
    %v6374 = vld [vmem:[%s11 + $0x7b0] sm:$0xff]
    %v6375 = vld [vmem:[%s11 + $0x7b8] sm:$0xff]
    %v6376 = vld [vmem:[%s11 + $0x7c0] sm:$0xff]
    %v6377 = vld [vmem:[%s11 + $0x7c8] sm:$0xff]
    %v6378 = vld [vmem:[%s11 + $0x7d0] sm:$0xff]
    %v6379 = vld [vmem:[%s11 + $0x7d8] sm:$0xff]
    %v6380 = vld [vmem:[%s11 + $0x7e0] sm:$0xff]
    %v6381 = vld [vmem:[%s11 + $0x7e8] sm:$0xff]
    %v6382 = vld [vmem:[%s11 + $0x7f0] sm:$0xff]
    %v6383 = vld [vmem:[%s11 + $0x7f8] sm:$0xff]
    %v6384 = vld [vmem:[%s12] sm:$0xf]
    %v6385 = vsub.f32 0.0, %v6019
    %v6386 = vsub.f32 0.0, %v6023
    %v6387 = vmul.f32 %v6385, 1.442695
    %v6388 = vpow.pop %v6387
    %v6389 = vmul.f32 %v6386, 1.442695
    %v6390 = vpow.pop %v6389
    %v6391 = vadd.f32 %v6388, 1.0
    %v6392 = vadd.f32 %v6390, 1.0
    %v6393 = vrcp.pop %v6391
    %v6394 = vmul.f32 %v6391, %v6393
    %v6395 = vsub.f32 1.0, %v6394
    %v6396 = vmul.f32 %v6393, %v6395
    %v6397 = vadd.f32 %v6393, %v6396
    %vm6398 = vweird.f32 %v6391
    %vm6399 = vweird.f32 %v6393
    %vm6400 = vmor %vm6398, %vm6399
    %v6401 = vsel %vm6400, %v6393, %v6397
    %v6402 = vand.u32 2147483647, %v6391
    %vm6403 = vcmp.eq.f32.partialorder %v6402, 8.507059e+37
    %v6404 = vand.u32 %v6391, 2147483648
    %v6405 = vor.u32 1.1754944e-38, %v6404
    %v6406 = vsel %vm6403, %v6405, %v6401
    %v6407 = vmul.f32 1.0, %v6406
    %v6408 = vrcp.pop %v6392
    %v6409 = vmul.f32 %v6392, %v6408
    %v6410 = vsub.f32 1.0, %v6409
    %v6411 = vmul.f32 %v6408, %v6410
    %v6412 = vadd.f32 %v6408, %v6411
    %vm6413 = vweird.f32 %v6392
    %vm6414 = vweird.f32 %v6408
    %vm6415 = vmor %vm6413, %vm6414
    %v6416 = vsel %vm6415, %v6408, %v6412
    %v6417 = vand.u32 2147483647, %v6392
    %vm6418 = vcmp.eq.f32.partialorder %v6417, 8.507059e+37
    %v6419 = vand.u32 %v6392, 2147483648
    %v6420 = vor.u32 1.1754944e-38, %v6419
    %v6421 = vsel %vm6418, %v6420, %v6416
    %v6422 = vmul.f32 1.0, %v6421
    %v6423 = vsub.f32 0.0, %v6053
    %v6424 = vsub.f32 0.0, %v6057
    %v6425 = vmul.f32 %v6423, 1.442695
    %v6426 = vpow.pop %v6425
    %v6427 = vmul.f32 %v6424, 1.442695
    %v6428 = vpow.pop %v6427
    %v6429 = vadd.f32 %v6426, 1.0
    %v6430 = vadd.f32 %v6428, 1.0
    %v6431 = vrcp.pop %v6429
    %v6432 = vmul.f32 %v6429, %v6431
    %v6433 = vsub.f32 1.0, %v6432
    %v6434 = vmul.f32 %v6431, %v6433
    %v6435 = vadd.f32 %v6431, %v6434
    %vm6436 = vweird.f32 %v6429
    %vm6437 = vweird.f32 %v6431
    %vm6438 = vmor %vm6436, %vm6437
    %v6439 = vsel %vm6438, %v6431, %v6435
    %v6440 = vand.u32 2147483647, %v6429
    %vm6441 = vcmp.eq.f32.partialorder %v6440, 8.507059e+37
    %v6442 = vand.u32 %v6429, 2147483648
    %v6443 = vor.u32 1.1754944e-38, %v6442
    %v6444 = vsel %vm6441, %v6443, %v6439
    %v6445 = vmul.f32 1.0, %v6444
    %v6446 = vrcp.pop %v6430
    %v6447 = vmul.f32 %v6430, %v6446
    %v6448 = vsub.f32 1.0, %v6447
    %v6449 = vmul.f32 %v6446, %v6448
    %v6450 = vadd.f32 %v6446, %v6449
    %vm6451 = vweird.f32 %v6430
    %vm6452 = vweird.f32 %v6446
    %vm6453 = vmor %vm6451, %vm6452
    %v6454 = vsel %vm6453, %v6446, %v6450
    %v6455 = vand.u32 2147483647, %v6430
    %vm6456 = vcmp.eq.f32.partialorder %v6455, 8.507059e+37
    %v6457 = vand.u32 %v6430, 2147483648
    %v6458 = vor.u32 1.1754944e-38, %v6457
    %v6459 = vsel %vm6456, %v6458, %v6454
    %v6460 = vmul.f32 1.0, %v6459
    %v6461 = vtanh.pop %v6087
    %v6462 = vtanh.pop %v6091
    %v6463 = vsub.f32 0.0, %v6121
    %v6464 = vsub.f32 0.0, %v6125
    %v6465 = vmul.f32 %v6463, 1.442695
    %v6466 = vpow.pop %v6465
    %v6467 = vmul.f32 %v6464, 1.442695
    %v6468 = vpow.pop %v6467
    %v6469 = vadd.f32 %v6466, 1.0
    %v6470 = vadd.f32 %v6468, 1.0
    %v6471 = vrcp.pop %v6469
    %v6472 = vmul.f32 %v6469, %v6471
    %v6473 = vsub.f32 1.0, %v6472
    %v6474 = vmul.f32 %v6471, %v6473
    %v6475 = vadd.f32 %v6471, %v6474
    %vm6476 = vweird.f32 %v6469
    %vm6477 = vweird.f32 %v6471
    %vm6478 = vmor %vm6476, %vm6477
    %v6479 = vsel %vm6478, %v6471, %v6475
    %v6480 = vand.u32 2147483647, %v6469
    %vm6481 = vcmp.eq.f32.partialorder %v6480, 8.507059e+37
    %v6482 = vand.u32 %v6469, 2147483648
    %v6483 = vor.u32 1.1754944e-38, %v6482
    %v6484 = vsel %vm6481, %v6483, %v6479
    %v6485 = vmul.f32 1.0, %v6484
    %v6486 = vrcp.pop %v6470
    %v6487 = vmul.f32 %v6470, %v6486
    %v6488 = vsub.f32 1.0, %v6487
    %v6489 = vmul.f32 %v6486, %v6488
    %v6490 = vadd.f32 %v6486, %v6489
    %vm6491 = vweird.f32 %v6470
    %vm6492 = vweird.f32 %v6486
    %vm6493 = vmor %vm6491, %vm6492
    %v6494 = vsel %vm6493, %v6486, %v6490
    %v6495 = vand.u32 2147483647, %v6470
    %vm6496 = vcmp.eq.f32.partialorder %v6495, 8.507059e+37
    %v6497 = vand.u32 %v6470, 2147483648
    %v6498 = vor.u32 1.1754944e-38, %v6497
    %v6499 = vsel %vm6496, %v6498, %v6494
    %v6500 = vmul.f32 1.0, %v6499
    %v6501 = vmul.f32 %v6445, 0.0
    %v6502 = vmul.f32 %v6460, 0.0
    %v6503 = vmul.f32 %v6407, %v6461
    %v6504 = vmul.f32 %v6422, %v6462
    %v6505 = vadd.f32 %v6501, %v6503
    %v6506 = vadd.f32 %v6502, %v6504
    %v6507 = vtanh.pop %v6505
    %v6508 = vtanh.pop %v6506
    %v6509 = vmul.f32 %v6485, %v6507
    %v6510 = vmul.f32 %v6500, %v6508
    %v6513 = vrot.slane %v6510, 7
    %vm6514 = vcmask 1041409
    %v6515 = vsel %vm6514, %v6513, %v6509
    %6517 = vmatpush.msra.mxu0 %v6248
    %6518 = vmatpush.msra.mxu0 %v6240
    %6519 = vmatpush.msra.mxu0 %v6232
    %6520 = vmatpush.msra.mxu0 %v6224
    %6521 = vmatpush.msra.mxu0 %v6216
    %6522 = vmatpush.msra.mxu0 %v6208
    %6523 = vmatpush.msra.mxu0 %v6200
    %6524 = vmatpush.msra.mxu0 %v6192
    %6525 = vmatpush.msra.mxu0 %v6184
    %6526 = vmatpush.msra.mxu0 %v6176
    %6527 = vmatpush.msra.mxu0 %v6168
    %6528 = vmatpush.msra.mxu0 %v6160
    %6529 = vmatpush.msra.mxu0 %v6152
    %6530 = vmatpush.msra.mxu0 %v6144
    %6531 = vmatpush.msra.mxu0 %v6136
    %6532 = vmatpush.msra.mxu0 %v6128
    %6533 = vmatmul.f32.gmra.mxu0 %v6515
    %v6534 = vpop.f32.mrf.mxu0
    %v6535 = vadd.f32 0.0, %v6534
    %6536 = vdwg.mxu0
    %6537 = vmatpush.msra.mxu0 %v6376
    %6538 = vmatpush.msra.mxu0 %v6368
    %6539 = vmatpush.msra.mxu0 %v6360
    %6540 = vmatpush.msra.mxu0 %v6352
    %6541 = vmatpush.msra.mxu0 %v6344
    %6542 = vmatpush.msra.mxu0 %v6336
    %6543 = vmatpush.msra.mxu0 %v6328
    %6544 = vmatpush.msra.mxu0 %v6320
    %6545 = vmatpush.msra.mxu0 %v6312
    %6546 = vmatpush.msra.mxu0 %v6304
    %6547 = vmatpush.msra.mxu0 %v6296
    %6548 = vmatpush.msra.mxu0 %v6288
    %6549 = vmatpush.msra.mxu0 %v6280
    %6550 = vmatpush.msra.mxu0 %v6272
    %6551 = vmatpush.msra.mxu0 %v6264
    %6552 = vmatpush.msra.mxu0 %v6256
    %6553 = vmatmul.f32.gmra.mxu0 0.0
    %v6554 = vpop.f32.mrf.mxu0
    %v6555 = vadd.f32 %v6535, %v6554
    %6556 = vdwg.mxu0
    %6557 = vmatpush.msra.mxu0 %v6249
    %6558 = vmatpush.msra.mxu0 %v6241
    %6559 = vmatpush.msra.mxu0 %v6233
    %6560 = vmatpush.msra.mxu0 %v6225
    %6561 = vmatpush.msra.mxu0 %v6217
    %6562 = vmatpush.msra.mxu0 %v6209
    %6563 = vmatpush.msra.mxu0 %v6201
    %6564 = vmatpush.msra.mxu0 %v6193
    %6565 = vmatpush.msra.mxu0 %v6185
    %6566 = vmatpush.msra.mxu0 %v6177
    %6567 = vmatpush.msra.mxu0 %v6169
    %6568 = vmatpush.msra.mxu0 %v6161
    %6569 = vmatpush.msra.mxu0 %v6153
    %6570 = vmatpush.msra.mxu0 %v6145
    %6571 = vmatpush.msra.mxu0 %v6137
    %6572 = vmatpush.msra.mxu0 %v6129
    %6573 = vmatmul.f32.gmra.mxu0 %v6515
    %v6574 = vpop.f32.mrf.mxu0
    %v6575 = vadd.f32 0.0, %v6574
    %6576 = vdwg.mxu0
    %6577 = vmatpush.msra.mxu0 %v6377
    %6578 = vmatpush.msra.mxu0 %v6369
    %6579 = vmatpush.msra.mxu0 %v6361
    %6580 = vmatpush.msra.mxu0 %v6353
    %6581 = vmatpush.msra.mxu0 %v6345
    %6582 = vmatpush.msra.mxu0 %v6337
    %6583 = vmatpush.msra.mxu0 %v6329
    %6584 = vmatpush.msra.mxu0 %v6321
    %6585 = vmatpush.msra.mxu0 %v6313
    %6586 = vmatpush.msra.mxu0 %v6305
    %6587 = vmatpush.msra.mxu0 %v6297
    %6588 = vmatpush.msra.mxu0 %v6289
    %6589 = vmatpush.msra.mxu0 %v6281
    %6590 = vmatpush.msra.mxu0 %v6273
    %6591 = vmatpush.msra.mxu0 %v6265
    %6592 = vmatpush.msra.mxu0 %v6257
    %6593 = vmatmul.f32.gmra.mxu0 0.0
    %v6594 = vpop.f32.mrf.mxu0
    %v6595 = vadd.f32 %v6575, %v6594
    %6596 = vdwg.mxu0
    %6597 = vmatpush.msra.mxu0 %v6250
    %6598 = vmatpush.msra.mxu0 %v6242
    %6599 = vmatpush.msra.mxu0 %v6234
    %6600 = vmatpush.msra.mxu0 %v6226
    %6601 = vmatpush.msra.mxu0 %v6218
    %6602 = vmatpush.msra.mxu0 %v6210
    %6603 = vmatpush.msra.mxu0 %v6202
    %6604 = vmatpush.msra.mxu0 %v6194
    %6605 = vmatpush.msra.mxu0 %v6186
    %6606 = vmatpush.msra.mxu0 %v6178
    %6607 = vmatpush.msra.mxu0 %v6170
    %6608 = vmatpush.msra.mxu0 %v6162
    %6609 = vmatpush.msra.mxu0 %v6154
    %6610 = vmatpush.msra.mxu0 %v6146
    %6611 = vmatpush.msra.mxu0 %v6138
    %6612 = vmatpush.msra.mxu0 %v6130
    %6613 = vmatmul.f32.gmra.mxu0 %v6515
    %v6614 = vpop.f32.mrf.mxu0
    %v6615 = vadd.f32 0.0, %v6614
    %6616 = vdwg.mxu0
    %6617 = vmatpush.msra.mxu0 %v6378
    %6618 = vmatpush.msra.mxu0 %v6370
    %6619 = vmatpush.msra.mxu0 %v6362
    %6620 = vmatpush.msra.mxu0 %v6354
    %6621 = vmatpush.msra.mxu0 %v6346
    %6622 = vmatpush.msra.mxu0 %v6338
    %6623 = vmatpush.msra.mxu0 %v6330
    %6624 = vmatpush.msra.mxu0 %v6322
    %6625 = vmatpush.msra.mxu0 %v6314
    %6626 = vmatpush.msra.mxu0 %v6306
    %6627 = vmatpush.msra.mxu0 %v6298
    %6628 = vmatpush.msra.mxu0 %v6290
    %6629 = vmatpush.msra.mxu0 %v6282
    %6630 = vmatpush.msra.mxu0 %v6274
    %6631 = vmatpush.msra.mxu0 %v6266
    %6632 = vmatpush.msra.mxu0 %v6258
    %6633 = vmatmul.f32.gmra.mxu0 0.0
    %v6634 = vpop.f32.mrf.mxu0
    %v6635 = vadd.f32 %v6615, %v6634
    %6636 = vdwg.mxu0
    %6637 = vmatpush.msra.mxu0 %v6251
    %6638 = vmatpush.msra.mxu0 %v6243
    %6639 = vmatpush.msra.mxu0 %v6235
    %6640 = vmatpush.msra.mxu0 %v6227
    %6641 = vmatpush.msra.mxu0 %v6219
    %6642 = vmatpush.msra.mxu0 %v6211
    %6643 = vmatpush.msra.mxu0 %v6203
    %6644 = vmatpush.msra.mxu0 %v6195
    %6645 = vmatpush.msra.mxu0 %v6187
    %6646 = vmatpush.msra.mxu0 %v6179
    %6647 = vmatpush.msra.mxu0 %v6171
    %6648 = vmatpush.msra.mxu0 %v6163
    %6649 = vmatpush.msra.mxu0 %v6155
    %6650 = vmatpush.msra.mxu0 %v6147
    %6651 = vmatpush.msra.mxu0 %v6139
    %6652 = vmatpush.msra.mxu0 %v6131
    %6653 = vmatmul.f32.gmra.mxu0 %v6515
    %v6654 = vpop.f32.mrf.mxu0
    %v6655 = vadd.f32 0.0, %v6654
    %6656 = vdwg.mxu0
    %6657 = vmatpush.msra.mxu0 %v6379
    %6658 = vmatpush.msra.mxu0 %v6371
    %6659 = vmatpush.msra.mxu0 %v6363
    %6660 = vmatpush.msra.mxu0 %v6355
    %6661 = vmatpush.msra.mxu0 %v6347
    %6662 = vmatpush.msra.mxu0 %v6339
    %6663 = vmatpush.msra.mxu0 %v6331
    %6664 = vmatpush.msra.mxu0 %v6323
    %6665 = vmatpush.msra.mxu0 %v6315
    %6666 = vmatpush.msra.mxu0 %v6307
    %6667 = vmatpush.msra.mxu0 %v6299
    %6668 = vmatpush.msra.mxu0 %v6291
    %6669 = vmatpush.msra.mxu0 %v6283
    %6670 = vmatpush.msra.mxu0 %v6275
    %6671 = vmatpush.msra.mxu0 %v6267
    %6672 = vmatpush.msra.mxu0 %v6259
    %6673 = vmatmul.f32.gmra.mxu0 0.0
    %v6674 = vpop.f32.mrf.mxu0
    %v6675 = vadd.f32 %v6655, %v6674
    %6676 = vdwg.mxu0
    %6677 = vmatpush.msra.mxu0 %v6252
    %6678 = vmatpush.msra.mxu0 %v6244
    %6679 = vmatpush.msra.mxu0 %v6236
    %6680 = vmatpush.msra.mxu0 %v6228
    %6681 = vmatpush.msra.mxu0 %v6220
    %6682 = vmatpush.msra.mxu0 %v6212
    %6683 = vmatpush.msra.mxu0 %v6204
    %6684 = vmatpush.msra.mxu0 %v6196
    %6685 = vmatpush.msra.mxu0 %v6188
    %6686 = vmatpush.msra.mxu0 %v6180
    %6687 = vmatpush.msra.mxu0 %v6172
    %6688 = vmatpush.msra.mxu0 %v6164
    %6689 = vmatpush.msra.mxu0 %v6156
    %6690 = vmatpush.msra.mxu0 %v6148
    %6691 = vmatpush.msra.mxu0 %v6140
    %6692 = vmatpush.msra.mxu0 %v6132
    %6693 = vmatmul.f32.gmra.mxu0 %v6515
    %v6694 = vpop.f32.mrf.mxu0
    %v6695 = vadd.f32 0.0, %v6694
    %6696 = vdwg.mxu0
    %6697 = vmatpush.msra.mxu0 %v6380
    %6698 = vmatpush.msra.mxu0 %v6372
    %6699 = vmatpush.msra.mxu0 %v6364
    %6700 = vmatpush.msra.mxu0 %v6356
    %6701 = vmatpush.msra.mxu0 %v6348
    %6702 = vmatpush.msra.mxu0 %v6340
    %6703 = vmatpush.msra.mxu0 %v6332
    %6704 = vmatpush.msra.mxu0 %v6324
    %6705 = vmatpush.msra.mxu0 %v6316
    %6706 = vmatpush.msra.mxu0 %v6308
    %6707 = vmatpush.msra.mxu0 %v6300
    %6708 = vmatpush.msra.mxu0 %v6292
    %6709 = vmatpush.msra.mxu0 %v6284
    %6710 = vmatpush.msra.mxu0 %v6276
    %6711 = vmatpush.msra.mxu0 %v6268
    %6712 = vmatpush.msra.mxu0 %v6260
    %6713 = vmatmul.f32.gmra.mxu0 0.0
    %v6714 = vpop.f32.mrf.mxu0
    %v6715 = vadd.f32 %v6695, %v6714
    %6716 = vdwg.mxu0
    %6717 = vmatpush.msra.mxu0 %v6253
    %6718 = vmatpush.msra.mxu0 %v6245
    %6719 = vmatpush.msra.mxu0 %v6237
    %6720 = vmatpush.msra.mxu0 %v6229
    %6721 = vmatpush.msra.mxu0 %v6221
    %6722 = vmatpush.msra.mxu0 %v6213
    %6723 = vmatpush.msra.mxu0 %v6205
    %6724 = vmatpush.msra.mxu0 %v6197
    %6725 = vmatpush.msra.mxu0 %v6189
    %6726 = vmatpush.msra.mxu0 %v6181
    %6727 = vmatpush.msra.mxu0 %v6173
    %6728 = vmatpush.msra.mxu0 %v6165
    %6729 = vmatpush.msra.mxu0 %v6157
    %6730 = vmatpush.msra.mxu0 %v6149
    %6731 = vmatpush.msra.mxu0 %v6141
    %6732 = vmatpush.msra.mxu0 %v6133
    %6733 = vmatmul.f32.gmra.mxu0 %v6515
    %v6734 = vpop.f32.mrf.mxu0
    %v6735 = vadd.f32 0.0, %v6734
    %6736 = vdwg.mxu0
    %6737 = vmatpush.msra.mxu0 %v6381
    %6738 = vmatpush.msra.mxu0 %v6373
    %6739 = vmatpush.msra.mxu0 %v6365
    %6740 = vmatpush.msra.mxu0 %v6357
    %6741 = vmatpush.msra.mxu0 %v6349
    %6742 = vmatpush.msra.mxu0 %v6341
    %6743 = vmatpush.msra.mxu0 %v6333
    %6744 = vmatpush.msra.mxu0 %v6325
    %6745 = vmatpush.msra.mxu0 %v6317
    %6746 = vmatpush.msra.mxu0 %v6309
    %6747 = vmatpush.msra.mxu0 %v6301
    %6748 = vmatpush.msra.mxu0 %v6293
    %6749 = vmatpush.msra.mxu0 %v6285
    %6750 = vmatpush.msra.mxu0 %v6277
    %6751 = vmatpush.msra.mxu0 %v6269
    %6752 = vmatpush.msra.mxu0 %v6261
    %6753 = vmatmul.f32.gmra.mxu0 0.0
    %v6754 = vpop.f32.mrf.mxu0
    %v6755 = vadd.f32 %v6735, %v6754
    %6756 = vdwg.mxu0
    %6757 = vmatpush.msra.mxu0 %v6254
    %6758 = vmatpush.msra.mxu0 %v6246
    %6759 = vmatpush.msra.mxu0 %v6238
    %6760 = vmatpush.msra.mxu0 %v6230
    %6761 = vmatpush.msra.mxu0 %v6222
    %6762 = vmatpush.msra.mxu0 %v6214
    %6763 = vmatpush.msra.mxu0 %v6206
    %6764 = vmatpush.msra.mxu0 %v6198
    %6765 = vmatpush.msra.mxu0 %v6190
    %6766 = vmatpush.msra.mxu0 %v6182
    %6767 = vmatpush.msra.mxu0 %v6174
    %6768 = vmatpush.msra.mxu0 %v6166
    %6769 = vmatpush.msra.mxu0 %v6158
    %6770 = vmatpush.msra.mxu0 %v6150
    %6771 = vmatpush.msra.mxu0 %v6142
    %6772 = vmatpush.msra.mxu0 %v6134
    %6773 = vmatmul.f32.gmra.mxu0 %v6515
    %v6774 = vpop.f32.mrf.mxu0
    %v6775 = vadd.f32 0.0, %v6774
    %6776 = vdwg.mxu0
    %6777 = vmatpush.msra.mxu0 %v6382
    %6778 = vmatpush.msra.mxu0 %v6374
    %6779 = vmatpush.msra.mxu0 %v6366
    %6780 = vmatpush.msra.mxu0 %v6358
    %6781 = vmatpush.msra.mxu0 %v6350
    %6782 = vmatpush.msra.mxu0 %v6342
    %6783 = vmatpush.msra.mxu0 %v6334
    %6784 = vmatpush.msra.mxu0 %v6326
    %6785 = vmatpush.msra.mxu0 %v6318
    %6786 = vmatpush.msra.mxu0 %v6310
    %6787 = vmatpush.msra.mxu0 %v6302
    %6788 = vmatpush.msra.mxu0 %v6294
    %6789 = vmatpush.msra.mxu0 %v6286
    %6790 = vmatpush.msra.mxu0 %v6278
    %6791 = vmatpush.msra.mxu0 %v6270
    %6792 = vmatpush.msra.mxu0 %v6262
    %6793 = vmatmul.f32.gmra.mxu0 0.0
    %v6794 = vpop.f32.mrf.mxu0
    %v6795 = vadd.f32 %v6775, %v6794
    %6796 = vdwg.mxu0
    %6797 = vmatpush.msra.mxu0 %v6255
    %6798 = vmatpush.msra.mxu0 %v6247
    %6799 = vmatpush.msra.mxu0 %v6239
    %6800 = vmatpush.msra.mxu0 %v6231
    %6801 = vmatpush.msra.mxu0 %v6223
    %6802 = vmatpush.msra.mxu0 %v6215
    %6803 = vmatpush.msra.mxu0 %v6207
    %6804 = vmatpush.msra.mxu0 %v6199
    %6805 = vmatpush.msra.mxu0 %v6191
    %6806 = vmatpush.msra.mxu0 %v6183
    %6807 = vmatpush.msra.mxu0 %v6175
    %6808 = vmatpush.msra.mxu0 %v6167
    %6809 = vmatpush.msra.mxu0 %v6159
    %6810 = vmatpush.msra.mxu0 %v6151
    %6811 = vmatpush.msra.mxu0 %v6143
    %6812 = vmatpush.msra.mxu0 %v6135
    %6813 = vmatmul.f32.gmra.mxu0 %v6515
    %v6814 = vpop.f32.mrf.mxu0
    %v6815 = vadd.f32 0.0, %v6814
    %6816 = vdwg.mxu0
    %6817 = vmatpush.msra.mxu0 %v6383
    %6818 = vmatpush.msra.mxu0 %v6375
    %6819 = vmatpush.msra.mxu0 %v6367
    %6820 = vmatpush.msra.mxu0 %v6359
    %6821 = vmatpush.msra.mxu0 %v6351
    %6822 = vmatpush.msra.mxu0 %v6343
    %6823 = vmatpush.msra.mxu0 %v6335
    %6824 = vmatpush.msra.mxu0 %v6327
    %6825 = vmatpush.msra.mxu0 %v6319
    %6826 = vmatpush.msra.mxu0 %v6311
    %6827 = vmatpush.msra.mxu0 %v6303
    %6828 = vmatpush.msra.mxu0 %v6295
    %6829 = vmatpush.msra.mxu0 %v6287
    %6830 = vmatpush.msra.mxu0 %v6279
    %6831 = vmatpush.msra.mxu0 %v6271
    %6832 = vmatpush.msra.mxu0 %v6263
    %6833 = vmatmul.f32.gmra.mxu0 0.0
    %v6834 = vpop.f32.mrf.mxu0
    %v6835 = vadd.f32 %v6815, %v6834
    %6836 = vdwg.mxu0
    %v6838 = vperm.slane %v6384, 0
    %v6839 = vperm.slane %v6384, 1
    %v6840 = vperm.slane %v6384, 2
    %v6841 = vperm.slane %v6384, 3
    %v6846 = vadd.f32 %v6715, %v6838
    %v6847 = vadd.f32 %v6755, %v6839
    %v6848 = vadd.f32 %v6795, %v6840
    %v6849 = vadd.f32 %v6835, %v6841
    %v6850 = vsub.f32 0.0, %v6846
    %v6851 = vmul.f32 %v6850, 1.442695
    %v6852 = vpow.pop %v6851
    %v6853 = vadd.f32 %v6852, 1.0
    %v6854 = vrcp.pop %v6853
    %v6855 = vmul.f32 %v6853, %v6854
    %v6856 = vsub.f32 1.0, %v6855
    %v6857 = vmul.f32 %v6854, %v6856
    %v6858 = vadd.f32 %v6854, %v6857
    %vm6859 = vweird.f32 %v6853
    %vm6860 = vweird.f32 %v6854
    %vm6861 = vmor %vm6859, %vm6860
    %v6862 = vsel %vm6861, %v6854, %v6858
    %v6863 = vand.u32 2147483647, %v6853
    %vm6864 = vcmp.eq.f32.partialorder %v6863, 8.507059e+37
    %v6865 = vand.u32 %v6853, 2147483648
    %v6866 = vor.u32 1.1754944e-38, %v6865
    %v6867 = vsel %vm6864, %v6866, %v6862
    %v6868 = vmul.f32 1.0, %v6867
    %v6869 = vsub.f32 0.0, %v6847
    %v6870 = vmul.f32 %v6869, 1.442695
    %v6871 = vpow.pop %v6870
    %v6872 = vadd.f32 %v6871, 1.0
    %v6873 = vrcp.pop %v6872
    %v6874 = vmul.f32 %v6872, %v6873
    %v6875 = vsub.f32 1.0, %v6874
    %v6876 = vmul.f32 %v6873, %v6875
    %v6877 = vadd.f32 %v6873, %v6876
    %vm6878 = vweird.f32 %v6872
    %vm6879 = vweird.f32 %v6873
    %vm6880 = vmor %vm6878, %vm6879
    %v6881 = vsel %vm6880, %v6873, %v6877
    %v6882 = vand.u32 2147483647, %v6872
    %vm6883 = vcmp.eq.f32.partialorder %v6882, 8.507059e+37
    %v6884 = vand.u32 %v6872, 2147483648
    %v6885 = vor.u32 1.1754944e-38, %v6884
    %v6886 = vsel %vm6883, %v6885, %v6881
    %v6887 = vmul.f32 1.0, %v6886
    %v6888 = vtanh.pop %v6848
    %v6889 = vsub.f32 0.0, %v6849
    %v6890 = vmul.f32 %v6889, 1.442695
    %v6891 = vpow.pop %v6890
    %v6892 = vadd.f32 %v6891, 1.0
    %v6893 = vrcp.pop %v6892
    %v6894 = vmul.f32 %v6892, %v6893
    %v6895 = vsub.f32 1.0, %v6894
    %v6896 = vmul.f32 %v6893, %v6895
    %v6897 = vadd.f32 %v6893, %v6896
    %vm6898 = vweird.f32 %v6892
    %vm6899 = vweird.f32 %v6893
    %vm6900 = vmor %vm6898, %vm6899
    %v6901 = vsel %vm6900, %v6893, %v6897
    %v6902 = vand.u32 2147483647, %v6892
    %vm6903 = vcmp.eq.f32.partialorder %v6902, 8.507059e+37
    %v6904 = vand.u32 %v6892, 2147483648
    %v6905 = vor.u32 1.1754944e-38, %v6904
    %v6906 = vsel %vm6903, %v6905, %v6901
    %v6907 = vmul.f32 1.0, %v6906
    %v6908 = vmul.f32 %v6887, 0.0
    %v6909 = vmul.f32 %v6868, %v6888
    %v6910 = vadd.f32 %v6908, %v6909
    %v6911 = vtanh.pop %v6910
    %v6912 = vmul.f32 %v6907, %v6911
    %v6917 = vrot.slane %v6555, 7
    %v6918 = vrot.slane %v6595, 7
    %v6919 = vrot.slane %v6635, 7
    %v6920 = vrot.slane %v6675, 7
    %v6929 = vadd.f32 %v6019, %v6917
    %v6930 = vadd.f32 %v6053, %v6918
    %v6931 = vadd.f32 %v6087, %v6919
    %v6932 = vadd.f32 %v6121, %v6920
    %v6933 = vadd.f32 %v6023, %v6555
    %v6934 = vadd.f32 %v6057, %v6595
    %v6935 = vadd.f32 %v6091, %v6635
    %v6936 = vadd.f32 %v6125, %v6675
    %v6937 = vsub.f32 0.0, %v6929
    %v6938 = vsub.f32 0.0, %v6933
    %v6939 = vmul.f32 %v6937, 1.442695
    %v6940 = vpow.pop %v6939
    %v6941 = vmul.f32 %v6938, 1.442695
    %v6942 = vpow.pop %v6941
    %v6943 = vadd.f32 %v6940, 1.0
    %v6944 = vadd.f32 %v6942, 1.0
    %v6945 = vrcp.pop %v6943
    %v6946 = vmul.f32 %v6943, %v6945
    %v6947 = vsub.f32 1.0, %v6946
    %v6948 = vmul.f32 %v6945, %v6947
    %v6949 = vadd.f32 %v6945, %v6948
    %vm6950 = vweird.f32 %v6943
    %vm6951 = vweird.f32 %v6945
    %vm6952 = vmor %vm6950, %vm6951
    %v6953 = vsel %vm6952, %v6945, %v6949
    %v6954 = vand.u32 2147483647, %v6943
    %vm6955 = vcmp.eq.f32.partialorder %v6954, 8.507059e+37
    %v6956 = vand.u32 %v6943, 2147483648
    %v6957 = vor.u32 1.1754944e-38, %v6956
    %v6958 = vsel %vm6955, %v6957, %v6953
    %v6959 = vmul.f32 1.0, %v6958
    %v6960 = vrcp.pop %v6944
    %v6961 = vmul.f32 %v6944, %v6960
    %v6962 = vsub.f32 1.0, %v6961
    %v6963 = vmul.f32 %v6960, %v6962
    %v6964 = vadd.f32 %v6960, %v6963
    %vm6965 = vweird.f32 %v6944
    %vm6966 = vweird.f32 %v6960
    %vm6967 = vmor %vm6965, %vm6966
    %v6968 = vsel %vm6967, %v6960, %v6964
    %v6969 = vand.u32 2147483647, %v6944
    %vm6970 = vcmp.eq.f32.partialorder %v6969, 8.507059e+37
    %v6971 = vand.u32 %v6944, 2147483648
    %v6972 = vor.u32 1.1754944e-38, %v6971
    %v6973 = vsel %vm6970, %v6972, %v6968
    %v6974 = vmul.f32 1.0, %v6973
    %v6975 = vsub.f32 0.0, %v6930
    %v6976 = vsub.f32 0.0, %v6934
    %v6977 = vmul.f32 %v6975, 1.442695
    %v6978 = vpow.pop %v6977
    %v6979 = vmul.f32 %v6976, 1.442695
    %v6980 = vpow.pop %v6979
    %v6981 = vadd.f32 %v6978, 1.0
    %v6982 = vadd.f32 %v6980, 1.0
    %v6983 = vrcp.pop %v6981
    %v6984 = vmul.f32 %v6981, %v6983
    %v6985 = vsub.f32 1.0, %v6984
    %v6986 = vmul.f32 %v6983, %v6985
    %v6987 = vadd.f32 %v6983, %v6986
    %vm6988 = vweird.f32 %v6981
    %vm6989 = vweird.f32 %v6983
    %vm6990 = vmor %vm6988, %vm6989
    %v6991 = vsel %vm6990, %v6983, %v6987
    %v6992 = vand.u32 2147483647, %v6981
    %vm6993 = vcmp.eq.f32.partialorder %v6992, 8.507059e+37
    %v6994 = vand.u32 %v6981, 2147483648
    %v6995 = vor.u32 1.1754944e-38, %v6994
    %v6996 = vsel %vm6993, %v6995, %v6991
    %v6997 = vmul.f32 1.0, %v6996
    %v6998 = vrcp.pop %v6982
    %v6999 = vmul.f32 %v6982, %v6998
    %v7000 = vsub.f32 1.0, %v6999
    %v7001 = vmul.f32 %v6998, %v7000
    %v7002 = vadd.f32 %v6998, %v7001
    %vm7003 = vweird.f32 %v6982
    %vm7004 = vweird.f32 %v6998
    %vm7005 = vmor %vm7003, %vm7004
    %v7006 = vsel %vm7005, %v6998, %v7002
    %v7007 = vand.u32 2147483647, %v6982
    %vm7008 = vcmp.eq.f32.partialorder %v7007, 8.507059e+37
    %v7009 = vand.u32 %v6982, 2147483648
    %v7010 = vor.u32 1.1754944e-38, %v7009
    %v7011 = vsel %vm7008, %v7010, %v7006
    %v7012 = vmul.f32 1.0, %v7011
    %v7013 = vtanh.pop %v6931
    %v7014 = vtanh.pop %v6935
    %v7015 = vsub.f32 0.0, %v6932
    %v7016 = vsub.f32 0.0, %v6936
    %v7017 = vmul.f32 %v7015, 1.442695
    %v7018 = vpow.pop %v7017
    %v7019 = vmul.f32 %v7016, 1.442695
    %v7020 = vpow.pop %v7019
    %v7021 = vadd.f32 %v7018, 1.0
    %v7022 = vadd.f32 %v7020, 1.0
    %v7023 = vrcp.pop %v7021
    %v7024 = vmul.f32 %v7021, %v7023
    %v7025 = vsub.f32 1.0, %v7024
    %v7026 = vmul.f32 %v7023, %v7025
    %v7027 = vadd.f32 %v7023, %v7026
    %vm7028 = vweird.f32 %v7021
    %vm7029 = vweird.f32 %v7023
    %vm7030 = vmor %vm7028, %vm7029
    %v7031 = vsel %vm7030, %v7023, %v7027
    %v7032 = vand.u32 2147483647, %v7021
    %vm7033 = vcmp.eq.f32.partialorder %v7032, 8.507059e+37
    %v7034 = vand.u32 %v7021, 2147483648
    %v7035 = vor.u32 1.1754944e-38, %v7034
    %v7036 = vsel %vm7033, %v7035, %v7031
    %v7037 = vmul.f32 1.0, %v7036
    %v7038 = vrcp.pop %v7022
    %v7039 = vmul.f32 %v7022, %v7038
    %v7040 = vsub.f32 1.0, %v7039
    %v7041 = vmul.f32 %v7038, %v7040
    %v7042 = vadd.f32 %v7038, %v7041
    %vm7043 = vweird.f32 %v7022
    %vm7044 = vweird.f32 %v7038
    %vm7045 = vmor %vm7043, %vm7044
    %v7046 = vsel %vm7045, %v7038, %v7042
    %v7047 = vand.u32 2147483647, %v7022
    %vm7048 = vcmp.eq.f32.partialorder %v7047, 8.507059e+37
    %v7049 = vand.u32 %v7022, 2147483648
    %v7050 = vor.u32 1.1754944e-38, %v7049
    %v7051 = vsel %vm7048, %v7050, %v7046
    %v7052 = vmul.f32 1.0, %v7051
    %v7055 = vrot.slane %v6505, 7
    %v7056 = vrot.slane %v6506, 7
    %v7059 = vmul.f32 %v6997, %v7055
    %v7060 = vmul.f32 %v7012, %v7056
    %v7061 = vmul.f32 %v6959, %v7013
    %v7062 = vmul.f32 %v6974, %v7014
    %v7063 = vadd.f32 %v7059, %v7061
    %v7064 = vadd.f32 %v7060, %v7062
    %v7065 = vtanh.pop %v7063
    %v7066 = vtanh.pop %v7064
    %v7067 = vmul.f32 %v7037, %v7065
    %v7068 = vmul.f32 %v7052, %v7066
    %v7071 = vrot.slane %v7068, 7
    %vm7072 = vcmask 1042434
    %v7073 = vsel %vm7072, %v7071, %v7067
    %v7075 = vrot.slane %v6912, 7
    %v7076 = vrot.slane %v7073, 1
    %v7077 = vrot.slane %v7075, 1
    %7080 = vmatpush.msra.mxu0 %v6248
    %7081 = vmatpush.msra.mxu0 %v6240
    %7082 = vmatpush.msra.mxu0 %v6232
    %7083 = vmatpush.msra.mxu0 %v6224
    %7084 = vmatpush.msra.mxu0 %v6216
    %7085 = vmatpush.msra.mxu0 %v6208
    %7086 = vmatpush.msra.mxu0 %v6200
    %7087 = vmatpush.msra.mxu0 %v6192
    %7088 = vmatpush.msra.mxu0 %v6184
    %7089 = vmatpush.msra.mxu0 %v6176
    %7090 = vmatpush.msra.mxu0 %v6168
    %7091 = vmatpush.msra.mxu0 %v6160
    %7092 = vmatpush.msra.mxu0 %v6152
    %7093 = vmatpush.msra.mxu0 %v6144
    %7094 = vmatpush.msra.mxu0 %v6136
    %7095 = vmatpush.msra.mxu0 %v6128
    %7096 = vmatmul.f32.gmra.mxu0 %v7076
    %v7097 = vpop.f32.mrf.mxu0
    %v7098 = vadd.f32 0.0, %v7097
    %7099 = vdwg.mxu0
    %7100 = vmatpush.msra.mxu0 %v6376
    %7101 = vmatpush.msra.mxu0 %v6368
    %7102 = vmatpush.msra.mxu0 %v6360
    %7103 = vmatpush.msra.mxu0 %v6352
    %7104 = vmatpush.msra.mxu0 %v6344
    %7105 = vmatpush.msra.mxu0 %v6336
    %7106 = vmatpush.msra.mxu0 %v6328
    %7107 = vmatpush.msra.mxu0 %v6320
    %7108 = vmatpush.msra.mxu0 %v6312
    %7109 = vmatpush.msra.mxu0 %v6304
    %7110 = vmatpush.msra.mxu0 %v6296
    %7111 = vmatpush.msra.mxu0 %v6288
    %7112 = vmatpush.msra.mxu0 %v6280
    %7113 = vmatpush.msra.mxu0 %v6272
    %7114 = vmatpush.msra.mxu0 %v6264
    %7115 = vmatpush.msra.mxu0 %v6256
    %7116 = vmatmul.f32.gmra.mxu0 %v7077
    %v7117 = vpop.f32.mrf.mxu0
    %v7118 = vadd.f32 %v7098, %v7117
    %7119 = vdwg.mxu0
    %7120 = vmatpush.msra.mxu0 %v6249
    %7121 = vmatpush.msra.mxu0 %v6241
    %7122 = vmatpush.msra.mxu0 %v6233
    %7123 = vmatpush.msra.mxu0 %v6225
    %7124 = vmatpush.msra.mxu0 %v6217
    %7125 = vmatpush.msra.mxu0 %v6209
    %7126 = vmatpush.msra.mxu0 %v6201
    %7127 = vmatpush.msra.mxu0 %v6193
    %7128 = vmatpush.msra.mxu0 %v6185
    %7129 = vmatpush.msra.mxu0 %v6177
    %7130 = vmatpush.msra.mxu0 %v6169
    %7131 = vmatpush.msra.mxu0 %v6161
    %7132 = vmatpush.msra.mxu0 %v6153
    %7133 = vmatpush.msra.mxu0 %v6145
    %7134 = vmatpush.msra.mxu0 %v6137
    %7135 = vmatpush.msra.mxu0 %v6129
    %7136 = vmatmul.f32.gmra.mxu0 %v7076
    %v7137 = vpop.f32.mrf.mxu0
    %v7138 = vadd.f32 0.0, %v7137
    %7139 = vdwg.mxu0
    %7140 = vmatpush.msra.mxu0 %v6377
    %7141 = vmatpush.msra.mxu0 %v6369
    %7142 = vmatpush.msra.mxu0 %v6361
    %7143 = vmatpush.msra.mxu0 %v6353
    %7144 = vmatpush.msra.mxu0 %v6345
    %7145 = vmatpush.msra.mxu0 %v6337
    %7146 = vmatpush.msra.mxu0 %v6329
    %7147 = vmatpush.msra.mxu0 %v6321
    %7148 = vmatpush.msra.mxu0 %v6313
    %7149 = vmatpush.msra.mxu0 %v6305
    %7150 = vmatpush.msra.mxu0 %v6297
    %7151 = vmatpush.msra.mxu0 %v6289
    %7152 = vmatpush.msra.mxu0 %v6281
    %7153 = vmatpush.msra.mxu0 %v6273
    %7154 = vmatpush.msra.mxu0 %v6265
    %7155 = vmatpush.msra.mxu0 %v6257
    %7156 = vmatmul.f32.gmra.mxu0 %v7077
    %v7157 = vpop.f32.mrf.mxu0
    %v7158 = vadd.f32 %v7138, %v7157
    %7159 = vdwg.mxu0
    %7160 = vmatpush.msra.mxu0 %v6250
    %7161 = vmatpush.msra.mxu0 %v6242
    %7162 = vmatpush.msra.mxu0 %v6234
    %7163 = vmatpush.msra.mxu0 %v6226
    %7164 = vmatpush.msra.mxu0 %v6218
    %7165 = vmatpush.msra.mxu0 %v6210
    %7166 = vmatpush.msra.mxu0 %v6202
    %7167 = vmatpush.msra.mxu0 %v6194
    %7168 = vmatpush.msra.mxu0 %v6186
    %7169 = vmatpush.msra.mxu0 %v6178
    %7170 = vmatpush.msra.mxu0 %v6170
    %7171 = vmatpush.msra.mxu0 %v6162
    %7172 = vmatpush.msra.mxu0 %v6154
    %7173 = vmatpush.msra.mxu0 %v6146
    %7174 = vmatpush.msra.mxu0 %v6138
    %7175 = vmatpush.msra.mxu0 %v6130
    %7176 = vmatmul.f32.gmra.mxu0 %v7076
    %v7177 = vpop.f32.mrf.mxu0
    %v7178 = vadd.f32 0.0, %v7177
    %7179 = vdwg.mxu0
    %7180 = vmatpush.msra.mxu0 %v6378
    %7181 = vmatpush.msra.mxu0 %v6370
    %7182 = vmatpush.msra.mxu0 %v6362
    %7183 = vmatpush.msra.mxu0 %v6354
    %7184 = vmatpush.msra.mxu0 %v6346
    %7185 = vmatpush.msra.mxu0 %v6338
    %7186 = vmatpush.msra.mxu0 %v6330
    %7187 = vmatpush.msra.mxu0 %v6322
    %7188 = vmatpush.msra.mxu0 %v6314
    %7189 = vmatpush.msra.mxu0 %v6306
    %7190 = vmatpush.msra.mxu0 %v6298
    %7191 = vmatpush.msra.mxu0 %v6290
    %7192 = vmatpush.msra.mxu0 %v6282
    %7193 = vmatpush.msra.mxu0 %v6274
    %7194 = vmatpush.msra.mxu0 %v6266
    %7195 = vmatpush.msra.mxu0 %v6258
    %7196 = vmatmul.f32.gmra.mxu0 %v7077
    %v7197 = vpop.f32.mrf.mxu0
    %v7198 = vadd.f32 %v7178, %v7197
    %7199 = vdwg.mxu0
    %7200 = vmatpush.msra.mxu0 %v6251
    %7201 = vmatpush.msra.mxu0 %v6243
    %7202 = vmatpush.msra.mxu0 %v6235
    %7203 = vmatpush.msra.mxu0 %v6227
    %7204 = vmatpush.msra.mxu0 %v6219
    %7205 = vmatpush.msra.mxu0 %v6211
    %7206 = vmatpush.msra.mxu0 %v6203
    %7207 = vmatpush.msra.mxu0 %v6195
    %7208 = vmatpush.msra.mxu0 %v6187
    %7209 = vmatpush.msra.mxu0 %v6179
    %7210 = vmatpush.msra.mxu0 %v6171
    %7211 = vmatpush.msra.mxu0 %v6163
    %7212 = vmatpush.msra.mxu0 %v6155
    %7213 = vmatpush.msra.mxu0 %v6147
    %7214 = vmatpush.msra.mxu0 %v6139
    %7215 = vmatpush.msra.mxu0 %v6131
    %7216 = vmatmul.f32.gmra.mxu0 %v7076
    %v7217 = vpop.f32.mrf.mxu0
    %v7218 = vadd.f32 0.0, %v7217
    %7219 = vdwg.mxu0
    %7220 = vmatpush.msra.mxu0 %v6379
    %7221 = vmatpush.msra.mxu0 %v6371
    %7222 = vmatpush.msra.mxu0 %v6363
    %7223 = vmatpush.msra.mxu0 %v6355
    %7224 = vmatpush.msra.mxu0 %v6347
    %7225 = vmatpush.msra.mxu0 %v6339
    %7226 = vmatpush.msra.mxu0 %v6331
    %7227 = vmatpush.msra.mxu0 %v6323
    %7228 = vmatpush.msra.mxu0 %v6315
    %7229 = vmatpush.msra.mxu0 %v6307
    %7230 = vmatpush.msra.mxu0 %v6299
    %7231 = vmatpush.msra.mxu0 %v6291
    %7232 = vmatpush.msra.mxu0 %v6283
    %7233 = vmatpush.msra.mxu0 %v6275
    %7234 = vmatpush.msra.mxu0 %v6267
    %7235 = vmatpush.msra.mxu0 %v6259
    %7236 = vmatmul.f32.gmra.mxu0 %v7077
    %v7237 = vpop.f32.mrf.mxu0
    %v7238 = vadd.f32 %v7218, %v7237
    %7239 = vdwg.mxu0
    %7240 = vmatpush.msra.mxu0 %v6252
    %7241 = vmatpush.msra.mxu0 %v6244
    %7242 = vmatpush.msra.mxu0 %v6236
    %7243 = vmatpush.msra.mxu0 %v6228
    %7244 = vmatpush.msra.mxu0 %v6220
    %7245 = vmatpush.msra.mxu0 %v6212
    %7246 = vmatpush.msra.mxu0 %v6204
    %7247 = vmatpush.msra.mxu0 %v6196
    %7248 = vmatpush.msra.mxu0 %v6188
    %7249 = vmatpush.msra.mxu0 %v6180
    %7250 = vmatpush.msra.mxu0 %v6172
    %7251 = vmatpush.msra.mxu0 %v6164
    %7252 = vmatpush.msra.mxu0 %v6156
    %7253 = vmatpush.msra.mxu0 %v6148
    %7254 = vmatpush.msra.mxu0 %v6140
    %7255 = vmatpush.msra.mxu0 %v6132
    %7256 = vmatmul.f32.gmra.mxu0 %v7076
    %v7257 = vpop.f32.mrf.mxu0
    %v7258 = vadd.f32 0.0, %v7257
    %7259 = vdwg.mxu0
    %7260 = vmatpush.msra.mxu0 %v6380
    %7261 = vmatpush.msra.mxu0 %v6372
    %7262 = vmatpush.msra.mxu0 %v6364
    %7263 = vmatpush.msra.mxu0 %v6356
    %7264 = vmatpush.msra.mxu0 %v6348
    %7265 = vmatpush.msra.mxu0 %v6340
    %7266 = vmatpush.msra.mxu0 %v6332
    %7267 = vmatpush.msra.mxu0 %v6324
    %7268 = vmatpush.msra.mxu0 %v6316
    %7269 = vmatpush.msra.mxu0 %v6308
    %7270 = vmatpush.msra.mxu0 %v6300
    %7271 = vmatpush.msra.mxu0 %v6292
    %7272 = vmatpush.msra.mxu0 %v6284
    %7273 = vmatpush.msra.mxu0 %v6276
    %7274 = vmatpush.msra.mxu0 %v6268
    %7275 = vmatpush.msra.mxu0 %v6260
    %7276 = vmatmul.f32.gmra.mxu0 %v7077
    %v7277 = vpop.f32.mrf.mxu0
    %v7278 = vadd.f32 %v7258, %v7277
    %7279 = vdwg.mxu0
    %7280 = vmatpush.msra.mxu0 %v6253
    %7281 = vmatpush.msra.mxu0 %v6245
    %7282 = vmatpush.msra.mxu0 %v6237
    %7283 = vmatpush.msra.mxu0 %v6229
    %7284 = vmatpush.msra.mxu0 %v6221
    %7285 = vmatpush.msra.mxu0 %v6213
    %7286 = vmatpush.msra.mxu0 %v6205
    %7287 = vmatpush.msra.mxu0 %v6197
    %7288 = vmatpush.msra.mxu0 %v6189
    %7289 = vmatpush.msra.mxu0 %v6181
    %7290 = vmatpush.msra.mxu0 %v6173
    %7291 = vmatpush.msra.mxu0 %v6165
    %7292 = vmatpush.msra.mxu0 %v6157
    %7293 = vmatpush.msra.mxu0 %v6149
    %7294 = vmatpush.msra.mxu0 %v6141
    %7295 = vmatpush.msra.mxu0 %v6133
    %7296 = vmatmul.f32.gmra.mxu0 %v7076
    %v7297 = vpop.f32.mrf.mxu0
    %v7298 = vadd.f32 0.0, %v7297
    %7299 = vdwg.mxu0
    %7300 = vmatpush.msra.mxu0 %v6381
    %7301 = vmatpush.msra.mxu0 %v6373
    %7302 = vmatpush.msra.mxu0 %v6365
    %7303 = vmatpush.msra.mxu0 %v6357
    %7304 = vmatpush.msra.mxu0 %v6349
    %7305 = vmatpush.msra.mxu0 %v6341
    %7306 = vmatpush.msra.mxu0 %v6333
    %7307 = vmatpush.msra.mxu0 %v6325
    %7308 = vmatpush.msra.mxu0 %v6317
    %7309 = vmatpush.msra.mxu0 %v6309
    %7310 = vmatpush.msra.mxu0 %v6301
    %7311 = vmatpush.msra.mxu0 %v6293
    %7312 = vmatpush.msra.mxu0 %v6285
    %7313 = vmatpush.msra.mxu0 %v6277
    %7314 = vmatpush.msra.mxu0 %v6269
    %7315 = vmatpush.msra.mxu0 %v6261
    %7316 = vmatmul.f32.gmra.mxu0 %v7077
    %v7317 = vpop.f32.mrf.mxu0
    %v7318 = vadd.f32 %v7298, %v7317
    %7319 = vdwg.mxu0
    %7320 = vmatpush.msra.mxu0 %v6254
    %7321 = vmatpush.msra.mxu0 %v6246
    %7322 = vmatpush.msra.mxu0 %v6238
    %7323 = vmatpush.msra.mxu0 %v6230
    %7324 = vmatpush.msra.mxu0 %v6222
    %7325 = vmatpush.msra.mxu0 %v6214
    %7326 = vmatpush.msra.mxu0 %v6206
    %7327 = vmatpush.msra.mxu0 %v6198
    %7328 = vmatpush.msra.mxu0 %v6190
    %7329 = vmatpush.msra.mxu0 %v6182
    %7330 = vmatpush.msra.mxu0 %v6174
    %7331 = vmatpush.msra.mxu0 %v6166
    %7332 = vmatpush.msra.mxu0 %v6158
    %7333 = vmatpush.msra.mxu0 %v6150
    %7334 = vmatpush.msra.mxu0 %v6142
    %7335 = vmatpush.msra.mxu0 %v6134
    %7336 = vmatmul.f32.gmra.mxu0 %v7076
    %v7337 = vpop.f32.mrf.mxu0
    %v7338 = vadd.f32 0.0, %v7337
    %7339 = vdwg.mxu0
    %7340 = vmatpush.msra.mxu0 %v6382
    %7341 = vmatpush.msra.mxu0 %v6374
    %7342 = vmatpush.msra.mxu0 %v6366
    %7343 = vmatpush.msra.mxu0 %v6358
    %7344 = vmatpush.msra.mxu0 %v6350
    %7345 = vmatpush.msra.mxu0 %v6342
    %7346 = vmatpush.msra.mxu0 %v6334
    %7347 = vmatpush.msra.mxu0 %v6326
    %7348 = vmatpush.msra.mxu0 %v6318
    %7349 = vmatpush.msra.mxu0 %v6310
    %7350 = vmatpush.msra.mxu0 %v6302
    %7351 = vmatpush.msra.mxu0 %v6294
    %7352 = vmatpush.msra.mxu0 %v6286
    %7353 = vmatpush.msra.mxu0 %v6278
    %7354 = vmatpush.msra.mxu0 %v6270
    %7355 = vmatpush.msra.mxu0 %v6262
    %7356 = vmatmul.f32.gmra.mxu0 %v7077
    %v7357 = vpop.f32.mrf.mxu0
    %v7358 = vadd.f32 %v7338, %v7357
    %7359 = vdwg.mxu0
    %7360 = vmatpush.msra.mxu0 %v6255
    %7361 = vmatpush.msra.mxu0 %v6247
    %7362 = vmatpush.msra.mxu0 %v6239
    %7363 = vmatpush.msra.mxu0 %v6231
    %7364 = vmatpush.msra.mxu0 %v6223
    %7365 = vmatpush.msra.mxu0 %v6215
    %7366 = vmatpush.msra.mxu0 %v6207
    %7367 = vmatpush.msra.mxu0 %v6199
    %7368 = vmatpush.msra.mxu0 %v6191
    %7369 = vmatpush.msra.mxu0 %v6183
    %7370 = vmatpush.msra.mxu0 %v6175
    %7371 = vmatpush.msra.mxu0 %v6167
    %7372 = vmatpush.msra.mxu0 %v6159
    %7373 = vmatpush.msra.mxu0 %v6151
    %7374 = vmatpush.msra.mxu0 %v6143
    %7375 = vmatpush.msra.mxu0 %v6135
    %7376 = vmatmul.f32.gmra.mxu0 %v7076
    %v7377 = vpop.f32.mrf.mxu0
    %v7378 = vadd.f32 0.0, %v7377
    %7379 = vdwg.mxu0
    %7380 = vmatpush.msra.mxu0 %v6383
    %7381 = vmatpush.msra.mxu0 %v6375
    %7382 = vmatpush.msra.mxu0 %v6367
    %7383 = vmatpush.msra.mxu0 %v6359
    %7384 = vmatpush.msra.mxu0 %v6351
    %7385 = vmatpush.msra.mxu0 %v6343
    %7386 = vmatpush.msra.mxu0 %v6335
    %7387 = vmatpush.msra.mxu0 %v6327
    %7388 = vmatpush.msra.mxu0 %v6319
    %7389 = vmatpush.msra.mxu0 %v6311
    %7390 = vmatpush.msra.mxu0 %v6303
    %7391 = vmatpush.msra.mxu0 %v6295
    %7392 = vmatpush.msra.mxu0 %v6287
    %7393 = vmatpush.msra.mxu0 %v6279
    %7394 = vmatpush.msra.mxu0 %v6271
    %7395 = vmatpush.msra.mxu0 %v6263
    %7396 = vmatmul.f32.gmra.mxu0 %v7077
    %v7397 = vpop.f32.mrf.mxu0
    %v7398 = vadd.f32 %v7378, %v7397
    %7399 = vdwg.mxu0
    %v7400 = vadd.f32 %v7278, %v6838
    %v7401 = vadd.f32 %v7318, %v6839
    %v7402 = vadd.f32 %v7358, %v6840
    %v7403 = vadd.f32 %v7398, %v6841
    %v7404 = vsub.f32 0.0, %v7400
    %v7405 = vmul.f32 %v7404, 1.442695
    %v7406 = vpow.pop %v7405
    %v7407 = vadd.f32 %v7406, 1.0
    %v7408 = vrcp.pop %v7407
    %v7409 = vmul.f32 %v7407, %v7408
    %v7410 = vsub.f32 1.0, %v7409
    %v7411 = vmul.f32 %v7408, %v7410
    %v7412 = vadd.f32 %v7408, %v7411
    %vm7413 = vweird.f32 %v7407
    %vm7414 = vweird.f32 %v7408
    %vm7415 = vmor %vm7413, %vm7414
    %v7416 = vsel %vm7415, %v7408, %v7412
    %v7417 = vand.u32 2147483647, %v7407
    %vm7418 = vcmp.eq.f32.partialorder %v7417, 8.507059e+37
    %v7419 = vand.u32 %v7407, 2147483648
    %v7420 = vor.u32 1.1754944e-38, %v7419
    %v7421 = vsel %vm7418, %v7420, %v7416
    %v7422 = vmul.f32 1.0, %v7421
    %v7423 = vsub.f32 0.0, %v7401
    %v7424 = vmul.f32 %v7423, 1.442695
    %v7425 = vpow.pop %v7424
    %v7426 = vadd.f32 %v7425, 1.0
    %v7427 = vrcp.pop %v7426
    %v7428 = vmul.f32 %v7426, %v7427
    %v7429 = vsub.f32 1.0, %v7428
    %v7430 = vmul.f32 %v7427, %v7429
    %v7431 = vadd.f32 %v7427, %v7430
    %vm7432 = vweird.f32 %v7426
    %vm7433 = vweird.f32 %v7427
    %vm7434 = vmor %vm7432, %vm7433
    %v7435 = vsel %vm7434, %v7427, %v7431
    %v7436 = vand.u32 2147483647, %v7426
    %vm7437 = vcmp.eq.f32.partialorder %v7436, 8.507059e+37
    %v7438 = vand.u32 %v7426, 2147483648
    %v7439 = vor.u32 1.1754944e-38, %v7438
    %v7440 = vsel %vm7437, %v7439, %v7435
    %v7441 = vmul.f32 1.0, %v7440
    %v7442 = vtanh.pop %v7402
    %v7443 = vsub.f32 0.0, %v7403
    %v7444 = vmul.f32 %v7443, 1.442695
    %v7445 = vpow.pop %v7444
    %v7446 = vadd.f32 %v7445, 1.0
    %v7447 = vrcp.pop %v7446
    %v7448 = vmul.f32 %v7446, %v7447
    %v7449 = vsub.f32 1.0, %v7448
    %v7450 = vmul.f32 %v7447, %v7449
    %v7451 = vadd.f32 %v7447, %v7450
    %vm7452 = vweird.f32 %v7446
    %vm7453 = vweird.f32 %v7447
    %vm7454 = vmor %vm7452, %vm7453
    %v7455 = vsel %vm7454, %v7447, %v7451
    %v7456 = vand.u32 2147483647, %v7446
    %vm7457 = vcmp.eq.f32.partialorder %v7456, 8.507059e+37
    %v7458 = vand.u32 %v7446, 2147483648
    %v7459 = vor.u32 1.1754944e-38, %v7458
    %v7460 = vsel %vm7457, %v7459, %v7455
    %v7461 = vmul.f32 1.0, %v7460
    %v7462 = vmul.f32 %v7441, %v6910
    %v7463 = vmul.f32 %v7422, %v7442
    %v7464 = vadd.f32 %v7462, %v7463
    %v7465 = vtanh.pop %v7464
    %v7466 = vmul.f32 %v7461, %v7465
    %v7471 = vrot.slane %v7118, 6
    %v7472 = vrot.slane %v7158, 6
    %v7473 = vrot.slane %v7198, 6
    %v7474 = vrot.slane %v7238, 6
    %v7475 = vrot.slane %v7118, 7
    %v7476 = vrot.slane %v7158, 7
    %v7477 = vrot.slane %v7198, 7
    %v7478 = vrot.slane %v7238, 7
    %v7487 = vadd.f32 %v6019, %v7471
    %v7488 = vadd.f32 %v6053, %v7472
    %v7489 = vadd.f32 %v6087, %v7473
    %v7490 = vadd.f32 %v6121, %v7474
    %v7491 = vadd.f32 %v6023, %v7475
    %v7492 = vadd.f32 %v6057, %v7476
    %v7493 = vadd.f32 %v6091, %v7477
    %v7494 = vadd.f32 %v6125, %v7478
    %v7495 = vsub.f32 0.0, %v7487
    %v7496 = vsub.f32 0.0, %v7491
    %v7497 = vmul.f32 %v7495, 1.442695
    %v7498 = vpow.pop %v7497
    %v7499 = vmul.f32 %v7496, 1.442695
    %v7500 = vpow.pop %v7499
    %v7501 = vadd.f32 %v7498, 1.0
    %v7502 = vadd.f32 %v7500, 1.0
    %v7503 = vrcp.pop %v7501
    %v7504 = vmul.f32 %v7501, %v7503
    %v7505 = vsub.f32 1.0, %v7504
    %v7506 = vmul.f32 %v7503, %v7505
    %v7507 = vadd.f32 %v7503, %v7506
    %vm7508 = vweird.f32 %v7501
    %vm7509 = vweird.f32 %v7503
    %vm7510 = vmor %vm7508, %vm7509
    %v7511 = vsel %vm7510, %v7503, %v7507
    %v7512 = vand.u32 2147483647, %v7501
    %vm7513 = vcmp.eq.f32.partialorder %v7512, 8.507059e+37
    %v7514 = vand.u32 %v7501, 2147483648
    %v7515 = vor.u32 1.1754944e-38, %v7514
    %v7516 = vsel %vm7513, %v7515, %v7511
    %v7517 = vmul.f32 1.0, %v7516
    %v7518 = vrcp.pop %v7502
    %v7519 = vmul.f32 %v7502, %v7518
    %v7520 = vsub.f32 1.0, %v7519
    %v7521 = vmul.f32 %v7518, %v7520
    %v7522 = vadd.f32 %v7518, %v7521
    %vm7523 = vweird.f32 %v7502
    %vm7524 = vweird.f32 %v7518
    %vm7525 = vmor %vm7523, %vm7524
    %v7526 = vsel %vm7525, %v7518, %v7522
    %v7527 = vand.u32 2147483647, %v7502
    %vm7528 = vcmp.eq.f32.partialorder %v7527, 8.507059e+37
    %v7529 = vand.u32 %v7502, 2147483648
    %v7530 = vor.u32 1.1754944e-38, %v7529
    %v7531 = vsel %vm7528, %v7530, %v7526
    %v7532 = vmul.f32 1.0, %v7531
    %v7533 = vsub.f32 0.0, %v7488
    %v7534 = vsub.f32 0.0, %v7492
    %v7535 = vmul.f32 %v7533, 1.442695
    %v7536 = vpow.pop %v7535
    %v7537 = vmul.f32 %v7534, 1.442695
    %v7538 = vpow.pop %v7537
    %v7539 = vadd.f32 %v7536, 1.0
    %v7540 = vadd.f32 %v7538, 1.0
    %v7541 = vrcp.pop %v7539
    %v7542 = vmul.f32 %v7539, %v7541
    %v7543 = vsub.f32 1.0, %v7542
    %v7544 = vmul.f32 %v7541, %v7543
    %v7545 = vadd.f32 %v7541, %v7544
    %vm7546 = vweird.f32 %v7539
    %vm7547 = vweird.f32 %v7541
    %vm7548 = vmor %vm7546, %vm7547
    %v7549 = vsel %vm7548, %v7541, %v7545
    %v7550 = vand.u32 2147483647, %v7539
    %vm7551 = vcmp.eq.f32.partialorder %v7550, 8.507059e+37
    %v7552 = vand.u32 %v7539, 2147483648
    %v7553 = vor.u32 1.1754944e-38, %v7552
    %v7554 = vsel %vm7551, %v7553, %v7549
    %v7555 = vmul.f32 1.0, %v7554
    %v7556 = vrcp.pop %v7540
    %v7557 = vmul.f32 %v7540, %v7556
    %v7558 = vsub.f32 1.0, %v7557
    %v7559 = vmul.f32 %v7556, %v7558
    %v7560 = vadd.f32 %v7556, %v7559
    %vm7561 = vweird.f32 %v7540
    %vm7562 = vweird.f32 %v7556
    %vm7563 = vmor %vm7561, %vm7562
    %v7564 = vsel %vm7563, %v7556, %v7560
    %v7565 = vand.u32 2147483647, %v7540
    %vm7566 = vcmp.eq.f32.partialorder %v7565, 8.507059e+37
    %v7567 = vand.u32 %v7540, 2147483648
    %v7568 = vor.u32 1.1754944e-38, %v7567
    %v7569 = vsel %vm7566, %v7568, %v7564
    %v7570 = vmul.f32 1.0, %v7569
    %v7571 = vtanh.pop %v7489
    %v7572 = vtanh.pop %v7493
    %v7573 = vsub.f32 0.0, %v7490
    %v7574 = vsub.f32 0.0, %v7494
    %v7575 = vmul.f32 %v7573, 1.442695
    %v7576 = vpow.pop %v7575
    %v7577 = vmul.f32 %v7574, 1.442695
    %v7578 = vpow.pop %v7577
    %v7579 = vadd.f32 %v7576, 1.0
    %v7580 = vadd.f32 %v7578, 1.0
    %v7581 = vrcp.pop %v7579
    %v7582 = vmul.f32 %v7579, %v7581
    %v7583 = vsub.f32 1.0, %v7582
    %v7584 = vmul.f32 %v7581, %v7583
    %v7585 = vadd.f32 %v7581, %v7584
    %vm7586 = vweird.f32 %v7579
    %vm7587 = vweird.f32 %v7581
    %vm7588 = vmor %vm7586, %vm7587
    %v7589 = vsel %vm7588, %v7581, %v7585
    %v7590 = vand.u32 2147483647, %v7579
    %vm7591 = vcmp.eq.f32.partialorder %v7590, 8.507059e+37
    %v7592 = vand.u32 %v7579, 2147483648
    %v7593 = vor.u32 1.1754944e-38, %v7592
    %v7594 = vsel %vm7591, %v7593, %v7589
    %v7595 = vmul.f32 1.0, %v7594
    %v7596 = vrcp.pop %v7580
    %v7597 = vmul.f32 %v7580, %v7596
    %v7598 = vsub.f32 1.0, %v7597
    %v7599 = vmul.f32 %v7596, %v7598
    %v7600 = vadd.f32 %v7596, %v7599
    %vm7601 = vweird.f32 %v7580
    %vm7602 = vweird.f32 %v7596
    %vm7603 = vmor %vm7601, %vm7602
    %v7604 = vsel %vm7603, %v7596, %v7600
    %v7605 = vand.u32 2147483647, %v7580
    %vm7606 = vcmp.eq.f32.partialorder %v7605, 8.507059e+37
    %v7607 = vand.u32 %v7580, 2147483648
    %v7608 = vor.u32 1.1754944e-38, %v7607
    %v7609 = vsel %vm7606, %v7608, %v7604
    %v7610 = vmul.f32 1.0, %v7609
    %v7613 = vrot.slane %v7063, 7
    %v7614 = vrot.slane %v7064, 7
    %v7617 = vmul.f32 %v7555, %v7613
    %v7618 = vmul.f32 %v7570, %v7614
    %v7619 = vmul.f32 %v7517, %v7571
    %v7620 = vmul.f32 %v7532, %v7572
    %v7621 = vadd.f32 %v7617, %v7619
    %v7622 = vadd.f32 %v7618, %v7620
    %v7623 = vtanh.pop %v7621
    %v7624 = vtanh.pop %v7622
    %v7625 = vmul.f32 %v7595, %v7623
    %v7626 = vmul.f32 %v7610, %v7624
    %v7629 = vrot.slane %v7626, 7
    %vm7630 = vcmask 1043459
    %v7631 = vsel %vm7630, %v7629, %v7625
    %v7633 = vrot.slane %v7466, 6
    %v7634 = vrot.slane %v7631, 2
    %v7635 = vrot.slane %v7633, 2
    %7638 = vmatpush.msra.mxu0 %v6248
    %7639 = vmatpush.msra.mxu0 %v6240
    %7640 = vmatpush.msra.mxu0 %v6232
    %7641 = vmatpush.msra.mxu0 %v6224
    %7642 = vmatpush.msra.mxu0 %v6216
    %7643 = vmatpush.msra.mxu0 %v6208
    %7644 = vmatpush.msra.mxu0 %v6200
    %7645 = vmatpush.msra.mxu0 %v6192
    %7646 = vmatpush.msra.mxu0 %v6184
    %7647 = vmatpush.msra.mxu0 %v6176
    %7648 = vmatpush.msra.mxu0 %v6168
    %7649 = vmatpush.msra.mxu0 %v6160
    %7650 = vmatpush.msra.mxu0 %v6152
    %7651 = vmatpush.msra.mxu0 %v6144
    %7652 = vmatpush.msra.mxu0 %v6136
    %7653 = vmatpush.msra.mxu0 %v6128
    %7654 = vmatmul.f32.gmra.mxu0 %v7634
    %v7655 = vpop.f32.mrf.mxu0
    %v7656 = vadd.f32 0.0, %v7655
    %7657 = vdwg.mxu0
    %7658 = vmatpush.msra.mxu0 %v6376
    %7659 = vmatpush.msra.mxu0 %v6368
    %7660 = vmatpush.msra.mxu0 %v6360
    %7661 = vmatpush.msra.mxu0 %v6352
    %7662 = vmatpush.msra.mxu0 %v6344
    %7663 = vmatpush.msra.mxu0 %v6336
    %7664 = vmatpush.msra.mxu0 %v6328
    %7665 = vmatpush.msra.mxu0 %v6320
    %7666 = vmatpush.msra.mxu0 %v6312
    %7667 = vmatpush.msra.mxu0 %v6304
    %7668 = vmatpush.msra.mxu0 %v6296
    %7669 = vmatpush.msra.mxu0 %v6288
    %7670 = vmatpush.msra.mxu0 %v6280
    %7671 = vmatpush.msra.mxu0 %v6272
    %7672 = vmatpush.msra.mxu0 %v6264
    %7673 = vmatpush.msra.mxu0 %v6256
    %7674 = vmatmul.f32.gmra.mxu0 %v7635
    %v7675 = vpop.f32.mrf.mxu0
    %v7676 = vadd.f32 %v7656, %v7675
    %7677 = vdwg.mxu0
    %7678 = vmatpush.msra.mxu0 %v6249
    %7679 = vmatpush.msra.mxu0 %v6241
    %7680 = vmatpush.msra.mxu0 %v6233
    %7681 = vmatpush.msra.mxu0 %v6225
    %7682 = vmatpush.msra.mxu0 %v6217
    %7683 = vmatpush.msra.mxu0 %v6209
    %7684 = vmatpush.msra.mxu0 %v6201
    %7685 = vmatpush.msra.mxu0 %v6193
    %7686 = vmatpush.msra.mxu0 %v6185
    %7687 = vmatpush.msra.mxu0 %v6177
    %7688 = vmatpush.msra.mxu0 %v6169
    %7689 = vmatpush.msra.mxu0 %v6161
    %7690 = vmatpush.msra.mxu0 %v6153
    %7691 = vmatpush.msra.mxu0 %v6145
    %7692 = vmatpush.msra.mxu0 %v6137
    %7693 = vmatpush.msra.mxu0 %v6129
    %7694 = vmatmul.f32.gmra.mxu0 %v7634
    %v7695 = vpop.f32.mrf.mxu0
    %v7696 = vadd.f32 0.0, %v7695
    %7697 = vdwg.mxu0
    %7698 = vmatpush.msra.mxu0 %v6377
    %7699 = vmatpush.msra.mxu0 %v6369
    %7700 = vmatpush.msra.mxu0 %v6361
    %7701 = vmatpush.msra.mxu0 %v6353
    %7702 = vmatpush.msra.mxu0 %v6345
    %7703 = vmatpush.msra.mxu0 %v6337
    %7704 = vmatpush.msra.mxu0 %v6329
    %7705 = vmatpush.msra.mxu0 %v6321
    %7706 = vmatpush.msra.mxu0 %v6313
    %7707 = vmatpush.msra.mxu0 %v6305
    %7708 = vmatpush.msra.mxu0 %v6297
    %7709 = vmatpush.msra.mxu0 %v6289
    %7710 = vmatpush.msra.mxu0 %v6281
    %7711 = vmatpush.msra.mxu0 %v6273
    %7712 = vmatpush.msra.mxu0 %v6265
    %7713 = vmatpush.msra.mxu0 %v6257
    %7714 = vmatmul.f32.gmra.mxu0 %v7635
    %v7715 = vpop.f32.mrf.mxu0
    %v7716 = vadd.f32 %v7696, %v7715
    %7717 = vdwg.mxu0
    %7718 = vmatpush.msra.mxu0 %v6250
    %7719 = vmatpush.msra.mxu0 %v6242
    %7720 = vmatpush.msra.mxu0 %v6234
    %7721 = vmatpush.msra.mxu0 %v6226
    %7722 = vmatpush.msra.mxu0 %v6218
    %7723 = vmatpush.msra.mxu0 %v6210
    %7724 = vmatpush.msra.mxu0 %v6202
    %7725 = vmatpush.msra.mxu0 %v6194
    %7726 = vmatpush.msra.mxu0 %v6186
    %7727 = vmatpush.msra.mxu0 %v6178
    %7728 = vmatpush.msra.mxu0 %v6170
    %7729 = vmatpush.msra.mxu0 %v6162
    %7730 = vmatpush.msra.mxu0 %v6154
    %7731 = vmatpush.msra.mxu0 %v6146
    %7732 = vmatpush.msra.mxu0 %v6138
    %7733 = vmatpush.msra.mxu0 %v6130
    %7734 = vmatmul.f32.gmra.mxu0 %v7634
    %v7735 = vpop.f32.mrf.mxu0
    %v7736 = vadd.f32 0.0, %v7735
    %7737 = vdwg.mxu0
    %7738 = vmatpush.msra.mxu0 %v6378
    %7739 = vmatpush.msra.mxu0 %v6370
    %7740 = vmatpush.msra.mxu0 %v6362
    %7741 = vmatpush.msra.mxu0 %v6354
    %7742 = vmatpush.msra.mxu0 %v6346
    %7743 = vmatpush.msra.mxu0 %v6338
    %7744 = vmatpush.msra.mxu0 %v6330
    %7745 = vmatpush.msra.mxu0 %v6322
    %7746 = vmatpush.msra.mxu0 %v6314
    %7747 = vmatpush.msra.mxu0 %v6306
    %7748 = vmatpush.msra.mxu0 %v6298
    %7749 = vmatpush.msra.mxu0 %v6290
    %7750 = vmatpush.msra.mxu0 %v6282
    %7751 = vmatpush.msra.mxu0 %v6274
    %7752 = vmatpush.msra.mxu0 %v6266
    %7753 = vmatpush.msra.mxu0 %v6258
    %7754 = vmatmul.f32.gmra.mxu0 %v7635
    %v7755 = vpop.f32.mrf.mxu0
    %v7756 = vadd.f32 %v7736, %v7755
    %7757 = vdwg.mxu0
    %7758 = vmatpush.msra.mxu0 %v6251
    %7759 = vmatpush.msra.mxu0 %v6243
    %7760 = vmatpush.msra.mxu0 %v6235
    %7761 = vmatpush.msra.mxu0 %v6227
    %7762 = vmatpush.msra.mxu0 %v6219
    %7763 = vmatpush.msra.mxu0 %v6211
    %7764 = vmatpush.msra.mxu0 %v6203
    %7765 = vmatpush.msra.mxu0 %v6195
    %7766 = vmatpush.msra.mxu0 %v6187
    %7767 = vmatpush.msra.mxu0 %v6179
    %7768 = vmatpush.msra.mxu0 %v6171
    %7769 = vmatpush.msra.mxu0 %v6163
    %7770 = vmatpush.msra.mxu0 %v6155
    %7771 = vmatpush.msra.mxu0 %v6147
    %7772 = vmatpush.msra.mxu0 %v6139
    %7773 = vmatpush.msra.mxu0 %v6131
    %7774 = vmatmul.f32.gmra.mxu0 %v7634
    %v7775 = vpop.f32.mrf.mxu0
    %v7776 = vadd.f32 0.0, %v7775
    %7777 = vdwg.mxu0
    %7778 = vmatpush.msra.mxu0 %v6379
    %7779 = vmatpush.msra.mxu0 %v6371
    %7780 = vmatpush.msra.mxu0 %v6363
    %7781 = vmatpush.msra.mxu0 %v6355
    %7782 = vmatpush.msra.mxu0 %v6347
    %7783 = vmatpush.msra.mxu0 %v6339
    %7784 = vmatpush.msra.mxu0 %v6331
    %7785 = vmatpush.msra.mxu0 %v6323
    %7786 = vmatpush.msra.mxu0 %v6315
    %7787 = vmatpush.msra.mxu0 %v6307
    %7788 = vmatpush.msra.mxu0 %v6299
    %7789 = vmatpush.msra.mxu0 %v6291
    %7790 = vmatpush.msra.mxu0 %v6283
    %7791 = vmatpush.msra.mxu0 %v6275
    %7792 = vmatpush.msra.mxu0 %v6267
    %7793 = vmatpush.msra.mxu0 %v6259
    %7794 = vmatmul.f32.gmra.mxu0 %v7635
    %v7795 = vpop.f32.mrf.mxu0
    %v7796 = vadd.f32 %v7776, %v7795
    %7797 = vdwg.mxu0
    %7798 = vmatpush.msra.mxu0 %v6252
    %7799 = vmatpush.msra.mxu0 %v6244
    %7800 = vmatpush.msra.mxu0 %v6236
    %7801 = vmatpush.msra.mxu0 %v6228
    %7802 = vmatpush.msra.mxu0 %v6220
    %7803 = vmatpush.msra.mxu0 %v6212
    %7804 = vmatpush.msra.mxu0 %v6204
    %7805 = vmatpush.msra.mxu0 %v6196
    %7806 = vmatpush.msra.mxu0 %v6188
    %7807 = vmatpush.msra.mxu0 %v6180
    %7808 = vmatpush.msra.mxu0 %v6172
    %7809 = vmatpush.msra.mxu0 %v6164
    %7810 = vmatpush.msra.mxu0 %v6156
    %7811 = vmatpush.msra.mxu0 %v6148
    %7812 = vmatpush.msra.mxu0 %v6140
    %7813 = vmatpush.msra.mxu0 %v6132
    %7814 = vmatmul.f32.gmra.mxu0 %v7634
    %v7815 = vpop.f32.mrf.mxu0
    %v7816 = vadd.f32 0.0, %v7815
    %7817 = vdwg.mxu0
    %7818 = vmatpush.msra.mxu0 %v6380
    %7819 = vmatpush.msra.mxu0 %v6372
    %7820 = vmatpush.msra.mxu0 %v6364
    %7821 = vmatpush.msra.mxu0 %v6356
    %7822 = vmatpush.msra.mxu0 %v6348
    %7823 = vmatpush.msra.mxu0 %v6340
    %7824 = vmatpush.msra.mxu0 %v6332
    %7825 = vmatpush.msra.mxu0 %v6324
    %7826 = vmatpush.msra.mxu0 %v6316
    %7827 = vmatpush.msra.mxu0 %v6308
    %7828 = vmatpush.msra.mxu0 %v6300
    %7829 = vmatpush.msra.mxu0 %v6292
    %7830 = vmatpush.msra.mxu0 %v6284
    %7831 = vmatpush.msra.mxu0 %v6276
    %7832 = vmatpush.msra.mxu0 %v6268
    %7833 = vmatpush.msra.mxu0 %v6260
    %7834 = vmatmul.f32.gmra.mxu0 %v7635
    %v7835 = vpop.f32.mrf.mxu0
    %v7836 = vadd.f32 %v7816, %v7835
    %7837 = vdwg.mxu0
    %7838 = vmatpush.msra.mxu0 %v6253
    %7839 = vmatpush.msra.mxu0 %v6245
    %7840 = vmatpush.msra.mxu0 %v6237
    %7841 = vmatpush.msra.mxu0 %v6229
    %7842 = vmatpush.msra.mxu0 %v6221
    %7843 = vmatpush.msra.mxu0 %v6213
    %7844 = vmatpush.msra.mxu0 %v6205
    %7845 = vmatpush.msra.mxu0 %v6197
    %7846 = vmatpush.msra.mxu0 %v6189
    %7847 = vmatpush.msra.mxu0 %v6181
    %7848 = vmatpush.msra.mxu0 %v6173
    %7849 = vmatpush.msra.mxu0 %v6165
    %7850 = vmatpush.msra.mxu0 %v6157
    %7851 = vmatpush.msra.mxu0 %v6149
    %7852 = vmatpush.msra.mxu0 %v6141
    %7853 = vmatpush.msra.mxu0 %v6133
    %7854 = vmatmul.f32.gmra.mxu0 %v7634
    %v7855 = vpop.f32.mrf.mxu0
    %v7856 = vadd.f32 0.0, %v7855
    %7857 = vdwg.mxu0
    %7858 = vmatpush.msra.mxu0 %v6381
    %7859 = vmatpush.msra.mxu0 %v6373
    %7860 = vmatpush.msra.mxu0 %v6365
    %7861 = vmatpush.msra.mxu0 %v6357
    %7862 = vmatpush.msra.mxu0 %v6349
    %7863 = vmatpush.msra.mxu0 %v6341
    %7864 = vmatpush.msra.mxu0 %v6333
    %7865 = vmatpush.msra.mxu0 %v6325
    %7866 = vmatpush.msra.mxu0 %v6317
    %7867 = vmatpush.msra.mxu0 %v6309
    %7868 = vmatpush.msra.mxu0 %v6301
    %7869 = vmatpush.msra.mxu0 %v6293
    %7870 = vmatpush.msra.mxu0 %v6285
    %7871 = vmatpush.msra.mxu0 %v6277
    %7872 = vmatpush.msra.mxu0 %v6269
    %7873 = vmatpush.msra.mxu0 %v6261
    %7874 = vmatmul.f32.gmra.mxu0 %v7635
    %v7875 = vpop.f32.mrf.mxu0
    %v7876 = vadd.f32 %v7856, %v7875
    %7877 = vdwg.mxu0
    %7878 = vmatpush.msra.mxu0 %v6254
    %7879 = vmatpush.msra.mxu0 %v6246
    %7880 = vmatpush.msra.mxu0 %v6238
    %7881 = vmatpush.msra.mxu0 %v6230
    %7882 = vmatpush.msra.mxu0 %v6222
    %7883 = vmatpush.msra.mxu0 %v6214
    %7884 = vmatpush.msra.mxu0 %v6206
    %7885 = vmatpush.msra.mxu0 %v6198
    %7886 = vmatpush.msra.mxu0 %v6190
    %7887 = vmatpush.msra.mxu0 %v6182
    %7888 = vmatpush.msra.mxu0 %v6174
    %7889 = vmatpush.msra.mxu0 %v6166
    %7890 = vmatpush.msra.mxu0 %v6158
    %7891 = vmatpush.msra.mxu0 %v6150
    %7892 = vmatpush.msra.mxu0 %v6142
    %7893 = vmatpush.msra.mxu0 %v6134
    %7894 = vmatmul.f32.gmra.mxu0 %v7634
    %v7895 = vpop.f32.mrf.mxu0
    %v7896 = vadd.f32 0.0, %v7895
    %7897 = vdwg.mxu0
    %7898 = vmatpush.msra.mxu0 %v6382
    %7899 = vmatpush.msra.mxu0 %v6374
    %7900 = vmatpush.msra.mxu0 %v6366
    %7901 = vmatpush.msra.mxu0 %v6358
    %7902 = vmatpush.msra.mxu0 %v6350
    %7903 = vmatpush.msra.mxu0 %v6342
    %7904 = vmatpush.msra.mxu0 %v6334
    %7905 = vmatpush.msra.mxu0 %v6326
    %7906 = vmatpush.msra.mxu0 %v6318
    %7907 = vmatpush.msra.mxu0 %v6310
    %7908 = vmatpush.msra.mxu0 %v6302
    %7909 = vmatpush.msra.mxu0 %v6294
    %7910 = vmatpush.msra.mxu0 %v6286
    %7911 = vmatpush.msra.mxu0 %v6278
    %7912 = vmatpush.msra.mxu0 %v6270
    %7913 = vmatpush.msra.mxu0 %v6262
    %7914 = vmatmul.f32.gmra.mxu0 %v7635
    %v7915 = vpop.f32.mrf.mxu0
    %v7916 = vadd.f32 %v7896, %v7915
    %7917 = vdwg.mxu0
    %7918 = vmatpush.msra.mxu0 %v6255
    %7919 = vmatpush.msra.mxu0 %v6247
    %7920 = vmatpush.msra.mxu0 %v6239
    %7921 = vmatpush.msra.mxu0 %v6231
    %7922 = vmatpush.msra.mxu0 %v6223
    %7923 = vmatpush.msra.mxu0 %v6215
    %7924 = vmatpush.msra.mxu0 %v6207
    %7925 = vmatpush.msra.mxu0 %v6199
    %7926 = vmatpush.msra.mxu0 %v6191
    %7927 = vmatpush.msra.mxu0 %v6183
    %7928 = vmatpush.msra.mxu0 %v6175
    %7929 = vmatpush.msra.mxu0 %v6167
    %7930 = vmatpush.msra.mxu0 %v6159
    %7931 = vmatpush.msra.mxu0 %v6151
    %7932 = vmatpush.msra.mxu0 %v6143
    %7933 = vmatpush.msra.mxu0 %v6135
    %7934 = vmatmul.f32.gmra.mxu0 %v7634
    %v7935 = vpop.f32.mrf.mxu0
    %v7936 = vadd.f32 0.0, %v7935
    %7937 = vdwg.mxu0
    %7938 = vmatpush.msra.mxu0 %v6383
    %7939 = vmatpush.msra.mxu0 %v6375
    %7940 = vmatpush.msra.mxu0 %v6367
    %7941 = vmatpush.msra.mxu0 %v6359
    %7942 = vmatpush.msra.mxu0 %v6351
    %7943 = vmatpush.msra.mxu0 %v6343
    %7944 = vmatpush.msra.mxu0 %v6335
    %7945 = vmatpush.msra.mxu0 %v6327
    %7946 = vmatpush.msra.mxu0 %v6319
    %7947 = vmatpush.msra.mxu0 %v6311
    %7948 = vmatpush.msra.mxu0 %v6303
    %7949 = vmatpush.msra.mxu0 %v6295
    %7950 = vmatpush.msra.mxu0 %v6287
    %7951 = vmatpush.msra.mxu0 %v6279
    %7952 = vmatpush.msra.mxu0 %v6271
    %7953 = vmatpush.msra.mxu0 %v6263
    %7954 = vmatmul.f32.gmra.mxu0 %v7635
    %v7955 = vpop.f32.mrf.mxu0
    %v7956 = vadd.f32 %v7936, %v7955
    %7957 = vdwg.mxu0
    %v7958 = vadd.f32 %v7836, %v6838
    %v7959 = vadd.f32 %v7876, %v6839
    %v7960 = vadd.f32 %v7916, %v6840
    %v7961 = vadd.f32 %v7956, %v6841
    %v7962 = vsub.f32 0.0, %v7958
    %v7963 = vmul.f32 %v7962, 1.442695
    %v7964 = vpow.pop %v7963
    %v7965 = vadd.f32 %v7964, 1.0
    %v7966 = vrcp.pop %v7965
    %v7967 = vmul.f32 %v7965, %v7966
    %v7968 = vsub.f32 1.0, %v7967
    %v7969 = vmul.f32 %v7966, %v7968
    %v7970 = vadd.f32 %v7966, %v7969
    %vm7971 = vweird.f32 %v7965
    %vm7972 = vweird.f32 %v7966
    %vm7973 = vmor %vm7971, %vm7972
    %v7974 = vsel %vm7973, %v7966, %v7970
    %v7975 = vand.u32 2147483647, %v7965
    %vm7976 = vcmp.eq.f32.partialorder %v7975, 8.507059e+37
    %v7977 = vand.u32 %v7965, 2147483648
    %v7978 = vor.u32 1.1754944e-38, %v7977
    %v7979 = vsel %vm7976, %v7978, %v7974
    %v7980 = vmul.f32 1.0, %v7979
    %v7981 = vsub.f32 0.0, %v7959
    %v7982 = vmul.f32 %v7981, 1.442695
    %v7983 = vpow.pop %v7982
    %v7984 = vadd.f32 %v7983, 1.0
    %v7985 = vrcp.pop %v7984
    %v7986 = vmul.f32 %v7984, %v7985
    %v7987 = vsub.f32 1.0, %v7986
    %v7988 = vmul.f32 %v7985, %v7987
    %v7989 = vadd.f32 %v7985, %v7988
    %vm7990 = vweird.f32 %v7984
    %vm7991 = vweird.f32 %v7985
    %vm7992 = vmor %vm7990, %vm7991
    %v7993 = vsel %vm7992, %v7985, %v7989
    %v7994 = vand.u32 2147483647, %v7984
    %vm7995 = vcmp.eq.f32.partialorder %v7994, 8.507059e+37
    %v7996 = vand.u32 %v7984, 2147483648
    %v7997 = vor.u32 1.1754944e-38, %v7996
    %v7998 = vsel %vm7995, %v7997, %v7993
    %v7999 = vmul.f32 1.0, %v7998
    %v8000 = vtanh.pop %v7960
    %v8001 = vsub.f32 0.0, %v7961
    %v8002 = vmul.f32 %v8001, 1.442695
    %v8003 = vpow.pop %v8002
    %v8004 = vadd.f32 %v8003, 1.0
    %v8005 = vrcp.pop %v8004
    %v8006 = vmul.f32 %v8004, %v8005
    %v8007 = vsub.f32 1.0, %v8006
    %v8008 = vmul.f32 %v8005, %v8007
    %v8009 = vadd.f32 %v8005, %v8008
    %vm8010 = vweird.f32 %v8004
    %vm8011 = vweird.f32 %v8005
    %vm8012 = vmor %vm8010, %vm8011
    %v8013 = vsel %vm8012, %v8005, %v8009
    %v8014 = vand.u32 2147483647, %v8004
    %vm8015 = vcmp.eq.f32.partialorder %v8014, 8.507059e+37
    %v8016 = vand.u32 %v8004, 2147483648
    %v8017 = vor.u32 1.1754944e-38, %v8016
    %v8018 = vsel %vm8015, %v8017, %v8013
    %v8019 = vmul.f32 1.0, %v8018
    %v8020 = vmul.f32 %v7999, %v7464
    %v8021 = vmul.f32 %v7980, %v8000
    %v8022 = vadd.f32 %v8020, %v8021
    %v8023 = vtanh.pop %v8022
    %v8024 = vmul.f32 %v8019, %v8023
    %v8029 = vrot.slane %v7676, 5
    %v8030 = vrot.slane %v7716, 5
    %v8031 = vrot.slane %v7756, 5
    %v8032 = vrot.slane %v7796, 5
    %v8033 = vrot.slane %v7676, 6
    %v8034 = vrot.slane %v7716, 6
    %v8035 = vrot.slane %v7756, 6
    %v8036 = vrot.slane %v7796, 6
    %v8045 = vadd.f32 %v6019, %v8029
    %v8046 = vadd.f32 %v6053, %v8030
    %v8047 = vadd.f32 %v6087, %v8031
    %v8048 = vadd.f32 %v6121, %v8032
    %v8049 = vadd.f32 %v6023, %v8033
    %v8050 = vadd.f32 %v6057, %v8034
    %v8051 = vadd.f32 %v6091, %v8035
    %v8052 = vadd.f32 %v6125, %v8036
    %v8053 = vsub.f32 0.0, %v8045
    %v8054 = vsub.f32 0.0, %v8049
    %v8055 = vmul.f32 %v8053, 1.442695
    %v8056 = vpow.pop %v8055
    %v8057 = vmul.f32 %v8054, 1.442695
    %v8058 = vpow.pop %v8057
    %v8059 = vadd.f32 %v8056, 1.0
    %v8060 = vadd.f32 %v8058, 1.0
    %v8061 = vrcp.pop %v8059
    %v8062 = vmul.f32 %v8059, %v8061
    %v8063 = vsub.f32 1.0, %v8062
    %v8064 = vmul.f32 %v8061, %v8063
    %v8065 = vadd.f32 %v8061, %v8064
    %vm8066 = vweird.f32 %v8059
    %vm8067 = vweird.f32 %v8061
    %vm8068 = vmor %vm8066, %vm8067
    %v8069 = vsel %vm8068, %v8061, %v8065
    %v8070 = vand.u32 2147483647, %v8059
    %vm8071 = vcmp.eq.f32.partialorder %v8070, 8.507059e+37
    %v8072 = vand.u32 %v8059, 2147483648
    %v8073 = vor.u32 1.1754944e-38, %v8072
    %v8074 = vsel %vm8071, %v8073, %v8069
    %v8075 = vmul.f32 1.0, %v8074
    %v8076 = vrcp.pop %v8060
    %v8077 = vmul.f32 %v8060, %v8076
    %v8078 = vsub.f32 1.0, %v8077
    %v8079 = vmul.f32 %v8076, %v8078
    %v8080 = vadd.f32 %v8076, %v8079
    %vm8081 = vweird.f32 %v8060
    %vm8082 = vweird.f32 %v8076
    %vm8083 = vmor %vm8081, %vm8082
    %v8084 = vsel %vm8083, %v8076, %v8080
    %v8085 = vand.u32 2147483647, %v8060
    %vm8086 = vcmp.eq.f32.partialorder %v8085, 8.507059e+37
    %v8087 = vand.u32 %v8060, 2147483648
    %v8088 = vor.u32 1.1754944e-38, %v8087
    %v8089 = vsel %vm8086, %v8088, %v8084
    %v8090 = vmul.f32 1.0, %v8089
    %v8091 = vsub.f32 0.0, %v8046
    %v8092 = vsub.f32 0.0, %v8050
    %v8093 = vmul.f32 %v8091, 1.442695
    %v8094 = vpow.pop %v8093
    %v8095 = vmul.f32 %v8092, 1.442695
    %v8096 = vpow.pop %v8095
    %v8097 = vadd.f32 %v8094, 1.0
    %v8098 = vadd.f32 %v8096, 1.0
    %v8099 = vrcp.pop %v8097
    %v8100 = vmul.f32 %v8097, %v8099
    %v8101 = vsub.f32 1.0, %v8100
    %v8102 = vmul.f32 %v8099, %v8101
    %v8103 = vadd.f32 %v8099, %v8102
    %vm8104 = vweird.f32 %v8097
    %vm8105 = vweird.f32 %v8099
    %vm8106 = vmor %vm8104, %vm8105
    %v8107 = vsel %vm8106, %v8099, %v8103
    %v8108 = vand.u32 2147483647, %v8097
    %vm8109 = vcmp.eq.f32.partialorder %v8108, 8.507059e+37
    %v8110 = vand.u32 %v8097, 2147483648
    %v8111 = vor.u32 1.1754944e-38, %v8110
    %v8112 = vsel %vm8109, %v8111, %v8107
    %v8113 = vmul.f32 1.0, %v8112
    %v8114 = vrcp.pop %v8098
    %v8115 = vmul.f32 %v8098, %v8114
    %v8116 = vsub.f32 1.0, %v8115
    %v8117 = vmul.f32 %v8114, %v8116
    %v8118 = vadd.f32 %v8114, %v8117
    %vm8119 = vweird.f32 %v8098
    %vm8120 = vweird.f32 %v8114
    %vm8121 = vmor %vm8119, %vm8120
    %v8122 = vsel %vm8121, %v8114, %v8118
    %v8123 = vand.u32 2147483647, %v8098
    %vm8124 = vcmp.eq.f32.partialorder %v8123, 8.507059e+37
    %v8125 = vand.u32 %v8098, 2147483648
    %v8126 = vor.u32 1.1754944e-38, %v8125
    %v8127 = vsel %vm8124, %v8126, %v8122
    %v8128 = vmul.f32 1.0, %v8127
    %v8129 = vtanh.pop %v8047
    %v8130 = vtanh.pop %v8051
    %v8131 = vsub.f32 0.0, %v8048
    %v8132 = vsub.f32 0.0, %v8052
    %v8133 = vmul.f32 %v8131, 1.442695
    %v8134 = vpow.pop %v8133
    %v8135 = vmul.f32 %v8132, 1.442695
    %v8136 = vpow.pop %v8135
    %v8137 = vadd.f32 %v8134, 1.0
    %v8138 = vadd.f32 %v8136, 1.0
    %v8139 = vrcp.pop %v8137
    %v8140 = vmul.f32 %v8137, %v8139
    %v8141 = vsub.f32 1.0, %v8140
    %v8142 = vmul.f32 %v8139, %v8141
    %v8143 = vadd.f32 %v8139, %v8142
    %vm8144 = vweird.f32 %v8137
    %vm8145 = vweird.f32 %v8139
    %vm8146 = vmor %vm8144, %vm8145
    %v8147 = vsel %vm8146, %v8139, %v8143
    %v8148 = vand.u32 2147483647, %v8137
    %vm8149 = vcmp.eq.f32.partialorder %v8148, 8.507059e+37
    %v8150 = vand.u32 %v8137, 2147483648
    %v8151 = vor.u32 1.1754944e-38, %v8150
    %v8152 = vsel %vm8149, %v8151, %v8147
    %v8153 = vmul.f32 1.0, %v8152
    %v8154 = vrcp.pop %v8138
    %v8155 = vmul.f32 %v8138, %v8154
    %v8156 = vsub.f32 1.0, %v8155
    %v8157 = vmul.f32 %v8154, %v8156
    %v8158 = vadd.f32 %v8154, %v8157
    %vm8159 = vweird.f32 %v8138
    %vm8160 = vweird.f32 %v8154
    %vm8161 = vmor %vm8159, %vm8160
    %v8162 = vsel %vm8161, %v8154, %v8158
    %v8163 = vand.u32 2147483647, %v8138
    %vm8164 = vcmp.eq.f32.partialorder %v8163, 8.507059e+37
    %v8165 = vand.u32 %v8138, 2147483648
    %v8166 = vor.u32 1.1754944e-38, %v8165
    %v8167 = vsel %vm8164, %v8166, %v8162
    %v8168 = vmul.f32 1.0, %v8167
    %v8171 = vrot.slane %v7621, 7
    %v8172 = vrot.slane %v7622, 7
    %v8175 = vmul.f32 %v8113, %v8171
    %v8176 = vmul.f32 %v8128, %v8172
    %v8177 = vmul.f32 %v8075, %v8129
    %v8178 = vmul.f32 %v8090, %v8130
    %v8179 = vadd.f32 %v8175, %v8177
    %v8180 = vadd.f32 %v8176, %v8178
    %v8181 = vtanh.pop %v8179
    %v8182 = vtanh.pop %v8180
    %v8183 = vmul.f32 %v8153, %v8181
    %v8184 = vmul.f32 %v8168, %v8182
    %v8187 = vrot.slane %v8184, 7
    %vm8188 = vcmask 1044484
    %v8189 = vsel %vm8188, %v8187, %v8183
    %v8191 = vrot.slane %v8024, 5
    %v8192 = vrot.slane %v8189, 3
    %v8193 = vrot.slane %v8191, 3
    %8196 = vmatpush.msra.mxu0 %v6248
    %8197 = vmatpush.msra.mxu0 %v6240
    %8198 = vmatpush.msra.mxu0 %v6232
    %8199 = vmatpush.msra.mxu0 %v6224
    %8200 = vmatpush.msra.mxu0 %v6216
    %8201 = vmatpush.msra.mxu0 %v6208
    %8202 = vmatpush.msra.mxu0 %v6200
    %8203 = vmatpush.msra.mxu0 %v6192
    %8204 = vmatpush.msra.mxu0 %v6184
    %8205 = vmatpush.msra.mxu0 %v6176
    %8206 = vmatpush.msra.mxu0 %v6168
    %8207 = vmatpush.msra.mxu0 %v6160
    %8208 = vmatpush.msra.mxu0 %v6152
    %8209 = vmatpush.msra.mxu0 %v6144
    %8210 = vmatpush.msra.mxu0 %v6136
    %8211 = vmatpush.msra.mxu0 %v6128
    %8212 = vmatmul.f32.gmra.mxu0 %v8192
    %v8213 = vpop.f32.mrf.mxu0
    %v8214 = vadd.f32 0.0, %v8213
    %8215 = vdwg.mxu0
    %8216 = vmatpush.msra.mxu0 %v6376
    %8217 = vmatpush.msra.mxu0 %v6368
    %8218 = vmatpush.msra.mxu0 %v6360
    %8219 = vmatpush.msra.mxu0 %v6352
    %8220 = vmatpush.msra.mxu0 %v6344
    %8221 = vmatpush.msra.mxu0 %v6336
    %8222 = vmatpush.msra.mxu0 %v6328
    %8223 = vmatpush.msra.mxu0 %v6320
    %8224 = vmatpush.msra.mxu0 %v6312
    %8225 = vmatpush.msra.mxu0 %v6304
    %8226 = vmatpush.msra.mxu0 %v6296
    %8227 = vmatpush.msra.mxu0 %v6288
    %8228 = vmatpush.msra.mxu0 %v6280
    %8229 = vmatpush.msra.mxu0 %v6272
    %8230 = vmatpush.msra.mxu0 %v6264
    %8231 = vmatpush.msra.mxu0 %v6256
    %8232 = vmatmul.f32.gmra.mxu0 %v8193
    %v8233 = vpop.f32.mrf.mxu0
    %v8234 = vadd.f32 %v8214, %v8233
    %8235 = vdwg.mxu0
    %8236 = vmatpush.msra.mxu0 %v6249
    %8237 = vmatpush.msra.mxu0 %v6241
    %8238 = vmatpush.msra.mxu0 %v6233
    %8239 = vmatpush.msra.mxu0 %v6225
    %8240 = vmatpush.msra.mxu0 %v6217
    %8241 = vmatpush.msra.mxu0 %v6209
    %8242 = vmatpush.msra.mxu0 %v6201
    %8243 = vmatpush.msra.mxu0 %v6193
    %8244 = vmatpush.msra.mxu0 %v6185
    %8245 = vmatpush.msra.mxu0 %v6177
    %8246 = vmatpush.msra.mxu0 %v6169
    %8247 = vmatpush.msra.mxu0 %v6161
    %8248 = vmatpush.msra.mxu0 %v6153
    %8249 = vmatpush.msra.mxu0 %v6145
    %8250 = vmatpush.msra.mxu0 %v6137
    %8251 = vmatpush.msra.mxu0 %v6129
    %8252 = vmatmul.f32.gmra.mxu0 %v8192
    %v8253 = vpop.f32.mrf.mxu0
    %v8254 = vadd.f32 0.0, %v8253
    %8255 = vdwg.mxu0
    %8256 = vmatpush.msra.mxu0 %v6377
    %8257 = vmatpush.msra.mxu0 %v6369
    %8258 = vmatpush.msra.mxu0 %v6361
    %8259 = vmatpush.msra.mxu0 %v6353
    %8260 = vmatpush.msra.mxu0 %v6345
    %8261 = vmatpush.msra.mxu0 %v6337
    %8262 = vmatpush.msra.mxu0 %v6329
    %8263 = vmatpush.msra.mxu0 %v6321
    %8264 = vmatpush.msra.mxu0 %v6313
    %8265 = vmatpush.msra.mxu0 %v6305
    %8266 = vmatpush.msra.mxu0 %v6297
    %8267 = vmatpush.msra.mxu0 %v6289
    %8268 = vmatpush.msra.mxu0 %v6281
    %8269 = vmatpush.msra.mxu0 %v6273
    %8270 = vmatpush.msra.mxu0 %v6265
    %8271 = vmatpush.msra.mxu0 %v6257
    %8272 = vmatmul.f32.gmra.mxu0 %v8193
    %v8273 = vpop.f32.mrf.mxu0
    %v8274 = vadd.f32 %v8254, %v8273
    %8275 = vdwg.mxu0
    %8276 = vmatpush.msra.mxu0 %v6250
    %8277 = vmatpush.msra.mxu0 %v6242
    %8278 = vmatpush.msra.mxu0 %v6234
    %8279 = vmatpush.msra.mxu0 %v6226
    %8280 = vmatpush.msra.mxu0 %v6218
    %8281 = vmatpush.msra.mxu0 %v6210
    %8282 = vmatpush.msra.mxu0 %v6202
    %8283 = vmatpush.msra.mxu0 %v6194
    %8284 = vmatpush.msra.mxu0 %v6186
    %8285 = vmatpush.msra.mxu0 %v6178
    %8286 = vmatpush.msra.mxu0 %v6170
    %8287 = vmatpush.msra.mxu0 %v6162
    %8288 = vmatpush.msra.mxu0 %v6154
    %8289 = vmatpush.msra.mxu0 %v6146
    %8290 = vmatpush.msra.mxu0 %v6138
    %8291 = vmatpush.msra.mxu0 %v6130
    %8292 = vmatmul.f32.gmra.mxu0 %v8192
    %v8293 = vpop.f32.mrf.mxu0
    %v8294 = vadd.f32 0.0, %v8293
    %8295 = vdwg.mxu0
    %8296 = vmatpush.msra.mxu0 %v6378
    %8297 = vmatpush.msra.mxu0 %v6370
    %8298 = vmatpush.msra.mxu0 %v6362
    %8299 = vmatpush.msra.mxu0 %v6354
    %8300 = vmatpush.msra.mxu0 %v6346
    %8301 = vmatpush.msra.mxu0 %v6338
    %8302 = vmatpush.msra.mxu0 %v6330
    %8303 = vmatpush.msra.mxu0 %v6322
    %8304 = vmatpush.msra.mxu0 %v6314
    %8305 = vmatpush.msra.mxu0 %v6306
    %8306 = vmatpush.msra.mxu0 %v6298
    %8307 = vmatpush.msra.mxu0 %v6290
    %8308 = vmatpush.msra.mxu0 %v6282
    %8309 = vmatpush.msra.mxu0 %v6274
    %8310 = vmatpush.msra.mxu0 %v6266
    %8311 = vmatpush.msra.mxu0 %v6258
    %8312 = vmatmul.f32.gmra.mxu0 %v8193
    %v8313 = vpop.f32.mrf.mxu0
    %v8314 = vadd.f32 %v8294, %v8313
    %8315 = vdwg.mxu0
    %8316 = vmatpush.msra.mxu0 %v6251
    %8317 = vmatpush.msra.mxu0 %v6243
    %8318 = vmatpush.msra.mxu0 %v6235
    %8319 = vmatpush.msra.mxu0 %v6227
    %8320 = vmatpush.msra.mxu0 %v6219
    %8321 = vmatpush.msra.mxu0 %v6211
    %8322 = vmatpush.msra.mxu0 %v6203
    %8323 = vmatpush.msra.mxu0 %v6195
    %8324 = vmatpush.msra.mxu0 %v6187
    %8325 = vmatpush.msra.mxu0 %v6179
    %8326 = vmatpush.msra.mxu0 %v6171
    %8327 = vmatpush.msra.mxu0 %v6163
    %8328 = vmatpush.msra.mxu0 %v6155
    %8329 = vmatpush.msra.mxu0 %v6147
    %8330 = vmatpush.msra.mxu0 %v6139
    %8331 = vmatpush.msra.mxu0 %v6131
    %8332 = vmatmul.f32.gmra.mxu0 %v8192
    %v8333 = vpop.f32.mrf.mxu0
    %v8334 = vadd.f32 0.0, %v8333
    %8335 = vdwg.mxu0
    %8336 = vmatpush.msra.mxu0 %v6379
    %8337 = vmatpush.msra.mxu0 %v6371
    %8338 = vmatpush.msra.mxu0 %v6363
    %8339 = vmatpush.msra.mxu0 %v6355
    %8340 = vmatpush.msra.mxu0 %v6347
    %8341 = vmatpush.msra.mxu0 %v6339
    %8342 = vmatpush.msra.mxu0 %v6331
    %8343 = vmatpush.msra.mxu0 %v6323
    %8344 = vmatpush.msra.mxu0 %v6315
    %8345 = vmatpush.msra.mxu0 %v6307
    %8346 = vmatpush.msra.mxu0 %v6299
    %8347 = vmatpush.msra.mxu0 %v6291
    %8348 = vmatpush.msra.mxu0 %v6283
    %8349 = vmatpush.msra.mxu0 %v6275
    %8350 = vmatpush.msra.mxu0 %v6267
    %8351 = vmatpush.msra.mxu0 %v6259
    %8352 = vmatmul.f32.gmra.mxu0 %v8193
    %v8353 = vpop.f32.mrf.mxu0
    %v8354 = vadd.f32 %v8334, %v8353
    %8355 = vdwg.mxu0
    %8356 = vmatpush.msra.mxu0 %v6252
    %8357 = vmatpush.msra.mxu0 %v6244
    %8358 = vmatpush.msra.mxu0 %v6236
    %8359 = vmatpush.msra.mxu0 %v6228
    %8360 = vmatpush.msra.mxu0 %v6220
    %8361 = vmatpush.msra.mxu0 %v6212
    %8362 = vmatpush.msra.mxu0 %v6204
    %8363 = vmatpush.msra.mxu0 %v6196
    %8364 = vmatpush.msra.mxu0 %v6188
    %8365 = vmatpush.msra.mxu0 %v6180
    %8366 = vmatpush.msra.mxu0 %v6172
    %8367 = vmatpush.msra.mxu0 %v6164
    %8368 = vmatpush.msra.mxu0 %v6156
    %8369 = vmatpush.msra.mxu0 %v6148
    %8370 = vmatpush.msra.mxu0 %v6140
    %8371 = vmatpush.msra.mxu0 %v6132
    %8372 = vmatmul.f32.gmra.mxu0 %v8192
    %v8373 = vpop.f32.mrf.mxu0
    %v8374 = vadd.f32 0.0, %v8373
    %8375 = vdwg.mxu0
    %8376 = vmatpush.msra.mxu0 %v6380
    %8377 = vmatpush.msra.mxu0 %v6372
    %8378 = vmatpush.msra.mxu0 %v6364
    %8379 = vmatpush.msra.mxu0 %v6356
    %8380 = vmatpush.msra.mxu0 %v6348
    %8381 = vmatpush.msra.mxu0 %v6340
    %8382 = vmatpush.msra.mxu0 %v6332
    %8383 = vmatpush.msra.mxu0 %v6324
    %8384 = vmatpush.msra.mxu0 %v6316
    %8385 = vmatpush.msra.mxu0 %v6308
    %8386 = vmatpush.msra.mxu0 %v6300
    %8387 = vmatpush.msra.mxu0 %v6292
    %8388 = vmatpush.msra.mxu0 %v6284
    %8389 = vmatpush.msra.mxu0 %v6276
    %8390 = vmatpush.msra.mxu0 %v6268
    %8391 = vmatpush.msra.mxu0 %v6260
    %8392 = vmatmul.f32.gmra.mxu0 %v8193
    %v8393 = vpop.f32.mrf.mxu0
    %v8394 = vadd.f32 %v8374, %v8393
    %8395 = vdwg.mxu0
    %8396 = vmatpush.msra.mxu0 %v6253
    %8397 = vmatpush.msra.mxu0 %v6245
    %8398 = vmatpush.msra.mxu0 %v6237
    %8399 = vmatpush.msra.mxu0 %v6229
    %8400 = vmatpush.msra.mxu0 %v6221
    %8401 = vmatpush.msra.mxu0 %v6213
    %8402 = vmatpush.msra.mxu0 %v6205
    %8403 = vmatpush.msra.mxu0 %v6197
    %8404 = vmatpush.msra.mxu0 %v6189
    %8405 = vmatpush.msra.mxu0 %v6181
    %8406 = vmatpush.msra.mxu0 %v6173
    %8407 = vmatpush.msra.mxu0 %v6165
    %8408 = vmatpush.msra.mxu0 %v6157
    %8409 = vmatpush.msra.mxu0 %v6149
    %8410 = vmatpush.msra.mxu0 %v6141
    %8411 = vmatpush.msra.mxu0 %v6133
    %8412 = vmatmul.f32.gmra.mxu0 %v8192
    %v8413 = vpop.f32.mrf.mxu0
    %v8414 = vadd.f32 0.0, %v8413
    %8415 = vdwg.mxu0
    %8416 = vmatpush.msra.mxu0 %v6381
    %8417 = vmatpush.msra.mxu0 %v6373
    %8418 = vmatpush.msra.mxu0 %v6365
    %8419 = vmatpush.msra.mxu0 %v6357
    %8420 = vmatpush.msra.mxu0 %v6349
    %8421 = vmatpush.msra.mxu0 %v6341
    %8422 = vmatpush.msra.mxu0 %v6333
    %8423 = vmatpush.msra.mxu0 %v6325
    %8424 = vmatpush.msra.mxu0 %v6317
    %8425 = vmatpush.msra.mxu0 %v6309
    %8426 = vmatpush.msra.mxu0 %v6301
    %8427 = vmatpush.msra.mxu0 %v6293
    %8428 = vmatpush.msra.mxu0 %v6285
    %8429 = vmatpush.msra.mxu0 %v6277
    %8430 = vmatpush.msra.mxu0 %v6269
    %8431 = vmatpush.msra.mxu0 %v6261
    %8432 = vmatmul.f32.gmra.mxu0 %v8193
    %v8433 = vpop.f32.mrf.mxu0
    %v8434 = vadd.f32 %v8414, %v8433
    %8435 = vdwg.mxu0
    %8436 = vmatpush.msra.mxu0 %v6254
    %8437 = vmatpush.msra.mxu0 %v6246
    %8438 = vmatpush.msra.mxu0 %v6238
    %8439 = vmatpush.msra.mxu0 %v6230
    %8440 = vmatpush.msra.mxu0 %v6222
    %8441 = vmatpush.msra.mxu0 %v6214
    %8442 = vmatpush.msra.mxu0 %v6206
    %8443 = vmatpush.msra.mxu0 %v6198
    %8444 = vmatpush.msra.mxu0 %v6190
    %8445 = vmatpush.msra.mxu0 %v6182
    %8446 = vmatpush.msra.mxu0 %v6174
    %8447 = vmatpush.msra.mxu0 %v6166
    %8448 = vmatpush.msra.mxu0 %v6158
    %8449 = vmatpush.msra.mxu0 %v6150
    %8450 = vmatpush.msra.mxu0 %v6142
    %8451 = vmatpush.msra.mxu0 %v6134
    %8452 = vmatmul.f32.gmra.mxu0 %v8192
    %v8453 = vpop.f32.mrf.mxu0
    %v8454 = vadd.f32 0.0, %v8453
    %8455 = vdwg.mxu0
    %8456 = vmatpush.msra.mxu0 %v6382
    %8457 = vmatpush.msra.mxu0 %v6374
    %8458 = vmatpush.msra.mxu0 %v6366
    %8459 = vmatpush.msra.mxu0 %v6358
    %8460 = vmatpush.msra.mxu0 %v6350
    %8461 = vmatpush.msra.mxu0 %v6342
    %8462 = vmatpush.msra.mxu0 %v6334
    %8463 = vmatpush.msra.mxu0 %v6326
    %8464 = vmatpush.msra.mxu0 %v6318
    %8465 = vmatpush.msra.mxu0 %v6310
    %8466 = vmatpush.msra.mxu0 %v6302
    %8467 = vmatpush.msra.mxu0 %v6294
    %8468 = vmatpush.msra.mxu0 %v6286
    %8469 = vmatpush.msra.mxu0 %v6278
    %8470 = vmatpush.msra.mxu0 %v6270
    %8471 = vmatpush.msra.mxu0 %v6262
    %8472 = vmatmul.f32.gmra.mxu0 %v8193
    %v8473 = vpop.f32.mrf.mxu0
    %v8474 = vadd.f32 %v8454, %v8473
    %8475 = vdwg.mxu0
    %8476 = vmatpush.msra.mxu0 %v6255
    %8477 = vmatpush.msra.mxu0 %v6247
    %8478 = vmatpush.msra.mxu0 %v6239
    %8479 = vmatpush.msra.mxu0 %v6231
    %8480 = vmatpush.msra.mxu0 %v6223
    %8481 = vmatpush.msra.mxu0 %v6215
    %8482 = vmatpush.msra.mxu0 %v6207
    %8483 = vmatpush.msra.mxu0 %v6199
    %8484 = vmatpush.msra.mxu0 %v6191
    %8485 = vmatpush.msra.mxu0 %v6183
    %8486 = vmatpush.msra.mxu0 %v6175
    %8487 = vmatpush.msra.mxu0 %v6167
    %8488 = vmatpush.msra.mxu0 %v6159
    %8489 = vmatpush.msra.mxu0 %v6151
    %8490 = vmatpush.msra.mxu0 %v6143
    %8491 = vmatpush.msra.mxu0 %v6135
    %8492 = vmatmul.f32.gmra.mxu0 %v8192
    %v8493 = vpop.f32.mrf.mxu0
    %v8494 = vadd.f32 0.0, %v8493
    %8495 = vdwg.mxu0
    %8496 = vmatpush.msra.mxu0 %v6383
    %8497 = vmatpush.msra.mxu0 %v6375
    %8498 = vmatpush.msra.mxu0 %v6367
    %8499 = vmatpush.msra.mxu0 %v6359
    %8500 = vmatpush.msra.mxu0 %v6351
    %8501 = vmatpush.msra.mxu0 %v6343
    %8502 = vmatpush.msra.mxu0 %v6335
    %8503 = vmatpush.msra.mxu0 %v6327
    %8504 = vmatpush.msra.mxu0 %v6319
    %8505 = vmatpush.msra.mxu0 %v6311
    %8506 = vmatpush.msra.mxu0 %v6303
    %8507 = vmatpush.msra.mxu0 %v6295
    %8508 = vmatpush.msra.mxu0 %v6287
    %8509 = vmatpush.msra.mxu0 %v6279
    %8510 = vmatpush.msra.mxu0 %v6271
    %8511 = vmatpush.msra.mxu0 %v6263
    %8512 = vmatmul.f32.gmra.mxu0 %v8193
    %v8513 = vpop.f32.mrf.mxu0
    %v8514 = vadd.f32 %v8494, %v8513
    %8515 = vdwg.mxu0
    %v8516 = vadd.f32 %v8394, %v6838
    %v8517 = vadd.f32 %v8434, %v6839
    %v8518 = vadd.f32 %v8474, %v6840
    %v8519 = vadd.f32 %v8514, %v6841
    %v8520 = vsub.f32 0.0, %v8516
    %v8521 = vmul.f32 %v8520, 1.442695
    %v8522 = vpow.pop %v8521
    %v8523 = vadd.f32 %v8522, 1.0
    %v8524 = vrcp.pop %v8523
    %v8525 = vmul.f32 %v8523, %v8524
    %v8526 = vsub.f32 1.0, %v8525
    %v8527 = vmul.f32 %v8524, %v8526
    %v8528 = vadd.f32 %v8524, %v8527
    %vm8529 = vweird.f32 %v8523
    %vm8530 = vweird.f32 %v8524
    %vm8531 = vmor %vm8529, %vm8530
    %v8532 = vsel %vm8531, %v8524, %v8528
    %v8533 = vand.u32 2147483647, %v8523
    %vm8534 = vcmp.eq.f32.partialorder %v8533, 8.507059e+37
    %v8535 = vand.u32 %v8523, 2147483648
    %v8536 = vor.u32 1.1754944e-38, %v8535
    %v8537 = vsel %vm8534, %v8536, %v8532
    %v8538 = vmul.f32 1.0, %v8537
    %v8539 = vsub.f32 0.0, %v8517
    %v8540 = vmul.f32 %v8539, 1.442695
    %v8541 = vpow.pop %v8540
    %v8542 = vadd.f32 %v8541, 1.0
    %v8543 = vrcp.pop %v8542
    %v8544 = vmul.f32 %v8542, %v8543
    %v8545 = vsub.f32 1.0, %v8544
    %v8546 = vmul.f32 %v8543, %v8545
    %v8547 = vadd.f32 %v8543, %v8546
    %vm8548 = vweird.f32 %v8542
    %vm8549 = vweird.f32 %v8543
    %vm8550 = vmor %vm8548, %vm8549
    %v8551 = vsel %vm8550, %v8543, %v8547
    %v8552 = vand.u32 2147483647, %v8542
    %vm8553 = vcmp.eq.f32.partialorder %v8552, 8.507059e+37
    %v8554 = vand.u32 %v8542, 2147483648
    %v8555 = vor.u32 1.1754944e-38, %v8554
    %v8556 = vsel %vm8553, %v8555, %v8551
    %v8557 = vmul.f32 1.0, %v8556
    %v8558 = vtanh.pop %v8518
    %v8559 = vsub.f32 0.0, %v8519
    %v8560 = vmul.f32 %v8559, 1.442695
    %v8561 = vpow.pop %v8560
    %v8562 = vadd.f32 %v8561, 1.0
    %v8563 = vrcp.pop %v8562
    %v8564 = vmul.f32 %v8562, %v8563
    %v8565 = vsub.f32 1.0, %v8564
    %v8566 = vmul.f32 %v8563, %v8565
    %v8567 = vadd.f32 %v8563, %v8566
    %vm8568 = vweird.f32 %v8562
    %vm8569 = vweird.f32 %v8563
    %vm8570 = vmor %vm8568, %vm8569
    %v8571 = vsel %vm8570, %v8563, %v8567
    %v8572 = vand.u32 2147483647, %v8562
    %vm8573 = vcmp.eq.f32.partialorder %v8572, 8.507059e+37
    %v8574 = vand.u32 %v8562, 2147483648
    %v8575 = vor.u32 1.1754944e-38, %v8574
    %v8576 = vsel %vm8573, %v8575, %v8571
    %v8577 = vmul.f32 1.0, %v8576
    %v8578 = vmul.f32 %v8557, %v8022
    %v8579 = vmul.f32 %v8538, %v8558
    %v8580 = vadd.f32 %v8578, %v8579
    %v8581 = vtanh.pop %v8580
    %v8582 = vmul.f32 %v8577, %v8581
    %v8587 = vrot.slane %v8234, 4
    %v8588 = vrot.slane %v8274, 4
    %v8589 = vrot.slane %v8314, 4
    %v8590 = vrot.slane %v8354, 4
    %v8591 = vrot.slane %v8234, 5
    %v8592 = vrot.slane %v8274, 5
    %v8593 = vrot.slane %v8314, 5
    %v8594 = vrot.slane %v8354, 5
    %v8603 = vadd.f32 %v6019, %v8587
    %v8604 = vadd.f32 %v6053, %v8588
    %v8605 = vadd.f32 %v6087, %v8589
    %v8606 = vadd.f32 %v6121, %v8590
    %v8607 = vadd.f32 %v6023, %v8591
    %v8608 = vadd.f32 %v6057, %v8592
    %v8609 = vadd.f32 %v6091, %v8593
    %v8610 = vadd.f32 %v6125, %v8594
    %v8611 = vsub.f32 0.0, %v8603
    %v8612 = vsub.f32 0.0, %v8607
    %v8613 = vmul.f32 %v8611, 1.442695
    %v8614 = vpow.pop %v8613
    %v8615 = vmul.f32 %v8612, 1.442695
    %v8616 = vpow.pop %v8615
    %v8617 = vadd.f32 %v8614, 1.0
    %v8618 = vadd.f32 %v8616, 1.0
    %v8619 = vrcp.pop %v8617
    %v8620 = vmul.f32 %v8617, %v8619
    %v8621 = vsub.f32 1.0, %v8620
    %v8622 = vmul.f32 %v8619, %v8621
    %v8623 = vadd.f32 %v8619, %v8622
    %vm8624 = vweird.f32 %v8617
    %vm8625 = vweird.f32 %v8619
    %vm8626 = vmor %vm8624, %vm8625
    %v8627 = vsel %vm8626, %v8619, %v8623
    %v8628 = vand.u32 2147483647, %v8617
    %vm8629 = vcmp.eq.f32.partialorder %v8628, 8.507059e+37
    %v8630 = vand.u32 %v8617, 2147483648
    %v8631 = vor.u32 1.1754944e-38, %v8630
    %v8632 = vsel %vm8629, %v8631, %v8627
    %v8633 = vmul.f32 1.0, %v8632
    %v8634 = vrcp.pop %v8618
    %v8635 = vmul.f32 %v8618, %v8634
    %v8636 = vsub.f32 1.0, %v8635
    %v8637 = vmul.f32 %v8634, %v8636
    %v8638 = vadd.f32 %v8634, %v8637
    %vm8639 = vweird.f32 %v8618
    %vm8640 = vweird.f32 %v8634
    %vm8641 = vmor %vm8639, %vm8640
    %v8642 = vsel %vm8641, %v8634, %v8638
    %v8643 = vand.u32 2147483647, %v8618
    %vm8644 = vcmp.eq.f32.partialorder %v8643, 8.507059e+37
    %v8645 = vand.u32 %v8618, 2147483648
    %v8646 = vor.u32 1.1754944e-38, %v8645
    %v8647 = vsel %vm8644, %v8646, %v8642
    %v8648 = vmul.f32 1.0, %v8647
    %v8649 = vsub.f32 0.0, %v8604
    %v8650 = vsub.f32 0.0, %v8608
    %v8651 = vmul.f32 %v8649, 1.442695
    %v8652 = vpow.pop %v8651
    %v8653 = vmul.f32 %v8650, 1.442695
    %v8654 = vpow.pop %v8653
    %v8655 = vadd.f32 %v8652, 1.0
    %v8656 = vadd.f32 %v8654, 1.0
    %v8657 = vrcp.pop %v8655
    %v8658 = vmul.f32 %v8655, %v8657
    %v8659 = vsub.f32 1.0, %v8658
    %v8660 = vmul.f32 %v8657, %v8659
    %v8661 = vadd.f32 %v8657, %v8660
    %vm8662 = vweird.f32 %v8655
    %vm8663 = vweird.f32 %v8657
    %vm8664 = vmor %vm8662, %vm8663
    %v8665 = vsel %vm8664, %v8657, %v8661
    %v8666 = vand.u32 2147483647, %v8655
    %vm8667 = vcmp.eq.f32.partialorder %v8666, 8.507059e+37
    %v8668 = vand.u32 %v8655, 2147483648
    %v8669 = vor.u32 1.1754944e-38, %v8668
    %v8670 = vsel %vm8667, %v8669, %v8665
    %v8671 = vmul.f32 1.0, %v8670
    %v8672 = vrcp.pop %v8656
    %v8673 = vmul.f32 %v8656, %v8672
    %v8674 = vsub.f32 1.0, %v8673
    %v8675 = vmul.f32 %v8672, %v8674
    %v8676 = vadd.f32 %v8672, %v8675
    %vm8677 = vweird.f32 %v8656
    %vm8678 = vweird.f32 %v8672
    %vm8679 = vmor %vm8677, %vm8678
    %v8680 = vsel %vm8679, %v8672, %v8676
    %v8681 = vand.u32 2147483647, %v8656
    %vm8682 = vcmp.eq.f32.partialorder %v8681, 8.507059e+37
    %v8683 = vand.u32 %v8656, 2147483648
    %v8684 = vor.u32 1.1754944e-38, %v8683
    %v8685 = vsel %vm8682, %v8684, %v8680
    %v8686 = vmul.f32 1.0, %v8685
    %v8687 = vtanh.pop %v8605
    %v8688 = vtanh.pop %v8609
    %v8689 = vsub.f32 0.0, %v8606
    %v8690 = vsub.f32 0.0, %v8610
    %v8691 = vmul.f32 %v8689, 1.442695
    %v8692 = vpow.pop %v8691
    %v8693 = vmul.f32 %v8690, 1.442695
    %v8694 = vpow.pop %v8693
    %v8695 = vadd.f32 %v8692, 1.0
    %v8696 = vadd.f32 %v8694, 1.0
    %v8697 = vrcp.pop %v8695
    %v8698 = vmul.f32 %v8695, %v8697
    %v8699 = vsub.f32 1.0, %v8698
    %v8700 = vmul.f32 %v8697, %v8699
    %v8701 = vadd.f32 %v8697, %v8700
    %vm8702 = vweird.f32 %v8695
    %vm8703 = vweird.f32 %v8697
    %vm8704 = vmor %vm8702, %vm8703
    %v8705 = vsel %vm8704, %v8697, %v8701
    %v8706 = vand.u32 2147483647, %v8695
    %vm8707 = vcmp.eq.f32.partialorder %v8706, 8.507059e+37
    %v8708 = vand.u32 %v8695, 2147483648
    %v8709 = vor.u32 1.1754944e-38, %v8708
    %v8710 = vsel %vm8707, %v8709, %v8705
    %v8711 = vmul.f32 1.0, %v8710
    %v8712 = vrcp.pop %v8696
    %v8713 = vmul.f32 %v8696, %v8712
    %v8714 = vsub.f32 1.0, %v8713
    %v8715 = vmul.f32 %v8712, %v8714
    %v8716 = vadd.f32 %v8712, %v8715
    %vm8717 = vweird.f32 %v8696
    %vm8718 = vweird.f32 %v8712
    %vm8719 = vmor %vm8717, %vm8718
    %v8720 = vsel %vm8719, %v8712, %v8716
    %v8721 = vand.u32 2147483647, %v8696
    %vm8722 = vcmp.eq.f32.partialorder %v8721, 8.507059e+37
    %v8723 = vand.u32 %v8696, 2147483648
    %v8724 = vor.u32 1.1754944e-38, %v8723
    %v8725 = vsel %vm8722, %v8724, %v8720
    %v8726 = vmul.f32 1.0, %v8725
    %v8729 = vrot.slane %v8179, 7
    %v8730 = vrot.slane %v8180, 7
    %v8733 = vmul.f32 %v8671, %v8729
    %v8734 = vmul.f32 %v8686, %v8730
    %v8735 = vmul.f32 %v8633, %v8687
    %v8736 = vmul.f32 %v8648, %v8688
    %v8737 = vadd.f32 %v8733, %v8735
    %v8738 = vadd.f32 %v8734, %v8736
    %v8739 = vtanh.pop %v8737
    %v8740 = vtanh.pop %v8738
    %v8741 = vmul.f32 %v8711, %v8739
    %v8742 = vmul.f32 %v8726, %v8740
    %v8745 = vrot.slane %v8742, 7
    %vm8746 = vcmask 1045509
    %v8747 = vsel %vm8746, %v8745, %v8741
    %v8749 = vrot.slane %v8582, 4
    %v8750 = vrot.slane %v8747, 4
    %v8751 = vrot.slane %v8749, 4
    %8754 = vmatpush.msra.mxu0 %v6248
    %8755 = vmatpush.msra.mxu0 %v6240
    %8756 = vmatpush.msra.mxu0 %v6232
    %8757 = vmatpush.msra.mxu0 %v6224
    %8758 = vmatpush.msra.mxu0 %v6216
    %8759 = vmatpush.msra.mxu0 %v6208
    %8760 = vmatpush.msra.mxu0 %v6200
    %8761 = vmatpush.msra.mxu0 %v6192
    %8762 = vmatpush.msra.mxu0 %v6184
    %8763 = vmatpush.msra.mxu0 %v6176
    %8764 = vmatpush.msra.mxu0 %v6168
    %8765 = vmatpush.msra.mxu0 %v6160
    %8766 = vmatpush.msra.mxu0 %v6152
    %8767 = vmatpush.msra.mxu0 %v6144
    %8768 = vmatpush.msra.mxu0 %v6136
    %8769 = vmatpush.msra.mxu0 %v6128
    %8770 = vmatmul.f32.gmra.mxu0 %v8750
    %v8771 = vpop.f32.mrf.mxu0
    %v8772 = vadd.f32 0.0, %v8771
    %8773 = vdwg.mxu0
    %8774 = vmatpush.msra.mxu0 %v6376
    %8775 = vmatpush.msra.mxu0 %v6368
    %8776 = vmatpush.msra.mxu0 %v6360
    %8777 = vmatpush.msra.mxu0 %v6352
    %8778 = vmatpush.msra.mxu0 %v6344
    %8779 = vmatpush.msra.mxu0 %v6336
    %8780 = vmatpush.msra.mxu0 %v6328
    %8781 = vmatpush.msra.mxu0 %v6320
    %8782 = vmatpush.msra.mxu0 %v6312
    %8783 = vmatpush.msra.mxu0 %v6304
    %8784 = vmatpush.msra.mxu0 %v6296
    %8785 = vmatpush.msra.mxu0 %v6288
    %8786 = vmatpush.msra.mxu0 %v6280
    %8787 = vmatpush.msra.mxu0 %v6272
    %8788 = vmatpush.msra.mxu0 %v6264
    %8789 = vmatpush.msra.mxu0 %v6256
    %8790 = vmatmul.f32.gmra.mxu0 %v8751
    %v8791 = vpop.f32.mrf.mxu0
    %v8792 = vadd.f32 %v8772, %v8791
    %8793 = vdwg.mxu0
    %8794 = vmatpush.msra.mxu0 %v6249
    %8795 = vmatpush.msra.mxu0 %v6241
    %8796 = vmatpush.msra.mxu0 %v6233
    %8797 = vmatpush.msra.mxu0 %v6225
    %8798 = vmatpush.msra.mxu0 %v6217
    %8799 = vmatpush.msra.mxu0 %v6209
    %8800 = vmatpush.msra.mxu0 %v6201
    %8801 = vmatpush.msra.mxu0 %v6193
    %8802 = vmatpush.msra.mxu0 %v6185
    %8803 = vmatpush.msra.mxu0 %v6177
    %8804 = vmatpush.msra.mxu0 %v6169
    %8805 = vmatpush.msra.mxu0 %v6161
    %8806 = vmatpush.msra.mxu0 %v6153
    %8807 = vmatpush.msra.mxu0 %v6145
    %8808 = vmatpush.msra.mxu0 %v6137
    %8809 = vmatpush.msra.mxu0 %v6129
    %8810 = vmatmul.f32.gmra.mxu0 %v8750
    %v8811 = vpop.f32.mrf.mxu0
    %v8812 = vadd.f32 0.0, %v8811
    %8813 = vdwg.mxu0
    %8814 = vmatpush.msra.mxu0 %v6377
    %8815 = vmatpush.msra.mxu0 %v6369
    %8816 = vmatpush.msra.mxu0 %v6361
    %8817 = vmatpush.msra.mxu0 %v6353
    %8818 = vmatpush.msra.mxu0 %v6345
    %8819 = vmatpush.msra.mxu0 %v6337
    %8820 = vmatpush.msra.mxu0 %v6329
    %8821 = vmatpush.msra.mxu0 %v6321
    %8822 = vmatpush.msra.mxu0 %v6313
    %8823 = vmatpush.msra.mxu0 %v6305
    %8824 = vmatpush.msra.mxu0 %v6297
    %8825 = vmatpush.msra.mxu0 %v6289
    %8826 = vmatpush.msra.mxu0 %v6281
    %8827 = vmatpush.msra.mxu0 %v6273
    %8828 = vmatpush.msra.mxu0 %v6265
    %8829 = vmatpush.msra.mxu0 %v6257
    %8830 = vmatmul.f32.gmra.mxu0 %v8751
    %v8831 = vpop.f32.mrf.mxu0
    %v8832 = vadd.f32 %v8812, %v8831
    %8833 = vdwg.mxu0
    %8834 = vmatpush.msra.mxu0 %v6250
    %8835 = vmatpush.msra.mxu0 %v6242
    %8836 = vmatpush.msra.mxu0 %v6234
    %8837 = vmatpush.msra.mxu0 %v6226
    %8838 = vmatpush.msra.mxu0 %v6218
    %8839 = vmatpush.msra.mxu0 %v6210
    %8840 = vmatpush.msra.mxu0 %v6202
    %8841 = vmatpush.msra.mxu0 %v6194
    %8842 = vmatpush.msra.mxu0 %v6186
    %8843 = vmatpush.msra.mxu0 %v6178
    %8844 = vmatpush.msra.mxu0 %v6170
    %8845 = vmatpush.msra.mxu0 %v6162
    %8846 = vmatpush.msra.mxu0 %v6154
    %8847 = vmatpush.msra.mxu0 %v6146
    %8848 = vmatpush.msra.mxu0 %v6138
    %8849 = vmatpush.msra.mxu0 %v6130
    %8850 = vmatmul.f32.gmra.mxu0 %v8750
    %v8851 = vpop.f32.mrf.mxu0
    %v8852 = vadd.f32 0.0, %v8851
    %8853 = vdwg.mxu0
    %8854 = vmatpush.msra.mxu0 %v6378
    %8855 = vmatpush.msra.mxu0 %v6370
    %8856 = vmatpush.msra.mxu0 %v6362
    %8857 = vmatpush.msra.mxu0 %v6354
    %8858 = vmatpush.msra.mxu0 %v6346
    %8859 = vmatpush.msra.mxu0 %v6338
    %8860 = vmatpush.msra.mxu0 %v6330
    %8861 = vmatpush.msra.mxu0 %v6322
    %8862 = vmatpush.msra.mxu0 %v6314
    %8863 = vmatpush.msra.mxu0 %v6306
    %8864 = vmatpush.msra.mxu0 %v6298
    %8865 = vmatpush.msra.mxu0 %v6290
    %8866 = vmatpush.msra.mxu0 %v6282
    %8867 = vmatpush.msra.mxu0 %v6274
    %8868 = vmatpush.msra.mxu0 %v6266
    %8869 = vmatpush.msra.mxu0 %v6258
    %8870 = vmatmul.f32.gmra.mxu0 %v8751
    %v8871 = vpop.f32.mrf.mxu0
    %v8872 = vadd.f32 %v8852, %v8871
    %8873 = vdwg.mxu0
    %8874 = vmatpush.msra.mxu0 %v6251
    %8875 = vmatpush.msra.mxu0 %v6243
    %8876 = vmatpush.msra.mxu0 %v6235
    %8877 = vmatpush.msra.mxu0 %v6227
    %8878 = vmatpush.msra.mxu0 %v6219
    %8879 = vmatpush.msra.mxu0 %v6211
    %8880 = vmatpush.msra.mxu0 %v6203
    %8881 = vmatpush.msra.mxu0 %v6195
    %8882 = vmatpush.msra.mxu0 %v6187
    %8883 = vmatpush.msra.mxu0 %v6179
    %8884 = vmatpush.msra.mxu0 %v6171
    %8885 = vmatpush.msra.mxu0 %v6163
    %8886 = vmatpush.msra.mxu0 %v6155
    %8887 = vmatpush.msra.mxu0 %v6147
    %8888 = vmatpush.msra.mxu0 %v6139
    %8889 = vmatpush.msra.mxu0 %v6131
    %8890 = vmatmul.f32.gmra.mxu0 %v8750
    %v8891 = vpop.f32.mrf.mxu0
    %v8892 = vadd.f32 0.0, %v8891
    %8893 = vdwg.mxu0
    %8894 = vmatpush.msra.mxu0 %v6379
    %8895 = vmatpush.msra.mxu0 %v6371
    %8896 = vmatpush.msra.mxu0 %v6363
    %8897 = vmatpush.msra.mxu0 %v6355
    %8898 = vmatpush.msra.mxu0 %v6347
    %8899 = vmatpush.msra.mxu0 %v6339
    %8900 = vmatpush.msra.mxu0 %v6331
    %8901 = vmatpush.msra.mxu0 %v6323
    %8902 = vmatpush.msra.mxu0 %v6315
    %8903 = vmatpush.msra.mxu0 %v6307
    %8904 = vmatpush.msra.mxu0 %v6299
    %8905 = vmatpush.msra.mxu0 %v6291
    %8906 = vmatpush.msra.mxu0 %v6283
    %8907 = vmatpush.msra.mxu0 %v6275
    %8908 = vmatpush.msra.mxu0 %v6267
    %8909 = vmatpush.msra.mxu0 %v6259
    %8910 = vmatmul.f32.gmra.mxu0 %v8751
    %v8911 = vpop.f32.mrf.mxu0
    %v8912 = vadd.f32 %v8892, %v8911
    %8913 = vdwg.mxu0
    %8914 = vmatpush.msra.mxu0 %v6252
    %8915 = vmatpush.msra.mxu0 %v6244
    %8916 = vmatpush.msra.mxu0 %v6236
    %8917 = vmatpush.msra.mxu0 %v6228
    %8918 = vmatpush.msra.mxu0 %v6220
    %8919 = vmatpush.msra.mxu0 %v6212
    %8920 = vmatpush.msra.mxu0 %v6204
    %8921 = vmatpush.msra.mxu0 %v6196
    %8922 = vmatpush.msra.mxu0 %v6188
    %8923 = vmatpush.msra.mxu0 %v6180
    %8924 = vmatpush.msra.mxu0 %v6172
    %8925 = vmatpush.msra.mxu0 %v6164
    %8926 = vmatpush.msra.mxu0 %v6156
    %8927 = vmatpush.msra.mxu0 %v6148
    %8928 = vmatpush.msra.mxu0 %v6140
    %8929 = vmatpush.msra.mxu0 %v6132
    %8930 = vmatmul.f32.gmra.mxu0 %v8750
    %v8931 = vpop.f32.mrf.mxu0
    %v8932 = vadd.f32 0.0, %v8931
    %8933 = vdwg.mxu0
    %8934 = vmatpush.msra.mxu0 %v6380
    %8935 = vmatpush.msra.mxu0 %v6372
    %8936 = vmatpush.msra.mxu0 %v6364
    %8937 = vmatpush.msra.mxu0 %v6356
    %8938 = vmatpush.msra.mxu0 %v6348
    %8939 = vmatpush.msra.mxu0 %v6340
    %8940 = vmatpush.msra.mxu0 %v6332
    %8941 = vmatpush.msra.mxu0 %v6324
    %8942 = vmatpush.msra.mxu0 %v6316
    %8943 = vmatpush.msra.mxu0 %v6308
    %8944 = vmatpush.msra.mxu0 %v6300
    %8945 = vmatpush.msra.mxu0 %v6292
    %8946 = vmatpush.msra.mxu0 %v6284
    %8947 = vmatpush.msra.mxu0 %v6276
    %8948 = vmatpush.msra.mxu0 %v6268
    %8949 = vmatpush.msra.mxu0 %v6260
    %8950 = vmatmul.f32.gmra.mxu0 %v8751
    %v8951 = vpop.f32.mrf.mxu0
    %v8952 = vadd.f32 %v8932, %v8951
    %8953 = vdwg.mxu0
    %8954 = vmatpush.msra.mxu0 %v6253
    %8955 = vmatpush.msra.mxu0 %v6245
    %8956 = vmatpush.msra.mxu0 %v6237
    %8957 = vmatpush.msra.mxu0 %v6229
    %8958 = vmatpush.msra.mxu0 %v6221
    %8959 = vmatpush.msra.mxu0 %v6213
    %8960 = vmatpush.msra.mxu0 %v6205
    %8961 = vmatpush.msra.mxu0 %v6197
    %8962 = vmatpush.msra.mxu0 %v6189
    %8963 = vmatpush.msra.mxu0 %v6181
    %8964 = vmatpush.msra.mxu0 %v6173
    %8965 = vmatpush.msra.mxu0 %v6165
    %8966 = vmatpush.msra.mxu0 %v6157
    %8967 = vmatpush.msra.mxu0 %v6149
    %8968 = vmatpush.msra.mxu0 %v6141
    %8969 = vmatpush.msra.mxu0 %v6133
    %8970 = vmatmul.f32.gmra.mxu0 %v8750
    %v8971 = vpop.f32.mrf.mxu0
    %v8972 = vadd.f32 0.0, %v8971
    %8973 = vdwg.mxu0
    %8974 = vmatpush.msra.mxu0 %v6381
    %8975 = vmatpush.msra.mxu0 %v6373
    %8976 = vmatpush.msra.mxu0 %v6365
    %8977 = vmatpush.msra.mxu0 %v6357
    %8978 = vmatpush.msra.mxu0 %v6349
    %8979 = vmatpush.msra.mxu0 %v6341
    %8980 = vmatpush.msra.mxu0 %v6333
    %8981 = vmatpush.msra.mxu0 %v6325
    %8982 = vmatpush.msra.mxu0 %v6317
    %8983 = vmatpush.msra.mxu0 %v6309
    %8984 = vmatpush.msra.mxu0 %v6301
    %8985 = vmatpush.msra.mxu0 %v6293
    %8986 = vmatpush.msra.mxu0 %v6285
    %8987 = vmatpush.msra.mxu0 %v6277
    %8988 = vmatpush.msra.mxu0 %v6269
    %8989 = vmatpush.msra.mxu0 %v6261
    %8990 = vmatmul.f32.gmra.mxu0 %v8751
    %v8991 = vpop.f32.mrf.mxu0
    %v8992 = vadd.f32 %v8972, %v8991
    %8993 = vdwg.mxu0
    %8994 = vmatpush.msra.mxu0 %v6254
    %8995 = vmatpush.msra.mxu0 %v6246
    %8996 = vmatpush.msra.mxu0 %v6238
    %8997 = vmatpush.msra.mxu0 %v6230
    %8998 = vmatpush.msra.mxu0 %v6222
    %8999 = vmatpush.msra.mxu0 %v6214
    %9000 = vmatpush.msra.mxu0 %v6206
    %9001 = vmatpush.msra.mxu0 %v6198
    %9002 = vmatpush.msra.mxu0 %v6190
    %9003 = vmatpush.msra.mxu0 %v6182
    %9004 = vmatpush.msra.mxu0 %v6174
    %9005 = vmatpush.msra.mxu0 %v6166
    %9006 = vmatpush.msra.mxu0 %v6158
    %9007 = vmatpush.msra.mxu0 %v6150
    %9008 = vmatpush.msra.mxu0 %v6142
    %9009 = vmatpush.msra.mxu0 %v6134
    %9010 = vmatmul.f32.gmra.mxu0 %v8750
    %v9011 = vpop.f32.mrf.mxu0
    %v9012 = vadd.f32 0.0, %v9011
    %9013 = vdwg.mxu0
    %9014 = vmatpush.msra.mxu0 %v6382
    %9015 = vmatpush.msra.mxu0 %v6374
    %9016 = vmatpush.msra.mxu0 %v6366
    %9017 = vmatpush.msra.mxu0 %v6358
    %9018 = vmatpush.msra.mxu0 %v6350
    %9019 = vmatpush.msra.mxu0 %v6342
    %9020 = vmatpush.msra.mxu0 %v6334
    %9021 = vmatpush.msra.mxu0 %v6326
    %9022 = vmatpush.msra.mxu0 %v6318
    %9023 = vmatpush.msra.mxu0 %v6310
    %9024 = vmatpush.msra.mxu0 %v6302
    %9025 = vmatpush.msra.mxu0 %v6294
    %9026 = vmatpush.msra.mxu0 %v6286
    %9027 = vmatpush.msra.mxu0 %v6278
    %9028 = vmatpush.msra.mxu0 %v6270
    %9029 = vmatpush.msra.mxu0 %v6262
    %9030 = vmatmul.f32.gmra.mxu0 %v8751
    %v9031 = vpop.f32.mrf.mxu0
    %v9032 = vadd.f32 %v9012, %v9031
    %9033 = vdwg.mxu0
    %9034 = vmatpush.msra.mxu0 %v6255
    %9035 = vmatpush.msra.mxu0 %v6247
    %9036 = vmatpush.msra.mxu0 %v6239
    %9037 = vmatpush.msra.mxu0 %v6231
    %9038 = vmatpush.msra.mxu0 %v6223
    %9039 = vmatpush.msra.mxu0 %v6215
    %9040 = vmatpush.msra.mxu0 %v6207
    %9041 = vmatpush.msra.mxu0 %v6199
    %9042 = vmatpush.msra.mxu0 %v6191
    %9043 = vmatpush.msra.mxu0 %v6183
    %9044 = vmatpush.msra.mxu0 %v6175
    %9045 = vmatpush.msra.mxu0 %v6167
    %9046 = vmatpush.msra.mxu0 %v6159
    %9047 = vmatpush.msra.mxu0 %v6151
    %9048 = vmatpush.msra.mxu0 %v6143
    %9049 = vmatpush.msra.mxu0 %v6135
    %9050 = vmatmul.f32.gmra.mxu0 %v8750
    %v9051 = vpop.f32.mrf.mxu0
    %v9052 = vadd.f32 0.0, %v9051
    %9053 = vdwg.mxu0
    %9054 = vmatpush.msra.mxu0 %v6383
    %9055 = vmatpush.msra.mxu0 %v6375
    %9056 = vmatpush.msra.mxu0 %v6367
    %9057 = vmatpush.msra.mxu0 %v6359
    %9058 = vmatpush.msra.mxu0 %v6351
    %9059 = vmatpush.msra.mxu0 %v6343
    %9060 = vmatpush.msra.mxu0 %v6335
    %9061 = vmatpush.msra.mxu0 %v6327
    %9062 = vmatpush.msra.mxu0 %v6319
    %9063 = vmatpush.msra.mxu0 %v6311
    %9064 = vmatpush.msra.mxu0 %v6303
    %9065 = vmatpush.msra.mxu0 %v6295
    %9066 = vmatpush.msra.mxu0 %v6287
    %9067 = vmatpush.msra.mxu0 %v6279
    %9068 = vmatpush.msra.mxu0 %v6271
    %9069 = vmatpush.msra.mxu0 %v6263
    %9070 = vmatmul.f32.gmra.mxu0 %v8751
    %v9071 = vpop.f32.mrf.mxu0
    %v9072 = vadd.f32 %v9052, %v9071
    %9073 = vdwg.mxu0
    %v9074 = vadd.f32 %v8952, %v6838
    %v9075 = vadd.f32 %v8992, %v6839
    %v9076 = vadd.f32 %v9032, %v6840
    %v9077 = vadd.f32 %v9072, %v6841
    %v9078 = vsub.f32 0.0, %v9074
    %v9079 = vmul.f32 %v9078, 1.442695
    %v9080 = vpow.pop %v9079
    %v9081 = vadd.f32 %v9080, 1.0
    %v9082 = vrcp.pop %v9081
    %v9083 = vmul.f32 %v9081, %v9082
    %v9084 = vsub.f32 1.0, %v9083
    %v9085 = vmul.f32 %v9082, %v9084
    %v9086 = vadd.f32 %v9082, %v9085
    %vm9087 = vweird.f32 %v9081
    %vm9088 = vweird.f32 %v9082
    %vm9089 = vmor %vm9087, %vm9088
    %v9090 = vsel %vm9089, %v9082, %v9086
    %v9091 = vand.u32 2147483647, %v9081
    %vm9092 = vcmp.eq.f32.partialorder %v9091, 8.507059e+37
    %v9093 = vand.u32 %v9081, 2147483648
    %v9094 = vor.u32 1.1754944e-38, %v9093
    %v9095 = vsel %vm9092, %v9094, %v9090
    %v9096 = vmul.f32 1.0, %v9095
    %v9097 = vsub.f32 0.0, %v9075
    %v9098 = vmul.f32 %v9097, 1.442695
    %v9099 = vpow.pop %v9098
    %v9100 = vadd.f32 %v9099, 1.0
    %v9101 = vrcp.pop %v9100
    %v9102 = vmul.f32 %v9100, %v9101
    %v9103 = vsub.f32 1.0, %v9102
    %v9104 = vmul.f32 %v9101, %v9103
    %v9105 = vadd.f32 %v9101, %v9104
    %vm9106 = vweird.f32 %v9100
    %vm9107 = vweird.f32 %v9101
    %vm9108 = vmor %vm9106, %vm9107
    %v9109 = vsel %vm9108, %v9101, %v9105
    %v9110 = vand.u32 2147483647, %v9100
    %vm9111 = vcmp.eq.f32.partialorder %v9110, 8.507059e+37
    %v9112 = vand.u32 %v9100, 2147483648
    %v9113 = vor.u32 1.1754944e-38, %v9112
    %v9114 = vsel %vm9111, %v9113, %v9109
    %v9115 = vmul.f32 1.0, %v9114
    %v9116 = vtanh.pop %v9076
    %v9117 = vsub.f32 0.0, %v9077
    %v9118 = vmul.f32 %v9117, 1.442695
    %v9119 = vpow.pop %v9118
    %v9120 = vadd.f32 %v9119, 1.0
    %v9121 = vrcp.pop %v9120
    %v9122 = vmul.f32 %v9120, %v9121
    %v9123 = vsub.f32 1.0, %v9122
    %v9124 = vmul.f32 %v9121, %v9123
    %v9125 = vadd.f32 %v9121, %v9124
    %vm9126 = vweird.f32 %v9120
    %vm9127 = vweird.f32 %v9121
    %vm9128 = vmor %vm9126, %vm9127
    %v9129 = vsel %vm9128, %v9121, %v9125
    %v9130 = vand.u32 2147483647, %v9120
    %vm9131 = vcmp.eq.f32.partialorder %v9130, 8.507059e+37
    %v9132 = vand.u32 %v9120, 2147483648
    %v9133 = vor.u32 1.1754944e-38, %v9132
    %v9134 = vsel %vm9131, %v9133, %v9129
    %v9135 = vmul.f32 1.0, %v9134
    %v9136 = vmul.f32 %v9115, %v8580
    %v9137 = vmul.f32 %v9096, %v9116
    %v9138 = vadd.f32 %v9136, %v9137
    %v9139 = vtanh.pop %v9138
    %v9140 = vmul.f32 %v9135, %v9139
    %v9145 = vrot.slane %v8792, 3
    %v9146 = vrot.slane %v8832, 3
    %v9147 = vrot.slane %v8872, 3
    %v9148 = vrot.slane %v8912, 3
    %v9149 = vrot.slane %v8792, 4
    %v9150 = vrot.slane %v8832, 4
    %v9151 = vrot.slane %v8872, 4
    %v9152 = vrot.slane %v8912, 4
    %v9161 = vadd.f32 %v6019, %v9145
    %v9162 = vadd.f32 %v6053, %v9146
    %v9163 = vadd.f32 %v6087, %v9147
    %v9164 = vadd.f32 %v6121, %v9148
    %v9165 = vadd.f32 %v6023, %v9149
    %v9166 = vadd.f32 %v6057, %v9150
    %v9167 = vadd.f32 %v6091, %v9151
    %v9168 = vadd.f32 %v6125, %v9152
    %v9169 = vsub.f32 0.0, %v9161
    %v9170 = vsub.f32 0.0, %v9165
    %v9171 = vmul.f32 %v9169, 1.442695
    %v9172 = vpow.pop %v9171
    %v9173 = vmul.f32 %v9170, 1.442695
    %v9174 = vpow.pop %v9173
    %v9175 = vadd.f32 %v9172, 1.0
    %v9176 = vadd.f32 %v9174, 1.0
    %v9177 = vrcp.pop %v9175
    %v9178 = vmul.f32 %v9175, %v9177
    %v9179 = vsub.f32 1.0, %v9178
    %v9180 = vmul.f32 %v9177, %v9179
    %v9181 = vadd.f32 %v9177, %v9180
    %vm9182 = vweird.f32 %v9175
    %vm9183 = vweird.f32 %v9177
    %vm9184 = vmor %vm9182, %vm9183
    %v9185 = vsel %vm9184, %v9177, %v9181
    %v9186 = vand.u32 2147483647, %v9175
    %vm9187 = vcmp.eq.f32.partialorder %v9186, 8.507059e+37
    %v9188 = vand.u32 %v9175, 2147483648
    %v9189 = vor.u32 1.1754944e-38, %v9188
    %v9190 = vsel %vm9187, %v9189, %v9185
    %v9191 = vmul.f32 1.0, %v9190
    %v9192 = vrcp.pop %v9176
    %v9193 = vmul.f32 %v9176, %v9192
    %v9194 = vsub.f32 1.0, %v9193
    %v9195 = vmul.f32 %v9192, %v9194
    %v9196 = vadd.f32 %v9192, %v9195
    %vm9197 = vweird.f32 %v9176
    %vm9198 = vweird.f32 %v9192
    %vm9199 = vmor %vm9197, %vm9198
    %v9200 = vsel %vm9199, %v9192, %v9196
    %v9201 = vand.u32 2147483647, %v9176
    %vm9202 = vcmp.eq.f32.partialorder %v9201, 8.507059e+37
    %v9203 = vand.u32 %v9176, 2147483648
    %v9204 = vor.u32 1.1754944e-38, %v9203
    %v9205 = vsel %vm9202, %v9204, %v9200
    %v9206 = vmul.f32 1.0, %v9205
    %v9207 = vsub.f32 0.0, %v9162
    %v9208 = vsub.f32 0.0, %v9166
    %v9209 = vmul.f32 %v9207, 1.442695
    %v9210 = vpow.pop %v9209
    %v9211 = vmul.f32 %v9208, 1.442695
    %v9212 = vpow.pop %v9211
    %v9213 = vadd.f32 %v9210, 1.0
    %v9214 = vadd.f32 %v9212, 1.0
    %v9215 = vrcp.pop %v9213
    %v9216 = vmul.f32 %v9213, %v9215
    %v9217 = vsub.f32 1.0, %v9216
    %v9218 = vmul.f32 %v9215, %v9217
    %v9219 = vadd.f32 %v9215, %v9218
    %vm9220 = vweird.f32 %v9213
    %vm9221 = vweird.f32 %v9215
    %vm9222 = vmor %vm9220, %vm9221
    %v9223 = vsel %vm9222, %v9215, %v9219
    %v9224 = vand.u32 2147483647, %v9213
    %vm9225 = vcmp.eq.f32.partialorder %v9224, 8.507059e+37
    %v9226 = vand.u32 %v9213, 2147483648
    %v9227 = vor.u32 1.1754944e-38, %v9226
    %v9228 = vsel %vm9225, %v9227, %v9223
    %v9229 = vmul.f32 1.0, %v9228
    %v9230 = vrcp.pop %v9214
    %v9231 = vmul.f32 %v9214, %v9230
    %v9232 = vsub.f32 1.0, %v9231
    %v9233 = vmul.f32 %v9230, %v9232
    %v9234 = vadd.f32 %v9230, %v9233
    %vm9235 = vweird.f32 %v9214
    %vm9236 = vweird.f32 %v9230
    %vm9237 = vmor %vm9235, %vm9236
    %v9238 = vsel %vm9237, %v9230, %v9234
    %v9239 = vand.u32 2147483647, %v9214
    %vm9240 = vcmp.eq.f32.partialorder %v9239, 8.507059e+37
    %v9241 = vand.u32 %v9214, 2147483648
    %v9242 = vor.u32 1.1754944e-38, %v9241
    %v9243 = vsel %vm9240, %v9242, %v9238
    %v9244 = vmul.f32 1.0, %v9243
    %v9245 = vtanh.pop %v9163
    %v9246 = vtanh.pop %v9167
    %v9247 = vsub.f32 0.0, %v9164
    %v9248 = vsub.f32 0.0, %v9168
    %v9249 = vmul.f32 %v9247, 1.442695
    %v9250 = vpow.pop %v9249
    %v9251 = vmul.f32 %v9248, 1.442695
    %v9252 = vpow.pop %v9251
    %v9253 = vadd.f32 %v9250, 1.0
    %v9254 = vadd.f32 %v9252, 1.0
    %v9255 = vrcp.pop %v9253
    %v9256 = vmul.f32 %v9253, %v9255
    %v9257 = vsub.f32 1.0, %v9256
    %v9258 = vmul.f32 %v9255, %v9257
    %v9259 = vadd.f32 %v9255, %v9258
    %vm9260 = vweird.f32 %v9253
    %vm9261 = vweird.f32 %v9255
    %vm9262 = vmor %vm9260, %vm9261
    %v9263 = vsel %vm9262, %v9255, %v9259
    %v9264 = vand.u32 2147483647, %v9253
    %vm9265 = vcmp.eq.f32.partialorder %v9264, 8.507059e+37
    %v9266 = vand.u32 %v9253, 2147483648
    %v9267 = vor.u32 1.1754944e-38, %v9266
    %v9268 = vsel %vm9265, %v9267, %v9263
    %v9269 = vmul.f32 1.0, %v9268
    %v9270 = vrcp.pop %v9254
    %v9271 = vmul.f32 %v9254, %v9270
    %v9272 = vsub.f32 1.0, %v9271
    %v9273 = vmul.f32 %v9270, %v9272
    %v9274 = vadd.f32 %v9270, %v9273
    %vm9275 = vweird.f32 %v9254
    %vm9276 = vweird.f32 %v9270
    %vm9277 = vmor %vm9275, %vm9276
    %v9278 = vsel %vm9277, %v9270, %v9274
    %v9279 = vand.u32 2147483647, %v9254
    %vm9280 = vcmp.eq.f32.partialorder %v9279, 8.507059e+37
    %v9281 = vand.u32 %v9254, 2147483648
    %v9282 = vor.u32 1.1754944e-38, %v9281
    %v9283 = vsel %vm9280, %v9282, %v9278
    %v9284 = vmul.f32 1.0, %v9283
    %v9287 = vrot.slane %v8737, 7
    %v9288 = vrot.slane %v8738, 7
    %v9291 = vmul.f32 %v9229, %v9287
    %v9292 = vmul.f32 %v9244, %v9288
    %v9293 = vmul.f32 %v9191, %v9245
    %v9294 = vmul.f32 %v9206, %v9246
    %v9295 = vadd.f32 %v9291, %v9293
    %v9296 = vadd.f32 %v9292, %v9294
    %v9297 = vtanh.pop %v9295
    %v9298 = vtanh.pop %v9296
    %v9299 = vmul.f32 %v9269, %v9297
    %v9300 = vmul.f32 %v9284, %v9298
    %v9303 = vrot.slane %v9300, 7
    %vm9304 = vcmask 1046534
    %v9305 = vsel %vm9304, %v9303, %v9299
    %v9307 = vrot.slane %v9140, 3
    %v9308 = vrot.slane %v9305, 5
    %v9309 = vrot.slane %v9307, 5
    %9312 = vmatpush.msra.mxu0 %v6248
    %9313 = vmatpush.msra.mxu0 %v6240
    %9314 = vmatpush.msra.mxu0 %v6232
    %9315 = vmatpush.msra.mxu0 %v6224
    %9316 = vmatpush.msra.mxu0 %v6216
    %9317 = vmatpush.msra.mxu0 %v6208
    %9318 = vmatpush.msra.mxu0 %v6200
    %9319 = vmatpush.msra.mxu0 %v6192
    %9320 = vmatpush.msra.mxu0 %v6184
    %9321 = vmatpush.msra.mxu0 %v6176
    %9322 = vmatpush.msra.mxu0 %v6168
    %9323 = vmatpush.msra.mxu0 %v6160
    %9324 = vmatpush.msra.mxu0 %v6152
    %9325 = vmatpush.msra.mxu0 %v6144
    %9326 = vmatpush.msra.mxu0 %v6136
    %9327 = vmatpush.msra.mxu0 %v6128
    %9328 = vmatmul.f32.gmra.mxu0 %v9308
    %v9329 = vpop.f32.mrf.mxu0
    %v9330 = vadd.f32 0.0, %v9329
    %9331 = vdwg.mxu0
    %9332 = vmatpush.msra.mxu0 %v6376
    %9333 = vmatpush.msra.mxu0 %v6368
    %9334 = vmatpush.msra.mxu0 %v6360
    %9335 = vmatpush.msra.mxu0 %v6352
    %9336 = vmatpush.msra.mxu0 %v6344
    %9337 = vmatpush.msra.mxu0 %v6336
    %9338 = vmatpush.msra.mxu0 %v6328
    %9339 = vmatpush.msra.mxu0 %v6320
    %9340 = vmatpush.msra.mxu0 %v6312
    %9341 = vmatpush.msra.mxu0 %v6304
    %9342 = vmatpush.msra.mxu0 %v6296
    %9343 = vmatpush.msra.mxu0 %v6288
    %9344 = vmatpush.msra.mxu0 %v6280
    %9345 = vmatpush.msra.mxu0 %v6272
    %9346 = vmatpush.msra.mxu0 %v6264
    %9347 = vmatpush.msra.mxu0 %v6256
    %9348 = vmatmul.f32.gmra.mxu0 %v9309
    %v9349 = vpop.f32.mrf.mxu0
    %v9350 = vadd.f32 %v9330, %v9349
    %9351 = vdwg.mxu0
    %9352 = vmatpush.msra.mxu0 %v6249
    %9353 = vmatpush.msra.mxu0 %v6241
    %9354 = vmatpush.msra.mxu0 %v6233
    %9355 = vmatpush.msra.mxu0 %v6225
    %9356 = vmatpush.msra.mxu0 %v6217
    %9357 = vmatpush.msra.mxu0 %v6209
    %9358 = vmatpush.msra.mxu0 %v6201
    %9359 = vmatpush.msra.mxu0 %v6193
    %9360 = vmatpush.msra.mxu0 %v6185
    %9361 = vmatpush.msra.mxu0 %v6177
    %9362 = vmatpush.msra.mxu0 %v6169
    %9363 = vmatpush.msra.mxu0 %v6161
    %9364 = vmatpush.msra.mxu0 %v6153
    %9365 = vmatpush.msra.mxu0 %v6145
    %9366 = vmatpush.msra.mxu0 %v6137
    %9367 = vmatpush.msra.mxu0 %v6129
    %9368 = vmatmul.f32.gmra.mxu0 %v9308
    %v9369 = vpop.f32.mrf.mxu0
    %v9370 = vadd.f32 0.0, %v9369
    %9371 = vdwg.mxu0
    %9372 = vmatpush.msra.mxu0 %v6377
    %9373 = vmatpush.msra.mxu0 %v6369
    %9374 = vmatpush.msra.mxu0 %v6361
    %9375 = vmatpush.msra.mxu0 %v6353
    %9376 = vmatpush.msra.mxu0 %v6345
    %9377 = vmatpush.msra.mxu0 %v6337
    %9378 = vmatpush.msra.mxu0 %v6329
    %9379 = vmatpush.msra.mxu0 %v6321
    %9380 = vmatpush.msra.mxu0 %v6313
    %9381 = vmatpush.msra.mxu0 %v6305
    %9382 = vmatpush.msra.mxu0 %v6297
    %9383 = vmatpush.msra.mxu0 %v6289
    %9384 = vmatpush.msra.mxu0 %v6281
    %9385 = vmatpush.msra.mxu0 %v6273
    %9386 = vmatpush.msra.mxu0 %v6265
    %9387 = vmatpush.msra.mxu0 %v6257
    %9388 = vmatmul.f32.gmra.mxu0 %v9309
    %v9389 = vpop.f32.mrf.mxu0
    %v9390 = vadd.f32 %v9370, %v9389
    %9391 = vdwg.mxu0
    %9392 = vmatpush.msra.mxu0 %v6250
    %9393 = vmatpush.msra.mxu0 %v6242
    %9394 = vmatpush.msra.mxu0 %v6234
    %9395 = vmatpush.msra.mxu0 %v6226
    %9396 = vmatpush.msra.mxu0 %v6218
    %9397 = vmatpush.msra.mxu0 %v6210
    %9398 = vmatpush.msra.mxu0 %v6202
    %9399 = vmatpush.msra.mxu0 %v6194
    %9400 = vmatpush.msra.mxu0 %v6186
    %9401 = vmatpush.msra.mxu0 %v6178
    %9402 = vmatpush.msra.mxu0 %v6170
    %9403 = vmatpush.msra.mxu0 %v6162
    %9404 = vmatpush.msra.mxu0 %v6154
    %9405 = vmatpush.msra.mxu0 %v6146
    %9406 = vmatpush.msra.mxu0 %v6138
    %9407 = vmatpush.msra.mxu0 %v6130
    %9408 = vmatmul.f32.gmra.mxu0 %v9308
    %v9409 = vpop.f32.mrf.mxu0
    %v9410 = vadd.f32 0.0, %v9409
    %9411 = vdwg.mxu0
    %9412 = vmatpush.msra.mxu0 %v6378
    %9413 = vmatpush.msra.mxu0 %v6370
    %9414 = vmatpush.msra.mxu0 %v6362
    %9415 = vmatpush.msra.mxu0 %v6354
    %9416 = vmatpush.msra.mxu0 %v6346
    %9417 = vmatpush.msra.mxu0 %v6338
    %9418 = vmatpush.msra.mxu0 %v6330
    %9419 = vmatpush.msra.mxu0 %v6322
    %9420 = vmatpush.msra.mxu0 %v6314
    %9421 = vmatpush.msra.mxu0 %v6306
    %9422 = vmatpush.msra.mxu0 %v6298
    %9423 = vmatpush.msra.mxu0 %v6290
    %9424 = vmatpush.msra.mxu0 %v6282
    %9425 = vmatpush.msra.mxu0 %v6274
    %9426 = vmatpush.msra.mxu0 %v6266
    %9427 = vmatpush.msra.mxu0 %v6258
    %9428 = vmatmul.f32.gmra.mxu0 %v9309
    %v9429 = vpop.f32.mrf.mxu0
    %v9430 = vadd.f32 %v9410, %v9429
    %9431 = vdwg.mxu0
    %9432 = vmatpush.msra.mxu0 %v6251
    %9433 = vmatpush.msra.mxu0 %v6243
    %9434 = vmatpush.msra.mxu0 %v6235
    %9435 = vmatpush.msra.mxu0 %v6227
    %9436 = vmatpush.msra.mxu0 %v6219
    %9437 = vmatpush.msra.mxu0 %v6211
    %9438 = vmatpush.msra.mxu0 %v6203
    %9439 = vmatpush.msra.mxu0 %v6195
    %9440 = vmatpush.msra.mxu0 %v6187
    %9441 = vmatpush.msra.mxu0 %v6179
    %9442 = vmatpush.msra.mxu0 %v6171
    %9443 = vmatpush.msra.mxu0 %v6163
    %9444 = vmatpush.msra.mxu0 %v6155
    %9445 = vmatpush.msra.mxu0 %v6147
    %9446 = vmatpush.msra.mxu0 %v6139
    %9447 = vmatpush.msra.mxu0 %v6131
    %9448 = vmatmul.f32.gmra.mxu0 %v9308
    %v9449 = vpop.f32.mrf.mxu0
    %v9450 = vadd.f32 0.0, %v9449
    %9451 = vdwg.mxu0
    %9452 = vmatpush.msra.mxu0 %v6379
    %9453 = vmatpush.msra.mxu0 %v6371
    %9454 = vmatpush.msra.mxu0 %v6363
    %9455 = vmatpush.msra.mxu0 %v6355
    %9456 = vmatpush.msra.mxu0 %v6347
    %9457 = vmatpush.msra.mxu0 %v6339
    %9458 = vmatpush.msra.mxu0 %v6331
    %9459 = vmatpush.msra.mxu0 %v6323
    %9460 = vmatpush.msra.mxu0 %v6315
    %9461 = vmatpush.msra.mxu0 %v6307
    %9462 = vmatpush.msra.mxu0 %v6299
    %9463 = vmatpush.msra.mxu0 %v6291
    %9464 = vmatpush.msra.mxu0 %v6283
    %9465 = vmatpush.msra.mxu0 %v6275
    %9466 = vmatpush.msra.mxu0 %v6267
    %9467 = vmatpush.msra.mxu0 %v6259
    %9468 = vmatmul.f32.gmra.mxu0 %v9309
    %v9469 = vpop.f32.mrf.mxu0
    %v9470 = vadd.f32 %v9450, %v9469
    %9471 = vdwg.mxu0
    %9472 = vmatpush.msra.mxu0 %v6252
    %9473 = vmatpush.msra.mxu0 %v6244
    %9474 = vmatpush.msra.mxu0 %v6236
    %9475 = vmatpush.msra.mxu0 %v6228
    %9476 = vmatpush.msra.mxu0 %v6220
    %9477 = vmatpush.msra.mxu0 %v6212
    %9478 = vmatpush.msra.mxu0 %v6204
    %9479 = vmatpush.msra.mxu0 %v6196
    %9480 = vmatpush.msra.mxu0 %v6188
    %9481 = vmatpush.msra.mxu0 %v6180
    %9482 = vmatpush.msra.mxu0 %v6172
    %9483 = vmatpush.msra.mxu0 %v6164
    %9484 = vmatpush.msra.mxu0 %v6156
    %9485 = vmatpush.msra.mxu0 %v6148
    %9486 = vmatpush.msra.mxu0 %v6140
    %9487 = vmatpush.msra.mxu0 %v6132
    %9488 = vmatmul.f32.gmra.mxu0 %v9308
    %v9489 = vpop.f32.mrf.mxu0
    %v9490 = vadd.f32 0.0, %v9489
    %9491 = vdwg.mxu0
    %9492 = vmatpush.msra.mxu0 %v6380
    %9493 = vmatpush.msra.mxu0 %v6372
    %9494 = vmatpush.msra.mxu0 %v6364
    %9495 = vmatpush.msra.mxu0 %v6356
    %9496 = vmatpush.msra.mxu0 %v6348
    %9497 = vmatpush.msra.mxu0 %v6340
    %9498 = vmatpush.msra.mxu0 %v6332
    %9499 = vmatpush.msra.mxu0 %v6324
    %9500 = vmatpush.msra.mxu0 %v6316
    %9501 = vmatpush.msra.mxu0 %v6308
    %9502 = vmatpush.msra.mxu0 %v6300
    %9503 = vmatpush.msra.mxu0 %v6292
    %9504 = vmatpush.msra.mxu0 %v6284
    %9505 = vmatpush.msra.mxu0 %v6276
    %9506 = vmatpush.msra.mxu0 %v6268
    %9507 = vmatpush.msra.mxu0 %v6260
    %9508 = vmatmul.f32.gmra.mxu0 %v9309
    %v9509 = vpop.f32.mrf.mxu0
    %v9510 = vadd.f32 %v9490, %v9509
    %9511 = vdwg.mxu0
    %9512 = vmatpush.msra.mxu0 %v6253
    %9513 = vmatpush.msra.mxu0 %v6245
    %9514 = vmatpush.msra.mxu0 %v6237
    %9515 = vmatpush.msra.mxu0 %v6229
    %9516 = vmatpush.msra.mxu0 %v6221
    %9517 = vmatpush.msra.mxu0 %v6213
    %9518 = vmatpush.msra.mxu0 %v6205
    %9519 = vmatpush.msra.mxu0 %v6197
    %9520 = vmatpush.msra.mxu0 %v6189
    %9521 = vmatpush.msra.mxu0 %v6181
    %9522 = vmatpush.msra.mxu0 %v6173
    %9523 = vmatpush.msra.mxu0 %v6165
    %9524 = vmatpush.msra.mxu0 %v6157
    %9525 = vmatpush.msra.mxu0 %v6149
    %9526 = vmatpush.msra.mxu0 %v6141
    %9527 = vmatpush.msra.mxu0 %v6133
    %9528 = vmatmul.f32.gmra.mxu0 %v9308
    %v9529 = vpop.f32.mrf.mxu0
    %v9530 = vadd.f32 0.0, %v9529
    %9531 = vdwg.mxu0
    %9532 = vmatpush.msra.mxu0 %v6381
    %9533 = vmatpush.msra.mxu0 %v6373
    %9534 = vmatpush.msra.mxu0 %v6365
    %9535 = vmatpush.msra.mxu0 %v6357
    %9536 = vmatpush.msra.mxu0 %v6349
    %9537 = vmatpush.msra.mxu0 %v6341
    %9538 = vmatpush.msra.mxu0 %v6333
    %9539 = vmatpush.msra.mxu0 %v6325
    %9540 = vmatpush.msra.mxu0 %v6317
    %9541 = vmatpush.msra.mxu0 %v6309
    %9542 = vmatpush.msra.mxu0 %v6301
    %9543 = vmatpush.msra.mxu0 %v6293
    %9544 = vmatpush.msra.mxu0 %v6285
    %9545 = vmatpush.msra.mxu0 %v6277
    %9546 = vmatpush.msra.mxu0 %v6269
    %9547 = vmatpush.msra.mxu0 %v6261
    %9548 = vmatmul.f32.gmra.mxu0 %v9309
    %v9549 = vpop.f32.mrf.mxu0
    %v9550 = vadd.f32 %v9530, %v9549
    %9551 = vdwg.mxu0
    %9552 = vmatpush.msra.mxu0 %v6254
    %9553 = vmatpush.msra.mxu0 %v6246
    %9554 = vmatpush.msra.mxu0 %v6238
    %9555 = vmatpush.msra.mxu0 %v6230
    %9556 = vmatpush.msra.mxu0 %v6222
    %9557 = vmatpush.msra.mxu0 %v6214
    %9558 = vmatpush.msra.mxu0 %v6206
    %9559 = vmatpush.msra.mxu0 %v6198
    %9560 = vmatpush.msra.mxu0 %v6190
    %9561 = vmatpush.msra.mxu0 %v6182
    %9562 = vmatpush.msra.mxu0 %v6174
    %9563 = vmatpush.msra.mxu0 %v6166
    %9564 = vmatpush.msra.mxu0 %v6158
    %9565 = vmatpush.msra.mxu0 %v6150
    %9566 = vmatpush.msra.mxu0 %v6142
    %9567 = vmatpush.msra.mxu0 %v6134
    %9568 = vmatmul.f32.gmra.mxu0 %v9308
    %v9569 = vpop.f32.mrf.mxu0
    %v9570 = vadd.f32 0.0, %v9569
    %9571 = vdwg.mxu0
    %9572 = vmatpush.msra.mxu0 %v6382
    %9573 = vmatpush.msra.mxu0 %v6374
    %9574 = vmatpush.msra.mxu0 %v6366
    %9575 = vmatpush.msra.mxu0 %v6358
    %9576 = vmatpush.msra.mxu0 %v6350
    %9577 = vmatpush.msra.mxu0 %v6342
    %9578 = vmatpush.msra.mxu0 %v6334
    %9579 = vmatpush.msra.mxu0 %v6326
    %9580 = vmatpush.msra.mxu0 %v6318
    %9581 = vmatpush.msra.mxu0 %v6310
    %9582 = vmatpush.msra.mxu0 %v6302
    %9583 = vmatpush.msra.mxu0 %v6294
    %9584 = vmatpush.msra.mxu0 %v6286
    %9585 = vmatpush.msra.mxu0 %v6278
    %9586 = vmatpush.msra.mxu0 %v6270
    %9587 = vmatpush.msra.mxu0 %v6262
    %9588 = vmatmul.f32.gmra.mxu0 %v9309
    %v9589 = vpop.f32.mrf.mxu0
    %v9590 = vadd.f32 %v9570, %v9589
    %9591 = vdwg.mxu0
    %9592 = vmatpush.msra.mxu0 %v6255
    %9593 = vmatpush.msra.mxu0 %v6247
    %9594 = vmatpush.msra.mxu0 %v6239
    %9595 = vmatpush.msra.mxu0 %v6231
    %9596 = vmatpush.msra.mxu0 %v6223
    %9597 = vmatpush.msra.mxu0 %v6215
    %9598 = vmatpush.msra.mxu0 %v6207
    %9599 = vmatpush.msra.mxu0 %v6199
    %9600 = vmatpush.msra.mxu0 %v6191
    %9601 = vmatpush.msra.mxu0 %v6183
    %9602 = vmatpush.msra.mxu0 %v6175
    %9603 = vmatpush.msra.mxu0 %v6167
    %9604 = vmatpush.msra.mxu0 %v6159
    %9605 = vmatpush.msra.mxu0 %v6151
    %9606 = vmatpush.msra.mxu0 %v6143
    %9607 = vmatpush.msra.mxu0 %v6135
    %9608 = vmatmul.f32.gmra.mxu0 %v9308
    %v9609 = vpop.f32.mrf.mxu0
    %v9610 = vadd.f32 0.0, %v9609
    %9611 = vdwg.mxu0
    %9612 = vmatpush.msra.mxu0 %v6383
    %9613 = vmatpush.msra.mxu0 %v6375
    %9614 = vmatpush.msra.mxu0 %v6367
    %9615 = vmatpush.msra.mxu0 %v6359
    %9616 = vmatpush.msra.mxu0 %v6351
    %9617 = vmatpush.msra.mxu0 %v6343
    %9618 = vmatpush.msra.mxu0 %v6335
    %9619 = vmatpush.msra.mxu0 %v6327
    %9620 = vmatpush.msra.mxu0 %v6319
    %9621 = vmatpush.msra.mxu0 %v6311
    %9622 = vmatpush.msra.mxu0 %v6303
    %9623 = vmatpush.msra.mxu0 %v6295
    %9624 = vmatpush.msra.mxu0 %v6287
    %9625 = vmatpush.msra.mxu0 %v6279
    %9626 = vmatpush.msra.mxu0 %v6271
    %9627 = vmatpush.msra.mxu0 %v6263
    %9628 = vmatmul.f32.gmra.mxu0 %v9309
    %v9629 = vpop.f32.mrf.mxu0
    %v9630 = vadd.f32 %v9610, %v9629
    %9631 = vdwg.mxu0
    %v9632 = vadd.f32 %v9510, %v6838
    %v9633 = vadd.f32 %v9550, %v6839
    %v9634 = vadd.f32 %v9590, %v6840
    %v9635 = vadd.f32 %v9630, %v6841
    %v9636 = vsub.f32 0.0, %v9632
    %v9637 = vmul.f32 %v9636, 1.442695
    %v9638 = vpow.pop %v9637
    %v9639 = vadd.f32 %v9638, 1.0
    %v9640 = vrcp.pop %v9639
    %v9641 = vmul.f32 %v9639, %v9640
    %v9642 = vsub.f32 1.0, %v9641
    %v9643 = vmul.f32 %v9640, %v9642
    %v9644 = vadd.f32 %v9640, %v9643
    %vm9645 = vweird.f32 %v9639
    %vm9646 = vweird.f32 %v9640
    %vm9647 = vmor %vm9645, %vm9646
    %v9648 = vsel %vm9647, %v9640, %v9644
    %v9649 = vand.u32 2147483647, %v9639
    %vm9650 = vcmp.eq.f32.partialorder %v9649, 8.507059e+37
    %v9651 = vand.u32 %v9639, 2147483648
    %v9652 = vor.u32 1.1754944e-38, %v9651
    %v9653 = vsel %vm9650, %v9652, %v9648
    %v9654 = vmul.f32 1.0, %v9653
    %v9655 = vsub.f32 0.0, %v9633
    %v9656 = vmul.f32 %v9655, 1.442695
    %v9657 = vpow.pop %v9656
    %v9658 = vadd.f32 %v9657, 1.0
    %v9659 = vrcp.pop %v9658
    %v9660 = vmul.f32 %v9658, %v9659
    %v9661 = vsub.f32 1.0, %v9660
    %v9662 = vmul.f32 %v9659, %v9661
    %v9663 = vadd.f32 %v9659, %v9662
    %vm9664 = vweird.f32 %v9658
    %vm9665 = vweird.f32 %v9659
    %vm9666 = vmor %vm9664, %vm9665
    %v9667 = vsel %vm9666, %v9659, %v9663
    %v9668 = vand.u32 2147483647, %v9658
    %vm9669 = vcmp.eq.f32.partialorder %v9668, 8.507059e+37
    %v9670 = vand.u32 %v9658, 2147483648
    %v9671 = vor.u32 1.1754944e-38, %v9670
    %v9672 = vsel %vm9669, %v9671, %v9667
    %v9673 = vmul.f32 1.0, %v9672
    %v9674 = vtanh.pop %v9634
    %v9675 = vsub.f32 0.0, %v9635
    %v9676 = vmul.f32 %v9675, 1.442695
    %v9677 = vpow.pop %v9676
    %v9678 = vadd.f32 %v9677, 1.0
    %v9679 = vrcp.pop %v9678
    %v9680 = vmul.f32 %v9678, %v9679
    %v9681 = vsub.f32 1.0, %v9680
    %v9682 = vmul.f32 %v9679, %v9681
    %v9683 = vadd.f32 %v9679, %v9682
    %vm9684 = vweird.f32 %v9678
    %vm9685 = vweird.f32 %v9679
    %vm9686 = vmor %vm9684, %vm9685
    %v9687 = vsel %vm9686, %v9679, %v9683
    %v9688 = vand.u32 2147483647, %v9678
    %vm9689 = vcmp.eq.f32.partialorder %v9688, 8.507059e+37
    %v9690 = vand.u32 %v9678, 2147483648
    %v9691 = vor.u32 1.1754944e-38, %v9690
    %v9692 = vsel %vm9689, %v9691, %v9687
    %v9693 = vmul.f32 1.0, %v9692
    %v9694 = vmul.f32 %v9673, %v9138
    %v9695 = vmul.f32 %v9654, %v9674
    %v9696 = vadd.f32 %v9694, %v9695
    %v9697 = vtanh.pop %v9696
    %v9698 = vmul.f32 %v9693, %v9697
    %v9703 = vrot.slane %v9350, 2
    %v9704 = vrot.slane %v9390, 2
    %v9705 = vrot.slane %v9430, 2
    %v9706 = vrot.slane %v9470, 2
    %v9707 = vrot.slane %v9350, 3
    %v9708 = vrot.slane %v9390, 3
    %v9709 = vrot.slane %v9430, 3
    %v9710 = vrot.slane %v9470, 3
    %v9719 = vadd.f32 %v6019, %v9703
    %v9720 = vadd.f32 %v6053, %v9704
    %v9721 = vadd.f32 %v6087, %v9705
    %v9722 = vadd.f32 %v6121, %v9706
    %v9723 = vadd.f32 %v6023, %v9707
    %v9724 = vadd.f32 %v6057, %v9708
    %v9725 = vadd.f32 %v6091, %v9709
    %v9726 = vadd.f32 %v6125, %v9710
    %v9727 = vsub.f32 0.0, %v9719
    %v9728 = vsub.f32 0.0, %v9723
    %v9729 = vmul.f32 %v9727, 1.442695
    %v9730 = vpow.pop %v9729
    %v9731 = vmul.f32 %v9728, 1.442695
    %v9732 = vpow.pop %v9731
    %v9733 = vadd.f32 %v9730, 1.0
    %v9734 = vadd.f32 %v9732, 1.0
    %v9735 = vrcp.pop %v9733
    %v9736 = vmul.f32 %v9733, %v9735
    %v9737 = vsub.f32 1.0, %v9736
    %v9738 = vmul.f32 %v9735, %v9737
    %v9739 = vadd.f32 %v9735, %v9738
    %vm9740 = vweird.f32 %v9733
    %vm9741 = vweird.f32 %v9735
    %vm9742 = vmor %vm9740, %vm9741
    %v9743 = vsel %vm9742, %v9735, %v9739
    %v9744 = vand.u32 2147483647, %v9733
    %vm9745 = vcmp.eq.f32.partialorder %v9744, 8.507059e+37
    %v9746 = vand.u32 %v9733, 2147483648
    %v9747 = vor.u32 1.1754944e-38, %v9746
    %v9748 = vsel %vm9745, %v9747, %v9743
    %v9749 = vmul.f32 1.0, %v9748
    %v9750 = vrcp.pop %v9734
    %v9751 = vmul.f32 %v9734, %v9750
    %v9752 = vsub.f32 1.0, %v9751
    %v9753 = vmul.f32 %v9750, %v9752
    %v9754 = vadd.f32 %v9750, %v9753
    %vm9755 = vweird.f32 %v9734
    %vm9756 = vweird.f32 %v9750
    %vm9757 = vmor %vm9755, %vm9756
    %v9758 = vsel %vm9757, %v9750, %v9754
    %v9759 = vand.u32 2147483647, %v9734
    %vm9760 = vcmp.eq.f32.partialorder %v9759, 8.507059e+37
    %v9761 = vand.u32 %v9734, 2147483648
    %v9762 = vor.u32 1.1754944e-38, %v9761
    %v9763 = vsel %vm9760, %v9762, %v9758
    %v9764 = vmul.f32 1.0, %v9763
    %v9765 = vsub.f32 0.0, %v9720
    %v9766 = vsub.f32 0.0, %v9724
    %v9767 = vmul.f32 %v9765, 1.442695
    %v9768 = vpow.pop %v9767
    %v9769 = vmul.f32 %v9766, 1.442695
    %v9770 = vpow.pop %v9769
    %v9771 = vadd.f32 %v9768, 1.0
    %v9772 = vadd.f32 %v9770, 1.0
    %v9773 = vrcp.pop %v9771
    %v9774 = vmul.f32 %v9771, %v9773
    %v9775 = vsub.f32 1.0, %v9774
    %v9776 = vmul.f32 %v9773, %v9775
    %v9777 = vadd.f32 %v9773, %v9776
    %vm9778 = vweird.f32 %v9771
    %vm9779 = vweird.f32 %v9773
    %vm9780 = vmor %vm9778, %vm9779
    %v9781 = vsel %vm9780, %v9773, %v9777
    %v9782 = vand.u32 2147483647, %v9771
    %vm9783 = vcmp.eq.f32.partialorder %v9782, 8.507059e+37
    %v9784 = vand.u32 %v9771, 2147483648
    %v9785 = vor.u32 1.1754944e-38, %v9784
    %v9786 = vsel %vm9783, %v9785, %v9781
    %v9787 = vmul.f32 1.0, %v9786
    %v9788 = vrcp.pop %v9772
    %v9789 = vmul.f32 %v9772, %v9788
    %v9790 = vsub.f32 1.0, %v9789
    %v9791 = vmul.f32 %v9788, %v9790
    %v9792 = vadd.f32 %v9788, %v9791
    %vm9793 = vweird.f32 %v9772
    %vm9794 = vweird.f32 %v9788
    %vm9795 = vmor %vm9793, %vm9794
    %v9796 = vsel %vm9795, %v9788, %v9792
    %v9797 = vand.u32 2147483647, %v9772
    %vm9798 = vcmp.eq.f32.partialorder %v9797, 8.507059e+37
    %v9799 = vand.u32 %v9772, 2147483648
    %v9800 = vor.u32 1.1754944e-38, %v9799
    %v9801 = vsel %vm9798, %v9800, %v9796
    %v9802 = vmul.f32 1.0, %v9801
    %v9803 = vtanh.pop %v9721
    %v9804 = vtanh.pop %v9725
    %v9805 = vsub.f32 0.0, %v9722
    %v9806 = vsub.f32 0.0, %v9726
    %v9807 = vmul.f32 %v9805, 1.442695
    %v9808 = vpow.pop %v9807
    %v9809 = vmul.f32 %v9806, 1.442695
    %v9810 = vpow.pop %v9809
    %v9811 = vadd.f32 %v9808, 1.0
    %v9812 = vadd.f32 %v9810, 1.0
    %v9813 = vrcp.pop %v9811
    %v9814 = vmul.f32 %v9811, %v9813
    %v9815 = vsub.f32 1.0, %v9814
    %v9816 = vmul.f32 %v9813, %v9815
    %v9817 = vadd.f32 %v9813, %v9816
    %vm9818 = vweird.f32 %v9811
    %vm9819 = vweird.f32 %v9813
    %vm9820 = vmor %vm9818, %vm9819
    %v9821 = vsel %vm9820, %v9813, %v9817
    %v9822 = vand.u32 2147483647, %v9811
    %vm9823 = vcmp.eq.f32.partialorder %v9822, 8.507059e+37
    %v9824 = vand.u32 %v9811, 2147483648
    %v9825 = vor.u32 1.1754944e-38, %v9824
    %v9826 = vsel %vm9823, %v9825, %v9821
    %v9827 = vmul.f32 1.0, %v9826
    %v9828 = vrcp.pop %v9812
    %v9829 = vmul.f32 %v9812, %v9828
    %v9830 = vsub.f32 1.0, %v9829
    %v9831 = vmul.f32 %v9828, %v9830
    %v9832 = vadd.f32 %v9828, %v9831
    %vm9833 = vweird.f32 %v9812
    %vm9834 = vweird.f32 %v9828
    %vm9835 = vmor %vm9833, %vm9834
    %v9836 = vsel %vm9835, %v9828, %v9832
    %v9837 = vand.u32 2147483647, %v9812
    %vm9838 = vcmp.eq.f32.partialorder %v9837, 8.507059e+37
    %v9839 = vand.u32 %v9812, 2147483648
    %v9840 = vor.u32 1.1754944e-38, %v9839
    %v9841 = vsel %vm9838, %v9840, %v9836
    %v9842 = vmul.f32 1.0, %v9841
    %v9845 = vrot.slane %v9295, 7
    %v9846 = vrot.slane %v9296, 7
    %v9849 = vmul.f32 %v9787, %v9845
    %v9850 = vmul.f32 %v9802, %v9846
    %v9851 = vmul.f32 %v9749, %v9803
    %v9852 = vmul.f32 %v9764, %v9804
    %v9853 = vadd.f32 %v9849, %v9851
    %v9854 = vadd.f32 %v9850, %v9852
    %v9855 = vtanh.pop %v9853
    %v9856 = vtanh.pop %v9854
    %v9857 = vmul.f32 %v9827, %v9855
    %v9858 = vmul.f32 %v9842, %v9856
    %v9861 = vrot.slane %v9858, 7
    %vm9862 = vcmask 1047559
    %v9863 = vsel %vm9862, %v9861, %v9857
    %v9865 = vrot.slane %v9698, 2
    %v9866 = vrot.slane %v9863, 6
    %v9867 = vrot.slane %v9865, 6
    %9870 = vmatpush.msra.mxu0 %v6248
    %9871 = vmatpush.msra.mxu0 %v6240
    %9872 = vmatpush.msra.mxu0 %v6232
    %9873 = vmatpush.msra.mxu0 %v6224
    %9874 = vmatpush.msra.mxu0 %v6216
    %9875 = vmatpush.msra.mxu0 %v6208
    %9876 = vmatpush.msra.mxu0 %v6200
    %9877 = vmatpush.msra.mxu0 %v6192
    %9878 = vmatpush.msra.mxu0 %v6184
    %9879 = vmatpush.msra.mxu0 %v6176
    %9880 = vmatpush.msra.mxu0 %v6168
    %9881 = vmatpush.msra.mxu0 %v6160
    %9882 = vmatpush.msra.mxu0 %v6152
    %9883 = vmatpush.msra.mxu0 %v6144
    %9884 = vmatpush.msra.mxu0 %v6136
    %9885 = vmatpush.msra.mxu0 %v6128
    %9886 = vmatmul.f32.gmra.mxu0 %v9866
    %v9887 = vpop.f32.mrf.mxu0
    %v9888 = vadd.f32 0.0, %v9887
    %9889 = vdwg.mxu0
    %9890 = vmatpush.msra.mxu0 %v6376
    %9891 = vmatpush.msra.mxu0 %v6368
    %9892 = vmatpush.msra.mxu0 %v6360
    %9893 = vmatpush.msra.mxu0 %v6352
    %9894 = vmatpush.msra.mxu0 %v6344
    %9895 = vmatpush.msra.mxu0 %v6336
    %9896 = vmatpush.msra.mxu0 %v6328
    %9897 = vmatpush.msra.mxu0 %v6320
    %9898 = vmatpush.msra.mxu0 %v6312
    %9899 = vmatpush.msra.mxu0 %v6304
    %9900 = vmatpush.msra.mxu0 %v6296
    %9901 = vmatpush.msra.mxu0 %v6288
    %9902 = vmatpush.msra.mxu0 %v6280
    %9903 = vmatpush.msra.mxu0 %v6272
    %9904 = vmatpush.msra.mxu0 %v6264
    %9905 = vmatpush.msra.mxu0 %v6256
    %9906 = vmatmul.f32.gmra.mxu0 %v9867
    %v9907 = vpop.f32.mrf.mxu0
    %v9908 = vadd.f32 %v9888, %v9907
    %9909 = vdwg.mxu0
    %9910 = vmatpush.msra.mxu0 %v6249
    %9911 = vmatpush.msra.mxu0 %v6241
    %9912 = vmatpush.msra.mxu0 %v6233
    %9913 = vmatpush.msra.mxu0 %v6225
    %9914 = vmatpush.msra.mxu0 %v6217
    %9915 = vmatpush.msra.mxu0 %v6209
    %9916 = vmatpush.msra.mxu0 %v6201
    %9917 = vmatpush.msra.mxu0 %v6193
    %9918 = vmatpush.msra.mxu0 %v6185
    %9919 = vmatpush.msra.mxu0 %v6177
    %9920 = vmatpush.msra.mxu0 %v6169
    %9921 = vmatpush.msra.mxu0 %v6161
    %9922 = vmatpush.msra.mxu0 %v6153
    %9923 = vmatpush.msra.mxu0 %v6145
    %9924 = vmatpush.msra.mxu0 %v6137
    %9925 = vmatpush.msra.mxu0 %v6129
    %9926 = vmatmul.f32.gmra.mxu0 %v9866
    %v9927 = vpop.f32.mrf.mxu0
    %v9928 = vadd.f32 0.0, %v9927
    %9929 = vdwg.mxu0
    %9930 = vmatpush.msra.mxu0 %v6377
    %9931 = vmatpush.msra.mxu0 %v6369
    %9932 = vmatpush.msra.mxu0 %v6361
    %9933 = vmatpush.msra.mxu0 %v6353
    %9934 = vmatpush.msra.mxu0 %v6345
    %9935 = vmatpush.msra.mxu0 %v6337
    %9936 = vmatpush.msra.mxu0 %v6329
    %9937 = vmatpush.msra.mxu0 %v6321
    %9938 = vmatpush.msra.mxu0 %v6313
    %9939 = vmatpush.msra.mxu0 %v6305
    %9940 = vmatpush.msra.mxu0 %v6297
    %9941 = vmatpush.msra.mxu0 %v6289
    %9942 = vmatpush.msra.mxu0 %v6281
    %9943 = vmatpush.msra.mxu0 %v6273
    %9944 = vmatpush.msra.mxu0 %v6265
    %9945 = vmatpush.msra.mxu0 %v6257
    %9946 = vmatmul.f32.gmra.mxu0 %v9867
    %v9947 = vpop.f32.mrf.mxu0
    %v9948 = vadd.f32 %v9928, %v9947
    %9949 = vdwg.mxu0
    %9950 = vmatpush.msra.mxu0 %v6250
    %9951 = vmatpush.msra.mxu0 %v6242
    %9952 = vmatpush.msra.mxu0 %v6234
    %9953 = vmatpush.msra.mxu0 %v6226
    %9954 = vmatpush.msra.mxu0 %v6218
    %9955 = vmatpush.msra.mxu0 %v6210
    %9956 = vmatpush.msra.mxu0 %v6202
    %9957 = vmatpush.msra.mxu0 %v6194
    %9958 = vmatpush.msra.mxu0 %v6186
    %9959 = vmatpush.msra.mxu0 %v6178
    %9960 = vmatpush.msra.mxu0 %v6170
    %9961 = vmatpush.msra.mxu0 %v6162
    %9962 = vmatpush.msra.mxu0 %v6154
    %9963 = vmatpush.msra.mxu0 %v6146
    %9964 = vmatpush.msra.mxu0 %v6138
    %9965 = vmatpush.msra.mxu0 %v6130
    %9966 = vmatmul.f32.gmra.mxu0 %v9866
    %v9967 = vpop.f32.mrf.mxu0
    %v9968 = vadd.f32 0.0, %v9967
    %9969 = vdwg.mxu0
    %9970 = vmatpush.msra.mxu0 %v6378
    %9971 = vmatpush.msra.mxu0 %v6370
    %9972 = vmatpush.msra.mxu0 %v6362
    %9973 = vmatpush.msra.mxu0 %v6354
    %9974 = vmatpush.msra.mxu0 %v6346
    %9975 = vmatpush.msra.mxu0 %v6338
    %9976 = vmatpush.msra.mxu0 %v6330
    %9977 = vmatpush.msra.mxu0 %v6322
    %9978 = vmatpush.msra.mxu0 %v6314
    %9979 = vmatpush.msra.mxu0 %v6306
    %9980 = vmatpush.msra.mxu0 %v6298
    %9981 = vmatpush.msra.mxu0 %v6290
    %9982 = vmatpush.msra.mxu0 %v6282
    %9983 = vmatpush.msra.mxu0 %v6274
    %9984 = vmatpush.msra.mxu0 %v6266
    %9985 = vmatpush.msra.mxu0 %v6258
    %9986 = vmatmul.f32.gmra.mxu0 %v9867
    %v9987 = vpop.f32.mrf.mxu0
    %v9988 = vadd.f32 %v9968, %v9987
    %9989 = vdwg.mxu0
    %9990 = vmatpush.msra.mxu0 %v6251
    %9991 = vmatpush.msra.mxu0 %v6243
    %9992 = vmatpush.msra.mxu0 %v6235
    %9993 = vmatpush.msra.mxu0 %v6227
    %9994 = vmatpush.msra.mxu0 %v6219
    %9995 = vmatpush.msra.mxu0 %v6211
    %9996 = vmatpush.msra.mxu0 %v6203
    %9997 = vmatpush.msra.mxu0 %v6195
    %9998 = vmatpush.msra.mxu0 %v6187
    %9999 = vmatpush.msra.mxu0 %v6179
    %10000 = vmatpush.msra.mxu0 %v6171
    %10001 = vmatpush.msra.mxu0 %v6163
    %10002 = vmatpush.msra.mxu0 %v6155
    %10003 = vmatpush.msra.mxu0 %v6147
    %10004 = vmatpush.msra.mxu0 %v6139
    %10005 = vmatpush.msra.mxu0 %v6131
    %10006 = vmatmul.f32.gmra.mxu0 %v9866
    %v10007 = vpop.f32.mrf.mxu0
    %v10008 = vadd.f32 0.0, %v10007
    %10009 = vdwg.mxu0
    %10010 = vmatpush.msra.mxu0 %v6379
    %10011 = vmatpush.msra.mxu0 %v6371
    %10012 = vmatpush.msra.mxu0 %v6363
    %10013 = vmatpush.msra.mxu0 %v6355
    %10014 = vmatpush.msra.mxu0 %v6347
    %10015 = vmatpush.msra.mxu0 %v6339
    %10016 = vmatpush.msra.mxu0 %v6331
    %10017 = vmatpush.msra.mxu0 %v6323
    %10018 = vmatpush.msra.mxu0 %v6315
    %10019 = vmatpush.msra.mxu0 %v6307
    %10020 = vmatpush.msra.mxu0 %v6299
    %10021 = vmatpush.msra.mxu0 %v6291
    %10022 = vmatpush.msra.mxu0 %v6283
    %10023 = vmatpush.msra.mxu0 %v6275
    %10024 = vmatpush.msra.mxu0 %v6267
    %10025 = vmatpush.msra.mxu0 %v6259
    %10026 = vmatmul.f32.gmra.mxu0 %v9867
    %v10027 = vpop.f32.mrf.mxu0
    %v10028 = vadd.f32 %v10008, %v10027
    %10029 = vdwg.mxu0
    %10030 = vmatpush.msra.mxu0 %v6252
    %10031 = vmatpush.msra.mxu0 %v6244
    %10032 = vmatpush.msra.mxu0 %v6236
    %10033 = vmatpush.msra.mxu0 %v6228
    %10034 = vmatpush.msra.mxu0 %v6220
    %10035 = vmatpush.msra.mxu0 %v6212
    %10036 = vmatpush.msra.mxu0 %v6204
    %10037 = vmatpush.msra.mxu0 %v6196
    %10038 = vmatpush.msra.mxu0 %v6188
    %10039 = vmatpush.msra.mxu0 %v6180
    %10040 = vmatpush.msra.mxu0 %v6172
    %10041 = vmatpush.msra.mxu0 %v6164
    %10042 = vmatpush.msra.mxu0 %v6156
    %10043 = vmatpush.msra.mxu0 %v6148
    %10044 = vmatpush.msra.mxu0 %v6140
    %10045 = vmatpush.msra.mxu0 %v6132
    %10046 = vmatmul.f32.gmra.mxu0 %v9866
    %v10047 = vpop.f32.mrf.mxu0
    %v10048 = vadd.f32 0.0, %v10047
    %10049 = vdwg.mxu0
    %10050 = vmatpush.msra.mxu0 %v6380
    %10051 = vmatpush.msra.mxu0 %v6372
    %10052 = vmatpush.msra.mxu0 %v6364
    %10053 = vmatpush.msra.mxu0 %v6356
    %10054 = vmatpush.msra.mxu0 %v6348
    %10055 = vmatpush.msra.mxu0 %v6340
    %10056 = vmatpush.msra.mxu0 %v6332
    %10057 = vmatpush.msra.mxu0 %v6324
    %10058 = vmatpush.msra.mxu0 %v6316
    %10059 = vmatpush.msra.mxu0 %v6308
    %10060 = vmatpush.msra.mxu0 %v6300
    %10061 = vmatpush.msra.mxu0 %v6292
    %10062 = vmatpush.msra.mxu0 %v6284
    %10063 = vmatpush.msra.mxu0 %v6276
    %10064 = vmatpush.msra.mxu0 %v6268
    %10065 = vmatpush.msra.mxu0 %v6260
    %10066 = vmatmul.f32.gmra.mxu0 %v9867
    %v10067 = vpop.f32.mrf.mxu0
    %v10068 = vadd.f32 %v10048, %v10067
    %10069 = vdwg.mxu0
    %10070 = vmatpush.msra.mxu0 %v6253
    %10071 = vmatpush.msra.mxu0 %v6245
    %10072 = vmatpush.msra.mxu0 %v6237
    %10073 = vmatpush.msra.mxu0 %v6229
    %10074 = vmatpush.msra.mxu0 %v6221
    %10075 = vmatpush.msra.mxu0 %v6213
    %10076 = vmatpush.msra.mxu0 %v6205
    %10077 = vmatpush.msra.mxu0 %v6197
    %10078 = vmatpush.msra.mxu0 %v6189
    %10079 = vmatpush.msra.mxu0 %v6181
    %10080 = vmatpush.msra.mxu0 %v6173
    %10081 = vmatpush.msra.mxu0 %v6165
    %10082 = vmatpush.msra.mxu0 %v6157
    %10083 = vmatpush.msra.mxu0 %v6149
    %10084 = vmatpush.msra.mxu0 %v6141
    %10085 = vmatpush.msra.mxu0 %v6133
    %10086 = vmatmul.f32.gmra.mxu0 %v9866
    %v10087 = vpop.f32.mrf.mxu0
    %v10088 = vadd.f32 0.0, %v10087
    %10089 = vdwg.mxu0
    %10090 = vmatpush.msra.mxu0 %v6381
    %10091 = vmatpush.msra.mxu0 %v6373
    %10092 = vmatpush.msra.mxu0 %v6365
    %10093 = vmatpush.msra.mxu0 %v6357
    %10094 = vmatpush.msra.mxu0 %v6349
    %10095 = vmatpush.msra.mxu0 %v6341
    %10096 = vmatpush.msra.mxu0 %v6333
    %10097 = vmatpush.msra.mxu0 %v6325
    %10098 = vmatpush.msra.mxu0 %v6317
    %10099 = vmatpush.msra.mxu0 %v6309
    %10100 = vmatpush.msra.mxu0 %v6301
    %10101 = vmatpush.msra.mxu0 %v6293
    %10102 = vmatpush.msra.mxu0 %v6285
    %10103 = vmatpush.msra.mxu0 %v6277
    %10104 = vmatpush.msra.mxu0 %v6269
    %10105 = vmatpush.msra.mxu0 %v6261
    %10106 = vmatmul.f32.gmra.mxu0 %v9867
    %v10107 = vpop.f32.mrf.mxu0
    %v10108 = vadd.f32 %v10088, %v10107
    %10109 = vdwg.mxu0
    %10110 = vmatpush.msra.mxu0 %v6254
    %10111 = vmatpush.msra.mxu0 %v6246
    %10112 = vmatpush.msra.mxu0 %v6238
    %10113 = vmatpush.msra.mxu0 %v6230
    %10114 = vmatpush.msra.mxu0 %v6222
    %10115 = vmatpush.msra.mxu0 %v6214
    %10116 = vmatpush.msra.mxu0 %v6206
    %10117 = vmatpush.msra.mxu0 %v6198
    %10118 = vmatpush.msra.mxu0 %v6190
    %10119 = vmatpush.msra.mxu0 %v6182
    %10120 = vmatpush.msra.mxu0 %v6174
    %10121 = vmatpush.msra.mxu0 %v6166
    %10122 = vmatpush.msra.mxu0 %v6158
    %10123 = vmatpush.msra.mxu0 %v6150
    %10124 = vmatpush.msra.mxu0 %v6142
    %10125 = vmatpush.msra.mxu0 %v6134
    %10126 = vmatmul.f32.gmra.mxu0 %v9866
    %v10127 = vpop.f32.mrf.mxu0
    %v10128 = vadd.f32 0.0, %v10127
    %10129 = vdwg.mxu0
    %10130 = vmatpush.msra.mxu0 %v6382
    %10131 = vmatpush.msra.mxu0 %v6374
    %10132 = vmatpush.msra.mxu0 %v6366
    %10133 = vmatpush.msra.mxu0 %v6358
    %10134 = vmatpush.msra.mxu0 %v6350
    %10135 = vmatpush.msra.mxu0 %v6342
    %10136 = vmatpush.msra.mxu0 %v6334
    %10137 = vmatpush.msra.mxu0 %v6326
    %10138 = vmatpush.msra.mxu0 %v6318
    %10139 = vmatpush.msra.mxu0 %v6310
    %10140 = vmatpush.msra.mxu0 %v6302
    %10141 = vmatpush.msra.mxu0 %v6294
    %10142 = vmatpush.msra.mxu0 %v6286
    %10143 = vmatpush.msra.mxu0 %v6278
    %10144 = vmatpush.msra.mxu0 %v6270
    %10145 = vmatpush.msra.mxu0 %v6262
    %10146 = vmatmul.f32.gmra.mxu0 %v9867
    %v10147 = vpop.f32.mrf.mxu0
    %v10148 = vadd.f32 %v10128, %v10147
    %10149 = vdwg.mxu0
    %10150 = vmatpush.msra.mxu0 %v6255
    %10151 = vmatpush.msra.mxu0 %v6247
    %10152 = vmatpush.msra.mxu0 %v6239
    %10153 = vmatpush.msra.mxu0 %v6231
    %10154 = vmatpush.msra.mxu0 %v6223
    %10155 = vmatpush.msra.mxu0 %v6215
    %10156 = vmatpush.msra.mxu0 %v6207
    %10157 = vmatpush.msra.mxu0 %v6199
    %10158 = vmatpush.msra.mxu0 %v6191
    %10159 = vmatpush.msra.mxu0 %v6183
    %10160 = vmatpush.msra.mxu0 %v6175
    %10161 = vmatpush.msra.mxu0 %v6167
    %10162 = vmatpush.msra.mxu0 %v6159
    %10163 = vmatpush.msra.mxu0 %v6151
    %10164 = vmatpush.msra.mxu0 %v6143
    %10165 = vmatpush.msra.mxu0 %v6135
    %10166 = vmatmul.f32.gmra.mxu0 %v9866
    %v10167 = vpop.f32.mrf.mxu0
    %v10168 = vadd.f32 0.0, %v10167
    %10169 = vdwg.mxu0
    %10170 = vmatpush.msra.mxu0 %v6383
    %10171 = vmatpush.msra.mxu0 %v6375
    %10172 = vmatpush.msra.mxu0 %v6367
    %10173 = vmatpush.msra.mxu0 %v6359
    %10174 = vmatpush.msra.mxu0 %v6351
    %10175 = vmatpush.msra.mxu0 %v6343
    %10176 = vmatpush.msra.mxu0 %v6335
    %10177 = vmatpush.msra.mxu0 %v6327
    %10178 = vmatpush.msra.mxu0 %v6319
    %10179 = vmatpush.msra.mxu0 %v6311
    %10180 = vmatpush.msra.mxu0 %v6303
    %10181 = vmatpush.msra.mxu0 %v6295
    %10182 = vmatpush.msra.mxu0 %v6287
    %10183 = vmatpush.msra.mxu0 %v6279
    %10184 = vmatpush.msra.mxu0 %v6271
    %10185 = vmatpush.msra.mxu0 %v6263
    %10186 = vmatmul.f32.gmra.mxu0 %v9867
    %v10187 = vpop.f32.mrf.mxu0
    %v10188 = vadd.f32 %v10168, %v10187
    %10189 = vdwg.mxu0
    %v10190 = vadd.f32 %v10068, %v6838
    %v10191 = vadd.f32 %v10108, %v6839
    %v10192 = vadd.f32 %v10148, %v6840
    %v10193 = vadd.f32 %v10188, %v6841
    %v10194 = vsub.f32 0.0, %v10190
    %v10195 = vmul.f32 %v10194, 1.442695
    %v10196 = vpow.pop %v10195
    %v10197 = vadd.f32 %v10196, 1.0
    %v10198 = vrcp.pop %v10197
    %v10199 = vmul.f32 %v10197, %v10198
    %v10200 = vsub.f32 1.0, %v10199
    %v10201 = vmul.f32 %v10198, %v10200
    %v10202 = vadd.f32 %v10198, %v10201
    %vm10203 = vweird.f32 %v10197
    %vm10204 = vweird.f32 %v10198
    %vm10205 = vmor %vm10203, %vm10204
    %v10206 = vsel %vm10205, %v10198, %v10202
    %v10207 = vand.u32 2147483647, %v10197
    %vm10208 = vcmp.eq.f32.partialorder %v10207, 8.507059e+37
    %v10209 = vand.u32 %v10197, 2147483648
    %v10210 = vor.u32 1.1754944e-38, %v10209
    %v10211 = vsel %vm10208, %v10210, %v10206
    %v10212 = vmul.f32 1.0, %v10211
    %v10213 = vsub.f32 0.0, %v10191
    %v10214 = vmul.f32 %v10213, 1.442695
    %v10215 = vpow.pop %v10214
    %v10216 = vadd.f32 %v10215, 1.0
    %v10217 = vrcp.pop %v10216
    %v10218 = vmul.f32 %v10216, %v10217
    %v10219 = vsub.f32 1.0, %v10218
    %v10220 = vmul.f32 %v10217, %v10219
    %v10221 = vadd.f32 %v10217, %v10220
    %vm10222 = vweird.f32 %v10216
    %vm10223 = vweird.f32 %v10217
    %vm10224 = vmor %vm10222, %vm10223
    %v10225 = vsel %vm10224, %v10217, %v10221
    %v10226 = vand.u32 2147483647, %v10216
    %vm10227 = vcmp.eq.f32.partialorder %v10226, 8.507059e+37
    %v10228 = vand.u32 %v10216, 2147483648
    %v10229 = vor.u32 1.1754944e-38, %v10228
    %v10230 = vsel %vm10227, %v10229, %v10225
    %v10231 = vmul.f32 1.0, %v10230
    %v10232 = vtanh.pop %v10192
    %v10233 = vsub.f32 0.0, %v10193
    %v10234 = vmul.f32 %v10233, 1.442695
    %v10235 = vpow.pop %v10234
    %v10236 = vadd.f32 %v10235, 1.0
    %v10237 = vrcp.pop %v10236
    %v10238 = vmul.f32 %v10236, %v10237
    %v10239 = vsub.f32 1.0, %v10238
    %v10240 = vmul.f32 %v10237, %v10239
    %v10241 = vadd.f32 %v10237, %v10240
    %vm10242 = vweird.f32 %v10236
    %vm10243 = vweird.f32 %v10237
    %vm10244 = vmor %vm10242, %vm10243
    %v10245 = vsel %vm10244, %v10237, %v10241
    %v10246 = vand.u32 2147483647, %v10236
    %vm10247 = vcmp.eq.f32.partialorder %v10246, 8.507059e+37
    %v10248 = vand.u32 %v10236, 2147483648
    %v10249 = vor.u32 1.1754944e-38, %v10248
    %v10250 = vsel %vm10247, %v10249, %v10245
    %v10251 = vmul.f32 1.0, %v10250
    %v10252 = vmul.f32 %v10231, %v9696
    %v10253 = vmul.f32 %v10212, %v10232
    %v10254 = vadd.f32 %v10252, %v10253
    %v10255 = vtanh.pop %v10254
    %v10256 = vmul.f32 %v10251, %v10255
    %v10261 = vrot.slane %v9908, 1
    %v10262 = vrot.slane %v9948, 1
    %v10263 = vrot.slane %v9988, 1
    %v10264 = vrot.slane %v10028, 1
    %v10265 = vrot.slane %v9908, 2
    %v10266 = vrot.slane %v9948, 2
    %v10267 = vrot.slane %v9988, 2
    %v10268 = vrot.slane %v10028, 2
    %v10277 = vadd.f32 %v6019, %v10261
    %v10278 = vadd.f32 %v6053, %v10262
    %v10279 = vadd.f32 %v6087, %v10263
    %v10280 = vadd.f32 %v6121, %v10264
    %v10281 = vadd.f32 %v6023, %v10265
    %v10282 = vadd.f32 %v6057, %v10266
    %v10283 = vadd.f32 %v6091, %v10267
    %v10284 = vadd.f32 %v6125, %v10268
    %v10285 = vsub.f32 0.0, %v10277
    %v10286 = vsub.f32 0.0, %v10281
    %v10287 = vmul.f32 %v10285, 1.442695
    %v10288 = vpow.pop %v10287
    %v10289 = vmul.f32 %v10286, 1.442695
    %v10290 = vpow.pop %v10289
    %v10291 = vadd.f32 %v10288, 1.0
    %v10292 = vadd.f32 %v10290, 1.0
    %v10293 = vrcp.pop %v10291
    %v10294 = vmul.f32 %v10291, %v10293
    %v10295 = vsub.f32 1.0, %v10294
    %v10296 = vmul.f32 %v10293, %v10295
    %v10297 = vadd.f32 %v10293, %v10296
    %vm10298 = vweird.f32 %v10291
    %vm10299 = vweird.f32 %v10293
    %vm10300 = vmor %vm10298, %vm10299
    %v10301 = vsel %vm10300, %v10293, %v10297
    %v10302 = vand.u32 2147483647, %v10291
    %vm10303 = vcmp.eq.f32.partialorder %v10302, 8.507059e+37
    %v10304 = vand.u32 %v10291, 2147483648
    %v10305 = vor.u32 1.1754944e-38, %v10304
    %v10306 = vsel %vm10303, %v10305, %v10301
    %v10307 = vmul.f32 1.0, %v10306
    %v10308 = vrcp.pop %v10292
    %v10309 = vmul.f32 %v10292, %v10308
    %v10310 = vsub.f32 1.0, %v10309
    %v10311 = vmul.f32 %v10308, %v10310
    %v10312 = vadd.f32 %v10308, %v10311
    %vm10313 = vweird.f32 %v10292
    %vm10314 = vweird.f32 %v10308
    %vm10315 = vmor %vm10313, %vm10314
    %v10316 = vsel %vm10315, %v10308, %v10312
    %v10317 = vand.u32 2147483647, %v10292
    %vm10318 = vcmp.eq.f32.partialorder %v10317, 8.507059e+37
    %v10319 = vand.u32 %v10292, 2147483648
    %v10320 = vor.u32 1.1754944e-38, %v10319
    %v10321 = vsel %vm10318, %v10320, %v10316
    %v10322 = vmul.f32 1.0, %v10321
    %v10323 = vsub.f32 0.0, %v10278
    %v10324 = vsub.f32 0.0, %v10282
    %v10325 = vmul.f32 %v10323, 1.442695
    %v10326 = vpow.pop %v10325
    %v10327 = vmul.f32 %v10324, 1.442695
    %v10328 = vpow.pop %v10327
    %v10329 = vadd.f32 %v10326, 1.0
    %v10330 = vadd.f32 %v10328, 1.0
    %v10331 = vrcp.pop %v10329
    %v10332 = vmul.f32 %v10329, %v10331
    %v10333 = vsub.f32 1.0, %v10332
    %v10334 = vmul.f32 %v10331, %v10333
    %v10335 = vadd.f32 %v10331, %v10334
    %vm10336 = vweird.f32 %v10329
    %vm10337 = vweird.f32 %v10331
    %vm10338 = vmor %vm10336, %vm10337
    %v10339 = vsel %vm10338, %v10331, %v10335
    %v10340 = vand.u32 2147483647, %v10329
    %vm10341 = vcmp.eq.f32.partialorder %v10340, 8.507059e+37
    %v10342 = vand.u32 %v10329, 2147483648
    %v10343 = vor.u32 1.1754944e-38, %v10342
    %v10344 = vsel %vm10341, %v10343, %v10339
    %v10345 = vmul.f32 1.0, %v10344
    %v10346 = vrcp.pop %v10330
    %v10347 = vmul.f32 %v10330, %v10346
    %v10348 = vsub.f32 1.0, %v10347
    %v10349 = vmul.f32 %v10346, %v10348
    %v10350 = vadd.f32 %v10346, %v10349
    %vm10351 = vweird.f32 %v10330
    %vm10352 = vweird.f32 %v10346
    %vm10353 = vmor %vm10351, %vm10352
    %v10354 = vsel %vm10353, %v10346, %v10350
    %v10355 = vand.u32 2147483647, %v10330
    %vm10356 = vcmp.eq.f32.partialorder %v10355, 8.507059e+37
    %v10357 = vand.u32 %v10330, 2147483648
    %v10358 = vor.u32 1.1754944e-38, %v10357
    %v10359 = vsel %vm10356, %v10358, %v10354
    %v10360 = vmul.f32 1.0, %v10359
    %v10361 = vtanh.pop %v10279
    %v10362 = vtanh.pop %v10283
    %v10363 = vsub.f32 0.0, %v10280
    %v10364 = vsub.f32 0.0, %v10284
    %v10365 = vmul.f32 %v10363, 1.442695
    %v10366 = vpow.pop %v10365
    %v10367 = vmul.f32 %v10364, 1.442695
    %v10368 = vpow.pop %v10367
    %v10369 = vadd.f32 %v10366, 1.0
    %v10370 = vadd.f32 %v10368, 1.0
    %v10371 = vrcp.pop %v10369
    %v10372 = vmul.f32 %v10369, %v10371
    %v10373 = vsub.f32 1.0, %v10372
    %v10374 = vmul.f32 %v10371, %v10373
    %v10375 = vadd.f32 %v10371, %v10374
    %vm10376 = vweird.f32 %v10369
    %vm10377 = vweird.f32 %v10371
    %vm10378 = vmor %vm10376, %vm10377
    %v10379 = vsel %vm10378, %v10371, %v10375
    %v10380 = vand.u32 2147483647, %v10369
    %vm10381 = vcmp.eq.f32.partialorder %v10380, 8.507059e+37
    %v10382 = vand.u32 %v10369, 2147483648
    %v10383 = vor.u32 1.1754944e-38, %v10382
    %v10384 = vsel %vm10381, %v10383, %v10379
    %v10385 = vmul.f32 1.0, %v10384
    %v10386 = vrcp.pop %v10370
    %v10387 = vmul.f32 %v10370, %v10386
    %v10388 = vsub.f32 1.0, %v10387
    %v10389 = vmul.f32 %v10386, %v10388
    %v10390 = vadd.f32 %v10386, %v10389
    %vm10391 = vweird.f32 %v10370
    %vm10392 = vweird.f32 %v10386
    %vm10393 = vmor %vm10391, %vm10392
    %v10394 = vsel %vm10393, %v10386, %v10390
    %v10395 = vand.u32 2147483647, %v10370
    %vm10396 = vcmp.eq.f32.partialorder %v10395, 8.507059e+37
    %v10397 = vand.u32 %v10370, 2147483648
    %v10398 = vor.u32 1.1754944e-38, %v10397
    %v10399 = vsel %vm10396, %v10398, %v10394
    %v10400 = vmul.f32 1.0, %v10399
    %v10403 = vrot.slane %v9853, 7
    %v10404 = vrot.slane %v9854, 7
    %v10407 = vmul.f32 %v10345, %v10403
    %v10408 = vmul.f32 %v10360, %v10404
    %v10409 = vmul.f32 %v10307, %v10361
    %v10410 = vmul.f32 %v10322, %v10362
    %v10411 = vadd.f32 %v10407, %v10409
    %v10412 = vadd.f32 %v10408, %v10410
    %v10413 = vtanh.pop %v10411
    %v10414 = vtanh.pop %v10412
    %v10415 = vmul.f32 %v10385, %v10413
    %v10416 = vmul.f32 %v10400, %v10414
    %v10419 = vrot.slane %v10416, 7
    %v10421 = vrot.slane %v10256, 1
    %vm10422 = vcmask 1040384
    %v10423 = vrot.slane %v10415, 7
    %v10424 = vrot.slane %v10419, 7
    %v10425 = vsel %vm10422, %v10423, %v10424
    %v10426 = vrot.slane %v10421, 7
    %v10427 = vsel %vm10422, %v10426, %v10426
    %10430 = vmatpush.msra.mxu0 %v6252
    %10431 = vmatpush.msra.mxu0 %v6244
    %10432 = vmatpush.msra.mxu0 %v6236
    %10433 = vmatpush.msra.mxu0 %v6228
    %10434 = vmatpush.msra.mxu0 %v6220
    %10435 = vmatpush.msra.mxu0 %v6212
    %10436 = vmatpush.msra.mxu0 %v6204
    %10437 = vmatpush.msra.mxu0 %v6196
    %10438 = vmatpush.msra.mxu0 %v6188
    %10439 = vmatpush.msra.mxu0 %v6180
    %10440 = vmatpush.msra.mxu0 %v6172
    %10441 = vmatpush.msra.mxu0 %v6164
    %10442 = vmatpush.msra.mxu0 %v6156
    %10443 = vmatpush.msra.mxu0 %v6148
    %10444 = vmatpush.msra.mxu0 %v6140
    %10445 = vmatpush.msra.mxu0 %v6132
    %10446 = vmatmul.f32.gmra.mxu0 %v10425
    %v10447 = vpop.f32.mrf.mxu0
    %v10448 = vadd.f32 0.0, %v10447
    %10449 = vdwg.mxu0
    %10450 = vmatpush.msra.mxu0 %v6380
    %10451 = vmatpush.msra.mxu0 %v6372
    %10452 = vmatpush.msra.mxu0 %v6364
    %10453 = vmatpush.msra.mxu0 %v6356
    %10454 = vmatpush.msra.mxu0 %v6348
    %10455 = vmatpush.msra.mxu0 %v6340
    %10456 = vmatpush.msra.mxu0 %v6332
    %10457 = vmatpush.msra.mxu0 %v6324
    %10458 = vmatpush.msra.mxu0 %v6316
    %10459 = vmatpush.msra.mxu0 %v6308
    %10460 = vmatpush.msra.mxu0 %v6300
    %10461 = vmatpush.msra.mxu0 %v6292
    %10462 = vmatpush.msra.mxu0 %v6284
    %10463 = vmatpush.msra.mxu0 %v6276
    %10464 = vmatpush.msra.mxu0 %v6268
    %10465 = vmatpush.msra.mxu0 %v6260
    %10466 = vmatmul.f32.gmra.mxu0 %v10427
    %v10467 = vpop.f32.mrf.mxu0
    %v10468 = vadd.f32 %v10448, %v10467
    %10469 = vdwg.mxu0
    %10470 = vmatpush.msra.mxu0 %v6253
    %10471 = vmatpush.msra.mxu0 %v6245
    %10472 = vmatpush.msra.mxu0 %v6237
    %10473 = vmatpush.msra.mxu0 %v6229
    %10474 = vmatpush.msra.mxu0 %v6221
    %10475 = vmatpush.msra.mxu0 %v6213
    %10476 = vmatpush.msra.mxu0 %v6205
    %10477 = vmatpush.msra.mxu0 %v6197
    %10478 = vmatpush.msra.mxu0 %v6189
    %10479 = vmatpush.msra.mxu0 %v6181
    %10480 = vmatpush.msra.mxu0 %v6173
    %10481 = vmatpush.msra.mxu0 %v6165
    %10482 = vmatpush.msra.mxu0 %v6157
    %10483 = vmatpush.msra.mxu0 %v6149
    %10484 = vmatpush.msra.mxu0 %v6141
    %10485 = vmatpush.msra.mxu0 %v6133
    %10486 = vmatmul.f32.gmra.mxu0 %v10425
    %v10487 = vpop.f32.mrf.mxu0
    %v10488 = vadd.f32 0.0, %v10487
    %10489 = vdwg.mxu0
    %10490 = vmatpush.msra.mxu0 %v6381
    %10491 = vmatpush.msra.mxu0 %v6373
    %10492 = vmatpush.msra.mxu0 %v6365
    %10493 = vmatpush.msra.mxu0 %v6357
    %10494 = vmatpush.msra.mxu0 %v6349
    %10495 = vmatpush.msra.mxu0 %v6341
    %10496 = vmatpush.msra.mxu0 %v6333
    %10497 = vmatpush.msra.mxu0 %v6325
    %10498 = vmatpush.msra.mxu0 %v6317
    %10499 = vmatpush.msra.mxu0 %v6309
    %10500 = vmatpush.msra.mxu0 %v6301
    %10501 = vmatpush.msra.mxu0 %v6293
    %10502 = vmatpush.msra.mxu0 %v6285
    %10503 = vmatpush.msra.mxu0 %v6277
    %10504 = vmatpush.msra.mxu0 %v6269
    %10505 = vmatpush.msra.mxu0 %v6261
    %10506 = vmatmul.f32.gmra.mxu0 %v10427
    %v10507 = vpop.f32.mrf.mxu0
    %v10508 = vadd.f32 %v10488, %v10507
    %10509 = vdwg.mxu0
    %10510 = vmatpush.msra.mxu0 %v6254
    %10511 = vmatpush.msra.mxu0 %v6246
    %10512 = vmatpush.msra.mxu0 %v6238
    %10513 = vmatpush.msra.mxu0 %v6230
    %10514 = vmatpush.msra.mxu0 %v6222
    %10515 = vmatpush.msra.mxu0 %v6214
    %10516 = vmatpush.msra.mxu0 %v6206
    %10517 = vmatpush.msra.mxu0 %v6198
    %10518 = vmatpush.msra.mxu0 %v6190
    %10519 = vmatpush.msra.mxu0 %v6182
    %10520 = vmatpush.msra.mxu0 %v6174
    %10521 = vmatpush.msra.mxu0 %v6166
    %10522 = vmatpush.msra.mxu0 %v6158
    %10523 = vmatpush.msra.mxu0 %v6150
    %10524 = vmatpush.msra.mxu0 %v6142
    %10525 = vmatpush.msra.mxu0 %v6134
    %10526 = vmatmul.f32.gmra.mxu0 %v10425
    %v10527 = vpop.f32.mrf.mxu0
    %v10528 = vadd.f32 0.0, %v10527
    %10529 = vdwg.mxu0
    %10530 = vmatpush.msra.mxu0 %v6382
    %10531 = vmatpush.msra.mxu0 %v6374
    %10532 = vmatpush.msra.mxu0 %v6366
    %10533 = vmatpush.msra.mxu0 %v6358
    %10534 = vmatpush.msra.mxu0 %v6350
    %10535 = vmatpush.msra.mxu0 %v6342
    %10536 = vmatpush.msra.mxu0 %v6334
    %10537 = vmatpush.msra.mxu0 %v6326
    %10538 = vmatpush.msra.mxu0 %v6318
    %10539 = vmatpush.msra.mxu0 %v6310
    %10540 = vmatpush.msra.mxu0 %v6302
    %10541 = vmatpush.msra.mxu0 %v6294
    %10542 = vmatpush.msra.mxu0 %v6286
    %10543 = vmatpush.msra.mxu0 %v6278
    %10544 = vmatpush.msra.mxu0 %v6270
    %10545 = vmatpush.msra.mxu0 %v6262
    %10546 = vmatmul.f32.gmra.mxu0 %v10427
    %v10547 = vpop.f32.mrf.mxu0
    %v10548 = vadd.f32 %v10528, %v10547
    %10549 = vdwg.mxu0
    %10550 = vmatpush.msra.mxu0 %v6255
    %10551 = vmatpush.msra.mxu0 %v6247
    %10552 = vmatpush.msra.mxu0 %v6239
    %10553 = vmatpush.msra.mxu0 %v6231
    %10554 = vmatpush.msra.mxu0 %v6223
    %10555 = vmatpush.msra.mxu0 %v6215
    %10556 = vmatpush.msra.mxu0 %v6207
    %10557 = vmatpush.msra.mxu0 %v6199
    %10558 = vmatpush.msra.mxu0 %v6191
    %10559 = vmatpush.msra.mxu0 %v6183
    %10560 = vmatpush.msra.mxu0 %v6175
    %10561 = vmatpush.msra.mxu0 %v6167
    %10562 = vmatpush.msra.mxu0 %v6159
    %10563 = vmatpush.msra.mxu0 %v6151
    %10564 = vmatpush.msra.mxu0 %v6143
    %10565 = vmatpush.msra.mxu0 %v6135
    %10566 = vmatmul.f32.gmra.mxu0 %v10425
    %v10567 = vpop.f32.mrf.mxu0
    %v10568 = vadd.f32 0.0, %v10567
    %10569 = vdwg.mxu0
    %10570 = vmatpush.msra.mxu0 %v6383
    %10571 = vmatpush.msra.mxu0 %v6375
    %10572 = vmatpush.msra.mxu0 %v6367
    %10573 = vmatpush.msra.mxu0 %v6359
    %10574 = vmatpush.msra.mxu0 %v6351
    %10575 = vmatpush.msra.mxu0 %v6343
    %10576 = vmatpush.msra.mxu0 %v6335
    %10577 = vmatpush.msra.mxu0 %v6327
    %10578 = vmatpush.msra.mxu0 %v6319
    %10579 = vmatpush.msra.mxu0 %v6311
    %10580 = vmatpush.msra.mxu0 %v6303
    %10581 = vmatpush.msra.mxu0 %v6295
    %10582 = vmatpush.msra.mxu0 %v6287
    %10583 = vmatpush.msra.mxu0 %v6279
    %10584 = vmatpush.msra.mxu0 %v6271
    %10585 = vmatpush.msra.mxu0 %v6263
    %10586 = vmatmul.f32.gmra.mxu0 %v10427
    %v10587 = vpop.f32.mrf.mxu0
    %v10588 = vadd.f32 %v10568, %v10587
    %10589 = vdwg.mxu0
    %v10590 = vadd.f32 %v10468, %v6838
    %v10591 = vadd.f32 %v10508, %v6839
    %v10592 = vadd.f32 %v10548, %v6840
    %v10593 = vadd.f32 %v10588, %v6841
    %v10594 = vsub.f32 0.0, %v10590
    %v10595 = vmul.f32 %v10594, 1.442695
    %v10596 = vpow.pop %v10595
    %v10597 = vadd.f32 %v10596, 1.0
    %v10598 = vrcp.pop %v10597
    %v10599 = vmul.f32 %v10597, %v10598
    %v10600 = vsub.f32 1.0, %v10599
    %v10601 = vmul.f32 %v10598, %v10600
    %v10602 = vadd.f32 %v10598, %v10601
    %vm10603 = vweird.f32 %v10597
    %vm10604 = vweird.f32 %v10598
    %vm10605 = vmor %vm10603, %vm10604
    %v10606 = vsel %vm10605, %v10598, %v10602
    %v10607 = vand.u32 2147483647, %v10597
    %vm10608 = vcmp.eq.f32.partialorder %v10607, 8.507059e+37
    %v10609 = vand.u32 %v10597, 2147483648
    %v10610 = vor.u32 1.1754944e-38, %v10609
    %v10611 = vsel %vm10608, %v10610, %v10606
    %v10612 = vmul.f32 1.0, %v10611
    %v10613 = vsub.f32 0.0, %v10591
    %v10614 = vmul.f32 %v10613, 1.442695
    %v10615 = vpow.pop %v10614
    %v10616 = vadd.f32 %v10615, 1.0
    %v10617 = vrcp.pop %v10616
    %v10618 = vmul.f32 %v10616, %v10617
    %v10619 = vsub.f32 1.0, %v10618
    %v10620 = vmul.f32 %v10617, %v10619
    %v10621 = vadd.f32 %v10617, %v10620
    %vm10622 = vweird.f32 %v10616
    %vm10623 = vweird.f32 %v10617
    %vm10624 = vmor %vm10622, %vm10623
    %v10625 = vsel %vm10624, %v10617, %v10621
    %v10626 = vand.u32 2147483647, %v10616
    %vm10627 = vcmp.eq.f32.partialorder %v10626, 8.507059e+37
    %v10628 = vand.u32 %v10616, 2147483648
    %v10629 = vor.u32 1.1754944e-38, %v10628
    %v10630 = vsel %vm10627, %v10629, %v10625
    %v10631 = vmul.f32 1.0, %v10630
    %v10632 = vtanh.pop %v10592
    %v10633 = vsub.f32 0.0, %v10593
    %v10634 = vmul.f32 %v10633, 1.442695
    %v10635 = vpow.pop %v10634
    %v10636 = vadd.f32 %v10635, 1.0
    %v10637 = vrcp.pop %v10636
    %v10638 = vmul.f32 %v10636, %v10637
    %v10639 = vsub.f32 1.0, %v10638
    %v10640 = vmul.f32 %v10637, %v10639
    %v10641 = vadd.f32 %v10637, %v10640
    %vm10642 = vweird.f32 %v10636
    %vm10643 = vweird.f32 %v10637
    %vm10644 = vmor %vm10642, %vm10643
    %v10645 = vsel %vm10644, %v10637, %v10641
    %v10646 = vand.u32 2147483647, %v10636
    %vm10647 = vcmp.eq.f32.partialorder %v10646, 8.507059e+37
    %v10648 = vand.u32 %v10636, 2147483648
    %v10649 = vor.u32 1.1754944e-38, %v10648
    %v10650 = vsel %vm10647, %v10649, %v10645
    %v10651 = vmul.f32 1.0, %v10650
    %v10652 = vmul.f32 %v10631, %v10254
    %v10653 = vmul.f32 %v10612, %v10632
    %v10654 = vadd.f32 %v10652, %v10653
    %v10655 = vtanh.pop %v10654
    %v10656 = vmul.f32 %v10651, %v10655
    %10657 = vst [vmem:[#allocation2] sm:$0x3] %v10656
    // Predicated region
    $region54: #{deepconvlstm_forward.1} parent=1 // pred_check
      _
    $region55: #{deepconvlstm_forward.1} parent=1 // pred_check_branch
      %10659 = sbr.rel (0) target = $region57
    $region56: #{deepconvlstm_forward.1} parent=1 // pred_region
      %10661 = vsyncadd [#allocation3], 0
      %s10663 = sshll.u32 [#allocation2], 4
      %s10664 = int_to_ptr.vmem [resolvable:$true] %s10663
      %s10665 = sshll.u32 %s13, 4
      %s10666 = int_to_ptr.hbm [resolvable:$true] %s10665
      %10668 = dma.vmem_to_hbm [thread:$0]  %s10664, 32, %s10666, [#allocation3]
    $region57: #{deepconvlstm_forward.1} parent=1 // pred_fallthru
      _
    // Predicated region
    $region58: #{deepconvlstm_forward.1} parent=1 // pred_check
      _
    $region59: #{deepconvlstm_forward.1} parent=1 // pred_check_branch
      %10670 = sbr.rel (0) target = $region61
    $region60: #{deepconvlstm_forward.1} parent=1 // pred_region
      %10672 = dma.done [#allocation3], 32
    $region61: #{deepconvlstm_forward.1} parent=1 // pred_fallthru
      _
    %10673 = vsyncpa [#allocation3], 1

</llo_original>
